<compile_context>
chip_gen: v5e
topology: v5e:2x2
jax: 0.10.0
libtpu: 0.0.40
codegen_flags: <defaults>
</compile_context>

<pallas_src>
import jax
import jax.numpy as jnp
from jax import lax
from jax.experimental import pallas as pl
from jax.experimental.pallas import tpu as pltpu

# ---- config constants (the RenderConfig fields that run() actually uses) ----
BOUND = 1.0
MIN_NEAR = 0.05
LATENT_MODE = True
DUAL_MODE = True
IMG_DIMS = 3 + 1 if LATENT_MODE else 3                 # = 4
ALBEDO_CH = IMG_DIMS + 1 if DUAL_MODE else IMG_DIMS    # = 5
ALBEDO_LT_CH = IMG_DIMS                                # = 4
NOUT = 1 + ALBEDO_CH + ALBEDO_LT_CH                    # = 10 live head rows
HIDDEN = 32
HEAD_ROWS = 16           # merged head rows, padded 10 -> 16 (sublane aligned)
SLAB_ROWS = 16           # wsum | depth | image(5) | image_lt(4) | zero pad


# =============================================================================
# Fused kernel: ray generation + density MLP + volume compositing
#   Layout: rays on lanes, T / channels / hidden on sublanes.
# =============================================================================
def _nerf_fused_kernel(rays_ref, w1_ref, wh_ref, tri_ref, w_ref, slab_ref):
    f32 = jnp.float32
    bf16 = jnp.bfloat16
    T = w_ref.shape[0]          # num_steps
    TN = w_ref.shape[1]         # rays in this tile
    M = T * TN

    rays = rays_ref[...]                        # (8, TN): ox oy oz dx dy dz near far
    o = rays[0:3, :]                            # (3, TN)
    d = rays[3:6, :]                            # (3, TN)
    near = rays[6:7, :]                         # (1, TN)
    span = rays[7:8, :] - near                  # (1, TN)

    # ---- sample positions along each ray (z on sublanes, rays on lanes) ----
    row = lax.broadcasted_iota(jnp.int32, (T, TN), 0)        # reused for z & deltas
    t_norm = row.astype(f32) * (1.0 / (T - 1))
    z = near + span * t_norm                                  # (T, TN)
    # deltas: constant spacing span/(T-1); last row uses sample_dist = span/T
    deltas = jnp.where(row < T - 1, span * (1.0 / (T - 1)), span * (1.0 / T))

    # xyz = clamp(o + d * z, aabb)  -> augmented with a ones row (folds layer-1 bias)
    xyz = jnp.clip(o[:, None, :] + d[:, None, :] * z[None, :, :], -BOUND, BOUND)
    x_flat = xyz.reshape(3, M)                                            # (3, M)
    x_aug = jnp.concatenate([x_flat, jnp.ones((1, M), f32)], axis=0)      # (4, M)
    x_aug = x_aug.astype(bf16)

    # ---- density MLP, merged heads, bf16 MXU operands, f32 accumulation ----
    # w1_ref: (H+1, 4); row H = [0,0,0,1] -> h row H == 1 (constant-ones hidden row,
    # which carries the head bias column of wh_ref through the second matmul).
    h = jnp.dot(w1_ref[...], x_aug, preferred_element_type=f32)           # (H+1, M)
    h = jnp.maximum(h, 0.0).astype(bf16)
    out = jnp.dot(wh_ref[...], h, preferred_element_type=f32)             # (16, M)
    out10 = out[:NOUT].reshape(NOUT, T, TN)                               # (10, T, TN)

    sigma = jax.nn.softplus(out10[0])                                     # (T, TN)
    act = jax.nn.sigmoid(out10[1:NOUT])          # (9, T, TN): albedo(5) | albedo_lt(4)

    # ---- compositing: exact transmittance via one strict-lower-tri matmul (f32) ----
    ds = deltas * sigma                                                   # (T, TN)
    alphas = 1.0 - jnp.exp(-ds)
    cum = jnp.dot(tri_ref[...], ds, preferred_element_type=f32)           # excl. prefix
    weights = alphas * jnp.exp(-cum)                                      # (T, TN)
    w_ref[...] = weights

    # packed per-ray slab, built as one value -> one dense (16, TN) store
    wsum = jnp.sum(weights, axis=0, keepdims=True)                        # (1, TN)
    depth = jnp.sum(weights * z, axis=0, keepdims=True)                   # (1, TN)
    chans = jnp.sum(weights[None, :, :] * act, axis=1)                    # (9, TN)
    pad = jnp.zeros((SLAB_ROWS - 2 - (NOUT - 1), TN), f32)                # (5, TN)
    slab_ref[...] = jnp.concatenate([wsum, depth, chans, pad], axis=0)    # (16, TN)


def _fused_call(packed_rays, w1_aug, wh_aug, tri, *, num_steps, tile_n):
    n_pad = packed_rays.shape[1]
    grid = (n_pad // tile_n,)

    def col_spec(rows):
        return pl.BlockSpec((rows, tile_n), lambda i: (0, i))

    def const_spec(a):
        return pl.BlockSpec(a.shape, lambda i: (0, 0))

    return pl.pallas_call(
        _nerf_fused_kernel,
        out_shape=(
            jax.ShapeDtypeStruct((num_steps, n_pad), jnp.float32),   # weights (T, N)
            jax.ShapeDtypeStruct((SLAB_ROWS, n_pad), jnp.float32),   # packed slab
        ),
        grid=grid,
        in_specs=[
            col_spec(8),
            const_spec(w1_aug), const_spec(wh_aug), const_spec(tri),
        ],
        out_specs=(
            col_spec(num_steps),
            col_spec(SLAB_ROWS),
        ),
        compiler_params=pltpu.CompilerParams(
            dimension_semantics=("parallel",),          # shards across TCs on v7x
            vmem_limit_bytes=48 * 1024 * 1024,          # headroom below v7x 64 MiB/TC
        ),
    )(packed_rays, w1_aug, wh_aug, tri)


# =============================================================================
# Parameter handling
# =============================================================================
def init_density_params(key, hidden=HIDDEN):
    """Natural (torch-like) parameter shapes for the synthetic density MLP."""
    ks = jax.random.split(key, 8)
    w1 = 0.5 * jax.random.normal(ks[0], (3, hidden), jnp.float32)
    b1 = 0.1 * jax.random.normal(ks[1], (hidden,), jnp.float32)
    ws = 0.5 * jax.random.normal(ks[2], (hidden, 1), jnp.float32)
    bs = 0.1 * jax.random.normal(ks[3], (1,), jnp.float32)
    wa = 0.5 * jax.random.normal(ks[4], (hidden, ALBEDO_CH), jnp.float32)
    ba = 0.1 * jax.random.normal(ks[5], (ALBEDO_CH,), jnp.float32)
    wl = 0.5 * jax.random.normal(ks[6], (hidden, ALBEDO_LT_CH), jnp.float32)
    bl = 0.1 * jax.random.normal(ks[7], (ALBEDO_LT_CH,), jnp.float32)
    return (w1, b1, ws, bs, wa, ba, wl, bl)


def prep_kernel_params(params):
    """Merge heads, fold biases into the weights, transpose for the
    lanes-on-samples layout, and cast MXU operands to bf16."""
    w1, b1, ws, bs, wa, ba, wl, bl = params
    hidden = w1.shape[1]

    # Layer 1, bias folded: (H+1, 4).  Row `hidden` is the constant-ones generator
    # ([0,0,0,1] against the ones input row) that carries the head bias downstream.
    w1_aug = jnp.zeros((hidden + 1, 4), jnp.float32)
    w1_aug = w1_aug.at[:hidden, :3].set(w1.T)
    w1_aug = w1_aug.at[:hidden, 3].set(b1)
    w1_aug = w1_aug.at[hidden, 3].set(1.0)

    # Merged heads [sigma | albedo | albedo_latent_tune], bias in the last column.
    w_head = jnp.concatenate([ws, wa, wl], axis=1)            # (H, 10)
    b_head = jnp.concatenate([bs, ba, bl], axis=0)            # (10,)
    wh_aug = jnp.zeros((HEAD_ROWS, hidden + 1), jnp.float32)
    wh_aug = wh_aug.at[:NOUT, :hidden].set(w_head.T)
    wh_aug = wh_aug.at[:NOUT, hidden].set(b_head)

    return w1_aug.astype(jnp.bfloat16), wh_aug.astype(jnp.bfloat16)


def _strict_lower_tri(n):
    r = jnp.arange(n)[:, None]
    c = jnp.arange(n)[None, :]
    return (c < r).astype(jnp.float32)


# =============================================================================
# NeRFRenderer.run() semantics (shading='albedo', upsample_steps=0)
# =============================================================================
def nerf_run(rays_o, rays_d, params, num_steps=64, tile_n=512):
    assert tile_n % 128 == 0, tile_n
    prefix = rays_o.shape[:-1]
    rays_o = rays_o.reshape(-1, 3).astype(jnp.float32)
    rays_d = rays_d.reshape(-1, 3).astype(jnp.float32)
    n_rays = rays_o.shape[0]

    # shrink the tile for small ray counts (keeps grid/padding sane in tests)
    tile_eff = min(tile_n, ((n_rays + 127) // 128) * 128)

    # near/far from a bounding sphere (type='sphere')
    radius = jnp.linalg.norm(rays_o, axis=-1, keepdims=True)          # (N, 1)
    nears = jnp.maximum(radius - BOUND, MIN_NEAR)
    fars = radius + BOUND

    # Pack rays lane-dense: (8, N) = [ox oy oz dx dy dz near far] x rays-on-lanes.
    packed = jnp.concatenate([rays_o, rays_d, nears, fars], axis=-1).T  # (8, N)
    n_pad = ((n_rays + tile_eff - 1) // tile_eff) * tile_eff
    if n_pad != n_rays:
        packed = jnp.pad(packed, ((0, 0), (0, n_pad - n_rays)), mode="edge")

    w1_aug, wh_aug = prep_kernel_params(params)
    tri = _strict_lower_tri(num_steps)

    weights_t, slab = _fused_call(
        packed, w1_aug, wh_aug, tri, num_steps=num_steps, tile_n=tile_eff)

    # un-pack / transpose back to the reference API shapes (layout plumbing only)
    weights = weights_t[:, :n_rays].T                                  # (N, T)
    weights_sum = slab[0, :n_rays]                                     # (N,)
    depth = slab[1, :n_rays]                                           # (N,)
    image = slab[2:2 + ALBEDO_CH, :n_rays].T                           # (N, 5)
    image_lt = slab[2 + ALBEDO_CH:2 + ALBEDO_CH + ALBEDO_LT_CH, :n_rays].T  # (N, 4)

    # auxiliary tensors the reference returns (plain XLA ops; not kernel traffic)
    t_lin = jnp.linspace(0.0, 1.0, num_steps, dtype=jnp.float32)[None, :]
    z_vals = nears + (fars - nears) * t_lin                            # (N, T)
    xyzs = jnp.clip(rays_o[:, None, :] + rays_d[:, None, :] * z_vals[..., None],
                    -BOUND, BOUND)                                     # (N, T, 3)

    # pdf recomputed in the wrapper (dropped from kernel outputs per perf review)
    sample_dist = (fars - nears) / num_steps                           # (N, 1)
    deltas = jnp.concatenate([z_vals[:, 1:] - z_vals[:, :-1], sample_dist], axis=-1)
    pdf = weights / jnp.maximum(deltas, 1e-5)                          # (N, T)

    # disable_background=True path: no background mixing.
    results = {
        "image": image.reshape(*prefix, ALBEDO_CH),
        "image_latent_tune": image_lt.reshape(*prefix, ALBEDO_LT_CH),
        "depth": depth.reshape(*prefix),
        "weights": weights,                       # (N, T) flat, as in torch run()
        "weights_sum": weights_sum,               # (N,)   flat, as in torch run()
        "mask": (nears < fars).reshape(*prefix),
        "xyzs": xyzs,
        "z_vals": z_vals,
        "pdf": pdf,
    }
    return results


# =============================================================================
# Pure-JAX reference (mirrors the torch math incl. cumprod form) for validation
# =============================================================================
def nerf_run_reference(rays_o, rays_d, params, num_steps):
    prefix = rays_o.shape[:-1]
    rays_o = rays_o.reshape(-1, 3)
    rays_d = rays_d.reshape(-1, 3)
    n_rays = rays_o.shape[0]
    radius = jnp.linalg.norm(rays_o, axis=-1, keepdims=True)
    nears = jnp.maximum(radius - BOUND, MIN_NEAR)
    fars = radius + BOUND
    z = nears + (fars - nears) * jnp.linspace(0.0, 1.0, num_steps)[None, :]
    sample_dist = (fars - nears) / num_steps
    xyzs = jnp.clip(rays_o[:, None, :] + rays_d[:, None, :] * z[..., None],
                    -BOUND, BOUND)
    w1, b1, ws, bs, wa, ba, wl, bl = params
    x = xyzs.reshape(-1, 3)
    h = jnp.maximum(x @ w1 + b1, 0.0)
    sigma = jax.nn.softplus(h @ ws + bs).reshape(n_rays, num_steps)
    alb = jax.nn.sigmoid(h @ wa + ba).reshape(n_rays, num_steps, ALBEDO_CH)
    alb_lt = jax.nn.sigmoid(h @ wl + bl).reshape(n_rays, num_steps, ALBEDO_LT_CH)
    deltas = jnp.concatenate([z[:, 1:] - z[:, :-1], sample_dist], axis=-1)
    alphas = 1.0 - jnp.exp(-deltas * sigma)
    shifted = jnp.concatenate([jnp.ones_like(alphas[:, :1]), 1.0 - alphas + 1e-15], axis=-1)
    weights = alphas * jnp.cumprod(shifted, axis=-1)[:, :-1]
    return {
        "weights": weights,
        "weights_sum": weights.sum(-1),
        "depth": (weights * z).sum(-1).reshape(*prefix),
        "image": (weights[..., None] * alb).sum(-2).reshape(*prefix, ALBEDO_CH),
        "image_latent_tune": (weights[..., None] * alb_lt).sum(-2).reshape(*prefix, ALBEDO_LT_CH),
    }


if __name__ == "__main__":
    B, NR, T = 2, 64, 64                       # 2 batches x 64 rays x 64 samples
    key = jax.random.PRNGKey(0)
    ko, kd, kp = jax.random.split(key, 3)

    rays_o = 0.3 * jax.random.normal(ko, (B, NR, 3), jnp.float32) + jnp.array([0.0, 0.0, 2.0])
    rays_d = jax.random.normal(kd, (B, NR, 3), jnp.float32)
    rays_d = rays_d / jnp.linalg.norm(rays_d, axis=-1, keepdims=True)

    params = init_density_params(kp)

    run = jax.jit(lambda o, d: nerf_run(o, d, params, num_steps=T))
    results = run(rays_o, rays_d)
    jax.block_until_ready(results)

    # shape / sanity checks
    assert results["image"].shape == (B, NR, ALBEDO_CH)
    assert results["image_latent_tune"].shape == (B, NR, ALBEDO_LT_CH)
    assert results["depth"].shape == (B, NR)
    assert results["weights"].shape == (B * NR, T)
    assert results["pdf"].shape == (B * NR, T)
    assert bool(jnp.all(jnp.isfinite(results["image"])))
    assert bool(jnp.all(jnp.isfinite(results["pdf"])))
    assert bool(jnp.all(results["weights_sum"] <= 1.0 + 1e-4))

    # numerical check against the pure-JAX (torch-equivalent) reference
    ref = nerf_run_reference(rays_o, rays_d, params, T)
    for name in ("image", "image_latent_tune", "depth", "weights", "weights_sum"):
        assert bool(jnp.allclose(results[name], ref[name], rtol=1e-2, atol=1e-2)), name

    print("KERNEL_OK")
</pallas_src>

<mosaic_0001>
module attributes {stable_mosaic.version = 11 : i64} {
  func.func @_nerf_fused_kernel(%arg0: i32, %arg1: memref<8x128xf32, #tpu.memory_space<vmem>>, %arg2: memref<33x4xbf16, #tpu.memory_space<vmem>>, %arg3: memref<16x33xbf16, #tpu.memory_space<vmem>>, %arg4: memref<64x64xf32, #tpu.memory_space<vmem>>, %arg5: memref<64x128xf32, #tpu.memory_space<vmem>>, %arg6: memref<16x128xf32, #tpu.memory_space<vmem>>) attributes {dimension_semantics = [#tpu.dimension_semantics<parallel>], iteration_bounds = array<i64: 1>, scalar_prefetch = 0 : i64, scratch_operands = 0 : i64, tpu.core_type = #tpu.core_type<tc>, window_params = [{transform_indices = @transform_0, window_bounds = array<i64: 8, 128>}, {pipeline_mode = #tpu.pipeline_mode<synchronous>, transform_indices = @transform_1, window_bounds = array<i64: 33, 4>}, {pipeline_mode = #tpu.pipeline_mode<synchronous>, transform_indices = @transform_2, window_bounds = array<i64: 16, 33>}, {pipeline_mode = #tpu.pipeline_mode<synchronous>, transform_indices = @transform_3, window_bounds = array<i64: 64, 64>}, {transform_indices = @transform_4, window_bounds = array<i64: 64, 128>}, {transform_indices = @transform_5, window_bounds = array<i64: 16, 128>}]} {
    %c0 = arith.constant 0 : index
    %c0_0 = arith.constant 0 : index
    %0 = vector.load %arg1[%c0, %c0_0] : memref<8x128xf32, #tpu.memory_space<vmem>>, vector<8x128xf32>
    %1 = vector.extract_strided_slice %0 {offsets = [0, 0], sizes = [3, 128], strides = [1, 1]} : vector<8x128xf32> to vector<3x128xf32>
    %2 = vector.extract_strided_slice %0 {offsets = [3, 0], sizes = [3, 128], strides = [1, 1]} : vector<8x128xf32> to vector<3x128xf32>
    %3 = vector.extract_strided_slice %0 {offsets = [6, 0], sizes = [1, 128], strides = [1, 1]} : vector<8x128xf32> to vector<1x128xf32>
    %4 = vector.extract_strided_slice %0 {offsets = [7, 0], sizes = [1, 128], strides = [1, 1]} : vector<8x128xf32> to vector<1x128xf32>
    %5 = arith.subf %4, %3 : vector<1x128xf32>
    %6 = tpu.iota {dimensions = array<i32: 0>} : vector<64x128xi32>
    %7 = arith.sitofp %6 : vector<64x128xi32> to vector<64x128xf32>
    %cst = arith.constant 0.0158730168 : f32
    %8 = vector.broadcast %cst : f32 to vector<64x128xf32>
    %9 = arith.mulf %7, %8 : vector<64x128xf32>
    %10 = vector.broadcast %5 : vector<1x128xf32> to vector<64x128xf32>
    %11 = arith.mulf %10, %9 : vector<64x128xf32>
    %12 = vector.broadcast %3 : vector<1x128xf32> to vector<64x128xf32>
    %13 = arith.addf %12, %11 : vector<64x128xf32>
    %c63_i32 = arith.constant 63 : i32
    %14 = vector.broadcast %c63_i32 : i32 to vector<64x128xi32>
    %15 = arith.cmpi slt, %6, %14 : vector<64x128xi32>
    %cst_1 = arith.constant 0.0158730168 : f32
    %16 = vector.broadcast %cst_1 : f32 to vector<1x128xf32>
    %17 = arith.mulf %5, %16 : vector<1x128xf32>
    %cst_2 = arith.constant 1.562500e-02 : f32
    %18 = vector.broadcast %cst_2 : f32 to vector<1x128xf32>
    %19 = arith.mulf %5, %18 : vector<1x128xf32>
    %20 = vector.shape_cast %17 : vector<1x128xf32> to vector<1x128xf32>
    %21 = vector.broadcast %20 : vector<1x128xf32> to vector<64x128xf32>
    %22 = vector.shape_cast %19 : vector<1x128xf32> to vector<1x128xf32>
    %23 = vector.broadcast %22 : vector<1x128xf32> to vector<64x128xf32>
    %24 = arith.select %15, %21, %23 : vector<64x128xi1>, vector<64x128xf32>
    %25 = vector.shape_cast %1 : vector<3x128xf32> to vector<3x1x128xf32>
    %26 = vector.shape_cast %2 : vector<3x128xf32> to vector<3x1x128xf32>
    %27 = vector.shape_cast %13 : vector<64x128xf32> to vector<1x64x128xf32>
    %28 = vector.broadcast %26 : vector<3x1x128xf32> to vector<3x64x128xf32>
    %29 = vector.broadcast %27 : vector<1x64x128xf32> to vector<3x64x128xf32>
    %30 = arith.mulf %28, %29 : vector<3x64x128xf32>
    %31 = vector.broadcast %25 : vector<3x1x128xf32> to vector<3x64x128xf32>
    %32 = arith.addf %31, %30 : vector<3x64x128xf32>
    %cst_3 = arith.constant -1.000000e+00 : f32
    %cst_4 = arith.constant 1.000000e+00 : f32
    %33 = vector.broadcast %cst_3 : f32 to vector<3x64x128xf32>
    %34 = arith.maximumf %33, %32 : vector<3x64x128xf32>
    %35 = vector.broadcast %cst_4 : f32 to vector<3x64x128xf32>
    %36 = arith.minimumf %35, %34 : vector<3x64x128xf32>
    %37 = vector.shape_cast %36 : vector<3x64x128xf32> to vector<3x8192xf32>
    %cst_5 = arith.constant 1.000000e+00 : f32
    %38 = vector.broadcast %cst_5 : f32 to vector<1x8192xf32>
    %39 = tpu.concatenate %37, %38 in 0 : vector<3x8192xf32>, vector<1x8192xf32> -> vector<4x8192xf32>
    %40 = arith.truncf %39 : vector<4x8192xf32> to vector<4x8192xbf16>
    %c0_6 = arith.constant 0 : index
    %c0_7 = arith.constant 0 : index
    %41 = vector.load %arg2[%c0_6, %c0_7] : memref<33x4xbf16, #tpu.memory_space<vmem>>, vector<33x4xbf16>
    %cst_8 = arith.constant dense<0.000000e+00> : vector<33x8192xf32>
    %42 = tpu.matmul %41, %40, %cst_8 {dimension_numbers = #tpu.dot_dimension_numbers<[1], [0], [0], [1], [0, 0, 1, 1], [], []>} : vector<33x4xbf16>, vector<4x8192xbf16>, vector<33x8192xf32> -> vector<33x8192xf32>
    %cst_9 = arith.constant 0.000000e+00 : f32
    %43 = vector.broadcast %cst_9 : f32 to vector<33x8192xf32>
    %44 = arith.maximumf %42, %43 : vector<33x8192xf32>
    %45 = arith.truncf %44 : vector<33x8192xf32> to vector<33x8192xbf16>
    %c0_10 = arith.constant 0 : index
    %c0_11 = arith.constant 0 : index
    %46 = vector.load %arg3[%c0_10, %c0_11] : memref<16x33xbf16, #tpu.memory_space<vmem>>, vector<16x33xbf16>
    %cst_12 = arith.constant dense<0.000000e+00> : vector<16x8192xf32>
    %47 = tpu.matmul %46, %45, %cst_12 {dimension_numbers = #tpu.dot_dimension_numbers<[1], [0], [0], [1], [0, 0, 1, 1], [], []>} : vector<16x33xbf16>, vector<33x8192xbf16>, vector<16x8192xf32> -> vector<16x8192xf32>
    %48 = vector.extract_strided_slice %47 {offsets = [0, 0], sizes = [10, 8192], strides = [1, 1]} : vector<16x8192xf32> to vector<10x8192xf32>
    %49 = vector.shape_cast %48 : vector<10x8192xf32> to vector<10x64x128xf32>
    %50 = vector.extract_strided_slice %49 {offsets = [0, 0, 0], sizes = [1, 64, 128], strides = [1, 1, 1]} : vector<10x64x128xf32> to vector<1x64x128xf32>
    %51 = vector.shape_cast %50 : vector<1x64x128xf32> to vector<64x128xf32>
    %cst_13 = arith.constant 0.000000e+00 : f32
    %52 = vector.broadcast %cst_13 : f32 to vector<64x128xf32>
    %53 = arith.maximumf %51, %52 : vector<64x128xf32>
    %54 = vector.broadcast %cst_13 : f32 to vector<64x128xf32>
    %55 = arith.subf %51, %54 : vector<64x128xf32>
    %56 = arith.cmpf one, %55, %55 : vector<64x128xf32>
    %57 = vector.broadcast %cst_13 : f32 to vector<64x128xf32>
    %58 = arith.addf %51, %57 : vector<64x128xf32>
    %59 = math.absf %55 : vector<64x128xf32>
    %cst_14 = arith.constant 0.000000e+00 : f32
    %60 = vector.broadcast %cst_14 : f32 to vector<64x128xf32>
    %61 = arith.subf %60, %59 : vector<64x128xf32>
    %62 = math.exp %61 : vector<64x128xf32>
    %63 = math.log1p %62 : vector<64x128xf32>
    %64 = arith.addf %53, %63 : vector<64x128xf32>
    %65 = arith.select %56, %58, %64 : vector<64x128xi1>, vector<64x128xf32>
    %66 = vector.extract_strided_slice %49 {offsets = [1, 0, 0], sizes = [9, 64, 128], strides = [1, 1, 1]} : vector<10x64x128xf32> to vector<9x64x128xf32>
    %67 = arith.negf %66 : vector<9x64x128xf32>
    %68 = math.exp %67 : vector<9x64x128xf32>
    %cst_15 = arith.constant 1.000000e+00 : f32
    %69 = vector.broadcast %cst_15 : f32 to vector<9x64x128xf32>
    %70 = arith.addf %69, %68 : vector<9x64x128xf32>
    %71 = arith.divf %69, %70 : vector<9x64x128xf32>
    %72 = arith.mulf %24, %65 : vector<64x128xf32>
    %cst_16 = arith.constant 0.000000e+00 : f32
    %73 = vector.broadcast %cst_16 : f32 to vector<64x128xf32>
    %74 = arith.subf %73, %72 : vector<64x128xf32>
    %75 = math.exp %74 : vector<64x128xf32>
    %cst_17 = arith.constant 1.000000e+00 : f32
    %76 = vector.broadcast %cst_17 : f32 to vector<64x128xf32>
    %77 = arith.subf %76, %75 : vector<64x128xf32>
    %c0_18 = arith.constant 0 : index
    %c0_19 = arith.constant 0 : index
    %78 = vector.load %arg4[%c0_18, %c0_19] : memref<64x64xf32, #tpu.memory_space<vmem>>, vector<64x64xf32>
    %cst_20 = arith.constant dense<0.000000e+00> : vector<64x128xf32>
    %79 = tpu.matmul %78, %72, %cst_20 {dimension_numbers = #tpu.dot_dimension_numbers<[1], [0], [0], [1], [0, 0, 1, 1], [], []>} : vector<64x64xf32>, vector<64x128xf32>, vector<64x128xf32> -> vector<64x128xf32>
    %cst_21 = arith.constant 0.000000e+00 : f32
    %80 = vector.broadcast %cst_21 : f32 to vector<64x128xf32>
    %81 = arith.subf %80, %79 : vector<64x128xf32>
    %82 = math.exp %81 : vector<64x128xf32>
    %83 = arith.mulf %77, %82 : vector<64x128xf32>
    %c0_22 = arith.constant 0 : index
    %c0_23 = arith.constant 0 : index
    %84 = vector.load %arg5[%c0_22, %c0_23] : memref<64x128xf32, #tpu.memory_space<vmem>>, vector<64x128xf32>
    tpu.vector_store %arg5[%c0_22, %c0_23], %83 {strides = array<i32>} : memref<64x128xf32, #tpu.memory_space<vmem>>, vector<64x128xf32>,
    %cst_24 = arith.constant dense<0.000000e+00> : vector<128xf32>
    %85 = vector.multi_reduction <add>, %83, %cst_24 [0] : vector<64x128xf32> to vector<128xf32>
    %86 = vector.shape_cast %85 : vector<128xf32> to vector<1x128xf32>
    %87 = arith.mulf %83, %13 : vector<64x128xf32>
    %cst_25 = arith.constant dense<0.000000e+00> : vector<128xf32>
    %88 = vector.multi_reduction <add>, %87, %cst_25 [0] : vector<64x128xf32> to vector<128xf32>
    %89 = vector.shape_cast %88 : vector<128xf32> to vector<1x128xf32>
    %90 = vector.shape_cast %83 : vector<64x128xf32> to vector<1x64x128xf32>
    %91 = vector.broadcast %90 : vector<1x64x128xf32> to vector<9x64x128xf32>
    %92 = arith.mulf %91, %71 : vector<9x64x128xf32>
    %cst_26 = arith.constant dense<0.000000e+00> : vector<9x128xf32>
    %93 = vector.multi_reduction <add>, %92, %cst_26 [1] : vector<9x64x128xf32> to vector<9x128xf32>
    %cst_27 = arith.constant 0.000000e+00 : f32
    %94 = vector.broadcast %cst_27 : f32 to vector<5x128xf32>
    %95 = tpu.concatenate %86, %89, %93, %94 in 0 : vector<1x128xf32>, vector<1x128xf32>, vector<9x128xf32>, vector<5x128xf32> -> vector<16x128xf32>
    %c0_28 = arith.constant 0 : index
    %c0_29 = arith.constant 0 : index
    %96 = vector.load %arg6[%c0_28, %c0_29] : memref<16x128xf32, #tpu.memory_space<vmem>>, vector<16x128xf32>
    tpu.vector_store %arg6[%c0_28, %c0_29], %95 {strides = array<i32>} : memref<16x128xf32, #tpu.memory_space<vmem>>, vector<16x128xf32>,
    return
  }
  func.func @transform_0(%arg0: i32) -> (i32, i32) {
    %c0_i32 = arith.constant 0 : i32
    %c0_i32_0 = arith.constant 0 : i32
    return %c0_i32, %arg0 : i32, i32
  }
  func.func @transform_1(%arg0: i32) -> (i32, i32) {
    %c0_i32 = arith.constant 0 : i32
    %c0_i32_0 = arith.constant 0 : i32
    %c0_i32_1 = arith.constant 0 : i32
    return %c0_i32, %c0_i32_0 : i32, i32
  }
  func.func @transform_2(%arg0: i32) -> (i32, i32) {
    %c0_i32 = arith.constant 0 : i32
    %c0_i32_0 = arith.constant 0 : i32
    %c0_i32_1 = arith.constant 0 : i32
    return %c0_i32, %c0_i32_0 : i32, i32
  }
  func.func @transform_3(%arg0: i32) -> (i32, i32) {
    %c0_i32 = arith.constant 0 : i32
    %c0_i32_0 = arith.constant 0 : i32
    %c0_i32_1 = arith.constant 0 : i32
    return %c0_i32, %c0_i32_0 : i32, i32
  }
  func.func @transform_4(%arg0: i32) -> (i32, i32) {
    %c0_i32 = arith.constant 0 : i32
    %c0_i32_0 = arith.constant 0 : i32
    return %c0_i32, %arg0 : i32, i32
  }
  func.func @transform_5(%arg0: i32) -> (i32, i32) {
    %c0_i32 = arith.constant 0 : i32
    %c0_i32_0 = arith.constant 0 : i32
    return %c0_i32, %arg0 : i32, i32
  }
}

</mosaic_0001>

<llo_original>
// kernel: sub.2
$region0: #{sub.2}
  #allocation0 [shape = 's32[1]{0}', space=sflag, size = 0x4, scoped, tag = 'scoped memory for sub.2']
  %s0 = inlined_call_operand.vmem [shape: f32[128], index: 0, kind: input, shape index: {}]
  %s1 = inlined_call_operand.vmem [shape: f32[128], index: 1, kind: input, shape index: {}]
  %s2 = inlined_call_operand.vmem [shape: f32[128], index: 2, kind: output, shape index: {}]
  %v3 = vld [vmem:[%s0] sm:$0x1]
  %v4 = vld [vmem:[%s1] sm:$0x1]
  %5 = xla_tuple %v3, %v4
  %6 = xla_tuple %5
  %v7 = vsub.f32 %v3, %v4
  %8 = xla_tuple %v7
  %9 = vst [vmem:[%s2] sm:$0x1] %v7

// kernel: squeeze.3
$region0: #{squeeze.3}
  %s0 = inlined_call_operand.vmem [shape: f32[128], index: 0, kind: input, shape index: {}]
  %s1 = inlined_call_operand.hbm [shape: f32[2,64], index: 1, kind: output, shape index: {}]
  $region1: #{squeeze.3} parent=0
    #allocation0 [shape = 'u8[1024]{0}', space=vmem, size = 0x400, scoped, tag = 'operand span for operand 1']
    #allocation1 [shape = 's32[1]{0}', space=sflag, size = 0x4, scoped, tag = 'scoped memory for squeeze.3']
    #allocation2 [shape = 'u8[4096]{0}', space=vmem, size = 0x1000, scoped, tag = 'scoped mem for output reshape']
    #allocation3 [shape = 'u8[4096]{0}', space=vmem, size = 0x1000, scoped, tag = 'scoped mem for input reshape']
    %2 = vsyncpa [#allocation1], 0
    %s4 = ssub.s32 2, 1
    %v5 = vld [vmem:[%s0] sm:%s4]
    %6 = vst [vmem:[#allocation3] sm:%s4] %v5
    %v7 = vld [vmem:[#allocation3] sm:$0x1]
    %vm8 = vcmask 523264
    %9 = vst.msk [vmem:[#allocation2] sm:$0x1] %vm8, %v7
    %v10 = vld [vmem:[#allocation3] sm:$0x1]
    %11 = vrot.lane.b32.xlu0 %v10, 64
    %v12 = vpop.permute.xlu0 %11
    %vm13 = vcmask 523264
    %s14 = scalar_lea.vmem [#allocation2], 1
    %15 = vst.msk [vmem:[%s14] sm:$0x1] %vm13, %v12
    %s17 = ssub.s32 4, 1
    %v18 = vld [vmem:[#allocation2] sm:%s17]
    %s20 = ssub.s32 4, 1
    %21 = vst [vmem:[#allocation0] sm:%s20] %v18
    %23 = vsyncadd [#allocation1], 0
    %s25 = sshll.u32 [#allocation0], 4
    %s26 = int_to_ptr.vmem [resolvable:$true] %s25
    %s27 = sshll.u32 %s1, 4
    %s28 = int_to_ptr.hbm [resolvable:$true] %s27
    %30 = dma.vmem_to_hbm [thread:$0]  %s26, 32, %s28, [#allocation1]
    %32 = dma.done [#allocation1], 32
    %33 = vsyncpa [#allocation1], 1

// kernel: _lambda_.1
$region0: #{_lambda_.1}
  #allocation0 [shape = 'u32[]', space=smem, size = 0x4, offset = 0x4, fixed_abs, tag = 'smem constant byte address 0x4 - core index']
  #allocation1 [shape = 'u32[72,128]{1,0:T(1,128)}', space=vmem, size = 0x9000, scoped, tag = 'internal scratch']
  %s0 = inlined_call_operand.vmem [shape: f32[8,128], index: 0, kind: input, shape index: {}]
  %s1 = inlined_call_operand.vmem [shape: bf16[33,4], index: 1, kind: input, shape index: {}]
  %s2 = inlined_call_operand.vmem [shape: bf16[16,33], index: 2, kind: input, shape index: {}]
  %s3 = inlined_call_operand.vmem [shape: f32[64,64], index: 3, kind: input, shape index: {}]
  %s4 = inlined_call_operand.vmem [shape: f32[64,128], index: 4, kind: output, shape index: {0}]
  %s5 = inlined_call_operand.vmem [shape: f32[16,128], index: 5, kind: output, shape index: {1}]
  %6 = xla_tuple %s4, %s5
  %s7 = sld [smem:[#allocation0]]
  $region34: #{_lambda_.1} parent=0
    _
  %s9 = ssub.s32 1, %s7
  %s10 = scalar_select 0, %s9, %s7
  // Predicated region
  $region2: #{_lambda_.1} parent=0 // pred_check
    _
  $region3: #{_lambda_.1} parent=0 // pred_check_branch
    %12 = sbr.rel (0) target = $region5
  $region4: #{_lambda_.1} parent=0 // pred_region
    _
  $region5: #{_lambda_.1} parent=0 // pred_fallthru
    _
  // Predicated region
  $region6: #{_lambda_.1} parent=0 // pred_check
    _
  $region7: #{_lambda_.1} parent=0 // pred_check_branch
    %14 = sbr.rel (0) target = $region9
  $region8: #{_lambda_.1} parent=0 // pred_region
    _
  $region9: #{_lambda_.1} parent=0 // pred_fallthru
    _
  // Predicated region
  $region10: #{_lambda_.1} parent=0 // pred_check
    _
  $region11: #{_lambda_.1} parent=0 // pred_check_branch
    %16 = sbr.rel (0) target = $region13
  $region12: #{_lambda_.1} parent=0 // pred_region
    _
  $region13: #{_lambda_.1} parent=0 // pred_fallthru
    _
  // Predicated region
  $region14: #{_lambda_.1} parent=0 // pred_check
    _
  $region15: #{_lambda_.1} parent=0 // pred_check_branch
    %18 = sbr.rel (0) target = $region17
  $region16: #{_lambda_.1} parent=0 // pred_region
    _
  $region17: #{_lambda_.1} parent=0 // pred_fallthru
    _
  %v20 = vld [vmem:[%s0] sm:$0xff]
  %v22 = vrot.slane %v20, 7
  %v24 = vsub.f32 %v20, %v22
  %v25 = vlaneseq
  %v26 = vshrl.u32 %v25, 7
  %v27 = vadd.s32 %v26, 8
  %v28 = vadd.s32 %v26, 16
  %v29 = vadd.s32 %v26, 24
  %v30 = vadd.s32 %v26, 32
  %v31 = vadd.s32 %v26, 40
  %v32 = vadd.s32 %v26, 48
  %v33 = vadd.s32 %v26, 56
  %v34 = vcvt.s32.f32 %v26
  %v35 = vcvt.s32.f32 %v27
  %v36 = vcvt.s32.f32 %v28
  %v37 = vcvt.s32.f32 %v29
  %v38 = vcvt.s32.f32 %v30
  %v39 = vcvt.s32.f32 %v31
  %v40 = vcvt.s32.f32 %v32
  %v41 = vcvt.s32.f32 %v33
  %v42 = vmul.f32 %v34, 0.015873017
  %v43 = vmul.f32 %v35, 0.015873017
  %v44 = vmul.f32 %v36, 0.015873017
  %v45 = vmul.f32 %v37, 0.015873017
  %v46 = vmul.f32 %v38, 0.015873017
  %v47 = vmul.f32 %v39, 0.015873017
  %v48 = vmul.f32 %v40, 0.015873017
  %v49 = vmul.f32 %v41, 0.015873017
  %v50 = vperm.slane %v24, 7
  %v51 = vmul.f32 %v50, %v42
  %v52 = vmul.f32 %v50, %v43
  %v53 = vmul.f32 %v50, %v44
  %v54 = vmul.f32 %v50, %v45
  %v55 = vmul.f32 %v50, %v46
  %v56 = vmul.f32 %v50, %v47
  %v57 = vmul.f32 %v50, %v48
  %v58 = vmul.f32 %v50, %v49
  %v59 = vperm.slane %v20, 6
  %v60 = vadd.f32 %v59, %v51
  %v61 = vadd.f32 %v59, %v52
  %v62 = vadd.f32 %v59, %v53
  %v63 = vadd.f32 %v59, %v54
  %v64 = vadd.f32 %v59, %v55
  %v65 = vadd.f32 %v59, %v56
  %v66 = vadd.f32 %v59, %v57
  %v67 = vadd.f32 %v59, %v58
  %vm68 = vcmp.lt.s32.totalorder %v26, 63
  %vm69 = vcmp.lt.s32.totalorder %v27, 63
  %vm70 = vcmp.lt.s32.totalorder %v28, 63
  %vm71 = vcmp.lt.s32.totalorder %v29, 63
  %vm72 = vcmp.lt.s32.totalorder %v30, 63
  %vm73 = vcmp.lt.s32.totalorder %v31, 63
  %vm74 = vcmp.lt.s32.totalorder %v32, 63
  %vm75 = vcmp.lt.s32.totalorder %v33, 63
  %v76 = vmul.f32 %v24, 0.015873017
  %v77 = vmul.f32 %v24, 0.015625
  %v78 = vperm.slane %v76, 7
  %v79 = vperm.slane %v77, 7
  %v80 = vsel %vm68, %v78, %v79
  %v81 = vsel %vm69, %v78, %v79
  %v82 = vsel %vm70, %v78, %v79
  %v83 = vsel %vm71, %v78, %v79
  %v84 = vsel %vm72, %v78, %v79
  %v85 = vsel %vm73, %v78, %v79
  %v86 = vsel %vm74, %v78, %v79
  %v87 = vsel %vm75, %v78, %v79
  %v88 = vrot.slane %v20, 1
  %v89 = vrot.slane %v20, 2
  %90 = vst [vmem:[#allocation1] sm:$0xff] %v20
  %s91 = scalar_lea.vmem [#allocation1], 3
  %v92 = vld [vmem:[%s91] ss:$9 sm:$0xff]
  %s93 = scalar_lea.vmem [#allocation1], 4
  %v94 = vld [vmem:[%s93] ss:$9 sm:$0xff]
  %s95 = scalar_lea.vmem [#allocation1], 5
  %v96 = vld [vmem:[%s95] ss:$9 sm:$0xff]
  %v97 = vperm.slane %v92, 0
  %v98 = vperm.slane %v94, 0
  %v99 = vperm.slane %v96, 0
  %v103 = vmul.f32 %v97, %v60
  %v104 = vmul.f32 %v97, %v61
  %v105 = vmul.f32 %v97, %v62
  %v106 = vmul.f32 %v97, %v63
  %v107 = vmul.f32 %v97, %v64
  %v108 = vmul.f32 %v97, %v65
  %v109 = vmul.f32 %v97, %v66
  %v110 = vmul.f32 %v97, %v67
  %v111 = vmul.f32 %v98, %v60
  %v112 = vmul.f32 %v98, %v61
  %v113 = vmul.f32 %v98, %v62
  %v114 = vmul.f32 %v98, %v63
  %v115 = vmul.f32 %v98, %v64
  %v116 = vmul.f32 %v98, %v65
  %v117 = vmul.f32 %v98, %v66
  %v118 = vmul.f32 %v98, %v67
  %v119 = vmul.f32 %v99, %v60
  %v120 = vmul.f32 %v99, %v61
  %v121 = vmul.f32 %v99, %v62
  %v122 = vmul.f32 %v99, %v63
  %v123 = vmul.f32 %v99, %v64
  %v124 = vmul.f32 %v99, %v65
  %v125 = vmul.f32 %v99, %v66
  %v126 = vmul.f32 %v99, %v67
  %v127 = vperm.slane %v20, 0
  %v128 = vperm.slane %v88, 0
  %v129 = vperm.slane %v89, 0
  %v133 = vadd.f32 %v127, %v103
  %v134 = vadd.f32 %v127, %v104
  %v135 = vadd.f32 %v127, %v105
  %v136 = vadd.f32 %v127, %v106
  %v137 = vadd.f32 %v127, %v107
  %v138 = vadd.f32 %v127, %v108
  %v139 = vadd.f32 %v127, %v109
  %v140 = vadd.f32 %v127, %v110
  %v141 = vadd.f32 %v128, %v111
  %v142 = vadd.f32 %v128, %v112
  %v143 = vadd.f32 %v128, %v113
  %v144 = vadd.f32 %v128, %v114
  %v145 = vadd.f32 %v128, %v115
  %v146 = vadd.f32 %v128, %v116
  %v147 = vadd.f32 %v128, %v117
  %v148 = vadd.f32 %v128, %v118
  %v149 = vadd.f32 %v129, %v119
  %v150 = vadd.f32 %v129, %v120
  %v151 = vadd.f32 %v129, %v121
  %v152 = vadd.f32 %v129, %v122
  %v153 = vadd.f32 %v129, %v123
  %v154 = vadd.f32 %v129, %v124
  %v155 = vadd.f32 %v129, %v125
  %v156 = vadd.f32 %v129, %v126
  %v157 = vmax.f32 %v133, -1.0
  %v158 = vmax.f32 %v134, -1.0
  %v159 = vmax.f32 %v135, -1.0
  %v160 = vmax.f32 %v136, -1.0
  %v161 = vmax.f32 %v137, -1.0
  %v162 = vmax.f32 %v138, -1.0
  %v163 = vmax.f32 %v139, -1.0
  %v164 = vmax.f32 %v140, -1.0
  %v165 = vmax.f32 %v141, -1.0
  %v166 = vmax.f32 %v142, -1.0
  %v167 = vmax.f32 %v143, -1.0
  %v168 = vmax.f32 %v144, -1.0
  %v169 = vmax.f32 %v145, -1.0
  %v170 = vmax.f32 %v146, -1.0
  %v171 = vmax.f32 %v147, -1.0
  %v172 = vmax.f32 %v148, -1.0
  %v173 = vmax.f32 %v149, -1.0
  %v174 = vmax.f32 %v150, -1.0
  %v175 = vmax.f32 %v151, -1.0
  %v176 = vmax.f32 %v152, -1.0
  %v177 = vmax.f32 %v153, -1.0
  %v178 = vmax.f32 %v154, -1.0
  %v179 = vmax.f32 %v155, -1.0
  %v180 = vmax.f32 %v156, -1.0
  %v181 = vmin.f32 %v157, 1.0
  %v182 = vmin.f32 %v158, 1.0
  %v183 = vmin.f32 %v159, 1.0
  %v184 = vmin.f32 %v160, 1.0
  %v185 = vmin.f32 %v161, 1.0
  %v186 = vmin.f32 %v162, 1.0
  %v187 = vmin.f32 %v163, 1.0
  %v188 = vmin.f32 %v164, 1.0
  %v189 = vmin.f32 %v165, 1.0
  %v190 = vmin.f32 %v166, 1.0
  %v191 = vmin.f32 %v167, 1.0
  %v192 = vmin.f32 %v168, 1.0
  %v193 = vmin.f32 %v169, 1.0
  %v194 = vmin.f32 %v170, 1.0
  %v195 = vmin.f32 %v171, 1.0
  %v196 = vmin.f32 %v172, 1.0
  %v197 = vmin.f32 %v173, 1.0
  %v198 = vmin.f32 %v174, 1.0
  %v199 = vmin.f32 %v175, 1.0
  %v200 = vmin.f32 %v176, 1.0
  %v201 = vmin.f32 %v177, 1.0
  %v202 = vmin.f32 %v178, 1.0
  %v203 = vmin.f32 %v179, 1.0
  %v204 = vmin.f32 %v180, 1.0
  %v205 = vrot.slane %v197, 4
  %vm206 = vcmask 1047556
  %v207 = vsel %vm206, %v205, %v181
  %v208 = vrot.slane %v181, 4
  %v209 = vsel %vm206, %v197, %v208
  %v211 = vunpack.c.l.s4 1983009808
  %v212 = vunpack.c.0.s8 %v211
  %v213 = vperm.slane %v207, %v212
  %v215 = vunpack.c.l.s4 1983009808
  %v216 = vunpack.c.0.s8 %v215
  %v217 = vperm.slane %v209, %v216
  %v218 = vrot.slane %v189, 4
  %v219 = vsel %vm206, 0.0, %v218
  %v221 = vunpack.c.l.s4 1983009808
  %v222 = vunpack.c.0.s8 %v221
  %v223 = vperm.slane %v189, %v222
  %v225 = vunpack.c.l.s4 1983009808
  %v226 = vunpack.c.0.s8 %v225
  %v227 = vperm.slane %v219, %v226
  %v228 = vrot.slane %v223, 4
  %v229 = vsel %vm206, %v228, %v213
  %v230 = vrot.slane %v213, 4
  %v231 = vsel %vm206, %v223, %v230
  %v233 = vunpack.c.l.s4 1934713408
  %v234 = vunpack.c.0.s8 %v233
  %v235 = vperm.slane %v229, %v234
  %v237 = vunpack.c.l.s4 1934713408
  %v238 = vunpack.c.0.s8 %v237
  %v239 = vperm.slane %v231, %v238
  %v240 = vrot.slane %v227, 4
  %v241 = vsel %vm206, %v240, %v217
  %v242 = vrot.slane %v217, 4
  %v243 = vsel %vm206, %v227, %v242
  %v245 = vunpack.c.l.s4 1934713408
  %v246 = vunpack.c.0.s8 %v245
  %v247 = vperm.slane %v241, %v246
  %v249 = vunpack.c.l.s4 1934713408
  %v250 = vunpack.c.0.s8 %v249
  %v251 = vperm.slane %v243, %v250
  %v252 = vrot.slane %v235, 4
  %v253 = vsel %vm206, 0.0, %v252
  %v254 = vrot.slane %v239, 4
  %v255 = vsel %vm206, 0.0, %v254
  %v256 = vrot.slane %v247, 4
  %v257 = vsel %vm206, 0.0, %v256
  %v258 = vrot.slane %v251, 4
  %v259 = vsel %vm206, 0.0, %v258
  %v260 = vrot.slane %v198, 4
  %v261 = vsel %vm206, %v260, %v182
  %v262 = vrot.slane %v182, 4
  %v263 = vsel %vm206, %v198, %v262
  %v265 = vunpack.c.l.s4 1983009808
  %v266 = vunpack.c.0.s8 %v265
  %v267 = vperm.slane %v261, %v266
  %v269 = vunpack.c.l.s4 1983009808
  %v270 = vunpack.c.0.s8 %v269
  %v271 = vperm.slane %v263, %v270
  %v272 = vrot.slane %v190, 4
  %v273 = vsel %vm206, 0.0, %v272
  %v275 = vunpack.c.l.s4 1983009808
  %v276 = vunpack.c.0.s8 %v275
  %v277 = vperm.slane %v190, %v276
  %v279 = vunpack.c.l.s4 1983009808
  %v280 = vunpack.c.0.s8 %v279
  %v281 = vperm.slane %v273, %v280
  %v282 = vrot.slane %v277, 4
  %v283 = vsel %vm206, %v282, %v267
  %v284 = vrot.slane %v267, 4
  %v285 = vsel %vm206, %v277, %v284
  %v287 = vunpack.c.l.s4 1934713408
  %v288 = vunpack.c.0.s8 %v287
  %v289 = vperm.slane %v283, %v288
  %v291 = vunpack.c.l.s4 1934713408
  %v292 = vunpack.c.0.s8 %v291
  %v293 = vperm.slane %v285, %v292
  %v294 = vrot.slane %v281, 4
  %v295 = vsel %vm206, %v294, %v271
  %v296 = vrot.slane %v271, 4
  %v297 = vsel %vm206, %v281, %v296
  %v299 = vunpack.c.l.s4 1934713408
  %v300 = vunpack.c.0.s8 %v299
  %v301 = vperm.slane %v295, %v300
  %v303 = vunpack.c.l.s4 1934713408
  %v304 = vunpack.c.0.s8 %v303
  %v305 = vperm.slane %v297, %v304
  %v306 = vrot.slane %v289, 4
  %v307 = vsel %vm206, 0.0, %v306
  %v308 = vrot.slane %v293, 4
  %v309 = vsel %vm206, 0.0, %v308
  %v310 = vrot.slane %v301, 4
  %v311 = vsel %vm206, 0.0, %v310
  %v312 = vrot.slane %v305, 4
  %v313 = vsel %vm206, 0.0, %v312
  %v314 = vrot.slane %v199, 4
  %v315 = vsel %vm206, %v314, %v183
  %v316 = vrot.slane %v183, 4
  %v317 = vsel %vm206, %v199, %v316
  %v319 = vunpack.c.l.s4 1983009808
  %v320 = vunpack.c.0.s8 %v319
  %v321 = vperm.slane %v315, %v320
  %v323 = vunpack.c.l.s4 1983009808
  %v324 = vunpack.c.0.s8 %v323
  %v325 = vperm.slane %v317, %v324
  %v326 = vrot.slane %v191, 4
  %v327 = vsel %vm206, 0.0, %v326
  %v329 = vunpack.c.l.s4 1983009808
  %v330 = vunpack.c.0.s8 %v329
  %v331 = vperm.slane %v191, %v330
  %v333 = vunpack.c.l.s4 1983009808
  %v334 = vunpack.c.0.s8 %v333
  %v335 = vperm.slane %v327, %v334
  %v336 = vrot.slane %v331, 4
  %v337 = vsel %vm206, %v336, %v321
  %v338 = vrot.slane %v321, 4
  %v339 = vsel %vm206, %v331, %v338
  %v341 = vunpack.c.l.s4 1934713408
  %v342 = vunpack.c.0.s8 %v341
  %v343 = vperm.slane %v337, %v342
  %v345 = vunpack.c.l.s4 1934713408
  %v346 = vunpack.c.0.s8 %v345
  %v347 = vperm.slane %v339, %v346
  %v348 = vrot.slane %v335, 4
  %v349 = vsel %vm206, %v348, %v325
  %v350 = vrot.slane %v325, 4
  %v351 = vsel %vm206, %v335, %v350
  %v353 = vunpack.c.l.s4 1934713408
  %v354 = vunpack.c.0.s8 %v353
  %v355 = vperm.slane %v349, %v354
  %v357 = vunpack.c.l.s4 1934713408
  %v358 = vunpack.c.0.s8 %v357
  %v359 = vperm.slane %v351, %v358
  %v360 = vrot.slane %v343, 4
  %v361 = vsel %vm206, 0.0, %v360
  %v362 = vrot.slane %v347, 4
  %v363 = vsel %vm206, 0.0, %v362
  %v364 = vrot.slane %v355, 4
  %v365 = vsel %vm206, 0.0, %v364
  %v366 = vrot.slane %v359, 4
  %v367 = vsel %vm206, 0.0, %v366
  %v368 = vrot.slane %v200, 4
  %v369 = vsel %vm206, %v368, %v184
  %v370 = vrot.slane %v184, 4
  %v371 = vsel %vm206, %v200, %v370
  %v373 = vunpack.c.l.s4 1983009808
  %v374 = vunpack.c.0.s8 %v373
  %v375 = vperm.slane %v369, %v374
  %v377 = vunpack.c.l.s4 1983009808
  %v378 = vunpack.c.0.s8 %v377
  %v379 = vperm.slane %v371, %v378
  %v380 = vrot.slane %v192, 4
  %v381 = vsel %vm206, 0.0, %v380
  %v383 = vunpack.c.l.s4 1983009808
  %v384 = vunpack.c.0.s8 %v383
  %v385 = vperm.slane %v192, %v384
  %v387 = vunpack.c.l.s4 1983009808
  %v388 = vunpack.c.0.s8 %v387
  %v389 = vperm.slane %v381, %v388
  %v390 = vrot.slane %v385, 4
  %v391 = vsel %vm206, %v390, %v375
  %v392 = vrot.slane %v375, 4
  %v393 = vsel %vm206, %v385, %v392
  %v395 = vunpack.c.l.s4 1934713408
  %v396 = vunpack.c.0.s8 %v395
  %v397 = vperm.slane %v391, %v396
  %v399 = vunpack.c.l.s4 1934713408
  %v400 = vunpack.c.0.s8 %v399
  %v401 = vperm.slane %v393, %v400
  %v402 = vrot.slane %v389, 4
  %v403 = vsel %vm206, %v402, %v379
  %v404 = vrot.slane %v379, 4
  %v405 = vsel %vm206, %v389, %v404
  %v407 = vunpack.c.l.s4 1934713408
  %v408 = vunpack.c.0.s8 %v407
  %v409 = vperm.slane %v403, %v408
  %v411 = vunpack.c.l.s4 1934713408
  %v412 = vunpack.c.0.s8 %v411
  %v413 = vperm.slane %v405, %v412
  %v414 = vrot.slane %v397, 4
  %v415 = vsel %vm206, 0.0, %v414
  %v416 = vrot.slane %v401, 4
  %v417 = vsel %vm206, 0.0, %v416
  %v418 = vrot.slane %v409, 4
  %v419 = vsel %vm206, 0.0, %v418
  %v420 = vrot.slane %v413, 4
  %v421 = vsel %vm206, 0.0, %v420
  %v422 = vrot.slane %v201, 4
  %v423 = vsel %vm206, %v422, %v185
  %v424 = vrot.slane %v185, 4
  %v425 = vsel %vm206, %v201, %v424
  %v427 = vunpack.c.l.s4 1983009808
  %v428 = vunpack.c.0.s8 %v427
  %v429 = vperm.slane %v423, %v428
  %v431 = vunpack.c.l.s4 1983009808
  %v432 = vunpack.c.0.s8 %v431
  %v433 = vperm.slane %v425, %v432
  %v434 = vrot.slane %v193, 4
  %v435 = vsel %vm206, 0.0, %v434
  %v437 = vunpack.c.l.s4 1983009808
  %v438 = vunpack.c.0.s8 %v437
  %v439 = vperm.slane %v193, %v438
  %v441 = vunpack.c.l.s4 1983009808
  %v442 = vunpack.c.0.s8 %v441
  %v443 = vperm.slane %v435, %v442
  %v444 = vrot.slane %v439, 4
  %v445 = vsel %vm206, %v444, %v429
  %v446 = vrot.slane %v429, 4
  %v447 = vsel %vm206, %v439, %v446
  %v449 = vunpack.c.l.s4 1934713408
  %v450 = vunpack.c.0.s8 %v449
  %v451 = vperm.slane %v445, %v450
  %v453 = vunpack.c.l.s4 1934713408
  %v454 = vunpack.c.0.s8 %v453
  %v455 = vperm.slane %v447, %v454
  %v456 = vrot.slane %v443, 4
  %v457 = vsel %vm206, %v456, %v433
  %v458 = vrot.slane %v433, 4
  %v459 = vsel %vm206, %v443, %v458
  %v461 = vunpack.c.l.s4 1934713408
  %v462 = vunpack.c.0.s8 %v461
  %v463 = vperm.slane %v457, %v462
  %v465 = vunpack.c.l.s4 1934713408
  %v466 = vunpack.c.0.s8 %v465
  %v467 = vperm.slane %v459, %v466
  %v468 = vrot.slane %v451, 4
  %v469 = vsel %vm206, 0.0, %v468
  %v470 = vrot.slane %v455, 4
  %v471 = vsel %vm206, 0.0, %v470
  %v472 = vrot.slane %v463, 4
  %v473 = vsel %vm206, 0.0, %v472
  %v474 = vrot.slane %v467, 4
  %v475 = vsel %vm206, 0.0, %v474
  %v476 = vrot.slane %v202, 4
  %v477 = vsel %vm206, %v476, %v186
  %v478 = vrot.slane %v186, 4
  %v479 = vsel %vm206, %v202, %v478
  %v481 = vunpack.c.l.s4 1983009808
  %v482 = vunpack.c.0.s8 %v481
  %v483 = vperm.slane %v477, %v482
  %v485 = vunpack.c.l.s4 1983009808
  %v486 = vunpack.c.0.s8 %v485
  %v487 = vperm.slane %v479, %v486
  %v488 = vrot.slane %v194, 4
  %v489 = vsel %vm206, 0.0, %v488
  %v491 = vunpack.c.l.s4 1983009808
  %v492 = vunpack.c.0.s8 %v491
  %v493 = vperm.slane %v194, %v492
  %v495 = vunpack.c.l.s4 1983009808
  %v496 = vunpack.c.0.s8 %v495
  %v497 = vperm.slane %v489, %v496
  %v498 = vrot.slane %v493, 4
  %v499 = vsel %vm206, %v498, %v483
  %v500 = vrot.slane %v483, 4
  %v501 = vsel %vm206, %v493, %v500
  %v503 = vunpack.c.l.s4 1934713408
  %v504 = vunpack.c.0.s8 %v503
  %v505 = vperm.slane %v499, %v504
  %v507 = vunpack.c.l.s4 1934713408
  %v508 = vunpack.c.0.s8 %v507
  %v509 = vperm.slane %v501, %v508
  %v510 = vrot.slane %v497, 4
  %v511 = vsel %vm206, %v510, %v487
  %v512 = vrot.slane %v487, 4
  %v513 = vsel %vm206, %v497, %v512
  %v515 = vunpack.c.l.s4 1934713408
  %v516 = vunpack.c.0.s8 %v515
  %v517 = vperm.slane %v511, %v516
  %v519 = vunpack.c.l.s4 1934713408
  %v520 = vunpack.c.0.s8 %v519
  %v521 = vperm.slane %v513, %v520
  %v522 = vrot.slane %v505, 4
  %v523 = vsel %vm206, 0.0, %v522
  %v524 = vrot.slane %v509, 4
  %v525 = vsel %vm206, 0.0, %v524
  %v526 = vrot.slane %v517, 4
  %v527 = vsel %vm206, 0.0, %v526
  %v528 = vrot.slane %v521, 4
  %v529 = vsel %vm206, 0.0, %v528
  %v530 = vrot.slane %v203, 4
  %v531 = vsel %vm206, %v530, %v187
  %v532 = vrot.slane %v187, 4
  %v533 = vsel %vm206, %v203, %v532
  %v535 = vunpack.c.l.s4 1983009808
  %v536 = vunpack.c.0.s8 %v535
  %v537 = vperm.slane %v531, %v536
  %v539 = vunpack.c.l.s4 1983009808
  %v540 = vunpack.c.0.s8 %v539
  %v541 = vperm.slane %v533, %v540
  %v542 = vrot.slane %v195, 4
  %v543 = vsel %vm206, 0.0, %v542
  %v545 = vunpack.c.l.s4 1983009808
  %v546 = vunpack.c.0.s8 %v545
  %v547 = vperm.slane %v195, %v546
  %v549 = vunpack.c.l.s4 1983009808
  %v550 = vunpack.c.0.s8 %v549
  %v551 = vperm.slane %v543, %v550
  %v552 = vrot.slane %v547, 4
  %v553 = vsel %vm206, %v552, %v537
  %v554 = vrot.slane %v537, 4
  %v555 = vsel %vm206, %v547, %v554
  %v557 = vunpack.c.l.s4 1934713408
  %v558 = vunpack.c.0.s8 %v557
  %v559 = vperm.slane %v553, %v558
  %v561 = vunpack.c.l.s4 1934713408
  %v562 = vunpack.c.0.s8 %v561
  %v563 = vperm.slane %v555, %v562
  %v564 = vrot.slane %v551, 4
  %v565 = vsel %vm206, %v564, %v541
  %v566 = vrot.slane %v541, 4
  %v567 = vsel %vm206, %v551, %v566
  %v569 = vunpack.c.l.s4 1934713408
  %v570 = vunpack.c.0.s8 %v569
  %v571 = vperm.slane %v565, %v570
  %v573 = vunpack.c.l.s4 1934713408
  %v574 = vunpack.c.0.s8 %v573
  %v575 = vperm.slane %v567, %v574
  %v576 = vrot.slane %v559, 4
  %v577 = vsel %vm206, 0.0, %v576
  %v578 = vrot.slane %v563, 4
  %v579 = vsel %vm206, 0.0, %v578
  %v580 = vrot.slane %v571, 4
  %v581 = vsel %vm206, 0.0, %v580
  %v582 = vrot.slane %v575, 4
  %v583 = vsel %vm206, 0.0, %v582
  %v584 = vrot.slane %v204, 4
  %v585 = vsel %vm206, %v584, %v188
  %v586 = vrot.slane %v188, 4
  %v587 = vsel %vm206, %v204, %v586
  %v589 = vunpack.c.l.s4 1983009808
  %v590 = vunpack.c.0.s8 %v589
  %v591 = vperm.slane %v585, %v590
  %v593 = vunpack.c.l.s4 1983009808
  %v594 = vunpack.c.0.s8 %v593
  %v595 = vperm.slane %v587, %v594
  %v596 = vrot.slane %v196, 4
  %v597 = vsel %vm206, 0.0, %v596
  %v599 = vunpack.c.l.s4 1983009808
  %v600 = vunpack.c.0.s8 %v599
  %v601 = vperm.slane %v196, %v600
  %v603 = vunpack.c.l.s4 1983009808
  %v604 = vunpack.c.0.s8 %v603
  %v605 = vperm.slane %v597, %v604
  %v606 = vrot.slane %v601, 4
  %v607 = vsel %vm206, %v606, %v591
  %v608 = vrot.slane %v591, 4
  %v609 = vsel %vm206, %v601, %v608
  %v611 = vunpack.c.l.s4 1934713408
  %v612 = vunpack.c.0.s8 %v611
  %v613 = vperm.slane %v607, %v612
  %v615 = vunpack.c.l.s4 1934713408
  %v616 = vunpack.c.0.s8 %v615
  %v617 = vperm.slane %v609, %v616
  %v618 = vrot.slane %v605, 4
  %v619 = vsel %vm206, %v618, %v595
  %v620 = vrot.slane %v595, 4
  %v621 = vsel %vm206, %v605, %v620
  %v623 = vunpack.c.l.s4 1934713408
  %v624 = vunpack.c.0.s8 %v623
  %v625 = vperm.slane %v619, %v624
  %v627 = vunpack.c.l.s4 1934713408
  %v628 = vunpack.c.0.s8 %v627
  %v629 = vperm.slane %v621, %v628
  %v630 = vrot.slane %v613, 4
  %v631 = vsel %vm206, 0.0, %v630
  %v632 = vrot.slane %v617, 4
  %v633 = vsel %vm206, 0.0, %v632
  %v634 = vrot.slane %v625, 4
  %v635 = vsel %vm206, 0.0, %v634
  %v636 = vrot.slane %v629, 4
  %v637 = vsel %vm206, 0.0, %v636
  %vm638 = vcmask 1042432
  %v639 = vsel %vm638, %v235, 1.0
  %v640 = vsel %vm638, %v253, 1.0
  %v641 = vsel %vm638, %v239, 1.0
  %v642 = vsel %vm638, %v255, 1.0
  %v643 = vsel %vm638, %v247, 1.0
  %v644 = vsel %vm638, %v257, 1.0
  %v645 = vsel %vm638, %v251, 1.0
  %v646 = vsel %vm638, %v259, 1.0
  %v647 = vsel %vm638, %v289, 1.0
  %v648 = vsel %vm638, %v307, 1.0
  %v649 = vsel %vm638, %v293, 1.0
  %v650 = vsel %vm638, %v309, 1.0
  %v651 = vsel %vm638, %v301, 1.0
  %v652 = vsel %vm638, %v311, 1.0
  %v653 = vsel %vm638, %v305, 1.0
  %v654 = vsel %vm638, %v313, 1.0
  %v655 = vsel %vm638, %v343, 1.0
  %v656 = vsel %vm638, %v361, 1.0
  %v657 = vsel %vm638, %v347, 1.0
  %v658 = vsel %vm638, %v363, 1.0
  %v659 = vsel %vm638, %v355, 1.0
  %v660 = vsel %vm638, %v365, 1.0
  %v661 = vsel %vm638, %v359, 1.0
  %v662 = vsel %vm638, %v367, 1.0
  %v663 = vsel %vm638, %v397, 1.0
  %v664 = vsel %vm638, %v415, 1.0
  %v665 = vsel %vm638, %v401, 1.0
  %v666 = vsel %vm638, %v417, 1.0
  %v667 = vsel %vm638, %v409, 1.0
  %v668 = vsel %vm638, %v419, 1.0
  %v669 = vsel %vm638, %v413, 1.0
  %v670 = vsel %vm638, %v421, 1.0
  %v671 = vsel %vm638, %v451, 1.0
  %v672 = vsel %vm638, %v469, 1.0
  %v673 = vsel %vm638, %v455, 1.0
  %v674 = vsel %vm638, %v471, 1.0
  %v675 = vsel %vm638, %v463, 1.0
  %v676 = vsel %vm638, %v473, 1.0
  %v677 = vsel %vm638, %v467, 1.0
  %v678 = vsel %vm638, %v475, 1.0
  %v679 = vsel %vm638, %v505, 1.0
  %v680 = vsel %vm638, %v523, 1.0
  %v681 = vsel %vm638, %v509, 1.0
  %v682 = vsel %vm638, %v525, 1.0
  %v683 = vsel %vm638, %v517, 1.0
  %v684 = vsel %vm638, %v527, 1.0
  %v685 = vsel %vm638, %v521, 1.0
  %v686 = vsel %vm638, %v529, 1.0
  %v687 = vsel %vm638, %v559, 1.0
  %v688 = vsel %vm638, %v577, 1.0
  %v689 = vsel %vm638, %v563, 1.0
  %v690 = vsel %vm638, %v579, 1.0
  %v691 = vsel %vm638, %v571, 1.0
  %v692 = vsel %vm638, %v581, 1.0
  %v693 = vsel %vm638, %v575, 1.0
  %v694 = vsel %vm638, %v583, 1.0
  %v695 = vsel %vm638, %v613, 1.0
  %v696 = vsel %vm638, %v631, 1.0
  %v697 = vsel %vm638, %v617, 1.0
  %v698 = vsel %vm638, %v633, 1.0
  %v699 = vsel %vm638, %v625, 1.0
  %v700 = vsel %vm638, %v635, 1.0
  %v701 = vsel %vm638, %v629, 1.0
  %v702 = vsel %vm638, %v637, 1.0
  %v703 = vpack.c.bf16 %v639, %v639
  %v704 = vpack.c.bf16 %v640, %v640
  %v705 = vpack.c.bf16 %v641, %v641
  %v706 = vpack.c.bf16 %v642, %v642
  %v707 = vpack.c.bf16 %v643, %v643
  %v708 = vpack.c.bf16 %v644, %v644
  %v709 = vpack.c.bf16 %v645, %v645
  %v710 = vpack.c.bf16 %v646, %v646
  %v711 = vpack.c.bf16 %v647, %v647
  %v712 = vpack.c.bf16 %v648, %v648
  %v713 = vpack.c.bf16 %v649, %v649
  %v714 = vpack.c.bf16 %v650, %v650
  %v715 = vpack.c.bf16 %v651, %v651
  %v716 = vpack.c.bf16 %v652, %v652
  %v717 = vpack.c.bf16 %v653, %v653
  %v718 = vpack.c.bf16 %v654, %v654
  %v719 = vpack.c.bf16 %v655, %v655
  %v720 = vpack.c.bf16 %v656, %v656
  %v721 = vpack.c.bf16 %v657, %v657
  %v722 = vpack.c.bf16 %v658, %v658
  %v723 = vpack.c.bf16 %v659, %v659
  %v724 = vpack.c.bf16 %v660, %v660
  %v725 = vpack.c.bf16 %v661, %v661
  %v726 = vpack.c.bf16 %v662, %v662
  %v727 = vpack.c.bf16 %v663, %v663
  %v728 = vpack.c.bf16 %v664, %v664
  %v729 = vpack.c.bf16 %v665, %v665
  %v730 = vpack.c.bf16 %v666, %v666
  %v731 = vpack.c.bf16 %v667, %v667
  %v732 = vpack.c.bf16 %v668, %v668
  %v733 = vpack.c.bf16 %v669, %v669
  %v734 = vpack.c.bf16 %v670, %v670
  %v735 = vpack.c.bf16 %v671, %v671
  %v736 = vpack.c.bf16 %v672, %v672
  %v737 = vpack.c.bf16 %v673, %v673
  %v738 = vpack.c.bf16 %v674, %v674
  %v739 = vpack.c.bf16 %v675, %v675
  %v740 = vpack.c.bf16 %v676, %v676
  %v741 = vpack.c.bf16 %v677, %v677
  %v742 = vpack.c.bf16 %v678, %v678
  %v743 = vpack.c.bf16 %v679, %v679
  %v744 = vpack.c.bf16 %v680, %v680
  %v745 = vpack.c.bf16 %v681, %v681
  %v746 = vpack.c.bf16 %v682, %v682
  %v747 = vpack.c.bf16 %v683, %v683
  %v748 = vpack.c.bf16 %v684, %v684
  %v749 = vpack.c.bf16 %v685, %v685
  %v750 = vpack.c.bf16 %v686, %v686
  %v751 = vpack.c.bf16 %v687, %v687
  %v752 = vpack.c.bf16 %v688, %v688
  %v753 = vpack.c.bf16 %v689, %v689
  %v754 = vpack.c.bf16 %v690, %v690
  %v755 = vpack.c.bf16 %v691, %v691
  %v756 = vpack.c.bf16 %v692, %v692
  %v757 = vpack.c.bf16 %v693, %v693
  %v758 = vpack.c.bf16 %v694, %v694
  %v759 = vpack.c.bf16 %v695, %v695
  %v760 = vpack.c.bf16 %v696, %v696
  %v761 = vpack.c.bf16 %v697, %v697
  %v762 = vpack.c.bf16 %v698, %v698
  %v763 = vpack.c.bf16 %v699, %v699
  %v764 = vpack.c.bf16 %v700, %v700
  %v765 = vpack.c.bf16 %v701, %v701
  %v766 = vpack.c.bf16 %v702, %v702
  %v767 = vld [vmem:[%s1] sm:$0xf]
  %v768 = vld [vmem:[%s1 + $0x4] sm:$0xf]
  %v769 = vld [vmem:[%s1 + $0x8] sm:$0xf]
  %v770 = vld [vmem:[%s1 + $0xc] sm:$0xf]
  %v771 = vld [vmem:[%s1 + $0x10] sm:$0x1]
  %v777 = vunpack.c.l.b16 %v767
  %v778 = vunpack.c.l.b16 %v768
  %v779 = vunpack.c.l.b16 %v769
  %v780 = vunpack.c.l.b16 %v770
  %v781 = vunpack.c.l.b16 %v771
  %v782 = vpack.c.b16 %v778, %v777
  %v783 = vpack.c.b16 %v780, %v779
  %v784 = vpack.c.b16 %v781, %v781
  %vm785 = vcmask 31744
  %v787 = vsel %vm785, %v782, 0
  %v790 = vsel %vm785, %v783, 0
  %v793 = vsel %vm785, %v784, 0
  %vm795 = vcmask 1041408
  %v797 = vsel %vm795, %v703, 0
  %v800 = vsel %vm795, %v704, 0
  %v803 = vsel %vm795, %v705, 0
  %v806 = vsel %vm795, %v706, 0
  %v809 = vsel %vm795, %v707, 0
  %v812 = vsel %vm795, %v708, 0
  %v815 = vsel %vm795, %v709, 0
  %v818 = vsel %vm795, %v710, 0
  %v821 = vsel %vm795, %v711, 0
  %v824 = vsel %vm795, %v712, 0
  %v827 = vsel %vm795, %v713, 0
  %v830 = vsel %vm795, %v714, 0
  %v833 = vsel %vm795, %v715, 0
  %v836 = vsel %vm795, %v716, 0
  %v839 = vsel %vm795, %v717, 0
  %v842 = vsel %vm795, %v718, 0
  %v845 = vsel %vm795, %v719, 0
  %v848 = vsel %vm795, %v720, 0
  %v851 = vsel %vm795, %v721, 0
  %v854 = vsel %vm795, %v722, 0
  %v857 = vsel %vm795, %v723, 0
  %v860 = vsel %vm795, %v724, 0
  %v863 = vsel %vm795, %v725, 0
  %v866 = vsel %vm795, %v726, 0
  %v869 = vsel %vm795, %v727, 0
  %v872 = vsel %vm795, %v728, 0
  %v875 = vsel %vm795, %v729, 0
  %v878 = vsel %vm795, %v730, 0
  %v881 = vsel %vm795, %v731, 0
  %v884 = vsel %vm795, %v732, 0
  %v887 = vsel %vm795, %v733, 0
  %v890 = vsel %vm795, %v734, 0
  %v893 = vsel %vm795, %v735, 0
  %v896 = vsel %vm795, %v736, 0
  %v899 = vsel %vm795, %v737, 0
  %v902 = vsel %vm795, %v738, 0
  %v905 = vsel %vm795, %v739, 0
  %v908 = vsel %vm795, %v740, 0
  %v911 = vsel %vm795, %v741, 0
  %v914 = vsel %vm795, %v742, 0
  %v917 = vsel %vm795, %v743, 0
  %v920 = vsel %vm795, %v744, 0
  %v923 = vsel %vm795, %v745, 0
  %v926 = vsel %vm795, %v746, 0
  %v929 = vsel %vm795, %v747, 0
  %v932 = vsel %vm795, %v748, 0
  %v935 = vsel %vm795, %v749, 0
  %v938 = vsel %vm795, %v750, 0
  %v941 = vsel %vm795, %v751, 0
  %v944 = vsel %vm795, %v752, 0
  %v947 = vsel %vm795, %v753, 0
  %v950 = vsel %vm795, %v754, 0
  %v953 = vsel %vm795, %v755, 0
  %v956 = vsel %vm795, %v756, 0
  %v959 = vsel %vm795, %v757, 0
  %v962 = vsel %vm795, %v758, 0
  %v965 = vsel %vm795, %v759, 0
  %v968 = vsel %vm795, %v760, 0
  %v971 = vsel %vm795, %v761, 0
  %v974 = vsel %vm795, %v762, 0
  %v977 = vsel %vm795, %v763, 0
  %v980 = vsel %vm795, %v764, 0
  %v983 = vsel %vm795, %v765, 0
  %v986 = vsel %vm795, %v766, 0
  %988 = vmatpush.bf16.msra.mxu0 0
  %989 = vmatpush.bf16.msra.mxu0 0
  %990 = vmatpush.bf16.msra.mxu0 0
  %991 = vmatpush.bf16.msra.mxu0 0
  %992 = vmatpush.bf16.msra.mxu0 0
  %993 = vmatpush.bf16.msra.mxu0 0
  %994 = vmatpush.bf16.msra.mxu0 0
  %995 = vmatpush.bf16.msra.mxu0 %v797
  %996 = vmatmul.bf16.gmra.mxu0 %v787
  %v997 = vpop.f32.mrf.mxu0
  %v998 = vadd.f32 0.0, %v997
  %v999 = vpop.f32.mrf.mxu0
  %v1000 = vadd.f32 0.0, %v999
  %1001 = vmatmul.bf16.gmra.mxu0 %v790
  %v1002 = vpop.f32.mrf.mxu0
  %v1003 = vadd.f32 0.0, %v1002
  %v1004 = vpop.f32.mrf.mxu0
  %v1005 = vadd.f32 0.0, %v1004
  %1006 = vmatmul.bf16.gmra.mxu0 %v793
  %v1007 = vpop.f32.mrf.mxu0
  %v1008 = vadd.f32 0.0, %v1007
  %v1009 = vpop.f32.mrf.mxu0
  %1010 = vdwg.mxu0
  %1011 = vmatpush.bf16.msra.mxu0 0
  %1012 = vmatpush.bf16.msra.mxu0 0
  %1013 = vmatpush.bf16.msra.mxu0 0
  %1014 = vmatpush.bf16.msra.mxu0 0
  %1015 = vmatpush.bf16.msra.mxu0 0
  %1016 = vmatpush.bf16.msra.mxu0 0
  %1017 = vmatpush.bf16.msra.mxu0 0
  %1018 = vmatpush.bf16.msra.mxu0 %v800
  %1019 = vmatmul.bf16.gmra.mxu0 %v787
  %v1020 = vpop.f32.mrf.mxu0
  %v1021 = vadd.f32 0.0, %v1020
  %v1022 = vpop.f32.mrf.mxu0
  %v1023 = vadd.f32 0.0, %v1022
  %1024 = vmatmul.bf16.gmra.mxu0 %v790
  %v1025 = vpop.f32.mrf.mxu0
  %v1026 = vadd.f32 0.0, %v1025
  %v1027 = vpop.f32.mrf.mxu0
  %v1028 = vadd.f32 0.0, %v1027
  %1029 = vmatmul.bf16.gmra.mxu0 %v793
  %v1030 = vpop.f32.mrf.mxu0
  %v1031 = vadd.f32 0.0, %v1030
  %v1032 = vpop.f32.mrf.mxu0
  %1033 = vdwg.mxu0
  %1034 = vmatpush.bf16.msra.mxu0 0
  %1035 = vmatpush.bf16.msra.mxu0 0
  %1036 = vmatpush.bf16.msra.mxu0 0
  %1037 = vmatpush.bf16.msra.mxu0 0
  %1038 = vmatpush.bf16.msra.mxu0 0
  %1039 = vmatpush.bf16.msra.mxu0 0
  %1040 = vmatpush.bf16.msra.mxu0 0
  %1041 = vmatpush.bf16.msra.mxu0 %v803
  %1042 = vmatmul.bf16.gmra.mxu0 %v787
  %v1043 = vpop.f32.mrf.mxu0
  %v1044 = vadd.f32 0.0, %v1043
  %v1045 = vpop.f32.mrf.mxu0
  %v1046 = vadd.f32 0.0, %v1045
  %1047 = vmatmul.bf16.gmra.mxu0 %v790
  %v1048 = vpop.f32.mrf.mxu0
  %v1049 = vadd.f32 0.0, %v1048
  %v1050 = vpop.f32.mrf.mxu0
  %v1051 = vadd.f32 0.0, %v1050
  %1052 = vmatmul.bf16.gmra.mxu0 %v793
  %v1053 = vpop.f32.mrf.mxu0
  %v1054 = vadd.f32 0.0, %v1053
  %v1055 = vpop.f32.mrf.mxu0
  %1056 = vdwg.mxu0
  %1057 = vmatpush.bf16.msra.mxu0 0
  %1058 = vmatpush.bf16.msra.mxu0 0
  %1059 = vmatpush.bf16.msra.mxu0 0
  %1060 = vmatpush.bf16.msra.mxu0 0
  %1061 = vmatpush.bf16.msra.mxu0 0
  %1062 = vmatpush.bf16.msra.mxu0 0
  %1063 = vmatpush.bf16.msra.mxu0 0
  %1064 = vmatpush.bf16.msra.mxu0 %v806
  %1065 = vmatmul.bf16.gmra.mxu0 %v787
  %v1066 = vpop.f32.mrf.mxu0
  %v1067 = vadd.f32 0.0, %v1066
  %v1068 = vpop.f32.mrf.mxu0
  %v1069 = vadd.f32 0.0, %v1068
  %1070 = vmatmul.bf16.gmra.mxu0 %v790
  %v1071 = vpop.f32.mrf.mxu0
  %v1072 = vadd.f32 0.0, %v1071
  %v1073 = vpop.f32.mrf.mxu0
  %v1074 = vadd.f32 0.0, %v1073
  %1075 = vmatmul.bf16.gmra.mxu0 %v793
  %v1076 = vpop.f32.mrf.mxu0
  %v1077 = vadd.f32 0.0, %v1076
  %v1078 = vpop.f32.mrf.mxu0
  %1079 = vdwg.mxu0
  %1080 = vmatpush.bf16.msra.mxu0 0
  %1081 = vmatpush.bf16.msra.mxu0 0
  %1082 = vmatpush.bf16.msra.mxu0 0
  %1083 = vmatpush.bf16.msra.mxu0 0
  %1084 = vmatpush.bf16.msra.mxu0 0
  %1085 = vmatpush.bf16.msra.mxu0 0
  %1086 = vmatpush.bf16.msra.mxu0 0
  %1087 = vmatpush.bf16.msra.mxu0 %v809
  %1088 = vmatmul.bf16.gmra.mxu0 %v787
  %v1089 = vpop.f32.mrf.mxu0
  %v1090 = vadd.f32 0.0, %v1089
  %v1091 = vpop.f32.mrf.mxu0
  %v1092 = vadd.f32 0.0, %v1091
  %1093 = vmatmul.bf16.gmra.mxu0 %v790
  %v1094 = vpop.f32.mrf.mxu0
  %v1095 = vadd.f32 0.0, %v1094
  %v1096 = vpop.f32.mrf.mxu0
  %v1097 = vadd.f32 0.0, %v1096
  %1098 = vmatmul.bf16.gmra.mxu0 %v793
  %v1099 = vpop.f32.mrf.mxu0
  %v1100 = vadd.f32 0.0, %v1099
  %v1101 = vpop.f32.mrf.mxu0
  %1102 = vdwg.mxu0
  %1103 = vmatpush.bf16.msra.mxu0 0
  %1104 = vmatpush.bf16.msra.mxu0 0
  %1105 = vmatpush.bf16.msra.mxu0 0
  %1106 = vmatpush.bf16.msra.mxu0 0
  %1107 = vmatpush.bf16.msra.mxu0 0
  %1108 = vmatpush.bf16.msra.mxu0 0
  %1109 = vmatpush.bf16.msra.mxu0 0
  %1110 = vmatpush.bf16.msra.mxu0 %v812
  %1111 = vmatmul.bf16.gmra.mxu0 %v787
  %v1112 = vpop.f32.mrf.mxu0
  %v1113 = vadd.f32 0.0, %v1112
  %v1114 = vpop.f32.mrf.mxu0
  %v1115 = vadd.f32 0.0, %v1114
  %1116 = vmatmul.bf16.gmra.mxu0 %v790
  %v1117 = vpop.f32.mrf.mxu0
  %v1118 = vadd.f32 0.0, %v1117
  %v1119 = vpop.f32.mrf.mxu0
  %v1120 = vadd.f32 0.0, %v1119
  %1121 = vmatmul.bf16.gmra.mxu0 %v793
  %v1122 = vpop.f32.mrf.mxu0
  %v1123 = vadd.f32 0.0, %v1122
  %v1124 = vpop.f32.mrf.mxu0
  %1125 = vdwg.mxu0
  %1126 = vmatpush.bf16.msra.mxu0 0
  %1127 = vmatpush.bf16.msra.mxu0 0
  %1128 = vmatpush.bf16.msra.mxu0 0
  %1129 = vmatpush.bf16.msra.mxu0 0
  %1130 = vmatpush.bf16.msra.mxu0 0
  %1131 = vmatpush.bf16.msra.mxu0 0
  %1132 = vmatpush.bf16.msra.mxu0 0
  %1133 = vmatpush.bf16.msra.mxu0 %v815
  %1134 = vmatmul.bf16.gmra.mxu0 %v787
  %v1135 = vpop.f32.mrf.mxu0
  %v1136 = vadd.f32 0.0, %v1135
  %v1137 = vpop.f32.mrf.mxu0
  %v1138 = vadd.f32 0.0, %v1137
  %1139 = vmatmul.bf16.gmra.mxu0 %v790
  %v1140 = vpop.f32.mrf.mxu0
  %v1141 = vadd.f32 0.0, %v1140
  %v1142 = vpop.f32.mrf.mxu0
  %v1143 = vadd.f32 0.0, %v1142
  %1144 = vmatmul.bf16.gmra.mxu0 %v793
  %v1145 = vpop.f32.mrf.mxu0
  %v1146 = vadd.f32 0.0, %v1145
  %v1147 = vpop.f32.mrf.mxu0
  %1148 = vdwg.mxu0
  %1149 = vmatpush.bf16.msra.mxu0 0
  %1150 = vmatpush.bf16.msra.mxu0 0
  %1151 = vmatpush.bf16.msra.mxu0 0
  %1152 = vmatpush.bf16.msra.mxu0 0
  %1153 = vmatpush.bf16.msra.mxu0 0
  %1154 = vmatpush.bf16.msra.mxu0 0
  %1155 = vmatpush.bf16.msra.mxu0 0
  %1156 = vmatpush.bf16.msra.mxu0 %v818
  %1157 = vmatmul.bf16.gmra.mxu0 %v787
  %v1158 = vpop.f32.mrf.mxu0
  %v1159 = vadd.f32 0.0, %v1158
  %v1160 = vpop.f32.mrf.mxu0
  %v1161 = vadd.f32 0.0, %v1160
  %1162 = vmatmul.bf16.gmra.mxu0 %v790
  %v1163 = vpop.f32.mrf.mxu0
  %v1164 = vadd.f32 0.0, %v1163
  %v1165 = vpop.f32.mrf.mxu0
  %v1166 = vadd.f32 0.0, %v1165
  %1167 = vmatmul.bf16.gmra.mxu0 %v793
  %v1168 = vpop.f32.mrf.mxu0
  %v1169 = vadd.f32 0.0, %v1168
  %v1170 = vpop.f32.mrf.mxu0
  %1171 = vdwg.mxu0
  %1172 = vmatpush.bf16.msra.mxu0 0
  %1173 = vmatpush.bf16.msra.mxu0 0
  %1174 = vmatpush.bf16.msra.mxu0 0
  %1175 = vmatpush.bf16.msra.mxu0 0
  %1176 = vmatpush.bf16.msra.mxu0 0
  %1177 = vmatpush.bf16.msra.mxu0 0
  %1178 = vmatpush.bf16.msra.mxu0 0
  %1179 = vmatpush.bf16.msra.mxu0 %v821
  %1180 = vmatmul.bf16.gmra.mxu0 %v787
  %v1181 = vpop.f32.mrf.mxu0
  %v1182 = vadd.f32 0.0, %v1181
  %v1183 = vpop.f32.mrf.mxu0
  %v1184 = vadd.f32 0.0, %v1183
  %1185 = vmatmul.bf16.gmra.mxu0 %v790
  %v1186 = vpop.f32.mrf.mxu0
  %v1187 = vadd.f32 0.0, %v1186
  %v1188 = vpop.f32.mrf.mxu0
  %v1189 = vadd.f32 0.0, %v1188
  %1190 = vmatmul.bf16.gmra.mxu0 %v793
  %v1191 = vpop.f32.mrf.mxu0
  %v1192 = vadd.f32 0.0, %v1191
  %v1193 = vpop.f32.mrf.mxu0
  %1194 = vdwg.mxu0
  %1195 = vmatpush.bf16.msra.mxu0 0
  %1196 = vmatpush.bf16.msra.mxu0 0
  %1197 = vmatpush.bf16.msra.mxu0 0
  %1198 = vmatpush.bf16.msra.mxu0 0
  %1199 = vmatpush.bf16.msra.mxu0 0
  %1200 = vmatpush.bf16.msra.mxu0 0
  %1201 = vmatpush.bf16.msra.mxu0 0
  %1202 = vmatpush.bf16.msra.mxu0 %v824
  %1203 = vmatmul.bf16.gmra.mxu0 %v787
  %v1204 = vpop.f32.mrf.mxu0
  %v1205 = vadd.f32 0.0, %v1204
  %v1206 = vpop.f32.mrf.mxu0
  %v1207 = vadd.f32 0.0, %v1206
  %1208 = vmatmul.bf16.gmra.mxu0 %v790
  %v1209 = vpop.f32.mrf.mxu0
  %v1210 = vadd.f32 0.0, %v1209
  %v1211 = vpop.f32.mrf.mxu0
  %v1212 = vadd.f32 0.0, %v1211
  %1213 = vmatmul.bf16.gmra.mxu0 %v793
  %v1214 = vpop.f32.mrf.mxu0
  %v1215 = vadd.f32 0.0, %v1214
  %v1216 = vpop.f32.mrf.mxu0
  %1217 = vdwg.mxu0
  %1218 = vmatpush.bf16.msra.mxu0 0
  %1219 = vmatpush.bf16.msra.mxu0 0
  %1220 = vmatpush.bf16.msra.mxu0 0
  %1221 = vmatpush.bf16.msra.mxu0 0
  %1222 = vmatpush.bf16.msra.mxu0 0
  %1223 = vmatpush.bf16.msra.mxu0 0
  %1224 = vmatpush.bf16.msra.mxu0 0
  %1225 = vmatpush.bf16.msra.mxu0 %v827
  %1226 = vmatmul.bf16.gmra.mxu0 %v787
  %v1227 = vpop.f32.mrf.mxu0
  %v1228 = vadd.f32 0.0, %v1227
  %v1229 = vpop.f32.mrf.mxu0
  %v1230 = vadd.f32 0.0, %v1229
  %1231 = vmatmul.bf16.gmra.mxu0 %v790
  %v1232 = vpop.f32.mrf.mxu0
  %v1233 = vadd.f32 0.0, %v1232
  %v1234 = vpop.f32.mrf.mxu0
  %v1235 = vadd.f32 0.0, %v1234
  %1236 = vmatmul.bf16.gmra.mxu0 %v793
  %v1237 = vpop.f32.mrf.mxu0
  %v1238 = vadd.f32 0.0, %v1237
  %v1239 = vpop.f32.mrf.mxu0
  %1240 = vdwg.mxu0
  %1241 = vmatpush.bf16.msra.mxu0 0
  %1242 = vmatpush.bf16.msra.mxu0 0
  %1243 = vmatpush.bf16.msra.mxu0 0
  %1244 = vmatpush.bf16.msra.mxu0 0
  %1245 = vmatpush.bf16.msra.mxu0 0
  %1246 = vmatpush.bf16.msra.mxu0 0
  %1247 = vmatpush.bf16.msra.mxu0 0
  %1248 = vmatpush.bf16.msra.mxu0 %v830
  %1249 = vmatmul.bf16.gmra.mxu0 %v787
  %v1250 = vpop.f32.mrf.mxu0
  %v1251 = vadd.f32 0.0, %v1250
  %v1252 = vpop.f32.mrf.mxu0
  %v1253 = vadd.f32 0.0, %v1252
  %1254 = vmatmul.bf16.gmra.mxu0 %v790
  %v1255 = vpop.f32.mrf.mxu0
  %v1256 = vadd.f32 0.0, %v1255
  %v1257 = vpop.f32.mrf.mxu0
  %v1258 = vadd.f32 0.0, %v1257
  %1259 = vmatmul.bf16.gmra.mxu0 %v793
  %v1260 = vpop.f32.mrf.mxu0
  %v1261 = vadd.f32 0.0, %v1260
  %v1262 = vpop.f32.mrf.mxu0
  %1263 = vdwg.mxu0
  %1264 = vmatpush.bf16.msra.mxu0 0
  %1265 = vmatpush.bf16.msra.mxu0 0
  %1266 = vmatpush.bf16.msra.mxu0 0
  %1267 = vmatpush.bf16.msra.mxu0 0
  %1268 = vmatpush.bf16.msra.mxu0 0
  %1269 = vmatpush.bf16.msra.mxu0 0
  %1270 = vmatpush.bf16.msra.mxu0 0
  %1271 = vmatpush.bf16.msra.mxu0 %v833
  %1272 = vmatmul.bf16.gmra.mxu0 %v787
  %v1273 = vpop.f32.mrf.mxu0
  %v1274 = vadd.f32 0.0, %v1273
  %v1275 = vpop.f32.mrf.mxu0
  %v1276 = vadd.f32 0.0, %v1275
  %1277 = vmatmul.bf16.gmra.mxu0 %v790
  %v1278 = vpop.f32.mrf.mxu0
  %v1279 = vadd.f32 0.0, %v1278
  %v1280 = vpop.f32.mrf.mxu0
  %v1281 = vadd.f32 0.0, %v1280
  %1282 = vmatmul.bf16.gmra.mxu0 %v793
  %v1283 = vpop.f32.mrf.mxu0
  %v1284 = vadd.f32 0.0, %v1283
  %v1285 = vpop.f32.mrf.mxu0
  %1286 = vdwg.mxu0
  %1287 = vmatpush.bf16.msra.mxu0 0
  %1288 = vmatpush.bf16.msra.mxu0 0
  %1289 = vmatpush.bf16.msra.mxu0 0
  %1290 = vmatpush.bf16.msra.mxu0 0
  %1291 = vmatpush.bf16.msra.mxu0 0
  %1292 = vmatpush.bf16.msra.mxu0 0
  %1293 = vmatpush.bf16.msra.mxu0 0
  %1294 = vmatpush.bf16.msra.mxu0 %v836
  %1295 = vmatmul.bf16.gmra.mxu0 %v787
  %v1296 = vpop.f32.mrf.mxu0
  %v1297 = vadd.f32 0.0, %v1296
  %v1298 = vpop.f32.mrf.mxu0
  %v1299 = vadd.f32 0.0, %v1298
  %1300 = vmatmul.bf16.gmra.mxu0 %v790
  %v1301 = vpop.f32.mrf.mxu0
  %v1302 = vadd.f32 0.0, %v1301
  %v1303 = vpop.f32.mrf.mxu0
  %v1304 = vadd.f32 0.0, %v1303
  %1305 = vmatmul.bf16.gmra.mxu0 %v793
  %v1306 = vpop.f32.mrf.mxu0
  %v1307 = vadd.f32 0.0, %v1306
  %v1308 = vpop.f32.mrf.mxu0
  %1309 = vdwg.mxu0
  %1310 = vmatpush.bf16.msra.mxu0 0
  %1311 = vmatpush.bf16.msra.mxu0 0
  %1312 = vmatpush.bf16.msra.mxu0 0
  %1313 = vmatpush.bf16.msra.mxu0 0
  %1314 = vmatpush.bf16.msra.mxu0 0
  %1315 = vmatpush.bf16.msra.mxu0 0
  %1316 = vmatpush.bf16.msra.mxu0 0
  %1317 = vmatpush.bf16.msra.mxu0 %v839
  %1318 = vmatmul.bf16.gmra.mxu0 %v787
  %v1319 = vpop.f32.mrf.mxu0
  %v1320 = vadd.f32 0.0, %v1319
  %v1321 = vpop.f32.mrf.mxu0
  %v1322 = vadd.f32 0.0, %v1321
  %1323 = vmatmul.bf16.gmra.mxu0 %v790
  %v1324 = vpop.f32.mrf.mxu0
  %v1325 = vadd.f32 0.0, %v1324
  %v1326 = vpop.f32.mrf.mxu0
  %v1327 = vadd.f32 0.0, %v1326
  %1328 = vmatmul.bf16.gmra.mxu0 %v793
  %v1329 = vpop.f32.mrf.mxu0
  %v1330 = vadd.f32 0.0, %v1329
  %v1331 = vpop.f32.mrf.mxu0
  %1332 = vdwg.mxu0
  %1333 = vmatpush.bf16.msra.mxu0 0
  %1334 = vmatpush.bf16.msra.mxu0 0
  %1335 = vmatpush.bf16.msra.mxu0 0
  %1336 = vmatpush.bf16.msra.mxu0 0
  %1337 = vmatpush.bf16.msra.mxu0 0
  %1338 = vmatpush.bf16.msra.mxu0 0
  %1339 = vmatpush.bf16.msra.mxu0 0
  %1340 = vmatpush.bf16.msra.mxu0 %v842
  %1341 = vmatmul.bf16.gmra.mxu0 %v787
  %v1342 = vpop.f32.mrf.mxu0
  %v1343 = vadd.f32 0.0, %v1342
  %v1344 = vpop.f32.mrf.mxu0
  %v1345 = vadd.f32 0.0, %v1344
  %1346 = vmatmul.bf16.gmra.mxu0 %v790
  %v1347 = vpop.f32.mrf.mxu0
  %v1348 = vadd.f32 0.0, %v1347
  %v1349 = vpop.f32.mrf.mxu0
  %v1350 = vadd.f32 0.0, %v1349
  %1351 = vmatmul.bf16.gmra.mxu0 %v793
  %v1352 = vpop.f32.mrf.mxu0
  %v1353 = vadd.f32 0.0, %v1352
  %v1354 = vpop.f32.mrf.mxu0
  %1355 = vdwg.mxu0
  %1356 = vmatpush.bf16.msra.mxu0 0
  %1357 = vmatpush.bf16.msra.mxu0 0
  %1358 = vmatpush.bf16.msra.mxu0 0
  %1359 = vmatpush.bf16.msra.mxu0 0
  %1360 = vmatpush.bf16.msra.mxu0 0
  %1361 = vmatpush.bf16.msra.mxu0 0
  %1362 = vmatpush.bf16.msra.mxu0 0
  %1363 = vmatpush.bf16.msra.mxu0 %v845
  %1364 = vmatmul.bf16.gmra.mxu0 %v787
  %v1365 = vpop.f32.mrf.mxu0
  %v1366 = vadd.f32 0.0, %v1365
  %v1367 = vpop.f32.mrf.mxu0
  %v1368 = vadd.f32 0.0, %v1367
  %1369 = vmatmul.bf16.gmra.mxu0 %v790
  %v1370 = vpop.f32.mrf.mxu0
  %v1371 = vadd.f32 0.0, %v1370
  %v1372 = vpop.f32.mrf.mxu0
  %v1373 = vadd.f32 0.0, %v1372
  %1374 = vmatmul.bf16.gmra.mxu0 %v793
  %v1375 = vpop.f32.mrf.mxu0
  %v1376 = vadd.f32 0.0, %v1375
  %v1377 = vpop.f32.mrf.mxu0
  %1378 = vdwg.mxu0
  %1379 = vmatpush.bf16.msra.mxu0 0
  %1380 = vmatpush.bf16.msra.mxu0 0
  %1381 = vmatpush.bf16.msra.mxu0 0
  %1382 = vmatpush.bf16.msra.mxu0 0
  %1383 = vmatpush.bf16.msra.mxu0 0
  %1384 = vmatpush.bf16.msra.mxu0 0
  %1385 = vmatpush.bf16.msra.mxu0 0
  %1386 = vmatpush.bf16.msra.mxu0 %v848
  %1387 = vmatmul.bf16.gmra.mxu0 %v787
  %v1388 = vpop.f32.mrf.mxu0
  %v1389 = vadd.f32 0.0, %v1388
  %v1390 = vpop.f32.mrf.mxu0
  %v1391 = vadd.f32 0.0, %v1390
  %1392 = vmatmul.bf16.gmra.mxu0 %v790
  %v1393 = vpop.f32.mrf.mxu0
  %v1394 = vadd.f32 0.0, %v1393
  %v1395 = vpop.f32.mrf.mxu0
  %v1396 = vadd.f32 0.0, %v1395
  %1397 = vmatmul.bf16.gmra.mxu0 %v793
  %v1398 = vpop.f32.mrf.mxu0
  %v1399 = vadd.f32 0.0, %v1398
  %v1400 = vpop.f32.mrf.mxu0
  %1401 = vdwg.mxu0
  %1402 = vmatpush.bf16.msra.mxu0 0
  %1403 = vmatpush.bf16.msra.mxu0 0
  %1404 = vmatpush.bf16.msra.mxu0 0
  %1405 = vmatpush.bf16.msra.mxu0 0
  %1406 = vmatpush.bf16.msra.mxu0 0
  %1407 = vmatpush.bf16.msra.mxu0 0
  %1408 = vmatpush.bf16.msra.mxu0 0
  %1409 = vmatpush.bf16.msra.mxu0 %v851
  %1410 = vmatmul.bf16.gmra.mxu0 %v787
  %v1411 = vpop.f32.mrf.mxu0
  %v1412 = vadd.f32 0.0, %v1411
  %v1413 = vpop.f32.mrf.mxu0
  %v1414 = vadd.f32 0.0, %v1413
  %1415 = vmatmul.bf16.gmra.mxu0 %v790
  %v1416 = vpop.f32.mrf.mxu0
  %v1417 = vadd.f32 0.0, %v1416
  %v1418 = vpop.f32.mrf.mxu0
  %v1419 = vadd.f32 0.0, %v1418
  %1420 = vmatmul.bf16.gmra.mxu0 %v793
  %v1421 = vpop.f32.mrf.mxu0
  %v1422 = vadd.f32 0.0, %v1421
  %v1423 = vpop.f32.mrf.mxu0
  %1424 = vdwg.mxu0
  %1425 = vmatpush.bf16.msra.mxu0 0
  %1426 = vmatpush.bf16.msra.mxu0 0
  %1427 = vmatpush.bf16.msra.mxu0 0
  %1428 = vmatpush.bf16.msra.mxu0 0
  %1429 = vmatpush.bf16.msra.mxu0 0
  %1430 = vmatpush.bf16.msra.mxu0 0
  %1431 = vmatpush.bf16.msra.mxu0 0
  %1432 = vmatpush.bf16.msra.mxu0 %v854
  %1433 = vmatmul.bf16.gmra.mxu0 %v787
  %v1434 = vpop.f32.mrf.mxu0
  %v1435 = vadd.f32 0.0, %v1434
  %v1436 = vpop.f32.mrf.mxu0
  %v1437 = vadd.f32 0.0, %v1436
  %1438 = vmatmul.bf16.gmra.mxu0 %v790
  %v1439 = vpop.f32.mrf.mxu0
  %v1440 = vadd.f32 0.0, %v1439
  %v1441 = vpop.f32.mrf.mxu0
  %v1442 = vadd.f32 0.0, %v1441
  %1443 = vmatmul.bf16.gmra.mxu0 %v793
  %v1444 = vpop.f32.mrf.mxu0
  %v1445 = vadd.f32 0.0, %v1444
  %v1446 = vpop.f32.mrf.mxu0
  %1447 = vdwg.mxu0
  %1448 = vmatpush.bf16.msra.mxu0 0
  %1449 = vmatpush.bf16.msra.mxu0 0
  %1450 = vmatpush.bf16.msra.mxu0 0
  %1451 = vmatpush.bf16.msra.mxu0 0
  %1452 = vmatpush.bf16.msra.mxu0 0
  %1453 = vmatpush.bf16.msra.mxu0 0
  %1454 = vmatpush.bf16.msra.mxu0 0
  %1455 = vmatpush.bf16.msra.mxu0 %v857
  %1456 = vmatmul.bf16.gmra.mxu0 %v787
  %v1457 = vpop.f32.mrf.mxu0
  %v1458 = vadd.f32 0.0, %v1457
  %v1459 = vpop.f32.mrf.mxu0
  %v1460 = vadd.f32 0.0, %v1459
  %1461 = vmatmul.bf16.gmra.mxu0 %v790
  %v1462 = vpop.f32.mrf.mxu0
  %v1463 = vadd.f32 0.0, %v1462
  %v1464 = vpop.f32.mrf.mxu0
  %v1465 = vadd.f32 0.0, %v1464
  %1466 = vmatmul.bf16.gmra.mxu0 %v793
  %v1467 = vpop.f32.mrf.mxu0
  %v1468 = vadd.f32 0.0, %v1467
  %v1469 = vpop.f32.mrf.mxu0
  %1470 = vdwg.mxu0
  %1471 = vmatpush.bf16.msra.mxu0 0
  %1472 = vmatpush.bf16.msra.mxu0 0
  %1473 = vmatpush.bf16.msra.mxu0 0
  %1474 = vmatpush.bf16.msra.mxu0 0
  %1475 = vmatpush.bf16.msra.mxu0 0
  %1476 = vmatpush.bf16.msra.mxu0 0
  %1477 = vmatpush.bf16.msra.mxu0 0
  %1478 = vmatpush.bf16.msra.mxu0 %v860
  %1479 = vmatmul.bf16.gmra.mxu0 %v787
  %v1480 = vpop.f32.mrf.mxu0
  %v1481 = vadd.f32 0.0, %v1480
  %v1482 = vpop.f32.mrf.mxu0
  %v1483 = vadd.f32 0.0, %v1482
  %1484 = vmatmul.bf16.gmra.mxu0 %v790
  %v1485 = vpop.f32.mrf.mxu0
  %v1486 = vadd.f32 0.0, %v1485
  %v1487 = vpop.f32.mrf.mxu0
  %v1488 = vadd.f32 0.0, %v1487
  %1489 = vmatmul.bf16.gmra.mxu0 %v793
  %v1490 = vpop.f32.mrf.mxu0
  %v1491 = vadd.f32 0.0, %v1490
  %v1492 = vpop.f32.mrf.mxu0
  %1493 = vdwg.mxu0
  %1494 = vmatpush.bf16.msra.mxu0 0
  %1495 = vmatpush.bf16.msra.mxu0 0
  %1496 = vmatpush.bf16.msra.mxu0 0
  %1497 = vmatpush.bf16.msra.mxu0 0
  %1498 = vmatpush.bf16.msra.mxu0 0
  %1499 = vmatpush.bf16.msra.mxu0 0
  %1500 = vmatpush.bf16.msra.mxu0 0
  %1501 = vmatpush.bf16.msra.mxu0 %v863
  %1502 = vmatmul.bf16.gmra.mxu0 %v787
  %v1503 = vpop.f32.mrf.mxu0
  %v1504 = vadd.f32 0.0, %v1503
  %v1505 = vpop.f32.mrf.mxu0
  %v1506 = vadd.f32 0.0, %v1505
  %1507 = vmatmul.bf16.gmra.mxu0 %v790
  %v1508 = vpop.f32.mrf.mxu0
  %v1509 = vadd.f32 0.0, %v1508
  %v1510 = vpop.f32.mrf.mxu0
  %v1511 = vadd.f32 0.0, %v1510
  %1512 = vmatmul.bf16.gmra.mxu0 %v793
  %v1513 = vpop.f32.mrf.mxu0
  %v1514 = vadd.f32 0.0, %v1513
  %v1515 = vpop.f32.mrf.mxu0
  %1516 = vdwg.mxu0
  %1517 = vmatpush.bf16.msra.mxu0 0
  %1518 = vmatpush.bf16.msra.mxu0 0
  %1519 = vmatpush.bf16.msra.mxu0 0
  %1520 = vmatpush.bf16.msra.mxu0 0
  %1521 = vmatpush.bf16.msra.mxu0 0
  %1522 = vmatpush.bf16.msra.mxu0 0
  %1523 = vmatpush.bf16.msra.mxu0 0
  %1524 = vmatpush.bf16.msra.mxu0 %v866
  %1525 = vmatmul.bf16.gmra.mxu0 %v787
  %v1526 = vpop.f32.mrf.mxu0
  %v1527 = vadd.f32 0.0, %v1526
  %v1528 = vpop.f32.mrf.mxu0
  %v1529 = vadd.f32 0.0, %v1528
  %1530 = vmatmul.bf16.gmra.mxu0 %v790
  %v1531 = vpop.f32.mrf.mxu0
  %v1532 = vadd.f32 0.0, %v1531
  %v1533 = vpop.f32.mrf.mxu0
  %v1534 = vadd.f32 0.0, %v1533
  %1535 = vmatmul.bf16.gmra.mxu0 %v793
  %v1536 = vpop.f32.mrf.mxu0
  %v1537 = vadd.f32 0.0, %v1536
  %v1538 = vpop.f32.mrf.mxu0
  %1539 = vdwg.mxu0
  %1540 = vmatpush.bf16.msra.mxu0 0
  %1541 = vmatpush.bf16.msra.mxu0 0
  %1542 = vmatpush.bf16.msra.mxu0 0
  %1543 = vmatpush.bf16.msra.mxu0 0
  %1544 = vmatpush.bf16.msra.mxu0 0
  %1545 = vmatpush.bf16.msra.mxu0 0
  %1546 = vmatpush.bf16.msra.mxu0 0
  %1547 = vmatpush.bf16.msra.mxu0 %v869
  %1548 = vmatmul.bf16.gmra.mxu0 %v787
  %v1549 = vpop.f32.mrf.mxu0
  %v1550 = vadd.f32 0.0, %v1549
  %v1551 = vpop.f32.mrf.mxu0
  %v1552 = vadd.f32 0.0, %v1551
  %1553 = vmatmul.bf16.gmra.mxu0 %v790
  %v1554 = vpop.f32.mrf.mxu0
  %v1555 = vadd.f32 0.0, %v1554
  %v1556 = vpop.f32.mrf.mxu0
  %v1557 = vadd.f32 0.0, %v1556
  %1558 = vmatmul.bf16.gmra.mxu0 %v793
  %v1559 = vpop.f32.mrf.mxu0
  %v1560 = vadd.f32 0.0, %v1559
  %v1561 = vpop.f32.mrf.mxu0
  %1562 = vdwg.mxu0
  %1563 = vmatpush.bf16.msra.mxu0 0
  %1564 = vmatpush.bf16.msra.mxu0 0
  %1565 = vmatpush.bf16.msra.mxu0 0
  %1566 = vmatpush.bf16.msra.mxu0 0
  %1567 = vmatpush.bf16.msra.mxu0 0
  %1568 = vmatpush.bf16.msra.mxu0 0
  %1569 = vmatpush.bf16.msra.mxu0 0
  %1570 = vmatpush.bf16.msra.mxu0 %v872
  %1571 = vmatmul.bf16.gmra.mxu0 %v787
  %v1572 = vpop.f32.mrf.mxu0
  %v1573 = vadd.f32 0.0, %v1572
  %v1574 = vpop.f32.mrf.mxu0
  %v1575 = vadd.f32 0.0, %v1574
  %1576 = vmatmul.bf16.gmra.mxu0 %v790
  %v1577 = vpop.f32.mrf.mxu0
  %v1578 = vadd.f32 0.0, %v1577
  %v1579 = vpop.f32.mrf.mxu0
  %v1580 = vadd.f32 0.0, %v1579
  %1581 = vmatmul.bf16.gmra.mxu0 %v793
  %v1582 = vpop.f32.mrf.mxu0
  %v1583 = vadd.f32 0.0, %v1582
  %v1584 = vpop.f32.mrf.mxu0
  %1585 = vdwg.mxu0
  %1586 = vmatpush.bf16.msra.mxu0 0
  %1587 = vmatpush.bf16.msra.mxu0 0
  %1588 = vmatpush.bf16.msra.mxu0 0
  %1589 = vmatpush.bf16.msra.mxu0 0
  %1590 = vmatpush.bf16.msra.mxu0 0
  %1591 = vmatpush.bf16.msra.mxu0 0
  %1592 = vmatpush.bf16.msra.mxu0 0
  %1593 = vmatpush.bf16.msra.mxu0 %v875
  %1594 = vmatmul.bf16.gmra.mxu0 %v787
  %v1595 = vpop.f32.mrf.mxu0
  %v1596 = vadd.f32 0.0, %v1595
  %v1597 = vpop.f32.mrf.mxu0
  %v1598 = vadd.f32 0.0, %v1597
  %1599 = vmatmul.bf16.gmra.mxu0 %v790
  %v1600 = vpop.f32.mrf.mxu0
  %v1601 = vadd.f32 0.0, %v1600
  %v1602 = vpop.f32.mrf.mxu0
  %v1603 = vadd.f32 0.0, %v1602
  %1604 = vmatmul.bf16.gmra.mxu0 %v793
  %v1605 = vpop.f32.mrf.mxu0
  %v1606 = vadd.f32 0.0, %v1605
  %v1607 = vpop.f32.mrf.mxu0
  %1608 = vdwg.mxu0
  %1609 = vmatpush.bf16.msra.mxu0 0
  %1610 = vmatpush.bf16.msra.mxu0 0
  %1611 = vmatpush.bf16.msra.mxu0 0
  %1612 = vmatpush.bf16.msra.mxu0 0
  %1613 = vmatpush.bf16.msra.mxu0 0
  %1614 = vmatpush.bf16.msra.mxu0 0
  %1615 = vmatpush.bf16.msra.mxu0 0
  %1616 = vmatpush.bf16.msra.mxu0 %v878
  %1617 = vmatmul.bf16.gmra.mxu0 %v787
  %v1618 = vpop.f32.mrf.mxu0
  %v1619 = vadd.f32 0.0, %v1618
  %v1620 = vpop.f32.mrf.mxu0
  %v1621 = vadd.f32 0.0, %v1620
  %1622 = vmatmul.bf16.gmra.mxu0 %v790
  %v1623 = vpop.f32.mrf.mxu0
  %v1624 = vadd.f32 0.0, %v1623
  %v1625 = vpop.f32.mrf.mxu0
  %v1626 = vadd.f32 0.0, %v1625
  %1627 = vmatmul.bf16.gmra.mxu0 %v793
  %v1628 = vpop.f32.mrf.mxu0
  %v1629 = vadd.f32 0.0, %v1628
  %v1630 = vpop.f32.mrf.mxu0
  %1631 = vdwg.mxu0
  %1632 = vmatpush.bf16.msra.mxu0 0
  %1633 = vmatpush.bf16.msra.mxu0 0
  %1634 = vmatpush.bf16.msra.mxu0 0
  %1635 = vmatpush.bf16.msra.mxu0 0
  %1636 = vmatpush.bf16.msra.mxu0 0
  %1637 = vmatpush.bf16.msra.mxu0 0
  %1638 = vmatpush.bf16.msra.mxu0 0
  %1639 = vmatpush.bf16.msra.mxu0 %v881
  %1640 = vmatmul.bf16.gmra.mxu0 %v787
  %v1641 = vpop.f32.mrf.mxu0
  %v1642 = vadd.f32 0.0, %v1641
  %v1643 = vpop.f32.mrf.mxu0
  %v1644 = vadd.f32 0.0, %v1643
  %1645 = vmatmul.bf16.gmra.mxu0 %v790
  %v1646 = vpop.f32.mrf.mxu0
  %v1647 = vadd.f32 0.0, %v1646
  %v1648 = vpop.f32.mrf.mxu0
  %v1649 = vadd.f32 0.0, %v1648
  %1650 = vmatmul.bf16.gmra.mxu0 %v793
  %v1651 = vpop.f32.mrf.mxu0
  %v1652 = vadd.f32 0.0, %v1651
  %v1653 = vpop.f32.mrf.mxu0
  %1654 = vdwg.mxu0
  %1655 = vmatpush.bf16.msra.mxu0 0
  %1656 = vmatpush.bf16.msra.mxu0 0
  %1657 = vmatpush.bf16.msra.mxu0 0
  %1658 = vmatpush.bf16.msra.mxu0 0
  %1659 = vmatpush.bf16.msra.mxu0 0
  %1660 = vmatpush.bf16.msra.mxu0 0
  %1661 = vmatpush.bf16.msra.mxu0 0
  %1662 = vmatpush.bf16.msra.mxu0 %v884
  %1663 = vmatmul.bf16.gmra.mxu0 %v787
  %v1664 = vpop.f32.mrf.mxu0
  %v1665 = vadd.f32 0.0, %v1664
  %v1666 = vpop.f32.mrf.mxu0
  %v1667 = vadd.f32 0.0, %v1666
  %1668 = vmatmul.bf16.gmra.mxu0 %v790
  %v1669 = vpop.f32.mrf.mxu0
  %v1670 = vadd.f32 0.0, %v1669
  %v1671 = vpop.f32.mrf.mxu0
  %v1672 = vadd.f32 0.0, %v1671
  %1673 = vmatmul.bf16.gmra.mxu0 %v793
  %v1674 = vpop.f32.mrf.mxu0
  %v1675 = vadd.f32 0.0, %v1674
  %v1676 = vpop.f32.mrf.mxu0
  %1677 = vdwg.mxu0
  %1678 = vmatpush.bf16.msra.mxu0 0
  %1679 = vmatpush.bf16.msra.mxu0 0
  %1680 = vmatpush.bf16.msra.mxu0 0
  %1681 = vmatpush.bf16.msra.mxu0 0
  %1682 = vmatpush.bf16.msra.mxu0 0
  %1683 = vmatpush.bf16.msra.mxu0 0
  %1684 = vmatpush.bf16.msra.mxu0 0
  %1685 = vmatpush.bf16.msra.mxu0 %v887
  %1686 = vmatmul.bf16.gmra.mxu0 %v787
  %v1687 = vpop.f32.mrf.mxu0
  %v1688 = vadd.f32 0.0, %v1687
  %v1689 = vpop.f32.mrf.mxu0
  %v1690 = vadd.f32 0.0, %v1689
  %1691 = vmatmul.bf16.gmra.mxu0 %v790
  %v1692 = vpop.f32.mrf.mxu0
  %v1693 = vadd.f32 0.0, %v1692
  %v1694 = vpop.f32.mrf.mxu0
  %v1695 = vadd.f32 0.0, %v1694
  %1696 = vmatmul.bf16.gmra.mxu0 %v793
  %v1697 = vpop.f32.mrf.mxu0
  %v1698 = vadd.f32 0.0, %v1697
  %v1699 = vpop.f32.mrf.mxu0
  %1700 = vdwg.mxu0
  %1701 = vmatpush.bf16.msra.mxu0 0
  %1702 = vmatpush.bf16.msra.mxu0 0
  %1703 = vmatpush.bf16.msra.mxu0 0
  %1704 = vmatpush.bf16.msra.mxu0 0
  %1705 = vmatpush.bf16.msra.mxu0 0
  %1706 = vmatpush.bf16.msra.mxu0 0
  %1707 = vmatpush.bf16.msra.mxu0 0
  %1708 = vmatpush.bf16.msra.mxu0 %v890
  %1709 = vmatmul.bf16.gmra.mxu0 %v787
  %v1710 = vpop.f32.mrf.mxu0
  %v1711 = vadd.f32 0.0, %v1710
  %v1712 = vpop.f32.mrf.mxu0
  %v1713 = vadd.f32 0.0, %v1712
  %1714 = vmatmul.bf16.gmra.mxu0 %v790
  %v1715 = vpop.f32.mrf.mxu0
  %v1716 = vadd.f32 0.0, %v1715
  %v1717 = vpop.f32.mrf.mxu0
  %v1718 = vadd.f32 0.0, %v1717
  %1719 = vmatmul.bf16.gmra.mxu0 %v793
  %v1720 = vpop.f32.mrf.mxu0
  %v1721 = vadd.f32 0.0, %v1720
  %v1722 = vpop.f32.mrf.mxu0
  %1723 = vdwg.mxu0
  %1724 = vmatpush.bf16.msra.mxu0 0
  %1725 = vmatpush.bf16.msra.mxu0 0
  %1726 = vmatpush.bf16.msra.mxu0 0
  %1727 = vmatpush.bf16.msra.mxu0 0
  %1728 = vmatpush.bf16.msra.mxu0 0
  %1729 = vmatpush.bf16.msra.mxu0 0
  %1730 = vmatpush.bf16.msra.mxu0 0
  %1731 = vmatpush.bf16.msra.mxu0 %v893
  %1732 = vmatmul.bf16.gmra.mxu0 %v787
  %v1733 = vpop.f32.mrf.mxu0
  %v1734 = vadd.f32 0.0, %v1733
  %v1735 = vpop.f32.mrf.mxu0
  %v1736 = vadd.f32 0.0, %v1735
  %1737 = vmatmul.bf16.gmra.mxu0 %v790
  %v1738 = vpop.f32.mrf.mxu0
  %v1739 = vadd.f32 0.0, %v1738
  %v1740 = vpop.f32.mrf.mxu0
  %v1741 = vadd.f32 0.0, %v1740
  %1742 = vmatmul.bf16.gmra.mxu0 %v793
  %v1743 = vpop.f32.mrf.mxu0
  %v1744 = vadd.f32 0.0, %v1743
  %v1745 = vpop.f32.mrf.mxu0
  %1746 = vdwg.mxu0
  %1747 = vmatpush.bf16.msra.mxu0 0
  %1748 = vmatpush.bf16.msra.mxu0 0
  %1749 = vmatpush.bf16.msra.mxu0 0
  %1750 = vmatpush.bf16.msra.mxu0 0
  %1751 = vmatpush.bf16.msra.mxu0 0
  %1752 = vmatpush.bf16.msra.mxu0 0
  %1753 = vmatpush.bf16.msra.mxu0 0
  %1754 = vmatpush.bf16.msra.mxu0 %v896
  %1755 = vmatmul.bf16.gmra.mxu0 %v787
  %v1756 = vpop.f32.mrf.mxu0
  %v1757 = vadd.f32 0.0, %v1756
  %v1758 = vpop.f32.mrf.mxu0
  %v1759 = vadd.f32 0.0, %v1758
  %1760 = vmatmul.bf16.gmra.mxu0 %v790
  %v1761 = vpop.f32.mrf.mxu0
  %v1762 = vadd.f32 0.0, %v1761
  %v1763 = vpop.f32.mrf.mxu0
  %v1764 = vadd.f32 0.0, %v1763
  %1765 = vmatmul.bf16.gmra.mxu0 %v793
  %v1766 = vpop.f32.mrf.mxu0
  %v1767 = vadd.f32 0.0, %v1766
  %v1768 = vpop.f32.mrf.mxu0
  %1769 = vdwg.mxu0
  %1770 = vmatpush.bf16.msra.mxu0 0
  %1771 = vmatpush.bf16.msra.mxu0 0
  %1772 = vmatpush.bf16.msra.mxu0 0
  %1773 = vmatpush.bf16.msra.mxu0 0
  %1774 = vmatpush.bf16.msra.mxu0 0
  %1775 = vmatpush.bf16.msra.mxu0 0
  %1776 = vmatpush.bf16.msra.mxu0 0
  %1777 = vmatpush.bf16.msra.mxu0 %v899
  %1778 = vmatmul.bf16.gmra.mxu0 %v787
  %v1779 = vpop.f32.mrf.mxu0
  %v1780 = vadd.f32 0.0, %v1779
  %v1781 = vpop.f32.mrf.mxu0
  %v1782 = vadd.f32 0.0, %v1781
  %1783 = vmatmul.bf16.gmra.mxu0 %v790
  %v1784 = vpop.f32.mrf.mxu0
  %v1785 = vadd.f32 0.0, %v1784
  %v1786 = vpop.f32.mrf.mxu0
  %v1787 = vadd.f32 0.0, %v1786
  %1788 = vmatmul.bf16.gmra.mxu0 %v793
  %v1789 = vpop.f32.mrf.mxu0
  %v1790 = vadd.f32 0.0, %v1789
  %v1791 = vpop.f32.mrf.mxu0
  %1792 = vdwg.mxu0
  %1793 = vmatpush.bf16.msra.mxu0 0
  %1794 = vmatpush.bf16.msra.mxu0 0
  %1795 = vmatpush.bf16.msra.mxu0 0
  %1796 = vmatpush.bf16.msra.mxu0 0
  %1797 = vmatpush.bf16.msra.mxu0 0
  %1798 = vmatpush.bf16.msra.mxu0 0
  %1799 = vmatpush.bf16.msra.mxu0 0
  %1800 = vmatpush.bf16.msra.mxu0 %v902
  %1801 = vmatmul.bf16.gmra.mxu0 %v787
  %v1802 = vpop.f32.mrf.mxu0
  %v1803 = vadd.f32 0.0, %v1802
  %v1804 = vpop.f32.mrf.mxu0
  %v1805 = vadd.f32 0.0, %v1804
  %1806 = vmatmul.bf16.gmra.mxu0 %v790
  %v1807 = vpop.f32.mrf.mxu0
  %v1808 = vadd.f32 0.0, %v1807
  %v1809 = vpop.f32.mrf.mxu0
  %v1810 = vadd.f32 0.0, %v1809
  %1811 = vmatmul.bf16.gmra.mxu0 %v793
  %v1812 = vpop.f32.mrf.mxu0
  %v1813 = vadd.f32 0.0, %v1812
  %v1814 = vpop.f32.mrf.mxu0
  %1815 = vdwg.mxu0
  %1816 = vmatpush.bf16.msra.mxu0 0
  %1817 = vmatpush.bf16.msra.mxu0 0
  %1818 = vmatpush.bf16.msra.mxu0 0
  %1819 = vmatpush.bf16.msra.mxu0 0
  %1820 = vmatpush.bf16.msra.mxu0 0
  %1821 = vmatpush.bf16.msra.mxu0 0
  %1822 = vmatpush.bf16.msra.mxu0 0
  %1823 = vmatpush.bf16.msra.mxu0 %v905
  %1824 = vmatmul.bf16.gmra.mxu0 %v787
  %v1825 = vpop.f32.mrf.mxu0
  %v1826 = vadd.f32 0.0, %v1825
  %v1827 = vpop.f32.mrf.mxu0
  %v1828 = vadd.f32 0.0, %v1827
  %1829 = vmatmul.bf16.gmra.mxu0 %v790
  %v1830 = vpop.f32.mrf.mxu0
  %v1831 = vadd.f32 0.0, %v1830
  %v1832 = vpop.f32.mrf.mxu0
  %v1833 = vadd.f32 0.0, %v1832
  %1834 = vmatmul.bf16.gmra.mxu0 %v793
  %v1835 = vpop.f32.mrf.mxu0
  %v1836 = vadd.f32 0.0, %v1835
  %v1837 = vpop.f32.mrf.mxu0
  %1838 = vdwg.mxu0
  %1839 = vmatpush.bf16.msra.mxu0 0
  %1840 = vmatpush.bf16.msra.mxu0 0
  %1841 = vmatpush.bf16.msra.mxu0 0
  %1842 = vmatpush.bf16.msra.mxu0 0
  %1843 = vmatpush.bf16.msra.mxu0 0
  %1844 = vmatpush.bf16.msra.mxu0 0
  %1845 = vmatpush.bf16.msra.mxu0 0
  %1846 = vmatpush.bf16.msra.mxu0 %v908
  %1847 = vmatmul.bf16.gmra.mxu0 %v787
  %v1848 = vpop.f32.mrf.mxu0
  %v1849 = vadd.f32 0.0, %v1848
  %v1850 = vpop.f32.mrf.mxu0
  %v1851 = vadd.f32 0.0, %v1850
  %1852 = vmatmul.bf16.gmra.mxu0 %v790
  %v1853 = vpop.f32.mrf.mxu0
  %v1854 = vadd.f32 0.0, %v1853
  %v1855 = vpop.f32.mrf.mxu0
  %v1856 = vadd.f32 0.0, %v1855
  %1857 = vmatmul.bf16.gmra.mxu0 %v793
  %v1858 = vpop.f32.mrf.mxu0
  %v1859 = vadd.f32 0.0, %v1858
  %v1860 = vpop.f32.mrf.mxu0
  %1861 = vdwg.mxu0
  %1862 = vmatpush.bf16.msra.mxu0 0
  %1863 = vmatpush.bf16.msra.mxu0 0
  %1864 = vmatpush.bf16.msra.mxu0 0
  %1865 = vmatpush.bf16.msra.mxu0 0
  %1866 = vmatpush.bf16.msra.mxu0 0
  %1867 = vmatpush.bf16.msra.mxu0 0
  %1868 = vmatpush.bf16.msra.mxu0 0
  %1869 = vmatpush.bf16.msra.mxu0 %v911
  %1870 = vmatmul.bf16.gmra.mxu0 %v787
  %v1871 = vpop.f32.mrf.mxu0
  %v1872 = vadd.f32 0.0, %v1871
  %v1873 = vpop.f32.mrf.mxu0
  %v1874 = vadd.f32 0.0, %v1873
  %1875 = vmatmul.bf16.gmra.mxu0 %v790
  %v1876 = vpop.f32.mrf.mxu0
  %v1877 = vadd.f32 0.0, %v1876
  %v1878 = vpop.f32.mrf.mxu0
  %v1879 = vadd.f32 0.0, %v1878
  %1880 = vmatmul.bf16.gmra.mxu0 %v793
  %v1881 = vpop.f32.mrf.mxu0
  %v1882 = vadd.f32 0.0, %v1881
  %v1883 = vpop.f32.mrf.mxu0
  %1884 = vdwg.mxu0
  %1885 = vmatpush.bf16.msra.mxu0 0
  %1886 = vmatpush.bf16.msra.mxu0 0
  %1887 = vmatpush.bf16.msra.mxu0 0
  %1888 = vmatpush.bf16.msra.mxu0 0
  %1889 = vmatpush.bf16.msra.mxu0 0
  %1890 = vmatpush.bf16.msra.mxu0 0
  %1891 = vmatpush.bf16.msra.mxu0 0
  %1892 = vmatpush.bf16.msra.mxu0 %v914
  %1893 = vmatmul.bf16.gmra.mxu0 %v787
  %v1894 = vpop.f32.mrf.mxu0
  %v1895 = vadd.f32 0.0, %v1894
  %v1896 = vpop.f32.mrf.mxu0
  %v1897 = vadd.f32 0.0, %v1896
  %1898 = vmatmul.bf16.gmra.mxu0 %v790
  %v1899 = vpop.f32.mrf.mxu0
  %v1900 = vadd.f32 0.0, %v1899
  %v1901 = vpop.f32.mrf.mxu0
  %v1902 = vadd.f32 0.0, %v1901
  %1903 = vmatmul.bf16.gmra.mxu0 %v793
  %v1904 = vpop.f32.mrf.mxu0
  %v1905 = vadd.f32 0.0, %v1904
  %v1906 = vpop.f32.mrf.mxu0
  %1907 = vdwg.mxu0
  %1908 = vmatpush.bf16.msra.mxu0 0
  %1909 = vmatpush.bf16.msra.mxu0 0
  %1910 = vmatpush.bf16.msra.mxu0 0
  %1911 = vmatpush.bf16.msra.mxu0 0
  %1912 = vmatpush.bf16.msra.mxu0 0
  %1913 = vmatpush.bf16.msra.mxu0 0
  %1914 = vmatpush.bf16.msra.mxu0 0
  %1915 = vmatpush.bf16.msra.mxu0 %v917
  %1916 = vmatmul.bf16.gmra.mxu0 %v787
  %v1917 = vpop.f32.mrf.mxu0
  %v1918 = vadd.f32 0.0, %v1917
  %v1919 = vpop.f32.mrf.mxu0
  %v1920 = vadd.f32 0.0, %v1919
  %1921 = vmatmul.bf16.gmra.mxu0 %v790
  %v1922 = vpop.f32.mrf.mxu0
  %v1923 = vadd.f32 0.0, %v1922
  %v1924 = vpop.f32.mrf.mxu0
  %v1925 = vadd.f32 0.0, %v1924
  %1926 = vmatmul.bf16.gmra.mxu0 %v793
  %v1927 = vpop.f32.mrf.mxu0
  %v1928 = vadd.f32 0.0, %v1927
  %v1929 = vpop.f32.mrf.mxu0
  %1930 = vdwg.mxu0
  %1931 = vmatpush.bf16.msra.mxu0 0
  %1932 = vmatpush.bf16.msra.mxu0 0
  %1933 = vmatpush.bf16.msra.mxu0 0
  %1934 = vmatpush.bf16.msra.mxu0 0
  %1935 = vmatpush.bf16.msra.mxu0 0
  %1936 = vmatpush.bf16.msra.mxu0 0
  %1937 = vmatpush.bf16.msra.mxu0 0
  %1938 = vmatpush.bf16.msra.mxu0 %v920
  %1939 = vmatmul.bf16.gmra.mxu0 %v787
  %v1940 = vpop.f32.mrf.mxu0
  %v1941 = vadd.f32 0.0, %v1940
  %v1942 = vpop.f32.mrf.mxu0
  %v1943 = vadd.f32 0.0, %v1942
  %1944 = vmatmul.bf16.gmra.mxu0 %v790
  %v1945 = vpop.f32.mrf.mxu0
  %v1946 = vadd.f32 0.0, %v1945
  %v1947 = vpop.f32.mrf.mxu0
  %v1948 = vadd.f32 0.0, %v1947
  %1949 = vmatmul.bf16.gmra.mxu0 %v793
  %v1950 = vpop.f32.mrf.mxu0
  %v1951 = vadd.f32 0.0, %v1950
  %v1952 = vpop.f32.mrf.mxu0
  %1953 = vdwg.mxu0
  %1954 = vmatpush.bf16.msra.mxu0 0
  %1955 = vmatpush.bf16.msra.mxu0 0
  %1956 = vmatpush.bf16.msra.mxu0 0
  %1957 = vmatpush.bf16.msra.mxu0 0
  %1958 = vmatpush.bf16.msra.mxu0 0
  %1959 = vmatpush.bf16.msra.mxu0 0
  %1960 = vmatpush.bf16.msra.mxu0 0
  %1961 = vmatpush.bf16.msra.mxu0 %v923
  %1962 = vmatmul.bf16.gmra.mxu0 %v787
  %v1963 = vpop.f32.mrf.mxu0
  %v1964 = vadd.f32 0.0, %v1963
  %v1965 = vpop.f32.mrf.mxu0
  %v1966 = vadd.f32 0.0, %v1965
  %1967 = vmatmul.bf16.gmra.mxu0 %v790
  %v1968 = vpop.f32.mrf.mxu0
  %v1969 = vadd.f32 0.0, %v1968
  %v1970 = vpop.f32.mrf.mxu0
  %v1971 = vadd.f32 0.0, %v1970
  %1972 = vmatmul.bf16.gmra.mxu0 %v793
  %v1973 = vpop.f32.mrf.mxu0
  %v1974 = vadd.f32 0.0, %v1973
  %v1975 = vpop.f32.mrf.mxu0
  %1976 = vdwg.mxu0
  %1977 = vmatpush.bf16.msra.mxu0 0
  %1978 = vmatpush.bf16.msra.mxu0 0
  %1979 = vmatpush.bf16.msra.mxu0 0
  %1980 = vmatpush.bf16.msra.mxu0 0
  %1981 = vmatpush.bf16.msra.mxu0 0
  %1982 = vmatpush.bf16.msra.mxu0 0
  %1983 = vmatpush.bf16.msra.mxu0 0
  %1984 = vmatpush.bf16.msra.mxu0 %v926
  %1985 = vmatmul.bf16.gmra.mxu0 %v787
  %v1986 = vpop.f32.mrf.mxu0
  %v1987 = vadd.f32 0.0, %v1986
  %v1988 = vpop.f32.mrf.mxu0
  %v1989 = vadd.f32 0.0, %v1988
  %1990 = vmatmul.bf16.gmra.mxu0 %v790
  %v1991 = vpop.f32.mrf.mxu0
  %v1992 = vadd.f32 0.0, %v1991
  %v1993 = vpop.f32.mrf.mxu0
  %v1994 = vadd.f32 0.0, %v1993
  %1995 = vmatmul.bf16.gmra.mxu0 %v793
  %v1996 = vpop.f32.mrf.mxu0
  %v1997 = vadd.f32 0.0, %v1996
  %v1998 = vpop.f32.mrf.mxu0
  %1999 = vdwg.mxu0
  %2000 = vmatpush.bf16.msra.mxu0 0
  %2001 = vmatpush.bf16.msra.mxu0 0
  %2002 = vmatpush.bf16.msra.mxu0 0
  %2003 = vmatpush.bf16.msra.mxu0 0
  %2004 = vmatpush.bf16.msra.mxu0 0
  %2005 = vmatpush.bf16.msra.mxu0 0
  %2006 = vmatpush.bf16.msra.mxu0 0
  %2007 = vmatpush.bf16.msra.mxu0 %v929
  %2008 = vmatmul.bf16.gmra.mxu0 %v787
  %v2009 = vpop.f32.mrf.mxu0
  %v2010 = vadd.f32 0.0, %v2009
  %v2011 = vpop.f32.mrf.mxu0
  %v2012 = vadd.f32 0.0, %v2011
  %2013 = vmatmul.bf16.gmra.mxu0 %v790
  %v2014 = vpop.f32.mrf.mxu0
  %v2015 = vadd.f32 0.0, %v2014
  %v2016 = vpop.f32.mrf.mxu0
  %v2017 = vadd.f32 0.0, %v2016
  %2018 = vmatmul.bf16.gmra.mxu0 %v793
  %v2019 = vpop.f32.mrf.mxu0
  %v2020 = vadd.f32 0.0, %v2019
  %v2021 = vpop.f32.mrf.mxu0
  %2022 = vdwg.mxu0
  %2023 = vmatpush.bf16.msra.mxu0 0
  %2024 = vmatpush.bf16.msra.mxu0 0
  %2025 = vmatpush.bf16.msra.mxu0 0
  %2026 = vmatpush.bf16.msra.mxu0 0
  %2027 = vmatpush.bf16.msra.mxu0 0
  %2028 = vmatpush.bf16.msra.mxu0 0
  %2029 = vmatpush.bf16.msra.mxu0 0
  %2030 = vmatpush.bf16.msra.mxu0 %v932
  %2031 = vmatmul.bf16.gmra.mxu0 %v787
  %v2032 = vpop.f32.mrf.mxu0
  %v2033 = vadd.f32 0.0, %v2032
  %v2034 = vpop.f32.mrf.mxu0
  %v2035 = vadd.f32 0.0, %v2034
  %2036 = vmatmul.bf16.gmra.mxu0 %v790
  %v2037 = vpop.f32.mrf.mxu0
  %v2038 = vadd.f32 0.0, %v2037
  %v2039 = vpop.f32.mrf.mxu0
  %v2040 = vadd.f32 0.0, %v2039
  %2041 = vmatmul.bf16.gmra.mxu0 %v793
  %v2042 = vpop.f32.mrf.mxu0
  %v2043 = vadd.f32 0.0, %v2042
  %v2044 = vpop.f32.mrf.mxu0
  %2045 = vdwg.mxu0
  %2046 = vmatpush.bf16.msra.mxu0 0
  %2047 = vmatpush.bf16.msra.mxu0 0
  %2048 = vmatpush.bf16.msra.mxu0 0
  %2049 = vmatpush.bf16.msra.mxu0 0
  %2050 = vmatpush.bf16.msra.mxu0 0
  %2051 = vmatpush.bf16.msra.mxu0 0
  %2052 = vmatpush.bf16.msra.mxu0 0
  %2053 = vmatpush.bf16.msra.mxu0 %v935
  %2054 = vmatmul.bf16.gmra.mxu0 %v787
  %v2055 = vpop.f32.mrf.mxu0
  %v2056 = vadd.f32 0.0, %v2055
  %v2057 = vpop.f32.mrf.mxu0
  %v2058 = vadd.f32 0.0, %v2057
  %2059 = vmatmul.bf16.gmra.mxu0 %v790
  %v2060 = vpop.f32.mrf.mxu0
  %v2061 = vadd.f32 0.0, %v2060
  %v2062 = vpop.f32.mrf.mxu0
  %v2063 = vadd.f32 0.0, %v2062
  %2064 = vmatmul.bf16.gmra.mxu0 %v793
  %v2065 = vpop.f32.mrf.mxu0
  %v2066 = vadd.f32 0.0, %v2065
  %v2067 = vpop.f32.mrf.mxu0
  %2068 = vdwg.mxu0
  %2069 = vmatpush.bf16.msra.mxu0 0
  %2070 = vmatpush.bf16.msra.mxu0 0
  %2071 = vmatpush.bf16.msra.mxu0 0
  %2072 = vmatpush.bf16.msra.mxu0 0
  %2073 = vmatpush.bf16.msra.mxu0 0
  %2074 = vmatpush.bf16.msra.mxu0 0
  %2075 = vmatpush.bf16.msra.mxu0 0
  %2076 = vmatpush.bf16.msra.mxu0 %v938
  %2077 = vmatmul.bf16.gmra.mxu0 %v787
  %v2078 = vpop.f32.mrf.mxu0
  %v2079 = vadd.f32 0.0, %v2078
  %v2080 = vpop.f32.mrf.mxu0
  %v2081 = vadd.f32 0.0, %v2080
  %2082 = vmatmul.bf16.gmra.mxu0 %v790
  %v2083 = vpop.f32.mrf.mxu0
  %v2084 = vadd.f32 0.0, %v2083
  %v2085 = vpop.f32.mrf.mxu0
  %v2086 = vadd.f32 0.0, %v2085
  %2087 = vmatmul.bf16.gmra.mxu0 %v793
  %v2088 = vpop.f32.mrf.mxu0
  %v2089 = vadd.f32 0.0, %v2088
  %v2090 = vpop.f32.mrf.mxu0
  %2091 = vdwg.mxu0
  %2092 = vmatpush.bf16.msra.mxu0 0
  %2093 = vmatpush.bf16.msra.mxu0 0
  %2094 = vmatpush.bf16.msra.mxu0 0
  %2095 = vmatpush.bf16.msra.mxu0 0
  %2096 = vmatpush.bf16.msra.mxu0 0
  %2097 = vmatpush.bf16.msra.mxu0 0
  %2098 = vmatpush.bf16.msra.mxu0 0
  %2099 = vmatpush.bf16.msra.mxu0 %v941
  %2100 = vmatmul.bf16.gmra.mxu0 %v787
  %v2101 = vpop.f32.mrf.mxu0
  %v2102 = vadd.f32 0.0, %v2101
  %v2103 = vpop.f32.mrf.mxu0
  %v2104 = vadd.f32 0.0, %v2103
  %2105 = vmatmul.bf16.gmra.mxu0 %v790
  %v2106 = vpop.f32.mrf.mxu0
  %v2107 = vadd.f32 0.0, %v2106
  %v2108 = vpop.f32.mrf.mxu0
  %v2109 = vadd.f32 0.0, %v2108
  %2110 = vmatmul.bf16.gmra.mxu0 %v793
  %v2111 = vpop.f32.mrf.mxu0
  %v2112 = vadd.f32 0.0, %v2111
  %v2113 = vpop.f32.mrf.mxu0
  %2114 = vdwg.mxu0
  %2115 = vmatpush.bf16.msra.mxu0 0
  %2116 = vmatpush.bf16.msra.mxu0 0
  %2117 = vmatpush.bf16.msra.mxu0 0
  %2118 = vmatpush.bf16.msra.mxu0 0
  %2119 = vmatpush.bf16.msra.mxu0 0
  %2120 = vmatpush.bf16.msra.mxu0 0
  %2121 = vmatpush.bf16.msra.mxu0 0
  %2122 = vmatpush.bf16.msra.mxu0 %v944
  %2123 = vmatmul.bf16.gmra.mxu0 %v787
  %v2124 = vpop.f32.mrf.mxu0
  %v2125 = vadd.f32 0.0, %v2124
  %v2126 = vpop.f32.mrf.mxu0
  %v2127 = vadd.f32 0.0, %v2126
  %2128 = vmatmul.bf16.gmra.mxu0 %v790
  %v2129 = vpop.f32.mrf.mxu0
  %v2130 = vadd.f32 0.0, %v2129
  %v2131 = vpop.f32.mrf.mxu0
  %v2132 = vadd.f32 0.0, %v2131
  %2133 = vmatmul.bf16.gmra.mxu0 %v793
  %v2134 = vpop.f32.mrf.mxu0
  %v2135 = vadd.f32 0.0, %v2134
  %v2136 = vpop.f32.mrf.mxu0
  %2137 = vdwg.mxu0
  %2138 = vmatpush.bf16.msra.mxu0 0
  %2139 = vmatpush.bf16.msra.mxu0 0
  %2140 = vmatpush.bf16.msra.mxu0 0
  %2141 = vmatpush.bf16.msra.mxu0 0
  %2142 = vmatpush.bf16.msra.mxu0 0
  %2143 = vmatpush.bf16.msra.mxu0 0
  %2144 = vmatpush.bf16.msra.mxu0 0
  %2145 = vmatpush.bf16.msra.mxu0 %v947
  %2146 = vmatmul.bf16.gmra.mxu0 %v787
  %v2147 = vpop.f32.mrf.mxu0
  %v2148 = vadd.f32 0.0, %v2147
  %v2149 = vpop.f32.mrf.mxu0
  %v2150 = vadd.f32 0.0, %v2149
  %2151 = vmatmul.bf16.gmra.mxu0 %v790
  %v2152 = vpop.f32.mrf.mxu0
  %v2153 = vadd.f32 0.0, %v2152
  %v2154 = vpop.f32.mrf.mxu0
  %v2155 = vadd.f32 0.0, %v2154
  %2156 = vmatmul.bf16.gmra.mxu0 %v793
  %v2157 = vpop.f32.mrf.mxu0
  %v2158 = vadd.f32 0.0, %v2157
  %v2159 = vpop.f32.mrf.mxu0
  %2160 = vdwg.mxu0
  %2161 = vmatpush.bf16.msra.mxu0 0
  %2162 = vmatpush.bf16.msra.mxu0 0
  %2163 = vmatpush.bf16.msra.mxu0 0
  %2164 = vmatpush.bf16.msra.mxu0 0
  %2165 = vmatpush.bf16.msra.mxu0 0
  %2166 = vmatpush.bf16.msra.mxu0 0
  %2167 = vmatpush.bf16.msra.mxu0 0
  %2168 = vmatpush.bf16.msra.mxu0 %v950
  %2169 = vmatmul.bf16.gmra.mxu0 %v787
  %v2170 = vpop.f32.mrf.mxu0
  %v2171 = vadd.f32 0.0, %v2170
  %v2172 = vpop.f32.mrf.mxu0
  %v2173 = vadd.f32 0.0, %v2172
  %2174 = vmatmul.bf16.gmra.mxu0 %v790
  %v2175 = vpop.f32.mrf.mxu0
  %v2176 = vadd.f32 0.0, %v2175
  %v2177 = vpop.f32.mrf.mxu0
  %v2178 = vadd.f32 0.0, %v2177
  %2179 = vmatmul.bf16.gmra.mxu0 %v793
  %v2180 = vpop.f32.mrf.mxu0
  %v2181 = vadd.f32 0.0, %v2180
  %v2182 = vpop.f32.mrf.mxu0
  %2183 = vdwg.mxu0
  %2184 = vmatpush.bf16.msra.mxu0 0
  %2185 = vmatpush.bf16.msra.mxu0 0
  %2186 = vmatpush.bf16.msra.mxu0 0
  %2187 = vmatpush.bf16.msra.mxu0 0
  %2188 = vmatpush.bf16.msra.mxu0 0
  %2189 = vmatpush.bf16.msra.mxu0 0
  %2190 = vmatpush.bf16.msra.mxu0 0
  %2191 = vmatpush.bf16.msra.mxu0 %v953
  %2192 = vmatmul.bf16.gmra.mxu0 %v787
  %v2193 = vpop.f32.mrf.mxu0
  %v2194 = vadd.f32 0.0, %v2193
  %v2195 = vpop.f32.mrf.mxu0
  %v2196 = vadd.f32 0.0, %v2195
  %2197 = vmatmul.bf16.gmra.mxu0 %v790
  %v2198 = vpop.f32.mrf.mxu0
  %v2199 = vadd.f32 0.0, %v2198
  %v2200 = vpop.f32.mrf.mxu0
  %v2201 = vadd.f32 0.0, %v2200
  %2202 = vmatmul.bf16.gmra.mxu0 %v793
  %v2203 = vpop.f32.mrf.mxu0
  %v2204 = vadd.f32 0.0, %v2203
  %v2205 = vpop.f32.mrf.mxu0
  %2206 = vdwg.mxu0
  %2207 = vmatpush.bf16.msra.mxu0 0
  %2208 = vmatpush.bf16.msra.mxu0 0
  %2209 = vmatpush.bf16.msra.mxu0 0
  %2210 = vmatpush.bf16.msra.mxu0 0
  %2211 = vmatpush.bf16.msra.mxu0 0
  %2212 = vmatpush.bf16.msra.mxu0 0
  %2213 = vmatpush.bf16.msra.mxu0 0
  %2214 = vmatpush.bf16.msra.mxu0 %v956
  %2215 = vmatmul.bf16.gmra.mxu0 %v787
  %v2216 = vpop.f32.mrf.mxu0
  %v2217 = vadd.f32 0.0, %v2216
  %v2218 = vpop.f32.mrf.mxu0
  %v2219 = vadd.f32 0.0, %v2218
  %2220 = vmatmul.bf16.gmra.mxu0 %v790
  %v2221 = vpop.f32.mrf.mxu0
  %v2222 = vadd.f32 0.0, %v2221
  %v2223 = vpop.f32.mrf.mxu0
  %v2224 = vadd.f32 0.0, %v2223
  %2225 = vmatmul.bf16.gmra.mxu0 %v793
  %v2226 = vpop.f32.mrf.mxu0
  %v2227 = vadd.f32 0.0, %v2226
  %v2228 = vpop.f32.mrf.mxu0
  %2229 = vdwg.mxu0
  %2230 = vmatpush.bf16.msra.mxu0 0
  %2231 = vmatpush.bf16.msra.mxu0 0
  %2232 = vmatpush.bf16.msra.mxu0 0
  %2233 = vmatpush.bf16.msra.mxu0 0
  %2234 = vmatpush.bf16.msra.mxu0 0
  %2235 = vmatpush.bf16.msra.mxu0 0
  %2236 = vmatpush.bf16.msra.mxu0 0
  %2237 = vmatpush.bf16.msra.mxu0 %v959
  %2238 = vmatmul.bf16.gmra.mxu0 %v787
  %v2239 = vpop.f32.mrf.mxu0
  %v2240 = vadd.f32 0.0, %v2239
  %v2241 = vpop.f32.mrf.mxu0
  %v2242 = vadd.f32 0.0, %v2241
  %2243 = vmatmul.bf16.gmra.mxu0 %v790
  %v2244 = vpop.f32.mrf.mxu0
  %v2245 = vadd.f32 0.0, %v2244
  %v2246 = vpop.f32.mrf.mxu0
  %v2247 = vadd.f32 0.0, %v2246
  %2248 = vmatmul.bf16.gmra.mxu0 %v793
  %v2249 = vpop.f32.mrf.mxu0
  %v2250 = vadd.f32 0.0, %v2249
  %v2251 = vpop.f32.mrf.mxu0
  %2252 = vdwg.mxu0
  %2253 = vmatpush.bf16.msra.mxu0 0
  %2254 = vmatpush.bf16.msra.mxu0 0
  %2255 = vmatpush.bf16.msra.mxu0 0
  %2256 = vmatpush.bf16.msra.mxu0 0
  %2257 = vmatpush.bf16.msra.mxu0 0
  %2258 = vmatpush.bf16.msra.mxu0 0
  %2259 = vmatpush.bf16.msra.mxu0 0
  %2260 = vmatpush.bf16.msra.mxu0 %v962
  %2261 = vmatmul.bf16.gmra.mxu0 %v787
  %v2262 = vpop.f32.mrf.mxu0
  %v2263 = vadd.f32 0.0, %v2262
  %v2264 = vpop.f32.mrf.mxu0
  %v2265 = vadd.f32 0.0, %v2264
  %2266 = vmatmul.bf16.gmra.mxu0 %v790
  %v2267 = vpop.f32.mrf.mxu0
  %v2268 = vadd.f32 0.0, %v2267
  %v2269 = vpop.f32.mrf.mxu0
  %v2270 = vadd.f32 0.0, %v2269
  %2271 = vmatmul.bf16.gmra.mxu0 %v793
  %v2272 = vpop.f32.mrf.mxu0
  %v2273 = vadd.f32 0.0, %v2272
  %v2274 = vpop.f32.mrf.mxu0
  %2275 = vdwg.mxu0
  %2276 = vmatpush.bf16.msra.mxu0 0
  %2277 = vmatpush.bf16.msra.mxu0 0
  %2278 = vmatpush.bf16.msra.mxu0 0
  %2279 = vmatpush.bf16.msra.mxu0 0
  %2280 = vmatpush.bf16.msra.mxu0 0
  %2281 = vmatpush.bf16.msra.mxu0 0
  %2282 = vmatpush.bf16.msra.mxu0 0
  %2283 = vmatpush.bf16.msra.mxu0 %v965
  %2284 = vmatmul.bf16.gmra.mxu0 %v787
  %v2285 = vpop.f32.mrf.mxu0
  %v2286 = vadd.f32 0.0, %v2285
  %v2287 = vpop.f32.mrf.mxu0
  %v2288 = vadd.f32 0.0, %v2287
  %2289 = vmatmul.bf16.gmra.mxu0 %v790
  %v2290 = vpop.f32.mrf.mxu0
  %v2291 = vadd.f32 0.0, %v2290
  %v2292 = vpop.f32.mrf.mxu0
  %v2293 = vadd.f32 0.0, %v2292
  %2294 = vmatmul.bf16.gmra.mxu0 %v793
  %v2295 = vpop.f32.mrf.mxu0
  %v2296 = vadd.f32 0.0, %v2295
  %v2297 = vpop.f32.mrf.mxu0
  %2298 = vdwg.mxu0
  %2299 = vmatpush.bf16.msra.mxu0 0
  %2300 = vmatpush.bf16.msra.mxu0 0
  %2301 = vmatpush.bf16.msra.mxu0 0
  %2302 = vmatpush.bf16.msra.mxu0 0
  %2303 = vmatpush.bf16.msra.mxu0 0
  %2304 = vmatpush.bf16.msra.mxu0 0
  %2305 = vmatpush.bf16.msra.mxu0 0
  %2306 = vmatpush.bf16.msra.mxu0 %v968
  %2307 = vmatmul.bf16.gmra.mxu0 %v787
  %v2308 = vpop.f32.mrf.mxu0
  %v2309 = vadd.f32 0.0, %v2308
  %v2310 = vpop.f32.mrf.mxu0
  %v2311 = vadd.f32 0.0, %v2310
  %2312 = vmatmul.bf16.gmra.mxu0 %v790
  %v2313 = vpop.f32.mrf.mxu0
  %v2314 = vadd.f32 0.0, %v2313
  %v2315 = vpop.f32.mrf.mxu0
  %v2316 = vadd.f32 0.0, %v2315
  %2317 = vmatmul.bf16.gmra.mxu0 %v793
  %v2318 = vpop.f32.mrf.mxu0
  %v2319 = vadd.f32 0.0, %v2318
  %v2320 = vpop.f32.mrf.mxu0
  %2321 = vdwg.mxu0
  %2322 = vmatpush.bf16.msra.mxu0 0
  %2323 = vmatpush.bf16.msra.mxu0 0
  %2324 = vmatpush.bf16.msra.mxu0 0
  %2325 = vmatpush.bf16.msra.mxu0 0
  %2326 = vmatpush.bf16.msra.mxu0 0
  %2327 = vmatpush.bf16.msra.mxu0 0
  %2328 = vmatpush.bf16.msra.mxu0 0
  %2329 = vmatpush.bf16.msra.mxu0 %v971
  %2330 = vmatmul.bf16.gmra.mxu0 %v787
  %v2331 = vpop.f32.mrf.mxu0
  %v2332 = vadd.f32 0.0, %v2331
  %v2333 = vpop.f32.mrf.mxu0
  %v2334 = vadd.f32 0.0, %v2333
  %2335 = vmatmul.bf16.gmra.mxu0 %v790
  %v2336 = vpop.f32.mrf.mxu0
  %v2337 = vadd.f32 0.0, %v2336
  %v2338 = vpop.f32.mrf.mxu0
  %v2339 = vadd.f32 0.0, %v2338
  %2340 = vmatmul.bf16.gmra.mxu0 %v793
  %v2341 = vpop.f32.mrf.mxu0
  %v2342 = vadd.f32 0.0, %v2341
  %v2343 = vpop.f32.mrf.mxu0
  %2344 = vdwg.mxu0
  %2345 = vmatpush.bf16.msra.mxu0 0
  %2346 = vmatpush.bf16.msra.mxu0 0
  %2347 = vmatpush.bf16.msra.mxu0 0
  %2348 = vmatpush.bf16.msra.mxu0 0
  %2349 = vmatpush.bf16.msra.mxu0 0
  %2350 = vmatpush.bf16.msra.mxu0 0
  %2351 = vmatpush.bf16.msra.mxu0 0
  %2352 = vmatpush.bf16.msra.mxu0 %v974
  %2353 = vmatmul.bf16.gmra.mxu0 %v787
  %v2354 = vpop.f32.mrf.mxu0
  %v2355 = vadd.f32 0.0, %v2354
  %v2356 = vpop.f32.mrf.mxu0
  %v2357 = vadd.f32 0.0, %v2356
  %2358 = vmatmul.bf16.gmra.mxu0 %v790
  %v2359 = vpop.f32.mrf.mxu0
  %v2360 = vadd.f32 0.0, %v2359
  %v2361 = vpop.f32.mrf.mxu0
  %v2362 = vadd.f32 0.0, %v2361
  %2363 = vmatmul.bf16.gmra.mxu0 %v793
  %v2364 = vpop.f32.mrf.mxu0
  %v2365 = vadd.f32 0.0, %v2364
  %v2366 = vpop.f32.mrf.mxu0
  %2367 = vdwg.mxu0
  %2368 = vmatpush.bf16.msra.mxu0 0
  %2369 = vmatpush.bf16.msra.mxu0 0
  %2370 = vmatpush.bf16.msra.mxu0 0
  %2371 = vmatpush.bf16.msra.mxu0 0
  %2372 = vmatpush.bf16.msra.mxu0 0
  %2373 = vmatpush.bf16.msra.mxu0 0
  %2374 = vmatpush.bf16.msra.mxu0 0
  %2375 = vmatpush.bf16.msra.mxu0 %v977
  %2376 = vmatmul.bf16.gmra.mxu0 %v787
  %v2377 = vpop.f32.mrf.mxu0
  %v2378 = vadd.f32 0.0, %v2377
  %v2379 = vpop.f32.mrf.mxu0
  %v2380 = vadd.f32 0.0, %v2379
  %2381 = vmatmul.bf16.gmra.mxu0 %v790
  %v2382 = vpop.f32.mrf.mxu0
  %v2383 = vadd.f32 0.0, %v2382
  %v2384 = vpop.f32.mrf.mxu0
  %v2385 = vadd.f32 0.0, %v2384
  %2386 = vmatmul.bf16.gmra.mxu0 %v793
  %v2387 = vpop.f32.mrf.mxu0
  %v2388 = vadd.f32 0.0, %v2387
  %v2389 = vpop.f32.mrf.mxu0
  %2390 = vdwg.mxu0
  %2391 = vmatpush.bf16.msra.mxu0 0
  %2392 = vmatpush.bf16.msra.mxu0 0
  %2393 = vmatpush.bf16.msra.mxu0 0
  %2394 = vmatpush.bf16.msra.mxu0 0
  %2395 = vmatpush.bf16.msra.mxu0 0
  %2396 = vmatpush.bf16.msra.mxu0 0
  %2397 = vmatpush.bf16.msra.mxu0 0
  %2398 = vmatpush.bf16.msra.mxu0 %v980
  %2399 = vmatmul.bf16.gmra.mxu0 %v787
  %v2400 = vpop.f32.mrf.mxu0
  %v2401 = vadd.f32 0.0, %v2400
  %v2402 = vpop.f32.mrf.mxu0
  %v2403 = vadd.f32 0.0, %v2402
  %2404 = vmatmul.bf16.gmra.mxu0 %v790
  %v2405 = vpop.f32.mrf.mxu0
  %v2406 = vadd.f32 0.0, %v2405
  %v2407 = vpop.f32.mrf.mxu0
  %v2408 = vadd.f32 0.0, %v2407
  %2409 = vmatmul.bf16.gmra.mxu0 %v793
  %v2410 = vpop.f32.mrf.mxu0
  %v2411 = vadd.f32 0.0, %v2410
  %v2412 = vpop.f32.mrf.mxu0
  %2413 = vdwg.mxu0
  %2414 = vmatpush.bf16.msra.mxu0 0
  %2415 = vmatpush.bf16.msra.mxu0 0
  %2416 = vmatpush.bf16.msra.mxu0 0
  %2417 = vmatpush.bf16.msra.mxu0 0
  %2418 = vmatpush.bf16.msra.mxu0 0
  %2419 = vmatpush.bf16.msra.mxu0 0
  %2420 = vmatpush.bf16.msra.mxu0 0
  %2421 = vmatpush.bf16.msra.mxu0 %v983
  %2422 = vmatmul.bf16.gmra.mxu0 %v787
  %v2423 = vpop.f32.mrf.mxu0
  %v2424 = vadd.f32 0.0, %v2423
  %v2425 = vpop.f32.mrf.mxu0
  %v2426 = vadd.f32 0.0, %v2425
  %2427 = vmatmul.bf16.gmra.mxu0 %v790
  %v2428 = vpop.f32.mrf.mxu0
  %v2429 = vadd.f32 0.0, %v2428
  %v2430 = vpop.f32.mrf.mxu0
  %v2431 = vadd.f32 0.0, %v2430
  %2432 = vmatmul.bf16.gmra.mxu0 %v793
  %v2433 = vpop.f32.mrf.mxu0
  %v2434 = vadd.f32 0.0, %v2433
  %v2435 = vpop.f32.mrf.mxu0
  %2436 = vdwg.mxu0
  %2437 = vmatpush.bf16.msra.mxu0 0
  %2438 = vmatpush.bf16.msra.mxu0 0
  %2439 = vmatpush.bf16.msra.mxu0 0
  %2440 = vmatpush.bf16.msra.mxu0 0
  %2441 = vmatpush.bf16.msra.mxu0 0
  %2442 = vmatpush.bf16.msra.mxu0 0
  %2443 = vmatpush.bf16.msra.mxu0 0
  %2444 = vmatpush.bf16.msra.mxu0 %v986
  %2445 = vmatmul.bf16.gmra.mxu0 %v787
  %v2446 = vpop.f32.mrf.mxu0
  %v2447 = vadd.f32 0.0, %v2446
  %v2448 = vpop.f32.mrf.mxu0
  %v2449 = vadd.f32 0.0, %v2448
  %2450 = vmatmul.bf16.gmra.mxu0 %v790
  %v2451 = vpop.f32.mrf.mxu0
  %v2452 = vadd.f32 0.0, %v2451
  %v2453 = vpop.f32.mrf.mxu0
  %v2454 = vadd.f32 0.0, %v2453
  %2455 = vmatmul.bf16.gmra.mxu0 %v793
  %v2456 = vpop.f32.mrf.mxu0
  %v2457 = vadd.f32 0.0, %v2456
  %v2458 = vpop.f32.mrf.mxu0
  %2459 = vdwg.mxu0
  %v2460 = vmax.f32 %v998, 0.0
  %v2461 = vmax.f32 %v1021, 0.0
  %v2462 = vmax.f32 %v1044, 0.0
  %v2463 = vmax.f32 %v1067, 0.0
  %v2464 = vmax.f32 %v1090, 0.0
  %v2465 = vmax.f32 %v1113, 0.0
  %v2466 = vmax.f32 %v1136, 0.0
  %v2467 = vmax.f32 %v1159, 0.0
  %v2468 = vmax.f32 %v1182, 0.0
  %v2469 = vmax.f32 %v1205, 0.0
  %v2470 = vmax.f32 %v1228, 0.0
  %v2471 = vmax.f32 %v1251, 0.0
  %v2472 = vmax.f32 %v1274, 0.0
  %v2473 = vmax.f32 %v1297, 0.0
  %v2474 = vmax.f32 %v1320, 0.0
  %v2475 = vmax.f32 %v1343, 0.0
  %v2476 = vmax.f32 %v1366, 0.0
  %v2477 = vmax.f32 %v1389, 0.0
  %v2478 = vmax.f32 %v1412, 0.0
  %v2479 = vmax.f32 %v1435, 0.0
  %v2480 = vmax.f32 %v1458, 0.0
  %v2481 = vmax.f32 %v1481, 0.0
  %v2482 = vmax.f32 %v1504, 0.0
  %v2483 = vmax.f32 %v1527, 0.0
  %v2484 = vmax.f32 %v1550, 0.0
  %v2485 = vmax.f32 %v1573, 0.0
  %v2486 = vmax.f32 %v1596, 0.0
  %v2487 = vmax.f32 %v1619, 0.0
  %v2488 = vmax.f32 %v1642, 0.0
  %v2489 = vmax.f32 %v1665, 0.0
  %v2490 = vmax.f32 %v1688, 0.0
  %v2491 = vmax.f32 %v1711, 0.0
  %v2492 = vmax.f32 %v1734, 0.0
  %v2493 = vmax.f32 %v1757, 0.0
  %v2494 = vmax.f32 %v1780, 0.0
  %v2495 = vmax.f32 %v1803, 0.0
  %v2496 = vmax.f32 %v1826, 0.0
  %v2497 = vmax.f32 %v1849, 0.0
  %v2498 = vmax.f32 %v1872, 0.0
  %v2499 = vmax.f32 %v1895, 0.0
  %v2500 = vmax.f32 %v1918, 0.0
  %v2501 = vmax.f32 %v1941, 0.0
  %v2502 = vmax.f32 %v1964, 0.0
  %v2503 = vmax.f32 %v1987, 0.0
  %v2504 = vmax.f32 %v2010, 0.0
  %v2505 = vmax.f32 %v2033, 0.0
  %v2506 = vmax.f32 %v2056, 0.0
  %v2507 = vmax.f32 %v2079, 0.0
  %v2508 = vmax.f32 %v2102, 0.0
  %v2509 = vmax.f32 %v2125, 0.0
  %v2510 = vmax.f32 %v2148, 0.0
  %v2511 = vmax.f32 %v2171, 0.0
  %v2512 = vmax.f32 %v2194, 0.0
  %v2513 = vmax.f32 %v2217, 0.0
  %v2514 = vmax.f32 %v2240, 0.0
  %v2515 = vmax.f32 %v2263, 0.0
  %v2516 = vmax.f32 %v2286, 0.0
  %v2517 = vmax.f32 %v2309, 0.0
  %v2518 = vmax.f32 %v2332, 0.0
  %v2519 = vmax.f32 %v2355, 0.0
  %v2520 = vmax.f32 %v2378, 0.0
  %v2521 = vmax.f32 %v2401, 0.0
  %v2522 = vmax.f32 %v2424, 0.0
  %v2523 = vmax.f32 %v2447, 0.0
  %v2524 = vmax.f32 %v1000, 0.0
  %v2525 = vmax.f32 %v1023, 0.0
  %v2526 = vmax.f32 %v1046, 0.0
  %v2527 = vmax.f32 %v1069, 0.0
  %v2528 = vmax.f32 %v1092, 0.0
  %v2529 = vmax.f32 %v1115, 0.0
  %v2530 = vmax.f32 %v1138, 0.0
  %v2531 = vmax.f32 %v1161, 0.0
  %v2532 = vmax.f32 %v1184, 0.0
  %v2533 = vmax.f32 %v1207, 0.0
  %v2534 = vmax.f32 %v1230, 0.0
  %v2535 = vmax.f32 %v1253, 0.0
  %v2536 = vmax.f32 %v1276, 0.0
  %v2537 = vmax.f32 %v1299, 0.0
  %v2538 = vmax.f32 %v1322, 0.0
  %v2539 = vmax.f32 %v1345, 0.0
  %v2540 = vmax.f32 %v1368, 0.0
  %v2541 = vmax.f32 %v1391, 0.0
  %v2542 = vmax.f32 %v1414, 0.0
  %v2543 = vmax.f32 %v1437, 0.0
  %v2544 = vmax.f32 %v1460, 0.0
  %v2545 = vmax.f32 %v1483, 0.0
  %v2546 = vmax.f32 %v1506, 0.0
  %v2547 = vmax.f32 %v1529, 0.0
  %v2548 = vmax.f32 %v1552, 0.0
  %v2549 = vmax.f32 %v1575, 0.0
  %v2550 = vmax.f32 %v1598, 0.0
  %v2551 = vmax.f32 %v1621, 0.0
  %v2552 = vmax.f32 %v1644, 0.0
  %v2553 = vmax.f32 %v1667, 0.0
  %v2554 = vmax.f32 %v1690, 0.0
  %v2555 = vmax.f32 %v1713, 0.0
  %v2556 = vmax.f32 %v1736, 0.0
  %v2557 = vmax.f32 %v1759, 0.0
  %v2558 = vmax.f32 %v1782, 0.0
  %v2559 = vmax.f32 %v1805, 0.0
  %v2560 = vmax.f32 %v1828, 0.0
  %v2561 = vmax.f32 %v1851, 0.0
  %v2562 = vmax.f32 %v1874, 0.0
  %v2563 = vmax.f32 %v1897, 0.0
  %v2564 = vmax.f32 %v1920, 0.0
  %v2565 = vmax.f32 %v1943, 0.0
  %v2566 = vmax.f32 %v1966, 0.0
  %v2567 = vmax.f32 %v1989, 0.0
  %v2568 = vmax.f32 %v2012, 0.0
  %v2569 = vmax.f32 %v2035, 0.0
  %v2570 = vmax.f32 %v2058, 0.0
  %v2571 = vmax.f32 %v2081, 0.0
  %v2572 = vmax.f32 %v2104, 0.0
  %v2573 = vmax.f32 %v2127, 0.0
  %v2574 = vmax.f32 %v2150, 0.0
  %v2575 = vmax.f32 %v2173, 0.0
  %v2576 = vmax.f32 %v2196, 0.0
  %v2577 = vmax.f32 %v2219, 0.0
  %v2578 = vmax.f32 %v2242, 0.0
  %v2579 = vmax.f32 %v2265, 0.0
  %v2580 = vmax.f32 %v2288, 0.0
  %v2581 = vmax.f32 %v2311, 0.0
  %v2582 = vmax.f32 %v2334, 0.0
  %v2583 = vmax.f32 %v2357, 0.0
  %v2584 = vmax.f32 %v2380, 0.0
  %v2585 = vmax.f32 %v2403, 0.0
  %v2586 = vmax.f32 %v2426, 0.0
  %v2587 = vmax.f32 %v2449, 0.0
  %v2588 = vmax.f32 %v1003, 0.0
  %v2589 = vmax.f32 %v1026, 0.0
  %v2590 = vmax.f32 %v1049, 0.0
  %v2591 = vmax.f32 %v1072, 0.0
  %v2592 = vmax.f32 %v1095, 0.0
  %v2593 = vmax.f32 %v1118, 0.0
  %v2594 = vmax.f32 %v1141, 0.0
  %v2595 = vmax.f32 %v1164, 0.0
  %v2596 = vmax.f32 %v1187, 0.0
  %v2597 = vmax.f32 %v1210, 0.0
  %v2598 = vmax.f32 %v1233, 0.0
  %v2599 = vmax.f32 %v1256, 0.0
  %v2600 = vmax.f32 %v1279, 0.0
  %v2601 = vmax.f32 %v1302, 0.0
  %v2602 = vmax.f32 %v1325, 0.0
  %v2603 = vmax.f32 %v1348, 0.0
  %v2604 = vmax.f32 %v1371, 0.0
  %v2605 = vmax.f32 %v1394, 0.0
  %v2606 = vmax.f32 %v1417, 0.0
  %v2607 = vmax.f32 %v1440, 0.0
  %v2608 = vmax.f32 %v1463, 0.0
  %v2609 = vmax.f32 %v1486, 0.0
  %v2610 = vmax.f32 %v1509, 0.0
  %v2611 = vmax.f32 %v1532, 0.0
  %v2612 = vmax.f32 %v1555, 0.0
  %v2613 = vmax.f32 %v1578, 0.0
  %v2614 = vmax.f32 %v1601, 0.0
  %v2615 = vmax.f32 %v1624, 0.0
  %v2616 = vmax.f32 %v1647, 0.0
  %v2617 = vmax.f32 %v1670, 0.0
  %v2618 = vmax.f32 %v1693, 0.0
  %v2619 = vmax.f32 %v1716, 0.0
  %v2620 = vmax.f32 %v1739, 0.0
  %v2621 = vmax.f32 %v1762, 0.0
  %v2622 = vmax.f32 %v1785, 0.0
  %v2623 = vmax.f32 %v1808, 0.0
  %v2624 = vmax.f32 %v1831, 0.0
  %v2625 = vmax.f32 %v1854, 0.0
  %v2626 = vmax.f32 %v1877, 0.0
  %v2627 = vmax.f32 %v1900, 0.0
  %v2628 = vmax.f32 %v1923, 0.0
  %v2629 = vmax.f32 %v1946, 0.0
  %v2630 = vmax.f32 %v1969, 0.0
  %v2631 = vmax.f32 %v1992, 0.0
  %v2632 = vmax.f32 %v2015, 0.0
  %v2633 = vmax.f32 %v2038, 0.0
  %v2634 = vmax.f32 %v2061, 0.0
  %v2635 = vmax.f32 %v2084, 0.0
  %v2636 = vmax.f32 %v2107, 0.0
  %v2637 = vmax.f32 %v2130, 0.0
  %v2638 = vmax.f32 %v2153, 0.0
  %v2639 = vmax.f32 %v2176, 0.0
  %v2640 = vmax.f32 %v2199, 0.0
  %v2641 = vmax.f32 %v2222, 0.0
  %v2642 = vmax.f32 %v2245, 0.0
  %v2643 = vmax.f32 %v2268, 0.0
  %v2644 = vmax.f32 %v2291, 0.0
  %v2645 = vmax.f32 %v2314, 0.0
  %v2646 = vmax.f32 %v2337, 0.0
  %v2647 = vmax.f32 %v2360, 0.0
  %v2648 = vmax.f32 %v2383, 0.0
  %v2649 = vmax.f32 %v2406, 0.0
  %v2650 = vmax.f32 %v2429, 0.0
  %v2651 = vmax.f32 %v2452, 0.0
  %v2652 = vmax.f32 %v1005, 0.0
  %v2653 = vmax.f32 %v1028, 0.0
  %v2654 = vmax.f32 %v1051, 0.0
  %v2655 = vmax.f32 %v1074, 0.0
  %v2656 = vmax.f32 %v1097, 0.0
  %v2657 = vmax.f32 %v1120, 0.0
  %v2658 = vmax.f32 %v1143, 0.0
  %v2659 = vmax.f32 %v1166, 0.0
  %v2660 = vmax.f32 %v1189, 0.0
  %v2661 = vmax.f32 %v1212, 0.0
  %v2662 = vmax.f32 %v1235, 0.0
  %v2663 = vmax.f32 %v1258, 0.0
  %v2664 = vmax.f32 %v1281, 0.0
  %v2665 = vmax.f32 %v1304, 0.0
  %v2666 = vmax.f32 %v1327, 0.0
  %v2667 = vmax.f32 %v1350, 0.0
  %v2668 = vmax.f32 %v1373, 0.0
  %v2669 = vmax.f32 %v1396, 0.0
  %v2670 = vmax.f32 %v1419, 0.0
  %v2671 = vmax.f32 %v1442, 0.0
  %v2672 = vmax.f32 %v1465, 0.0
  %v2673 = vmax.f32 %v1488, 0.0
  %v2674 = vmax.f32 %v1511, 0.0
  %v2675 = vmax.f32 %v1534, 0.0
  %v2676 = vmax.f32 %v1557, 0.0
  %v2677 = vmax.f32 %v1580, 0.0
  %v2678 = vmax.f32 %v1603, 0.0
  %v2679 = vmax.f32 %v1626, 0.0
  %v2680 = vmax.f32 %v1649, 0.0
  %v2681 = vmax.f32 %v1672, 0.0
  %v2682 = vmax.f32 %v1695, 0.0
  %v2683 = vmax.f32 %v1718, 0.0
  %v2684 = vmax.f32 %v1741, 0.0
  %v2685 = vmax.f32 %v1764, 0.0
  %v2686 = vmax.f32 %v1787, 0.0
  %v2687 = vmax.f32 %v1810, 0.0
  %v2688 = vmax.f32 %v1833, 0.0
  %v2689 = vmax.f32 %v1856, 0.0
  %v2690 = vmax.f32 %v1879, 0.0
  %v2691 = vmax.f32 %v1902, 0.0
  %v2692 = vmax.f32 %v1925, 0.0
  %v2693 = vmax.f32 %v1948, 0.0
  %v2694 = vmax.f32 %v1971, 0.0
  %v2695 = vmax.f32 %v1994, 0.0
  %v2696 = vmax.f32 %v2017, 0.0
  %v2697 = vmax.f32 %v2040, 0.0
  %v2698 = vmax.f32 %v2063, 0.0
  %v2699 = vmax.f32 %v2086, 0.0
  %v2700 = vmax.f32 %v2109, 0.0
  %v2701 = vmax.f32 %v2132, 0.0
  %v2702 = vmax.f32 %v2155, 0.0
  %v2703 = vmax.f32 %v2178, 0.0
  %v2704 = vmax.f32 %v2201, 0.0
  %v2705 = vmax.f32 %v2224, 0.0
  %v2706 = vmax.f32 %v2247, 0.0
  %v2707 = vmax.f32 %v2270, 0.0
  %v2708 = vmax.f32 %v2293, 0.0
  %v2709 = vmax.f32 %v2316, 0.0
  %v2710 = vmax.f32 %v2339, 0.0
  %v2711 = vmax.f32 %v2362, 0.0
  %v2712 = vmax.f32 %v2385, 0.0
  %v2713 = vmax.f32 %v2408, 0.0
  %v2714 = vmax.f32 %v2431, 0.0
  %v2715 = vmax.f32 %v2454, 0.0
  %v2716 = vmax.f32 %v1008, 0.0
  %v2717 = vmax.f32 %v1031, 0.0
  %v2718 = vmax.f32 %v1054, 0.0
  %v2719 = vmax.f32 %v1077, 0.0
  %v2720 = vmax.f32 %v1100, 0.0
  %v2721 = vmax.f32 %v1123, 0.0
  %v2722 = vmax.f32 %v1146, 0.0
  %v2723 = vmax.f32 %v1169, 0.0
  %v2724 = vmax.f32 %v1192, 0.0
  %v2725 = vmax.f32 %v1215, 0.0
  %v2726 = vmax.f32 %v1238, 0.0
  %v2727 = vmax.f32 %v1261, 0.0
  %v2728 = vmax.f32 %v1284, 0.0
  %v2729 = vmax.f32 %v1307, 0.0
  %v2730 = vmax.f32 %v1330, 0.0
  %v2731 = vmax.f32 %v1353, 0.0
  %v2732 = vmax.f32 %v1376, 0.0
  %v2733 = vmax.f32 %v1399, 0.0
  %v2734 = vmax.f32 %v1422, 0.0
  %v2735 = vmax.f32 %v1445, 0.0
  %v2736 = vmax.f32 %v1468, 0.0
  %v2737 = vmax.f32 %v1491, 0.0
  %v2738 = vmax.f32 %v1514, 0.0
  %v2739 = vmax.f32 %v1537, 0.0
  %v2740 = vmax.f32 %v1560, 0.0
  %v2741 = vmax.f32 %v1583, 0.0
  %v2742 = vmax.f32 %v1606, 0.0
  %v2743 = vmax.f32 %v1629, 0.0
  %v2744 = vmax.f32 %v1652, 0.0
  %v2745 = vmax.f32 %v1675, 0.0
  %v2746 = vmax.f32 %v1698, 0.0
  %v2747 = vmax.f32 %v1721, 0.0
  %v2748 = vmax.f32 %v1744, 0.0
  %v2749 = vmax.f32 %v1767, 0.0
  %v2750 = vmax.f32 %v1790, 0.0
  %v2751 = vmax.f32 %v1813, 0.0
  %v2752 = vmax.f32 %v1836, 0.0
  %v2753 = vmax.f32 %v1859, 0.0
  %v2754 = vmax.f32 %v1882, 0.0
  %v2755 = vmax.f32 %v1905, 0.0
  %v2756 = vmax.f32 %v1928, 0.0
  %v2757 = vmax.f32 %v1951, 0.0
  %v2758 = vmax.f32 %v1974, 0.0
  %v2759 = vmax.f32 %v1997, 0.0
  %v2760 = vmax.f32 %v2020, 0.0
  %v2761 = vmax.f32 %v2043, 0.0
  %v2762 = vmax.f32 %v2066, 0.0
  %v2763 = vmax.f32 %v2089, 0.0
  %v2764 = vmax.f32 %v2112, 0.0
  %v2765 = vmax.f32 %v2135, 0.0
  %v2766 = vmax.f32 %v2158, 0.0
  %v2767 = vmax.f32 %v2181, 0.0
  %v2768 = vmax.f32 %v2204, 0.0
  %v2769 = vmax.f32 %v2227, 0.0
  %v2770 = vmax.f32 %v2250, 0.0
  %v2771 = vmax.f32 %v2273, 0.0
  %v2772 = vmax.f32 %v2296, 0.0
  %v2773 = vmax.f32 %v2319, 0.0
  %v2774 = vmax.f32 %v2342, 0.0
  %v2775 = vmax.f32 %v2365, 0.0
  %v2776 = vmax.f32 %v2388, 0.0
  %v2777 = vmax.f32 %v2411, 0.0
  %v2778 = vmax.f32 %v2434, 0.0
  %v2779 = vmax.f32 %v2457, 0.0
  %v2780 = vpack.c.bf16 %v2524, %v2460
  %v2781 = vpack.c.bf16 %v2525, %v2461
  %v2782 = vpack.c.bf16 %v2526, %v2462
  %v2783 = vpack.c.bf16 %v2527, %v2463
  %v2784 = vpack.c.bf16 %v2528, %v2464
  %v2785 = vpack.c.bf16 %v2529, %v2465
  %v2786 = vpack.c.bf16 %v2530, %v2466
  %v2787 = vpack.c.bf16 %v2531, %v2467
  %v2788 = vpack.c.bf16 %v2532, %v2468
  %v2789 = vpack.c.bf16 %v2533, %v2469
  %v2790 = vpack.c.bf16 %v2534, %v2470
  %v2791 = vpack.c.bf16 %v2535, %v2471
  %v2792 = vpack.c.bf16 %v2536, %v2472
  %v2793 = vpack.c.bf16 %v2537, %v2473
  %v2794 = vpack.c.bf16 %v2538, %v2474
  %v2795 = vpack.c.bf16 %v2539, %v2475
  %v2796 = vpack.c.bf16 %v2540, %v2476
  %v2797 = vpack.c.bf16 %v2541, %v2477
  %v2798 = vpack.c.bf16 %v2542, %v2478
  %v2799 = vpack.c.bf16 %v2543, %v2479
  %v2800 = vpack.c.bf16 %v2544, %v2480
  %v2801 = vpack.c.bf16 %v2545, %v2481
  %v2802 = vpack.c.bf16 %v2546, %v2482
  %v2803 = vpack.c.bf16 %v2547, %v2483
  %v2804 = vpack.c.bf16 %v2548, %v2484
  %v2805 = vpack.c.bf16 %v2549, %v2485
  %v2806 = vpack.c.bf16 %v2550, %v2486
  %v2807 = vpack.c.bf16 %v2551, %v2487
  %v2808 = vpack.c.bf16 %v2552, %v2488
  %v2809 = vpack.c.bf16 %v2553, %v2489
  %v2810 = vpack.c.bf16 %v2554, %v2490
  %v2811 = vpack.c.bf16 %v2555, %v2491
  %v2812 = vpack.c.bf16 %v2556, %v2492
  %v2813 = vpack.c.bf16 %v2557, %v2493
  %v2814 = vpack.c.bf16 %v2558, %v2494
  %v2815 = vpack.c.bf16 %v2559, %v2495
  %v2816 = vpack.c.bf16 %v2560, %v2496
  %v2817 = vpack.c.bf16 %v2561, %v2497
  %v2818 = vpack.c.bf16 %v2562, %v2498
  %v2819 = vpack.c.bf16 %v2563, %v2499
  %v2820 = vpack.c.bf16 %v2564, %v2500
  %v2821 = vpack.c.bf16 %v2565, %v2501
  %v2822 = vpack.c.bf16 %v2566, %v2502
  %v2823 = vpack.c.bf16 %v2567, %v2503
  %v2824 = vpack.c.bf16 %v2568, %v2504
  %v2825 = vpack.c.bf16 %v2569, %v2505
  %v2826 = vpack.c.bf16 %v2570, %v2506
  %v2827 = vpack.c.bf16 %v2571, %v2507
  %v2828 = vpack.c.bf16 %v2572, %v2508
  %v2829 = vpack.c.bf16 %v2573, %v2509
  %v2830 = vpack.c.bf16 %v2574, %v2510
  %v2831 = vpack.c.bf16 %v2575, %v2511
  %v2832 = vpack.c.bf16 %v2576, %v2512
  %v2833 = vpack.c.bf16 %v2577, %v2513
  %v2834 = vpack.c.bf16 %v2578, %v2514
  %v2835 = vpack.c.bf16 %v2579, %v2515
  %v2836 = vpack.c.bf16 %v2580, %v2516
  %v2837 = vpack.c.bf16 %v2581, %v2517
  %v2838 = vpack.c.bf16 %v2582, %v2518
  %v2839 = vpack.c.bf16 %v2583, %v2519
  %v2840 = vpack.c.bf16 %v2584, %v2520
  %v2841 = vpack.c.bf16 %v2585, %v2521
  %v2842 = vpack.c.bf16 %v2586, %v2522
  %v2843 = vpack.c.bf16 %v2587, %v2523
  %v2844 = vpack.c.bf16 %v2652, %v2588
  %v2845 = vpack.c.bf16 %v2653, %v2589
  %v2846 = vpack.c.bf16 %v2654, %v2590
  %v2847 = vpack.c.bf16 %v2655, %v2591
  %v2848 = vpack.c.bf16 %v2656, %v2592
  %v2849 = vpack.c.bf16 %v2657, %v2593
  %v2850 = vpack.c.bf16 %v2658, %v2594
  %v2851 = vpack.c.bf16 %v2659, %v2595
  %v2852 = vpack.c.bf16 %v2660, %v2596
  %v2853 = vpack.c.bf16 %v2661, %v2597
  %v2854 = vpack.c.bf16 %v2662, %v2598
  %v2855 = vpack.c.bf16 %v2663, %v2599
  %v2856 = vpack.c.bf16 %v2664, %v2600
  %v2857 = vpack.c.bf16 %v2665, %v2601
  %v2858 = vpack.c.bf16 %v2666, %v2602
  %v2859 = vpack.c.bf16 %v2667, %v2603
  %v2860 = vpack.c.bf16 %v2668, %v2604
  %v2861 = vpack.c.bf16 %v2669, %v2605
  %v2862 = vpack.c.bf16 %v2670, %v2606
  %v2863 = vpack.c.bf16 %v2671, %v2607
  %v2864 = vpack.c.bf16 %v2672, %v2608
  %v2865 = vpack.c.bf16 %v2673, %v2609
  %v2866 = vpack.c.bf16 %v2674, %v2610
  %v2867 = vpack.c.bf16 %v2675, %v2611
  %v2868 = vpack.c.bf16 %v2676, %v2612
  %v2869 = vpack.c.bf16 %v2677, %v2613
  %v2870 = vpack.c.bf16 %v2678, %v2614
  %v2871 = vpack.c.bf16 %v2679, %v2615
  %v2872 = vpack.c.bf16 %v2680, %v2616
  %v2873 = vpack.c.bf16 %v2681, %v2617
  %v2874 = vpack.c.bf16 %v2682, %v2618
  %v2875 = vpack.c.bf16 %v2683, %v2619
  %v2876 = vpack.c.bf16 %v2684, %v2620
  %v2877 = vpack.c.bf16 %v2685, %v2621
  %v2878 = vpack.c.bf16 %v2686, %v2622
  %v2879 = vpack.c.bf16 %v2687, %v2623
  %v2880 = vpack.c.bf16 %v2688, %v2624
  %v2881 = vpack.c.bf16 %v2689, %v2625
  %v2882 = vpack.c.bf16 %v2690, %v2626
  %v2883 = vpack.c.bf16 %v2691, %v2627
  %v2884 = vpack.c.bf16 %v2692, %v2628
  %v2885 = vpack.c.bf16 %v2693, %v2629
  %v2886 = vpack.c.bf16 %v2694, %v2630
  %v2887 = vpack.c.bf16 %v2695, %v2631
  %v2888 = vpack.c.bf16 %v2696, %v2632
  %v2889 = vpack.c.bf16 %v2697, %v2633
  %v2890 = vpack.c.bf16 %v2698, %v2634
  %v2891 = vpack.c.bf16 %v2699, %v2635
  %v2892 = vpack.c.bf16 %v2700, %v2636
  %v2893 = vpack.c.bf16 %v2701, %v2637
  %v2894 = vpack.c.bf16 %v2702, %v2638
  %v2895 = vpack.c.bf16 %v2703, %v2639
  %v2896 = vpack.c.bf16 %v2704, %v2640
  %v2897 = vpack.c.bf16 %v2705, %v2641
  %v2898 = vpack.c.bf16 %v2706, %v2642
  %v2899 = vpack.c.bf16 %v2707, %v2643
  %v2900 = vpack.c.bf16 %v2708, %v2644
  %v2901 = vpack.c.bf16 %v2709, %v2645
  %v2902 = vpack.c.bf16 %v2710, %v2646
  %v2903 = vpack.c.bf16 %v2711, %v2647
  %v2904 = vpack.c.bf16 %v2712, %v2648
  %v2905 = vpack.c.bf16 %v2713, %v2649
  %v2906 = vpack.c.bf16 %v2714, %v2650
  %v2907 = vpack.c.bf16 %v2715, %v2651
  %v2908 = vpack.c.bf16 %v2716, %v2716
  %v2909 = vpack.c.bf16 %v2717, %v2717
  %v2910 = vpack.c.bf16 %v2718, %v2718
  %v2911 = vpack.c.bf16 %v2719, %v2719
  %v2912 = vpack.c.bf16 %v2720, %v2720
  %v2913 = vpack.c.bf16 %v2721, %v2721
  %v2914 = vpack.c.bf16 %v2722, %v2722
  %v2915 = vpack.c.bf16 %v2723, %v2723
  %v2916 = vpack.c.bf16 %v2724, %v2724
  %v2917 = vpack.c.bf16 %v2725, %v2725
  %v2918 = vpack.c.bf16 %v2726, %v2726
  %v2919 = vpack.c.bf16 %v2727, %v2727
  %v2920 = vpack.c.bf16 %v2728, %v2728
  %v2921 = vpack.c.bf16 %v2729, %v2729
  %v2922 = vpack.c.bf16 %v2730, %v2730
  %v2923 = vpack.c.bf16 %v2731, %v2731
  %v2924 = vpack.c.bf16 %v2732, %v2732
  %v2925 = vpack.c.bf16 %v2733, %v2733
  %v2926 = vpack.c.bf16 %v2734, %v2734
  %v2927 = vpack.c.bf16 %v2735, %v2735
  %v2928 = vpack.c.bf16 %v2736, %v2736
  %v2929 = vpack.c.bf16 %v2737, %v2737
  %v2930 = vpack.c.bf16 %v2738, %v2738
  %v2931 = vpack.c.bf16 %v2739, %v2739
  %v2932 = vpack.c.bf16 %v2740, %v2740
  %v2933 = vpack.c.bf16 %v2741, %v2741
  %v2934 = vpack.c.bf16 %v2742, %v2742
  %v2935 = vpack.c.bf16 %v2743, %v2743
  %v2936 = vpack.c.bf16 %v2744, %v2744
  %v2937 = vpack.c.bf16 %v2745, %v2745
  %v2938 = vpack.c.bf16 %v2746, %v2746
  %v2939 = vpack.c.bf16 %v2747, %v2747
  %v2940 = vpack.c.bf16 %v2748, %v2748
  %v2941 = vpack.c.bf16 %v2749, %v2749
  %v2942 = vpack.c.bf16 %v2750, %v2750
  %v2943 = vpack.c.bf16 %v2751, %v2751
  %v2944 = vpack.c.bf16 %v2752, %v2752
  %v2945 = vpack.c.bf16 %v2753, %v2753
  %v2946 = vpack.c.bf16 %v2754, %v2754
  %v2947 = vpack.c.bf16 %v2755, %v2755
  %v2948 = vpack.c.bf16 %v2756, %v2756
  %v2949 = vpack.c.bf16 %v2757, %v2757
  %v2950 = vpack.c.bf16 %v2758, %v2758
  %v2951 = vpack.c.bf16 %v2759, %v2759
  %v2952 = vpack.c.bf16 %v2760, %v2760
  %v2953 = vpack.c.bf16 %v2761, %v2761
  %v2954 = vpack.c.bf16 %v2762, %v2762
  %v2955 = vpack.c.bf16 %v2763, %v2763
  %v2956 = vpack.c.bf16 %v2764, %v2764
  %v2957 = vpack.c.bf16 %v2765, %v2765
  %v2958 = vpack.c.bf16 %v2766, %v2766
  %v2959 = vpack.c.bf16 %v2767, %v2767
  %v2960 = vpack.c.bf16 %v2768, %v2768
  %v2961 = vpack.c.bf16 %v2769, %v2769
  %v2962 = vpack.c.bf16 %v2770, %v2770
  %v2963 = vpack.c.bf16 %v2771, %v2771
  %v2964 = vpack.c.bf16 %v2772, %v2772
  %v2965 = vpack.c.bf16 %v2773, %v2773
  %v2966 = vpack.c.bf16 %v2774, %v2774
  %v2967 = vpack.c.bf16 %v2775, %v2775
  %v2968 = vpack.c.bf16 %v2776, %v2776
  %v2969 = vpack.c.bf16 %v2777, %v2777
  %v2970 = vpack.c.bf16 %v2778, %v2778
  %v2971 = vpack.c.bf16 %v2779, %v2779
  %v2972 = vld [vmem:[%s2] sm:$0xf]
  %v2973 = vld [vmem:[%s2 + $0x4] sm:$0xf]
  %v2976 = vunpack.c.l.b16 %v2972
  %v2977 = vunpack.c.l.b16 %v2973
  %v2978 = vpack.c.b16 %v2977, %v2976
  %vm2979 = vcmask 269312
  %v2981 = vsel %vm2979, %v2978, 0
  %vm2983 = vcmask 1040384
  %v2984 = vsel 0, 4294967295, 65535
  %v2985 = vsel %vm2983, %v2984, 0
  %v2987 = vand.u32 %v2908, %v2985
  %v2990 = vand.u32 %v2909, %v2985
  %v2993 = vand.u32 %v2910, %v2985
  %v2996 = vand.u32 %v2911, %v2985
  %v2999 = vand.u32 %v2912, %v2985
  %v3002 = vand.u32 %v2913, %v2985
  %v3005 = vand.u32 %v2914, %v2985
  %v3008 = vand.u32 %v2915, %v2985
  %v3011 = vand.u32 %v2916, %v2985
  %v3014 = vand.u32 %v2917, %v2985
  %v3017 = vand.u32 %v2918, %v2985
  %v3020 = vand.u32 %v2919, %v2985
  %v3023 = vand.u32 %v2920, %v2985
  %v3026 = vand.u32 %v2921, %v2985
  %v3029 = vand.u32 %v2922, %v2985
  %v3032 = vand.u32 %v2923, %v2985
  %v3035 = vand.u32 %v2924, %v2985
  %v3038 = vand.u32 %v2925, %v2985
  %v3041 = vand.u32 %v2926, %v2985
  %v3044 = vand.u32 %v2927, %v2985
  %v3047 = vand.u32 %v2928, %v2985
  %v3050 = vand.u32 %v2929, %v2985
  %v3053 = vand.u32 %v2930, %v2985
  %v3056 = vand.u32 %v2931, %v2985
  %v3059 = vand.u32 %v2932, %v2985
  %v3062 = vand.u32 %v2933, %v2985
  %v3065 = vand.u32 %v2934, %v2985
  %v3068 = vand.u32 %v2935, %v2985
  %v3071 = vand.u32 %v2936, %v2985
  %v3074 = vand.u32 %v2937, %v2985
  %v3077 = vand.u32 %v2938, %v2985
  %v3080 = vand.u32 %v2939, %v2985
  %v3083 = vand.u32 %v2940, %v2985
  %v3086 = vand.u32 %v2941, %v2985
  %v3089 = vand.u32 %v2942, %v2985
  %v3092 = vand.u32 %v2943, %v2985
  %v3095 = vand.u32 %v2944, %v2985
  %v3098 = vand.u32 %v2945, %v2985
  %v3101 = vand.u32 %v2946, %v2985
  %v3104 = vand.u32 %v2947, %v2985
  %v3107 = vand.u32 %v2948, %v2985
  %v3110 = vand.u32 %v2949, %v2985
  %v3113 = vand.u32 %v2950, %v2985
  %v3116 = vand.u32 %v2951, %v2985
  %v3119 = vand.u32 %v2952, %v2985
  %v3122 = vand.u32 %v2953, %v2985
  %v3125 = vand.u32 %v2954, %v2985
  %v3128 = vand.u32 %v2955, %v2985
  %v3131 = vand.u32 %v2956, %v2985
  %v3134 = vand.u32 %v2957, %v2985
  %v3137 = vand.u32 %v2958, %v2985
  %v3140 = vand.u32 %v2959, %v2985
  %v3143 = vand.u32 %v2960, %v2985
  %v3146 = vand.u32 %v2961, %v2985
  %v3149 = vand.u32 %v2962, %v2985
  %v3152 = vand.u32 %v2963, %v2985
  %v3155 = vand.u32 %v2964, %v2985
  %v3158 = vand.u32 %v2965, %v2985
  %v3161 = vand.u32 %v2966, %v2985
  %v3164 = vand.u32 %v2967, %v2985
  %v3167 = vand.u32 %v2968, %v2985
  %v3170 = vand.u32 %v2969, %v2985
  %v3173 = vand.u32 %v2970, %v2985
  %v3176 = vand.u32 %v2971, %v2985
  %3178 = vmatpush.bf16.msra.mxu0 0
  %3179 = vmatpush.bf16.msra.mxu0 0
  %3180 = vmatpush.bf16.msra.mxu0 0
  %3181 = vmatpush.bf16.msra.mxu0 0
  %3182 = vmatpush.bf16.msra.mxu0 0
  %3183 = vmatpush.bf16.msra.mxu0 %v2987
  %3184 = vmatpush.bf16.msra.mxu0 %v2844
  %3185 = vmatpush.bf16.msra.mxu0 %v2780
  %3186 = vmatmul.bf16.gmra.mxu0 %v2981
  %v3187 = vpop.f32.mrf.mxu0
  %v3188 = vadd.f32 0.0, %v3187
  %v3189 = vpop.f32.mrf.mxu0
  %v3190 = vadd.f32 0.0, %v3189
  %3191 = vdwg.mxu0
  %3192 = vmatpush.bf16.msra.mxu0 0
  %3193 = vmatpush.bf16.msra.mxu0 0
  %3194 = vmatpush.bf16.msra.mxu0 0
  %3195 = vmatpush.bf16.msra.mxu0 0
  %3196 = vmatpush.bf16.msra.mxu0 0
  %3197 = vmatpush.bf16.msra.mxu0 %v2990
  %3198 = vmatpush.bf16.msra.mxu0 %v2845
  %3199 = vmatpush.bf16.msra.mxu0 %v2781
  %3200 = vmatmul.bf16.gmra.mxu0 %v2981
  %v3201 = vpop.f32.mrf.mxu0
  %v3202 = vadd.f32 0.0, %v3201
  %v3203 = vpop.f32.mrf.mxu0
  %v3204 = vadd.f32 0.0, %v3203
  %3205 = vdwg.mxu0
  %3206 = vmatpush.bf16.msra.mxu0 0
  %3207 = vmatpush.bf16.msra.mxu0 0
  %3208 = vmatpush.bf16.msra.mxu0 0
  %3209 = vmatpush.bf16.msra.mxu0 0
  %3210 = vmatpush.bf16.msra.mxu0 0
  %3211 = vmatpush.bf16.msra.mxu0 %v2993
  %3212 = vmatpush.bf16.msra.mxu0 %v2846
  %3213 = vmatpush.bf16.msra.mxu0 %v2782
  %3214 = vmatmul.bf16.gmra.mxu0 %v2981
  %v3215 = vpop.f32.mrf.mxu0
  %v3216 = vadd.f32 0.0, %v3215
  %v3217 = vpop.f32.mrf.mxu0
  %v3218 = vadd.f32 0.0, %v3217
  %3219 = vdwg.mxu0
  %3220 = vmatpush.bf16.msra.mxu0 0
  %3221 = vmatpush.bf16.msra.mxu0 0
  %3222 = vmatpush.bf16.msra.mxu0 0
  %3223 = vmatpush.bf16.msra.mxu0 0
  %3224 = vmatpush.bf16.msra.mxu0 0
  %3225 = vmatpush.bf16.msra.mxu0 %v2996
  %3226 = vmatpush.bf16.msra.mxu0 %v2847
  %3227 = vmatpush.bf16.msra.mxu0 %v2783
  %3228 = vmatmul.bf16.gmra.mxu0 %v2981
  %v3229 = vpop.f32.mrf.mxu0
  %v3230 = vadd.f32 0.0, %v3229
  %v3231 = vpop.f32.mrf.mxu0
  %v3232 = vadd.f32 0.0, %v3231
  %3233 = vdwg.mxu0
  %3234 = vmatpush.bf16.msra.mxu0 0
  %3235 = vmatpush.bf16.msra.mxu0 0
  %3236 = vmatpush.bf16.msra.mxu0 0
  %3237 = vmatpush.bf16.msra.mxu0 0
  %3238 = vmatpush.bf16.msra.mxu0 0
  %3239 = vmatpush.bf16.msra.mxu0 %v2999
  %3240 = vmatpush.bf16.msra.mxu0 %v2848
  %3241 = vmatpush.bf16.msra.mxu0 %v2784
  %3242 = vmatmul.bf16.gmra.mxu0 %v2981
  %v3243 = vpop.f32.mrf.mxu0
  %v3244 = vadd.f32 0.0, %v3243
  %v3245 = vpop.f32.mrf.mxu0
  %v3246 = vadd.f32 0.0, %v3245
  %3247 = vdwg.mxu0
  %3248 = vmatpush.bf16.msra.mxu0 0
  %3249 = vmatpush.bf16.msra.mxu0 0
  %3250 = vmatpush.bf16.msra.mxu0 0
  %3251 = vmatpush.bf16.msra.mxu0 0
  %3252 = vmatpush.bf16.msra.mxu0 0
  %3253 = vmatpush.bf16.msra.mxu0 %v3002
  %3254 = vmatpush.bf16.msra.mxu0 %v2849
  %3255 = vmatpush.bf16.msra.mxu0 %v2785
  %3256 = vmatmul.bf16.gmra.mxu0 %v2981
  %v3257 = vpop.f32.mrf.mxu0
  %v3258 = vadd.f32 0.0, %v3257
  %v3259 = vpop.f32.mrf.mxu0
  %v3260 = vadd.f32 0.0, %v3259
  %3261 = vdwg.mxu0
  %3262 = vmatpush.bf16.msra.mxu0 0
  %3263 = vmatpush.bf16.msra.mxu0 0
  %3264 = vmatpush.bf16.msra.mxu0 0
  %3265 = vmatpush.bf16.msra.mxu0 0
  %3266 = vmatpush.bf16.msra.mxu0 0
  %3267 = vmatpush.bf16.msra.mxu0 %v3005
  %3268 = vmatpush.bf16.msra.mxu0 %v2850
  %3269 = vmatpush.bf16.msra.mxu0 %v2786
  %3270 = vmatmul.bf16.gmra.mxu0 %v2981
  %v3271 = vpop.f32.mrf.mxu0
  %v3272 = vadd.f32 0.0, %v3271
  %v3273 = vpop.f32.mrf.mxu0
  %v3274 = vadd.f32 0.0, %v3273
  %3275 = vdwg.mxu0
  %3276 = vmatpush.bf16.msra.mxu0 0
  %3277 = vmatpush.bf16.msra.mxu0 0
  %3278 = vmatpush.bf16.msra.mxu0 0
  %3279 = vmatpush.bf16.msra.mxu0 0
  %3280 = vmatpush.bf16.msra.mxu0 0
  %3281 = vmatpush.bf16.msra.mxu0 %v3008
  %3282 = vmatpush.bf16.msra.mxu0 %v2851
  %3283 = vmatpush.bf16.msra.mxu0 %v2787
  %3284 = vmatmul.bf16.gmra.mxu0 %v2981
  %v3285 = vpop.f32.mrf.mxu0
  %v3286 = vadd.f32 0.0, %v3285
  %v3287 = vpop.f32.mrf.mxu0
  %v3288 = vadd.f32 0.0, %v3287
  %3289 = vdwg.mxu0
  %3290 = vmatpush.bf16.msra.mxu0 0
  %3291 = vmatpush.bf16.msra.mxu0 0
  %3292 = vmatpush.bf16.msra.mxu0 0
  %3293 = vmatpush.bf16.msra.mxu0 0
  %3294 = vmatpush.bf16.msra.mxu0 0
  %3295 = vmatpush.bf16.msra.mxu0 %v3011
  %3296 = vmatpush.bf16.msra.mxu0 %v2852
  %3297 = vmatpush.bf16.msra.mxu0 %v2788
  %3298 = vmatmul.bf16.gmra.mxu0 %v2981
  %v3299 = vpop.f32.mrf.mxu0
  %v3300 = vadd.f32 0.0, %v3299
  %v3301 = vpop.f32.mrf.mxu0
  %v3302 = vadd.f32 0.0, %v3301
  %3303 = vdwg.mxu0
  %3304 = vmatpush.bf16.msra.mxu0 0
  %3305 = vmatpush.bf16.msra.mxu0 0
  %3306 = vmatpush.bf16.msra.mxu0 0
  %3307 = vmatpush.bf16.msra.mxu0 0
  %3308 = vmatpush.bf16.msra.mxu0 0
  %3309 = vmatpush.bf16.msra.mxu0 %v3014
  %3310 = vmatpush.bf16.msra.mxu0 %v2853
  %3311 = vmatpush.bf16.msra.mxu0 %v2789
  %3312 = vmatmul.bf16.gmra.mxu0 %v2981
  %v3313 = vpop.f32.mrf.mxu0
  %v3314 = vadd.f32 0.0, %v3313
  %v3315 = vpop.f32.mrf.mxu0
  %v3316 = vadd.f32 0.0, %v3315
  %3317 = vdwg.mxu0
  %3318 = vmatpush.bf16.msra.mxu0 0
  %3319 = vmatpush.bf16.msra.mxu0 0
  %3320 = vmatpush.bf16.msra.mxu0 0
  %3321 = vmatpush.bf16.msra.mxu0 0
  %3322 = vmatpush.bf16.msra.mxu0 0
  %3323 = vmatpush.bf16.msra.mxu0 %v3017
  %3324 = vmatpush.bf16.msra.mxu0 %v2854
  %3325 = vmatpush.bf16.msra.mxu0 %v2790
  %3326 = vmatmul.bf16.gmra.mxu0 %v2981
  %v3327 = vpop.f32.mrf.mxu0
  %v3328 = vadd.f32 0.0, %v3327
  %v3329 = vpop.f32.mrf.mxu0
  %v3330 = vadd.f32 0.0, %v3329
  %3331 = vdwg.mxu0
  %3332 = vmatpush.bf16.msra.mxu0 0
  %3333 = vmatpush.bf16.msra.mxu0 0
  %3334 = vmatpush.bf16.msra.mxu0 0
  %3335 = vmatpush.bf16.msra.mxu0 0
  %3336 = vmatpush.bf16.msra.mxu0 0
  %3337 = vmatpush.bf16.msra.mxu0 %v3020
  %3338 = vmatpush.bf16.msra.mxu0 %v2855
  %3339 = vmatpush.bf16.msra.mxu0 %v2791
  %3340 = vmatmul.bf16.gmra.mxu0 %v2981
  %v3341 = vpop.f32.mrf.mxu0
  %v3342 = vadd.f32 0.0, %v3341
  %v3343 = vpop.f32.mrf.mxu0
  %v3344 = vadd.f32 0.0, %v3343
  %3345 = vdwg.mxu0
  %3346 = vmatpush.bf16.msra.mxu0 0
  %3347 = vmatpush.bf16.msra.mxu0 0
  %3348 = vmatpush.bf16.msra.mxu0 0
  %3349 = vmatpush.bf16.msra.mxu0 0
  %3350 = vmatpush.bf16.msra.mxu0 0
  %3351 = vmatpush.bf16.msra.mxu0 %v3023
  %3352 = vmatpush.bf16.msra.mxu0 %v2856
  %3353 = vmatpush.bf16.msra.mxu0 %v2792
  %3354 = vmatmul.bf16.gmra.mxu0 %v2981
  %v3355 = vpop.f32.mrf.mxu0
  %v3356 = vadd.f32 0.0, %v3355
  %v3357 = vpop.f32.mrf.mxu0
  %v3358 = vadd.f32 0.0, %v3357
  %3359 = vdwg.mxu0
  %3360 = vmatpush.bf16.msra.mxu0 0
  %3361 = vmatpush.bf16.msra.mxu0 0
  %3362 = vmatpush.bf16.msra.mxu0 0
  %3363 = vmatpush.bf16.msra.mxu0 0
  %3364 = vmatpush.bf16.msra.mxu0 0
  %3365 = vmatpush.bf16.msra.mxu0 %v3026
  %3366 = vmatpush.bf16.msra.mxu0 %v2857
  %3367 = vmatpush.bf16.msra.mxu0 %v2793
  %3368 = vmatmul.bf16.gmra.mxu0 %v2981
  %v3369 = vpop.f32.mrf.mxu0
  %v3370 = vadd.f32 0.0, %v3369
  %v3371 = vpop.f32.mrf.mxu0
  %v3372 = vadd.f32 0.0, %v3371
  %3373 = vdwg.mxu0
  %3374 = vmatpush.bf16.msra.mxu0 0
  %3375 = vmatpush.bf16.msra.mxu0 0
  %3376 = vmatpush.bf16.msra.mxu0 0
  %3377 = vmatpush.bf16.msra.mxu0 0
  %3378 = vmatpush.bf16.msra.mxu0 0
  %3379 = vmatpush.bf16.msra.mxu0 %v3029
  %3380 = vmatpush.bf16.msra.mxu0 %v2858
  %3381 = vmatpush.bf16.msra.mxu0 %v2794
  %3382 = vmatmul.bf16.gmra.mxu0 %v2981
  %v3383 = vpop.f32.mrf.mxu0
  %v3384 = vadd.f32 0.0, %v3383
  %v3385 = vpop.f32.mrf.mxu0
  %v3386 = vadd.f32 0.0, %v3385
  %3387 = vdwg.mxu0
  %3388 = vmatpush.bf16.msra.mxu0 0
  %3389 = vmatpush.bf16.msra.mxu0 0
  %3390 = vmatpush.bf16.msra.mxu0 0
  %3391 = vmatpush.bf16.msra.mxu0 0
  %3392 = vmatpush.bf16.msra.mxu0 0
  %3393 = vmatpush.bf16.msra.mxu0 %v3032
  %3394 = vmatpush.bf16.msra.mxu0 %v2859
  %3395 = vmatpush.bf16.msra.mxu0 %v2795
  %3396 = vmatmul.bf16.gmra.mxu0 %v2981
  %v3397 = vpop.f32.mrf.mxu0
  %v3398 = vadd.f32 0.0, %v3397
  %v3399 = vpop.f32.mrf.mxu0
  %v3400 = vadd.f32 0.0, %v3399
  %3401 = vdwg.mxu0
  %3402 = vmatpush.bf16.msra.mxu0 0
  %3403 = vmatpush.bf16.msra.mxu0 0
  %3404 = vmatpush.bf16.msra.mxu0 0
  %3405 = vmatpush.bf16.msra.mxu0 0
  %3406 = vmatpush.bf16.msra.mxu0 0
  %3407 = vmatpush.bf16.msra.mxu0 %v3035
  %3408 = vmatpush.bf16.msra.mxu0 %v2860
  %3409 = vmatpush.bf16.msra.mxu0 %v2796
  %3410 = vmatmul.bf16.gmra.mxu0 %v2981
  %v3411 = vpop.f32.mrf.mxu0
  %v3412 = vadd.f32 0.0, %v3411
  %v3413 = vpop.f32.mrf.mxu0
  %v3414 = vadd.f32 0.0, %v3413
  %3415 = vdwg.mxu0
  %3416 = vmatpush.bf16.msra.mxu0 0
  %3417 = vmatpush.bf16.msra.mxu0 0
  %3418 = vmatpush.bf16.msra.mxu0 0
  %3419 = vmatpush.bf16.msra.mxu0 0
  %3420 = vmatpush.bf16.msra.mxu0 0
  %3421 = vmatpush.bf16.msra.mxu0 %v3038
  %3422 = vmatpush.bf16.msra.mxu0 %v2861
  %3423 = vmatpush.bf16.msra.mxu0 %v2797
  %3424 = vmatmul.bf16.gmra.mxu0 %v2981
  %v3425 = vpop.f32.mrf.mxu0
  %v3426 = vadd.f32 0.0, %v3425
  %v3427 = vpop.f32.mrf.mxu0
  %v3428 = vadd.f32 0.0, %v3427
  %3429 = vdwg.mxu0
  %3430 = vmatpush.bf16.msra.mxu0 0
  %3431 = vmatpush.bf16.msra.mxu0 0
  %3432 = vmatpush.bf16.msra.mxu0 0
  %3433 = vmatpush.bf16.msra.mxu0 0
  %3434 = vmatpush.bf16.msra.mxu0 0
  %3435 = vmatpush.bf16.msra.mxu0 %v3041
  %3436 = vmatpush.bf16.msra.mxu0 %v2862
  %3437 = vmatpush.bf16.msra.mxu0 %v2798
  %3438 = vmatmul.bf16.gmra.mxu0 %v2981
  %v3439 = vpop.f32.mrf.mxu0
  %v3440 = vadd.f32 0.0, %v3439
  %v3441 = vpop.f32.mrf.mxu0
  %v3442 = vadd.f32 0.0, %v3441
  %3443 = vdwg.mxu0
  %3444 = vmatpush.bf16.msra.mxu0 0
  %3445 = vmatpush.bf16.msra.mxu0 0
  %3446 = vmatpush.bf16.msra.mxu0 0
  %3447 = vmatpush.bf16.msra.mxu0 0
  %3448 = vmatpush.bf16.msra.mxu0 0
  %3449 = vmatpush.bf16.msra.mxu0 %v3044
  %3450 = vmatpush.bf16.msra.mxu0 %v2863
  %3451 = vmatpush.bf16.msra.mxu0 %v2799
  %3452 = vmatmul.bf16.gmra.mxu0 %v2981
  %v3453 = vpop.f32.mrf.mxu0
  %v3454 = vadd.f32 0.0, %v3453
  %v3455 = vpop.f32.mrf.mxu0
  %v3456 = vadd.f32 0.0, %v3455
  %3457 = vdwg.mxu0
  %3458 = vmatpush.bf16.msra.mxu0 0
  %3459 = vmatpush.bf16.msra.mxu0 0
  %3460 = vmatpush.bf16.msra.mxu0 0
  %3461 = vmatpush.bf16.msra.mxu0 0
  %3462 = vmatpush.bf16.msra.mxu0 0
  %3463 = vmatpush.bf16.msra.mxu0 %v3047
  %3464 = vmatpush.bf16.msra.mxu0 %v2864
  %3465 = vmatpush.bf16.msra.mxu0 %v2800
  %3466 = vmatmul.bf16.gmra.mxu0 %v2981
  %v3467 = vpop.f32.mrf.mxu0
  %v3468 = vadd.f32 0.0, %v3467
  %v3469 = vpop.f32.mrf.mxu0
  %v3470 = vadd.f32 0.0, %v3469
  %3471 = vdwg.mxu0
  %3472 = vmatpush.bf16.msra.mxu0 0
  %3473 = vmatpush.bf16.msra.mxu0 0
  %3474 = vmatpush.bf16.msra.mxu0 0
  %3475 = vmatpush.bf16.msra.mxu0 0
  %3476 = vmatpush.bf16.msra.mxu0 0
  %3477 = vmatpush.bf16.msra.mxu0 %v3050
  %3478 = vmatpush.bf16.msra.mxu0 %v2865
  %3479 = vmatpush.bf16.msra.mxu0 %v2801
  %3480 = vmatmul.bf16.gmra.mxu0 %v2981
  %v3481 = vpop.f32.mrf.mxu0
  %v3482 = vadd.f32 0.0, %v3481
  %v3483 = vpop.f32.mrf.mxu0
  %v3484 = vadd.f32 0.0, %v3483
  %3485 = vdwg.mxu0
  %3486 = vmatpush.bf16.msra.mxu0 0
  %3487 = vmatpush.bf16.msra.mxu0 0
  %3488 = vmatpush.bf16.msra.mxu0 0
  %3489 = vmatpush.bf16.msra.mxu0 0
  %3490 = vmatpush.bf16.msra.mxu0 0
  %3491 = vmatpush.bf16.msra.mxu0 %v3053
  %3492 = vmatpush.bf16.msra.mxu0 %v2866
  %3493 = vmatpush.bf16.msra.mxu0 %v2802
  %3494 = vmatmul.bf16.gmra.mxu0 %v2981
  %v3495 = vpop.f32.mrf.mxu0
  %v3496 = vadd.f32 0.0, %v3495
  %v3497 = vpop.f32.mrf.mxu0
  %v3498 = vadd.f32 0.0, %v3497
  %3499 = vdwg.mxu0
  %3500 = vmatpush.bf16.msra.mxu0 0
  %3501 = vmatpush.bf16.msra.mxu0 0
  %3502 = vmatpush.bf16.msra.mxu0 0
  %3503 = vmatpush.bf16.msra.mxu0 0
  %3504 = vmatpush.bf16.msra.mxu0 0
  %3505 = vmatpush.bf16.msra.mxu0 %v3056
  %3506 = vmatpush.bf16.msra.mxu0 %v2867
  %3507 = vmatpush.bf16.msra.mxu0 %v2803
  %3508 = vmatmul.bf16.gmra.mxu0 %v2981
  %v3509 = vpop.f32.mrf.mxu0
  %v3510 = vadd.f32 0.0, %v3509
  %v3511 = vpop.f32.mrf.mxu0
  %v3512 = vadd.f32 0.0, %v3511
  %3513 = vdwg.mxu0
  %3514 = vmatpush.bf16.msra.mxu0 0
  %3515 = vmatpush.bf16.msra.mxu0 0
  %3516 = vmatpush.bf16.msra.mxu0 0
  %3517 = vmatpush.bf16.msra.mxu0 0
  %3518 = vmatpush.bf16.msra.mxu0 0
  %3519 = vmatpush.bf16.msra.mxu0 %v3059
  %3520 = vmatpush.bf16.msra.mxu0 %v2868
  %3521 = vmatpush.bf16.msra.mxu0 %v2804
  %3522 = vmatmul.bf16.gmra.mxu0 %v2981
  %v3523 = vpop.f32.mrf.mxu0
  %v3524 = vadd.f32 0.0, %v3523
  %v3525 = vpop.f32.mrf.mxu0
  %v3526 = vadd.f32 0.0, %v3525
  %3527 = vdwg.mxu0
  %3528 = vmatpush.bf16.msra.mxu0 0
  %3529 = vmatpush.bf16.msra.mxu0 0
  %3530 = vmatpush.bf16.msra.mxu0 0
  %3531 = vmatpush.bf16.msra.mxu0 0
  %3532 = vmatpush.bf16.msra.mxu0 0
  %3533 = vmatpush.bf16.msra.mxu0 %v3062
  %3534 = vmatpush.bf16.msra.mxu0 %v2869
  %3535 = vmatpush.bf16.msra.mxu0 %v2805
  %3536 = vmatmul.bf16.gmra.mxu0 %v2981
  %v3537 = vpop.f32.mrf.mxu0
  %v3538 = vadd.f32 0.0, %v3537
  %v3539 = vpop.f32.mrf.mxu0
  %v3540 = vadd.f32 0.0, %v3539
  %3541 = vdwg.mxu0
  %3542 = vmatpush.bf16.msra.mxu0 0
  %3543 = vmatpush.bf16.msra.mxu0 0
  %3544 = vmatpush.bf16.msra.mxu0 0
  %3545 = vmatpush.bf16.msra.mxu0 0
  %3546 = vmatpush.bf16.msra.mxu0 0
  %3547 = vmatpush.bf16.msra.mxu0 %v3065
  %3548 = vmatpush.bf16.msra.mxu0 %v2870
  %3549 = vmatpush.bf16.msra.mxu0 %v2806
  %3550 = vmatmul.bf16.gmra.mxu0 %v2981
  %v3551 = vpop.f32.mrf.mxu0
  %v3552 = vadd.f32 0.0, %v3551
  %v3553 = vpop.f32.mrf.mxu0
  %v3554 = vadd.f32 0.0, %v3553
  %3555 = vdwg.mxu0
  %3556 = vmatpush.bf16.msra.mxu0 0
  %3557 = vmatpush.bf16.msra.mxu0 0
  %3558 = vmatpush.bf16.msra.mxu0 0
  %3559 = vmatpush.bf16.msra.mxu0 0
  %3560 = vmatpush.bf16.msra.mxu0 0
  %3561 = vmatpush.bf16.msra.mxu0 %v3068
  %3562 = vmatpush.bf16.msra.mxu0 %v2871
  %3563 = vmatpush.bf16.msra.mxu0 %v2807
  %3564 = vmatmul.bf16.gmra.mxu0 %v2981
  %v3565 = vpop.f32.mrf.mxu0
  %v3566 = vadd.f32 0.0, %v3565
  %v3567 = vpop.f32.mrf.mxu0
  %v3568 = vadd.f32 0.0, %v3567
  %3569 = vdwg.mxu0
  %3570 = vmatpush.bf16.msra.mxu0 0
  %3571 = vmatpush.bf16.msra.mxu0 0
  %3572 = vmatpush.bf16.msra.mxu0 0
  %3573 = vmatpush.bf16.msra.mxu0 0
  %3574 = vmatpush.bf16.msra.mxu0 0
  %3575 = vmatpush.bf16.msra.mxu0 %v3071
  %3576 = vmatpush.bf16.msra.mxu0 %v2872
  %3577 = vmatpush.bf16.msra.mxu0 %v2808
  %3578 = vmatmul.bf16.gmra.mxu0 %v2981
  %v3579 = vpop.f32.mrf.mxu0
  %v3580 = vadd.f32 0.0, %v3579
  %v3581 = vpop.f32.mrf.mxu0
  %v3582 = vadd.f32 0.0, %v3581
  %3583 = vdwg.mxu0
  %3584 = vmatpush.bf16.msra.mxu0 0
  %3585 = vmatpush.bf16.msra.mxu0 0
  %3586 = vmatpush.bf16.msra.mxu0 0
  %3587 = vmatpush.bf16.msra.mxu0 0
  %3588 = vmatpush.bf16.msra.mxu0 0
  %3589 = vmatpush.bf16.msra.mxu0 %v3074
  %3590 = vmatpush.bf16.msra.mxu0 %v2873
  %3591 = vmatpush.bf16.msra.mxu0 %v2809
  %3592 = vmatmul.bf16.gmra.mxu0 %v2981
  %v3593 = vpop.f32.mrf.mxu0
  %v3594 = vadd.f32 0.0, %v3593
  %v3595 = vpop.f32.mrf.mxu0
  %v3596 = vadd.f32 0.0, %v3595
  %3597 = vdwg.mxu0
  %3598 = vmatpush.bf16.msra.mxu0 0
  %3599 = vmatpush.bf16.msra.mxu0 0
  %3600 = vmatpush.bf16.msra.mxu0 0
  %3601 = vmatpush.bf16.msra.mxu0 0
  %3602 = vmatpush.bf16.msra.mxu0 0
  %3603 = vmatpush.bf16.msra.mxu0 %v3077
  %3604 = vmatpush.bf16.msra.mxu0 %v2874
  %3605 = vmatpush.bf16.msra.mxu0 %v2810
  %3606 = vmatmul.bf16.gmra.mxu0 %v2981
  %v3607 = vpop.f32.mrf.mxu0
  %v3608 = vadd.f32 0.0, %v3607
  %v3609 = vpop.f32.mrf.mxu0
  %v3610 = vadd.f32 0.0, %v3609
  %3611 = vdwg.mxu0
  %3612 = vmatpush.bf16.msra.mxu0 0
  %3613 = vmatpush.bf16.msra.mxu0 0
  %3614 = vmatpush.bf16.msra.mxu0 0
  %3615 = vmatpush.bf16.msra.mxu0 0
  %3616 = vmatpush.bf16.msra.mxu0 0
  %3617 = vmatpush.bf16.msra.mxu0 %v3080
  %3618 = vmatpush.bf16.msra.mxu0 %v2875
  %3619 = vmatpush.bf16.msra.mxu0 %v2811
  %3620 = vmatmul.bf16.gmra.mxu0 %v2981
  %v3621 = vpop.f32.mrf.mxu0
  %v3622 = vadd.f32 0.0, %v3621
  %v3623 = vpop.f32.mrf.mxu0
  %v3624 = vadd.f32 0.0, %v3623
  %3625 = vdwg.mxu0
  %3626 = vmatpush.bf16.msra.mxu0 0
  %3627 = vmatpush.bf16.msra.mxu0 0
  %3628 = vmatpush.bf16.msra.mxu0 0
  %3629 = vmatpush.bf16.msra.mxu0 0
  %3630 = vmatpush.bf16.msra.mxu0 0
  %3631 = vmatpush.bf16.msra.mxu0 %v3083
  %3632 = vmatpush.bf16.msra.mxu0 %v2876
  %3633 = vmatpush.bf16.msra.mxu0 %v2812
  %3634 = vmatmul.bf16.gmra.mxu0 %v2981
  %v3635 = vpop.f32.mrf.mxu0
  %v3636 = vadd.f32 0.0, %v3635
  %v3637 = vpop.f32.mrf.mxu0
  %v3638 = vadd.f32 0.0, %v3637
  %3639 = vdwg.mxu0
  %3640 = vmatpush.bf16.msra.mxu0 0
  %3641 = vmatpush.bf16.msra.mxu0 0
  %3642 = vmatpush.bf16.msra.mxu0 0
  %3643 = vmatpush.bf16.msra.mxu0 0
  %3644 = vmatpush.bf16.msra.mxu0 0
  %3645 = vmatpush.bf16.msra.mxu0 %v3086
  %3646 = vmatpush.bf16.msra.mxu0 %v2877
  %3647 = vmatpush.bf16.msra.mxu0 %v2813
  %3648 = vmatmul.bf16.gmra.mxu0 %v2981
  %v3649 = vpop.f32.mrf.mxu0
  %v3650 = vadd.f32 0.0, %v3649
  %v3651 = vpop.f32.mrf.mxu0
  %v3652 = vadd.f32 0.0, %v3651
  %3653 = vdwg.mxu0
  %3654 = vmatpush.bf16.msra.mxu0 0
  %3655 = vmatpush.bf16.msra.mxu0 0
  %3656 = vmatpush.bf16.msra.mxu0 0
  %3657 = vmatpush.bf16.msra.mxu0 0
  %3658 = vmatpush.bf16.msra.mxu0 0
  %3659 = vmatpush.bf16.msra.mxu0 %v3089
  %3660 = vmatpush.bf16.msra.mxu0 %v2878
  %3661 = vmatpush.bf16.msra.mxu0 %v2814
  %3662 = vmatmul.bf16.gmra.mxu0 %v2981
  %v3663 = vpop.f32.mrf.mxu0
  %v3664 = vadd.f32 0.0, %v3663
  %v3665 = vpop.f32.mrf.mxu0
  %v3666 = vadd.f32 0.0, %v3665
  %3667 = vdwg.mxu0
  %3668 = vmatpush.bf16.msra.mxu0 0
  %3669 = vmatpush.bf16.msra.mxu0 0
  %3670 = vmatpush.bf16.msra.mxu0 0
  %3671 = vmatpush.bf16.msra.mxu0 0
  %3672 = vmatpush.bf16.msra.mxu0 0
  %3673 = vmatpush.bf16.msra.mxu0 %v3092
  %3674 = vmatpush.bf16.msra.mxu0 %v2879
  %3675 = vmatpush.bf16.msra.mxu0 %v2815
  %3676 = vmatmul.bf16.gmra.mxu0 %v2981
  %v3677 = vpop.f32.mrf.mxu0
  %v3678 = vadd.f32 0.0, %v3677
  %v3679 = vpop.f32.mrf.mxu0
  %v3680 = vadd.f32 0.0, %v3679
  %3681 = vdwg.mxu0
  %3682 = vmatpush.bf16.msra.mxu0 0
  %3683 = vmatpush.bf16.msra.mxu0 0
  %3684 = vmatpush.bf16.msra.mxu0 0
  %3685 = vmatpush.bf16.msra.mxu0 0
  %3686 = vmatpush.bf16.msra.mxu0 0
  %3687 = vmatpush.bf16.msra.mxu0 %v3095
  %3688 = vmatpush.bf16.msra.mxu0 %v2880
  %3689 = vmatpush.bf16.msra.mxu0 %v2816
  %3690 = vmatmul.bf16.gmra.mxu0 %v2981
  %v3691 = vpop.f32.mrf.mxu0
  %v3692 = vadd.f32 0.0, %v3691
  %v3693 = vpop.f32.mrf.mxu0
  %v3694 = vadd.f32 0.0, %v3693
  %3695 = vdwg.mxu0
  %3696 = vmatpush.bf16.msra.mxu0 0
  %3697 = vmatpush.bf16.msra.mxu0 0
  %3698 = vmatpush.bf16.msra.mxu0 0
  %3699 = vmatpush.bf16.msra.mxu0 0
  %3700 = vmatpush.bf16.msra.mxu0 0
  %3701 = vmatpush.bf16.msra.mxu0 %v3098
  %3702 = vmatpush.bf16.msra.mxu0 %v2881
  %3703 = vmatpush.bf16.msra.mxu0 %v2817
  %3704 = vmatmul.bf16.gmra.mxu0 %v2981
  %v3705 = vpop.f32.mrf.mxu0
  %v3706 = vadd.f32 0.0, %v3705
  %v3707 = vpop.f32.mrf.mxu0
  %v3708 = vadd.f32 0.0, %v3707
  %3709 = vdwg.mxu0
  %3710 = vmatpush.bf16.msra.mxu0 0
  %3711 = vmatpush.bf16.msra.mxu0 0
  %3712 = vmatpush.bf16.msra.mxu0 0
  %3713 = vmatpush.bf16.msra.mxu0 0
  %3714 = vmatpush.bf16.msra.mxu0 0
  %3715 = vmatpush.bf16.msra.mxu0 %v3101
  %3716 = vmatpush.bf16.msra.mxu0 %v2882
  %3717 = vmatpush.bf16.msra.mxu0 %v2818
  %3718 = vmatmul.bf16.gmra.mxu0 %v2981
  %v3719 = vpop.f32.mrf.mxu0
  %v3720 = vadd.f32 0.0, %v3719
  %v3721 = vpop.f32.mrf.mxu0
  %v3722 = vadd.f32 0.0, %v3721
  %3723 = vdwg.mxu0
  %3724 = vmatpush.bf16.msra.mxu0 0
  %3725 = vmatpush.bf16.msra.mxu0 0
  %3726 = vmatpush.bf16.msra.mxu0 0
  %3727 = vmatpush.bf16.msra.mxu0 0
  %3728 = vmatpush.bf16.msra.mxu0 0
  %3729 = vmatpush.bf16.msra.mxu0 %v3104
  %3730 = vmatpush.bf16.msra.mxu0 %v2883
  %3731 = vmatpush.bf16.msra.mxu0 %v2819
  %3732 = vmatmul.bf16.gmra.mxu0 %v2981
  %v3733 = vpop.f32.mrf.mxu0
  %v3734 = vadd.f32 0.0, %v3733
  %v3735 = vpop.f32.mrf.mxu0
  %v3736 = vadd.f32 0.0, %v3735
  %3737 = vdwg.mxu0
  %3738 = vmatpush.bf16.msra.mxu0 0
  %3739 = vmatpush.bf16.msra.mxu0 0
  %3740 = vmatpush.bf16.msra.mxu0 0
  %3741 = vmatpush.bf16.msra.mxu0 0
  %3742 = vmatpush.bf16.msra.mxu0 0
  %3743 = vmatpush.bf16.msra.mxu0 %v3107
  %3744 = vmatpush.bf16.msra.mxu0 %v2884
  %3745 = vmatpush.bf16.msra.mxu0 %v2820
  %3746 = vmatmul.bf16.gmra.mxu0 %v2981
  %v3747 = vpop.f32.mrf.mxu0
  %v3748 = vadd.f32 0.0, %v3747
  %v3749 = vpop.f32.mrf.mxu0
  %v3750 = vadd.f32 0.0, %v3749
  %3751 = vdwg.mxu0
  %3752 = vmatpush.bf16.msra.mxu0 0
  %3753 = vmatpush.bf16.msra.mxu0 0
  %3754 = vmatpush.bf16.msra.mxu0 0
  %3755 = vmatpush.bf16.msra.mxu0 0
  %3756 = vmatpush.bf16.msra.mxu0 0
  %3757 = vmatpush.bf16.msra.mxu0 %v3110
  %3758 = vmatpush.bf16.msra.mxu0 %v2885
  %3759 = vmatpush.bf16.msra.mxu0 %v2821
  %3760 = vmatmul.bf16.gmra.mxu0 %v2981
  %v3761 = vpop.f32.mrf.mxu0
  %v3762 = vadd.f32 0.0, %v3761
  %v3763 = vpop.f32.mrf.mxu0
  %v3764 = vadd.f32 0.0, %v3763
  %3765 = vdwg.mxu0
  %3766 = vmatpush.bf16.msra.mxu0 0
  %3767 = vmatpush.bf16.msra.mxu0 0
  %3768 = vmatpush.bf16.msra.mxu0 0
  %3769 = vmatpush.bf16.msra.mxu0 0
  %3770 = vmatpush.bf16.msra.mxu0 0
  %3771 = vmatpush.bf16.msra.mxu0 %v3113
  %3772 = vmatpush.bf16.msra.mxu0 %v2886
  %3773 = vmatpush.bf16.msra.mxu0 %v2822
  %3774 = vmatmul.bf16.gmra.mxu0 %v2981
  %v3775 = vpop.f32.mrf.mxu0
  %v3776 = vadd.f32 0.0, %v3775
  %v3777 = vpop.f32.mrf.mxu0
  %v3778 = vadd.f32 0.0, %v3777
  %3779 = vdwg.mxu0
  %3780 = vmatpush.bf16.msra.mxu0 0
  %3781 = vmatpush.bf16.msra.mxu0 0
  %3782 = vmatpush.bf16.msra.mxu0 0
  %3783 = vmatpush.bf16.msra.mxu0 0
  %3784 = vmatpush.bf16.msra.mxu0 0
  %3785 = vmatpush.bf16.msra.mxu0 %v3116
  %3786 = vmatpush.bf16.msra.mxu0 %v2887
  %3787 = vmatpush.bf16.msra.mxu0 %v2823
  %3788 = vmatmul.bf16.gmra.mxu0 %v2981
  %v3789 = vpop.f32.mrf.mxu0
  %v3790 = vadd.f32 0.0, %v3789
  %v3791 = vpop.f32.mrf.mxu0
  %v3792 = vadd.f32 0.0, %v3791
  %3793 = vdwg.mxu0
  %3794 = vmatpush.bf16.msra.mxu0 0
  %3795 = vmatpush.bf16.msra.mxu0 0
  %3796 = vmatpush.bf16.msra.mxu0 0
  %3797 = vmatpush.bf16.msra.mxu0 0
  %3798 = vmatpush.bf16.msra.mxu0 0
  %3799 = vmatpush.bf16.msra.mxu0 %v3119
  %3800 = vmatpush.bf16.msra.mxu0 %v2888
  %3801 = vmatpush.bf16.msra.mxu0 %v2824
  %3802 = vmatmul.bf16.gmra.mxu0 %v2981
  %v3803 = vpop.f32.mrf.mxu0
  %v3804 = vadd.f32 0.0, %v3803
  %v3805 = vpop.f32.mrf.mxu0
  %v3806 = vadd.f32 0.0, %v3805
  %3807 = vdwg.mxu0
  %3808 = vmatpush.bf16.msra.mxu0 0
  %3809 = vmatpush.bf16.msra.mxu0 0
  %3810 = vmatpush.bf16.msra.mxu0 0
  %3811 = vmatpush.bf16.msra.mxu0 0
  %3812 = vmatpush.bf16.msra.mxu0 0
  %3813 = vmatpush.bf16.msra.mxu0 %v3122
  %3814 = vmatpush.bf16.msra.mxu0 %v2889
  %3815 = vmatpush.bf16.msra.mxu0 %v2825
  %3816 = vmatmul.bf16.gmra.mxu0 %v2981
  %v3817 = vpop.f32.mrf.mxu0
  %v3818 = vadd.f32 0.0, %v3817
  %v3819 = vpop.f32.mrf.mxu0
  %v3820 = vadd.f32 0.0, %v3819
  %3821 = vdwg.mxu0
  %3822 = vmatpush.bf16.msra.mxu0 0
  %3823 = vmatpush.bf16.msra.mxu0 0
  %3824 = vmatpush.bf16.msra.mxu0 0
  %3825 = vmatpush.bf16.msra.mxu0 0
  %3826 = vmatpush.bf16.msra.mxu0 0
  %3827 = vmatpush.bf16.msra.mxu0 %v3125
  %3828 = vmatpush.bf16.msra.mxu0 %v2890
  %3829 = vmatpush.bf16.msra.mxu0 %v2826
  %3830 = vmatmul.bf16.gmra.mxu0 %v2981
  %v3831 = vpop.f32.mrf.mxu0
  %v3832 = vadd.f32 0.0, %v3831
  %v3833 = vpop.f32.mrf.mxu0
  %v3834 = vadd.f32 0.0, %v3833
  %3835 = vdwg.mxu0
  %3836 = vmatpush.bf16.msra.mxu0 0
  %3837 = vmatpush.bf16.msra.mxu0 0
  %3838 = vmatpush.bf16.msra.mxu0 0
  %3839 = vmatpush.bf16.msra.mxu0 0
  %3840 = vmatpush.bf16.msra.mxu0 0
  %3841 = vmatpush.bf16.msra.mxu0 %v3128
  %3842 = vmatpush.bf16.msra.mxu0 %v2891
  %3843 = vmatpush.bf16.msra.mxu0 %v2827
  %3844 = vmatmul.bf16.gmra.mxu0 %v2981
  %v3845 = vpop.f32.mrf.mxu0
  %v3846 = vadd.f32 0.0, %v3845
  %v3847 = vpop.f32.mrf.mxu0
  %v3848 = vadd.f32 0.0, %v3847
  %3849 = vdwg.mxu0
  %3850 = vmatpush.bf16.msra.mxu0 0
  %3851 = vmatpush.bf16.msra.mxu0 0
  %3852 = vmatpush.bf16.msra.mxu0 0
  %3853 = vmatpush.bf16.msra.mxu0 0
  %3854 = vmatpush.bf16.msra.mxu0 0
  %3855 = vmatpush.bf16.msra.mxu0 %v3131
  %3856 = vmatpush.bf16.msra.mxu0 %v2892
  %3857 = vmatpush.bf16.msra.mxu0 %v2828
  %3858 = vmatmul.bf16.gmra.mxu0 %v2981
  %v3859 = vpop.f32.mrf.mxu0
  %v3860 = vadd.f32 0.0, %v3859
  %v3861 = vpop.f32.mrf.mxu0
  %v3862 = vadd.f32 0.0, %v3861
  %3863 = vdwg.mxu0
  %3864 = vmatpush.bf16.msra.mxu0 0
  %3865 = vmatpush.bf16.msra.mxu0 0
  %3866 = vmatpush.bf16.msra.mxu0 0
  %3867 = vmatpush.bf16.msra.mxu0 0
  %3868 = vmatpush.bf16.msra.mxu0 0
  %3869 = vmatpush.bf16.msra.mxu0 %v3134
  %3870 = vmatpush.bf16.msra.mxu0 %v2893
  %3871 = vmatpush.bf16.msra.mxu0 %v2829
  %3872 = vmatmul.bf16.gmra.mxu0 %v2981
  %v3873 = vpop.f32.mrf.mxu0
  %v3874 = vadd.f32 0.0, %v3873
  %v3875 = vpop.f32.mrf.mxu0
  %v3876 = vadd.f32 0.0, %v3875
  %3877 = vdwg.mxu0
  %3878 = vmatpush.bf16.msra.mxu0 0
  %3879 = vmatpush.bf16.msra.mxu0 0
  %3880 = vmatpush.bf16.msra.mxu0 0
  %3881 = vmatpush.bf16.msra.mxu0 0
  %3882 = vmatpush.bf16.msra.mxu0 0
  %3883 = vmatpush.bf16.msra.mxu0 %v3137
  %3884 = vmatpush.bf16.msra.mxu0 %v2894
  %3885 = vmatpush.bf16.msra.mxu0 %v2830
  %3886 = vmatmul.bf16.gmra.mxu0 %v2981
  %v3887 = vpop.f32.mrf.mxu0
  %v3888 = vadd.f32 0.0, %v3887
  %v3889 = vpop.f32.mrf.mxu0
  %v3890 = vadd.f32 0.0, %v3889
  %3891 = vdwg.mxu0
  %3892 = vmatpush.bf16.msra.mxu0 0
  %3893 = vmatpush.bf16.msra.mxu0 0
  %3894 = vmatpush.bf16.msra.mxu0 0
  %3895 = vmatpush.bf16.msra.mxu0 0
  %3896 = vmatpush.bf16.msra.mxu0 0
  %3897 = vmatpush.bf16.msra.mxu0 %v3140
  %3898 = vmatpush.bf16.msra.mxu0 %v2895
  %3899 = vmatpush.bf16.msra.mxu0 %v2831
  %3900 = vmatmul.bf16.gmra.mxu0 %v2981
  %v3901 = vpop.f32.mrf.mxu0
  %v3902 = vadd.f32 0.0, %v3901
  %v3903 = vpop.f32.mrf.mxu0
  %v3904 = vadd.f32 0.0, %v3903
  %3905 = vdwg.mxu0
  %3906 = vmatpush.bf16.msra.mxu0 0
  %3907 = vmatpush.bf16.msra.mxu0 0
  %3908 = vmatpush.bf16.msra.mxu0 0
  %3909 = vmatpush.bf16.msra.mxu0 0
  %3910 = vmatpush.bf16.msra.mxu0 0
  %3911 = vmatpush.bf16.msra.mxu0 %v3143
  %3912 = vmatpush.bf16.msra.mxu0 %v2896
  %3913 = vmatpush.bf16.msra.mxu0 %v2832
  %3914 = vmatmul.bf16.gmra.mxu0 %v2981
  %v3915 = vpop.f32.mrf.mxu0
  %v3916 = vadd.f32 0.0, %v3915
  %v3917 = vpop.f32.mrf.mxu0
  %v3918 = vadd.f32 0.0, %v3917
  %3919 = vdwg.mxu0
  %3920 = vmatpush.bf16.msra.mxu0 0
  %3921 = vmatpush.bf16.msra.mxu0 0
  %3922 = vmatpush.bf16.msra.mxu0 0
  %3923 = vmatpush.bf16.msra.mxu0 0
  %3924 = vmatpush.bf16.msra.mxu0 0
  %3925 = vmatpush.bf16.msra.mxu0 %v3146
  %3926 = vmatpush.bf16.msra.mxu0 %v2897
  %3927 = vmatpush.bf16.msra.mxu0 %v2833
  %3928 = vmatmul.bf16.gmra.mxu0 %v2981
  %v3929 = vpop.f32.mrf.mxu0
  %v3930 = vadd.f32 0.0, %v3929
  %v3931 = vpop.f32.mrf.mxu0
  %v3932 = vadd.f32 0.0, %v3931
  %3933 = vdwg.mxu0
  %3934 = vmatpush.bf16.msra.mxu0 0
  %3935 = vmatpush.bf16.msra.mxu0 0
  %3936 = vmatpush.bf16.msra.mxu0 0
  %3937 = vmatpush.bf16.msra.mxu0 0
  %3938 = vmatpush.bf16.msra.mxu0 0
  %3939 = vmatpush.bf16.msra.mxu0 %v3149
  %3940 = vmatpush.bf16.msra.mxu0 %v2898
  %3941 = vmatpush.bf16.msra.mxu0 %v2834
  %3942 = vmatmul.bf16.gmra.mxu0 %v2981
  %v3943 = vpop.f32.mrf.mxu0
  %v3944 = vadd.f32 0.0, %v3943
  %v3945 = vpop.f32.mrf.mxu0
  %v3946 = vadd.f32 0.0, %v3945
  %3947 = vdwg.mxu0
  %3948 = vmatpush.bf16.msra.mxu0 0
  %3949 = vmatpush.bf16.msra.mxu0 0
  %3950 = vmatpush.bf16.msra.mxu0 0
  %3951 = vmatpush.bf16.msra.mxu0 0
  %3952 = vmatpush.bf16.msra.mxu0 0
  %3953 = vmatpush.bf16.msra.mxu0 %v3152
  %3954 = vmatpush.bf16.msra.mxu0 %v2899
  %3955 = vmatpush.bf16.msra.mxu0 %v2835
  %3956 = vmatmul.bf16.gmra.mxu0 %v2981
  %v3957 = vpop.f32.mrf.mxu0
  %v3958 = vadd.f32 0.0, %v3957
  %v3959 = vpop.f32.mrf.mxu0
  %v3960 = vadd.f32 0.0, %v3959
  %3961 = vdwg.mxu0
  %3962 = vmatpush.bf16.msra.mxu0 0
  %3963 = vmatpush.bf16.msra.mxu0 0
  %3964 = vmatpush.bf16.msra.mxu0 0
  %3965 = vmatpush.bf16.msra.mxu0 0
  %3966 = vmatpush.bf16.msra.mxu0 0
  %3967 = vmatpush.bf16.msra.mxu0 %v3155
  %3968 = vmatpush.bf16.msra.mxu0 %v2900
  %3969 = vmatpush.bf16.msra.mxu0 %v2836
  %3970 = vmatmul.bf16.gmra.mxu0 %v2981
  %v3971 = vpop.f32.mrf.mxu0
  %v3972 = vadd.f32 0.0, %v3971
  %v3973 = vpop.f32.mrf.mxu0
  %v3974 = vadd.f32 0.0, %v3973
  %3975 = vdwg.mxu0
  %3976 = vmatpush.bf16.msra.mxu0 0
  %3977 = vmatpush.bf16.msra.mxu0 0
  %3978 = vmatpush.bf16.msra.mxu0 0
  %3979 = vmatpush.bf16.msra.mxu0 0
  %3980 = vmatpush.bf16.msra.mxu0 0
  %3981 = vmatpush.bf16.msra.mxu0 %v3158
  %3982 = vmatpush.bf16.msra.mxu0 %v2901
  %3983 = vmatpush.bf16.msra.mxu0 %v2837
  %3984 = vmatmul.bf16.gmra.mxu0 %v2981
  %v3985 = vpop.f32.mrf.mxu0
  %v3986 = vadd.f32 0.0, %v3985
  %v3987 = vpop.f32.mrf.mxu0
  %v3988 = vadd.f32 0.0, %v3987
  %3989 = vdwg.mxu0
  %3990 = vmatpush.bf16.msra.mxu0 0
  %3991 = vmatpush.bf16.msra.mxu0 0
  %3992 = vmatpush.bf16.msra.mxu0 0
  %3993 = vmatpush.bf16.msra.mxu0 0
  %3994 = vmatpush.bf16.msra.mxu0 0
  %3995 = vmatpush.bf16.msra.mxu0 %v3161
  %3996 = vmatpush.bf16.msra.mxu0 %v2902
  %3997 = vmatpush.bf16.msra.mxu0 %v2838
  %3998 = vmatmul.bf16.gmra.mxu0 %v2981
  %v3999 = vpop.f32.mrf.mxu0
  %v4000 = vadd.f32 0.0, %v3999
  %v4001 = vpop.f32.mrf.mxu0
  %v4002 = vadd.f32 0.0, %v4001
  %4003 = vdwg.mxu0
  %4004 = vmatpush.bf16.msra.mxu0 0
  %4005 = vmatpush.bf16.msra.mxu0 0
  %4006 = vmatpush.bf16.msra.mxu0 0
  %4007 = vmatpush.bf16.msra.mxu0 0
  %4008 = vmatpush.bf16.msra.mxu0 0
  %4009 = vmatpush.bf16.msra.mxu0 %v3164
  %4010 = vmatpush.bf16.msra.mxu0 %v2903
  %4011 = vmatpush.bf16.msra.mxu0 %v2839
  %4012 = vmatmul.bf16.gmra.mxu0 %v2981
  %v4013 = vpop.f32.mrf.mxu0
  %v4014 = vadd.f32 0.0, %v4013
  %v4015 = vpop.f32.mrf.mxu0
  %v4016 = vadd.f32 0.0, %v4015
  %4017 = vdwg.mxu0
  %4018 = vmatpush.bf16.msra.mxu0 0
  %4019 = vmatpush.bf16.msra.mxu0 0
  %4020 = vmatpush.bf16.msra.mxu0 0
  %4021 = vmatpush.bf16.msra.mxu0 0
  %4022 = vmatpush.bf16.msra.mxu0 0
  %4023 = vmatpush.bf16.msra.mxu0 %v3167
  %4024 = vmatpush.bf16.msra.mxu0 %v2904
  %4025 = vmatpush.bf16.msra.mxu0 %v2840
  %4026 = vmatmul.bf16.gmra.mxu0 %v2981
  %v4027 = vpop.f32.mrf.mxu0
  %v4028 = vadd.f32 0.0, %v4027
  %v4029 = vpop.f32.mrf.mxu0
  %v4030 = vadd.f32 0.0, %v4029
  %4031 = vdwg.mxu0
  %4032 = vmatpush.bf16.msra.mxu0 0
  %4033 = vmatpush.bf16.msra.mxu0 0
  %4034 = vmatpush.bf16.msra.mxu0 0
  %4035 = vmatpush.bf16.msra.mxu0 0
  %4036 = vmatpush.bf16.msra.mxu0 0
  %4037 = vmatpush.bf16.msra.mxu0 %v3170
  %4038 = vmatpush.bf16.msra.mxu0 %v2905
  %4039 = vmatpush.bf16.msra.mxu0 %v2841
  %4040 = vmatmul.bf16.gmra.mxu0 %v2981
  %v4041 = vpop.f32.mrf.mxu0
  %v4042 = vadd.f32 0.0, %v4041
  %v4043 = vpop.f32.mrf.mxu0
  %v4044 = vadd.f32 0.0, %v4043
  %4045 = vdwg.mxu0
  %4046 = vmatpush.bf16.msra.mxu0 0
  %4047 = vmatpush.bf16.msra.mxu0 0
  %4048 = vmatpush.bf16.msra.mxu0 0
  %4049 = vmatpush.bf16.msra.mxu0 0
  %4050 = vmatpush.bf16.msra.mxu0 0
  %4051 = vmatpush.bf16.msra.mxu0 %v3173
  %4052 = vmatpush.bf16.msra.mxu0 %v2906
  %4053 = vmatpush.bf16.msra.mxu0 %v2842
  %4054 = vmatmul.bf16.gmra.mxu0 %v2981
  %v4055 = vpop.f32.mrf.mxu0
  %v4056 = vadd.f32 0.0, %v4055
  %v4057 = vpop.f32.mrf.mxu0
  %v4058 = vadd.f32 0.0, %v4057
  %4059 = vdwg.mxu0
  %4060 = vmatpush.bf16.msra.mxu0 0
  %4061 = vmatpush.bf16.msra.mxu0 0
  %4062 = vmatpush.bf16.msra.mxu0 0
  %4063 = vmatpush.bf16.msra.mxu0 0
  %4064 = vmatpush.bf16.msra.mxu0 0
  %4065 = vmatpush.bf16.msra.mxu0 %v3176
  %4066 = vmatpush.bf16.msra.mxu0 %v2907
  %4067 = vmatpush.bf16.msra.mxu0 %v2843
  %4068 = vmatmul.bf16.gmra.mxu0 %v2981
  %v4069 = vpop.f32.mrf.mxu0
  %v4070 = vadd.f32 0.0, %v4069
  %v4071 = vpop.f32.mrf.mxu0
  %v4072 = vadd.f32 0.0, %v4071
  %4073 = vdwg.mxu0
  %v4074 = vrot.slane %v3216, 4
  %v4075 = vsel %vm206, %v4074, %v3188
  %v4076 = vrot.slane %v3188, 4
  %v4077 = vsel %vm206, %v3216, %v4076
  %v4079 = vunpack.c.l.s4 1983009808
  %v4080 = vunpack.c.0.s8 %v4079
  %v4081 = vperm.slane %v4075, %v4080
  %v4083 = vunpack.c.l.s4 1983009808
  %v4084 = vunpack.c.0.s8 %v4083
  %v4085 = vperm.slane %v4077, %v4084
  %v4086 = vrot.slane %v3230, 4
  %v4087 = vsel %vm206, %v4086, %v3202
  %v4088 = vrot.slane %v3202, 4
  %v4089 = vsel %vm206, %v3230, %v4088
  %v4091 = vunpack.c.l.s4 1983009808
  %v4092 = vunpack.c.0.s8 %v4091
  %v4093 = vperm.slane %v4087, %v4092
  %v4095 = vunpack.c.l.s4 1983009808
  %v4096 = vunpack.c.0.s8 %v4095
  %v4097 = vperm.slane %v4089, %v4096
  %v4098 = vrot.slane %v3272, 4
  %v4099 = vsel %vm206, %v4098, %v3244
  %v4100 = vrot.slane %v3244, 4
  %v4101 = vsel %vm206, %v3272, %v4100
  %v4103 = vunpack.c.l.s4 1983009808
  %v4104 = vunpack.c.0.s8 %v4103
  %v4105 = vperm.slane %v4099, %v4104
  %v4107 = vunpack.c.l.s4 1983009808
  %v4108 = vunpack.c.0.s8 %v4107
  %v4109 = vperm.slane %v4101, %v4108
  %v4110 = vrot.slane %v3286, 4
  %v4111 = vsel %vm206, %v4110, %v3258
  %v4112 = vrot.slane %v3258, 4
  %v4113 = vsel %vm206, %v3286, %v4112
  %v4115 = vunpack.c.l.s4 1983009808
  %v4116 = vunpack.c.0.s8 %v4115
  %v4117 = vperm.slane %v4111, %v4116
  %v4119 = vunpack.c.l.s4 1983009808
  %v4120 = vunpack.c.0.s8 %v4119
  %v4121 = vperm.slane %v4113, %v4120
  %v4122 = vrot.slane %v4093, 4
  %v4123 = vsel %vm206, %v4122, %v4081
  %v4124 = vrot.slane %v4081, 4
  %v4125 = vsel %vm206, %v4093, %v4124
  %v4127 = vunpack.c.l.s4 1934713408
  %v4128 = vunpack.c.0.s8 %v4127
  %v4129 = vperm.slane %v4123, %v4128
  %v4131 = vunpack.c.l.s4 1934713408
  %v4132 = vunpack.c.0.s8 %v4131
  %v4133 = vperm.slane %v4125, %v4132
  %v4134 = vrot.slane %v4097, 4
  %v4135 = vsel %vm206, %v4134, %v4085
  %v4136 = vrot.slane %v4085, 4
  %v4137 = vsel %vm206, %v4097, %v4136
  %v4139 = vunpack.c.l.s4 1934713408
  %v4140 = vunpack.c.0.s8 %v4139
  %v4141 = vperm.slane %v4135, %v4140
  %v4143 = vunpack.c.l.s4 1934713408
  %v4144 = vunpack.c.0.s8 %v4143
  %v4145 = vperm.slane %v4137, %v4144
  %v4146 = vrot.slane %v4117, 4
  %v4147 = vsel %vm206, %v4146, %v4105
  %v4148 = vrot.slane %v4105, 4
  %v4149 = vsel %vm206, %v4117, %v4148
  %v4151 = vunpack.c.l.s4 1934713408
  %v4152 = vunpack.c.0.s8 %v4151
  %v4153 = vperm.slane %v4147, %v4152
  %v4155 = vunpack.c.l.s4 1934713408
  %v4156 = vunpack.c.0.s8 %v4155
  %v4157 = vperm.slane %v4149, %v4156
  %v4158 = vrot.slane %v4121, 4
  %v4159 = vsel %vm206, %v4158, %v4109
  %v4160 = vrot.slane %v4109, 4
  %v4161 = vsel %vm206, %v4121, %v4160
  %v4163 = vunpack.c.l.s4 1934713408
  %v4164 = vunpack.c.0.s8 %v4163
  %v4165 = vperm.slane %v4159, %v4164
  %v4167 = vunpack.c.l.s4 1934713408
  %v4168 = vunpack.c.0.s8 %v4167
  %v4169 = vperm.slane %v4161, %v4168
  %v4170 = vrot.slane %v4153, 4
  %v4171 = vsel %vm206, %v4170, %v4129
  %v4172 = vrot.slane %v4129, 4
  %v4173 = vsel %vm206, %v4153, %v4172
  %v4174 = vrot.slane %v4157, 4
  %v4175 = vsel %vm206, %v4174, %v4133
  %v4176 = vrot.slane %v4133, 4
  %v4177 = vsel %vm206, %v4157, %v4176
  %v4178 = vrot.slane %v4165, 4
  %v4179 = vsel %vm206, %v4178, %v4141
  %v4180 = vrot.slane %v4141, 4
  %v4181 = vsel %vm206, %v4165, %v4180
  %v4182 = vrot.slane %v4169, 4
  %v4183 = vsel %vm206, %v4182, %v4145
  %v4184 = vrot.slane %v4145, 4
  %v4185 = vsel %vm206, %v4169, %v4184
  %v4186 = vrot.slane %v3328, 4
  %v4187 = vsel %vm206, %v4186, %v3300
  %v4188 = vrot.slane %v3300, 4
  %v4189 = vsel %vm206, %v3328, %v4188
  %v4191 = vunpack.c.l.s4 1983009808
  %v4192 = vunpack.c.0.s8 %v4191
  %v4193 = vperm.slane %v4187, %v4192
  %v4195 = vunpack.c.l.s4 1983009808
  %v4196 = vunpack.c.0.s8 %v4195
  %v4197 = vperm.slane %v4189, %v4196
  %v4198 = vrot.slane %v3342, 4
  %v4199 = vsel %vm206, %v4198, %v3314
  %v4200 = vrot.slane %v3314, 4
  %v4201 = vsel %vm206, %v3342, %v4200
  %v4203 = vunpack.c.l.s4 1983009808
  %v4204 = vunpack.c.0.s8 %v4203
  %v4205 = vperm.slane %v4199, %v4204
  %v4207 = vunpack.c.l.s4 1983009808
  %v4208 = vunpack.c.0.s8 %v4207
  %v4209 = vperm.slane %v4201, %v4208
  %v4210 = vrot.slane %v3384, 4
  %v4211 = vsel %vm206, %v4210, %v3356
  %v4212 = vrot.slane %v3356, 4
  %v4213 = vsel %vm206, %v3384, %v4212
  %v4215 = vunpack.c.l.s4 1983009808
  %v4216 = vunpack.c.0.s8 %v4215
  %v4217 = vperm.slane %v4211, %v4216
  %v4219 = vunpack.c.l.s4 1983009808
  %v4220 = vunpack.c.0.s8 %v4219
  %v4221 = vperm.slane %v4213, %v4220
  %v4222 = vrot.slane %v3398, 4
  %v4223 = vsel %vm206, %v4222, %v3370
  %v4224 = vrot.slane %v3370, 4
  %v4225 = vsel %vm206, %v3398, %v4224
  %v4227 = vunpack.c.l.s4 1983009808
  %v4228 = vunpack.c.0.s8 %v4227
  %v4229 = vperm.slane %v4223, %v4228
  %v4231 = vunpack.c.l.s4 1983009808
  %v4232 = vunpack.c.0.s8 %v4231
  %v4233 = vperm.slane %v4225, %v4232
  %v4234 = vrot.slane %v4205, 4
  %v4235 = vsel %vm206, %v4234, %v4193
  %v4236 = vrot.slane %v4193, 4
  %v4237 = vsel %vm206, %v4205, %v4236
  %v4239 = vunpack.c.l.s4 1934713408
  %v4240 = vunpack.c.0.s8 %v4239
  %v4241 = vperm.slane %v4235, %v4240
  %v4243 = vunpack.c.l.s4 1934713408
  %v4244 = vunpack.c.0.s8 %v4243
  %v4245 = vperm.slane %v4237, %v4244
  %v4246 = vrot.slane %v4209, 4
  %v4247 = vsel %vm206, %v4246, %v4197
  %v4248 = vrot.slane %v4197, 4
  %v4249 = vsel %vm206, %v4209, %v4248
  %v4251 = vunpack.c.l.s4 1934713408
  %v4252 = vunpack.c.0.s8 %v4251
  %v4253 = vperm.slane %v4247, %v4252
  %v4255 = vunpack.c.l.s4 1934713408
  %v4256 = vunpack.c.0.s8 %v4255
  %v4257 = vperm.slane %v4249, %v4256
  %v4258 = vrot.slane %v4229, 4
  %v4259 = vsel %vm206, %v4258, %v4217
  %v4260 = vrot.slane %v4217, 4
  %v4261 = vsel %vm206, %v4229, %v4260
  %v4263 = vunpack.c.l.s4 1934713408
  %v4264 = vunpack.c.0.s8 %v4263
  %v4265 = vperm.slane %v4259, %v4264
  %v4267 = vunpack.c.l.s4 1934713408
  %v4268 = vunpack.c.0.s8 %v4267
  %v4269 = vperm.slane %v4261, %v4268
  %v4270 = vrot.slane %v4233, 4
  %v4271 = vsel %vm206, %v4270, %v4221
  %v4272 = vrot.slane %v4221, 4
  %v4273 = vsel %vm206, %v4233, %v4272
  %v4275 = vunpack.c.l.s4 1934713408
  %v4276 = vunpack.c.0.s8 %v4275
  %v4277 = vperm.slane %v4271, %v4276
  %v4279 = vunpack.c.l.s4 1934713408
  %v4280 = vunpack.c.0.s8 %v4279
  %v4281 = vperm.slane %v4273, %v4280
  %v4282 = vrot.slane %v4265, 4
  %v4283 = vsel %vm206, %v4282, %v4241
  %v4284 = vrot.slane %v4241, 4
  %v4285 = vsel %vm206, %v4265, %v4284
  %v4286 = vrot.slane %v4269, 4
  %v4287 = vsel %vm206, %v4286, %v4245
  %v4288 = vrot.slane %v4245, 4
  %v4289 = vsel %vm206, %v4269, %v4288
  %v4290 = vrot.slane %v4277, 4
  %v4291 = vsel %vm206, %v4290, %v4253
  %v4292 = vrot.slane %v4253, 4
  %v4293 = vsel %vm206, %v4277, %v4292
  %v4294 = vrot.slane %v4281, 4
  %v4295 = vsel %vm206, %v4294, %v4257
  %v4296 = vrot.slane %v4257, 4
  %v4297 = vsel %vm206, %v4281, %v4296
  %v4298 = vrot.slane %v3440, 4
  %v4299 = vsel %vm206, %v4298, %v3412
  %v4300 = vrot.slane %v3412, 4
  %v4301 = vsel %vm206, %v3440, %v4300
  %v4303 = vunpack.c.l.s4 1983009808
  %v4304 = vunpack.c.0.s8 %v4303
  %v4305 = vperm.slane %v4299, %v4304
  %v4307 = vunpack.c.l.s4 1983009808
  %v4308 = vunpack.c.0.s8 %v4307
  %v4309 = vperm.slane %v4301, %v4308
  %v4310 = vrot.slane %v3454, 4
  %v4311 = vsel %vm206, %v4310, %v3426
  %v4312 = vrot.slane %v3426, 4
  %v4313 = vsel %vm206, %v3454, %v4312
  %v4315 = vunpack.c.l.s4 1983009808
  %v4316 = vunpack.c.0.s8 %v4315
  %v4317 = vperm.slane %v4311, %v4316
  %v4319 = vunpack.c.l.s4 1983009808
  %v4320 = vunpack.c.0.s8 %v4319
  %v4321 = vperm.slane %v4313, %v4320
  %v4322 = vrot.slane %v3496, 4
  %v4323 = vsel %vm206, %v4322, %v3468
  %v4324 = vrot.slane %v3468, 4
  %v4325 = vsel %vm206, %v3496, %v4324
  %v4327 = vunpack.c.l.s4 1983009808
  %v4328 = vunpack.c.0.s8 %v4327
  %v4329 = vperm.slane %v4323, %v4328
  %v4331 = vunpack.c.l.s4 1983009808
  %v4332 = vunpack.c.0.s8 %v4331
  %v4333 = vperm.slane %v4325, %v4332
  %v4334 = vrot.slane %v3510, 4
  %v4335 = vsel %vm206, %v4334, %v3482
  %v4336 = vrot.slane %v3482, 4
  %v4337 = vsel %vm206, %v3510, %v4336
  %v4339 = vunpack.c.l.s4 1983009808
  %v4340 = vunpack.c.0.s8 %v4339
  %v4341 = vperm.slane %v4335, %v4340
  %v4343 = vunpack.c.l.s4 1983009808
  %v4344 = vunpack.c.0.s8 %v4343
  %v4345 = vperm.slane %v4337, %v4344
  %v4346 = vrot.slane %v4317, 4
  %v4347 = vsel %vm206, %v4346, %v4305
  %v4348 = vrot.slane %v4305, 4
  %v4349 = vsel %vm206, %v4317, %v4348
  %v4351 = vunpack.c.l.s4 1934713408
  %v4352 = vunpack.c.0.s8 %v4351
  %v4353 = vperm.slane %v4347, %v4352
  %v4355 = vunpack.c.l.s4 1934713408
  %v4356 = vunpack.c.0.s8 %v4355
  %v4357 = vperm.slane %v4349, %v4356
  %v4358 = vrot.slane %v4321, 4
  %v4359 = vsel %vm206, %v4358, %v4309
  %v4360 = vrot.slane %v4309, 4
  %v4361 = vsel %vm206, %v4321, %v4360
  %v4363 = vunpack.c.l.s4 1934713408
  %v4364 = vunpack.c.0.s8 %v4363
  %v4365 = vperm.slane %v4359, %v4364
  %v4367 = vunpack.c.l.s4 1934713408
  %v4368 = vunpack.c.0.s8 %v4367
  %v4369 = vperm.slane %v4361, %v4368
  %v4370 = vrot.slane %v4341, 4
  %v4371 = vsel %vm206, %v4370, %v4329
  %v4372 = vrot.slane %v4329, 4
  %v4373 = vsel %vm206, %v4341, %v4372
  %v4375 = vunpack.c.l.s4 1934713408
  %v4376 = vunpack.c.0.s8 %v4375
  %v4377 = vperm.slane %v4371, %v4376
  %v4379 = vunpack.c.l.s4 1934713408
  %v4380 = vunpack.c.0.s8 %v4379
  %v4381 = vperm.slane %v4373, %v4380
  %v4382 = vrot.slane %v4345, 4
  %v4383 = vsel %vm206, %v4382, %v4333
  %v4384 = vrot.slane %v4333, 4
  %v4385 = vsel %vm206, %v4345, %v4384
  %v4387 = vunpack.c.l.s4 1934713408
  %v4388 = vunpack.c.0.s8 %v4387
  %v4389 = vperm.slane %v4383, %v4388
  %v4391 = vunpack.c.l.s4 1934713408
  %v4392 = vunpack.c.0.s8 %v4391
  %v4393 = vperm.slane %v4385, %v4392
  %v4394 = vrot.slane %v4377, 4
  %v4395 = vsel %vm206, %v4394, %v4353
  %v4396 = vrot.slane %v4353, 4
  %v4397 = vsel %vm206, %v4377, %v4396
  %v4398 = vrot.slane %v4381, 4
  %v4399 = vsel %vm206, %v4398, %v4357
  %v4400 = vrot.slane %v4357, 4
  %v4401 = vsel %vm206, %v4381, %v4400
  %v4402 = vrot.slane %v4389, 4
  %v4403 = vsel %vm206, %v4402, %v4365
  %v4404 = vrot.slane %v4365, 4
  %v4405 = vsel %vm206, %v4389, %v4404
  %v4406 = vrot.slane %v4393, 4
  %v4407 = vsel %vm206, %v4406, %v4369
  %v4408 = vrot.slane %v4369, 4
  %v4409 = vsel %vm206, %v4393, %v4408
  %v4410 = vrot.slane %v3552, 4
  %v4411 = vsel %vm206, %v4410, %v3524
  %v4412 = vrot.slane %v3524, 4
  %v4413 = vsel %vm206, %v3552, %v4412
  %v4415 = vunpack.c.l.s4 1983009808
  %v4416 = vunpack.c.0.s8 %v4415
  %v4417 = vperm.slane %v4411, %v4416
  %v4419 = vunpack.c.l.s4 1983009808
  %v4420 = vunpack.c.0.s8 %v4419
  %v4421 = vperm.slane %v4413, %v4420
  %v4422 = vrot.slane %v3566, 4
  %v4423 = vsel %vm206, %v4422, %v3538
  %v4424 = vrot.slane %v3538, 4
  %v4425 = vsel %vm206, %v3566, %v4424
  %v4427 = vunpack.c.l.s4 1983009808
  %v4428 = vunpack.c.0.s8 %v4427
  %v4429 = vperm.slane %v4423, %v4428
  %v4431 = vunpack.c.l.s4 1983009808
  %v4432 = vunpack.c.0.s8 %v4431
  %v4433 = vperm.slane %v4425, %v4432
  %v4434 = vrot.slane %v3608, 4
  %v4435 = vsel %vm206, %v4434, %v3580
  %v4436 = vrot.slane %v3580, 4
  %v4437 = vsel %vm206, %v3608, %v4436
  %v4439 = vunpack.c.l.s4 1983009808
  %v4440 = vunpack.c.0.s8 %v4439
  %v4441 = vperm.slane %v4435, %v4440
  %v4443 = vunpack.c.l.s4 1983009808
  %v4444 = vunpack.c.0.s8 %v4443
  %v4445 = vperm.slane %v4437, %v4444
  %v4446 = vrot.slane %v3622, 4
  %v4447 = vsel %vm206, %v4446, %v3594
  %v4448 = vrot.slane %v3594, 4
  %v4449 = vsel %vm206, %v3622, %v4448
  %v4451 = vunpack.c.l.s4 1983009808
  %v4452 = vunpack.c.0.s8 %v4451
  %v4453 = vperm.slane %v4447, %v4452
  %v4455 = vunpack.c.l.s4 1983009808
  %v4456 = vunpack.c.0.s8 %v4455
  %v4457 = vperm.slane %v4449, %v4456
  %v4458 = vrot.slane %v4429, 4
  %v4459 = vsel %vm206, %v4458, %v4417
  %v4460 = vrot.slane %v4417, 4
  %v4461 = vsel %vm206, %v4429, %v4460
  %v4463 = vunpack.c.l.s4 1934713408
  %v4464 = vunpack.c.0.s8 %v4463
  %v4465 = vperm.slane %v4459, %v4464
  %v4467 = vunpack.c.l.s4 1934713408
  %v4468 = vunpack.c.0.s8 %v4467
  %v4469 = vperm.slane %v4461, %v4468
  %v4470 = vrot.slane %v4433, 4
  %v4471 = vsel %vm206, %v4470, %v4421
  %v4472 = vrot.slane %v4421, 4
  %v4473 = vsel %vm206, %v4433, %v4472
  %v4475 = vunpack.c.l.s4 1934713408
  %v4476 = vunpack.c.0.s8 %v4475
  %v4477 = vperm.slane %v4471, %v4476
  %v4479 = vunpack.c.l.s4 1934713408
  %v4480 = vunpack.c.0.s8 %v4479
  %v4481 = vperm.slane %v4473, %v4480
  %v4482 = vrot.slane %v4453, 4
  %v4483 = vsel %vm206, %v4482, %v4441
  %v4484 = vrot.slane %v4441, 4
  %v4485 = vsel %vm206, %v4453, %v4484
  %v4487 = vunpack.c.l.s4 1934713408
  %v4488 = vunpack.c.0.s8 %v4487
  %v4489 = vperm.slane %v4483, %v4488
  %v4491 = vunpack.c.l.s4 1934713408
  %v4492 = vunpack.c.0.s8 %v4491
  %v4493 = vperm.slane %v4485, %v4492
  %v4494 = vrot.slane %v4457, 4
  %v4495 = vsel %vm206, %v4494, %v4445
  %v4496 = vrot.slane %v4445, 4
  %v4497 = vsel %vm206, %v4457, %v4496
  %v4499 = vunpack.c.l.s4 1934713408
  %v4500 = vunpack.c.0.s8 %v4499
  %v4501 = vperm.slane %v4495, %v4500
  %v4503 = vunpack.c.l.s4 1934713408
  %v4504 = vunpack.c.0.s8 %v4503
  %v4505 = vperm.slane %v4497, %v4504
  %v4506 = vrot.slane %v4489, 4
  %v4507 = vsel %vm206, %v4506, %v4465
  %v4508 = vrot.slane %v4465, 4
  %v4509 = vsel %vm206, %v4489, %v4508
  %v4510 = vrot.slane %v4493, 4
  %v4511 = vsel %vm206, %v4510, %v4469
  %v4512 = vrot.slane %v4469, 4
  %v4513 = vsel %vm206, %v4493, %v4512
  %v4514 = vrot.slane %v4501, 4
  %v4515 = vsel %vm206, %v4514, %v4477
  %v4516 = vrot.slane %v4477, 4
  %v4517 = vsel %vm206, %v4501, %v4516
  %v4518 = vrot.slane %v4505, 4
  %v4519 = vsel %vm206, %v4518, %v4481
  %v4520 = vrot.slane %v4481, 4
  %v4521 = vsel %vm206, %v4505, %v4520
  %v4522 = vrot.slane %v3664, 4
  %v4523 = vsel %vm206, %v4522, %v3636
  %v4524 = vrot.slane %v3636, 4
  %v4525 = vsel %vm206, %v3664, %v4524
  %v4527 = vunpack.c.l.s4 1983009808
  %v4528 = vunpack.c.0.s8 %v4527
  %v4529 = vperm.slane %v4523, %v4528
  %v4531 = vunpack.c.l.s4 1983009808
  %v4532 = vunpack.c.0.s8 %v4531
  %v4533 = vperm.slane %v4525, %v4532
  %v4534 = vrot.slane %v3678, 4
  %v4535 = vsel %vm206, %v4534, %v3650
  %v4536 = vrot.slane %v3650, 4
  %v4537 = vsel %vm206, %v3678, %v4536
  %v4539 = vunpack.c.l.s4 1983009808
  %v4540 = vunpack.c.0.s8 %v4539
  %v4541 = vperm.slane %v4535, %v4540
  %v4543 = vunpack.c.l.s4 1983009808
  %v4544 = vunpack.c.0.s8 %v4543
  %v4545 = vperm.slane %v4537, %v4544
  %v4546 = vrot.slane %v3720, 4
  %v4547 = vsel %vm206, %v4546, %v3692
  %v4548 = vrot.slane %v3692, 4
  %v4549 = vsel %vm206, %v3720, %v4548
  %v4551 = vunpack.c.l.s4 1983009808
  %v4552 = vunpack.c.0.s8 %v4551
  %v4553 = vperm.slane %v4547, %v4552
  %v4555 = vunpack.c.l.s4 1983009808
  %v4556 = vunpack.c.0.s8 %v4555
  %v4557 = vperm.slane %v4549, %v4556
  %v4558 = vrot.slane %v3734, 4
  %v4559 = vsel %vm206, %v4558, %v3706
  %v4560 = vrot.slane %v3706, 4
  %v4561 = vsel %vm206, %v3734, %v4560
  %v4563 = vunpack.c.l.s4 1983009808
  %v4564 = vunpack.c.0.s8 %v4563
  %v4565 = vperm.slane %v4559, %v4564
  %v4567 = vunpack.c.l.s4 1983009808
  %v4568 = vunpack.c.0.s8 %v4567
  %v4569 = vperm.slane %v4561, %v4568
  %v4570 = vrot.slane %v4541, 4
  %v4571 = vsel %vm206, %v4570, %v4529
  %v4572 = vrot.slane %v4529, 4
  %v4573 = vsel %vm206, %v4541, %v4572
  %v4575 = vunpack.c.l.s4 1934713408
  %v4576 = vunpack.c.0.s8 %v4575
  %v4577 = vperm.slane %v4571, %v4576
  %v4579 = vunpack.c.l.s4 1934713408
  %v4580 = vunpack.c.0.s8 %v4579
  %v4581 = vperm.slane %v4573, %v4580
  %v4582 = vrot.slane %v4545, 4
  %v4583 = vsel %vm206, %v4582, %v4533
  %v4584 = vrot.slane %v4533, 4
  %v4585 = vsel %vm206, %v4545, %v4584
  %v4587 = vunpack.c.l.s4 1934713408
  %v4588 = vunpack.c.0.s8 %v4587
  %v4589 = vperm.slane %v4583, %v4588
  %v4591 = vunpack.c.l.s4 1934713408
  %v4592 = vunpack.c.0.s8 %v4591
  %v4593 = vperm.slane %v4585, %v4592
  %v4594 = vrot.slane %v4565, 4
  %v4595 = vsel %vm206, %v4594, %v4553
  %v4596 = vrot.slane %v4553, 4
  %v4597 = vsel %vm206, %v4565, %v4596
  %v4599 = vunpack.c.l.s4 1934713408
  %v4600 = vunpack.c.0.s8 %v4599
  %v4601 = vperm.slane %v4595, %v4600
  %v4603 = vunpack.c.l.s4 1934713408
  %v4604 = vunpack.c.0.s8 %v4603
  %v4605 = vperm.slane %v4597, %v4604
  %v4606 = vrot.slane %v4569, 4
  %v4607 = vsel %vm206, %v4606, %v4557
  %v4608 = vrot.slane %v4557, 4
  %v4609 = vsel %vm206, %v4569, %v4608
  %v4611 = vunpack.c.l.s4 1934713408
  %v4612 = vunpack.c.0.s8 %v4611
  %v4613 = vperm.slane %v4607, %v4612
  %v4615 = vunpack.c.l.s4 1934713408
  %v4616 = vunpack.c.0.s8 %v4615
  %v4617 = vperm.slane %v4609, %v4616
  %v4618 = vrot.slane %v4601, 4
  %v4619 = vsel %vm206, %v4618, %v4577
  %v4620 = vrot.slane %v4577, 4
  %v4621 = vsel %vm206, %v4601, %v4620
  %v4622 = vrot.slane %v4605, 4
  %v4623 = vsel %vm206, %v4622, %v4581
  %v4624 = vrot.slane %v4581, 4
  %v4625 = vsel %vm206, %v4605, %v4624
  %v4626 = vrot.slane %v4613, 4
  %v4627 = vsel %vm206, %v4626, %v4589
  %v4628 = vrot.slane %v4589, 4
  %v4629 = vsel %vm206, %v4613, %v4628
  %v4630 = vrot.slane %v4617, 4
  %v4631 = vsel %vm206, %v4630, %v4593
  %v4632 = vrot.slane %v4593, 4
  %v4633 = vsel %vm206, %v4617, %v4632
  %v4634 = vrot.slane %v3776, 4
  %v4635 = vsel %vm206, %v4634, %v3748
  %v4636 = vrot.slane %v3748, 4
  %v4637 = vsel %vm206, %v3776, %v4636
  %v4639 = vunpack.c.l.s4 1983009808
  %v4640 = vunpack.c.0.s8 %v4639
  %v4641 = vperm.slane %v4635, %v4640
  %v4643 = vunpack.c.l.s4 1983009808
  %v4644 = vunpack.c.0.s8 %v4643
  %v4645 = vperm.slane %v4637, %v4644
  %v4646 = vrot.slane %v3790, 4
  %v4647 = vsel %vm206, %v4646, %v3762
  %v4648 = vrot.slane %v3762, 4
  %v4649 = vsel %vm206, %v3790, %v4648
  %v4651 = vunpack.c.l.s4 1983009808
  %v4652 = vunpack.c.0.s8 %v4651
  %v4653 = vperm.slane %v4647, %v4652
  %v4655 = vunpack.c.l.s4 1983009808
  %v4656 = vunpack.c.0.s8 %v4655
  %v4657 = vperm.slane %v4649, %v4656
  %v4658 = vrot.slane %v3832, 4
  %v4659 = vsel %vm206, %v4658, %v3804
  %v4660 = vrot.slane %v3804, 4
  %v4661 = vsel %vm206, %v3832, %v4660
  %v4663 = vunpack.c.l.s4 1983009808
  %v4664 = vunpack.c.0.s8 %v4663
  %v4665 = vperm.slane %v4659, %v4664
  %v4667 = vunpack.c.l.s4 1983009808
  %v4668 = vunpack.c.0.s8 %v4667
  %v4669 = vperm.slane %v4661, %v4668
  %v4670 = vrot.slane %v3846, 4
  %v4671 = vsel %vm206, %v4670, %v3818
  %v4672 = vrot.slane %v3818, 4
  %v4673 = vsel %vm206, %v3846, %v4672
  %v4675 = vunpack.c.l.s4 1983009808
  %v4676 = vunpack.c.0.s8 %v4675
  %v4677 = vperm.slane %v4671, %v4676
  %v4679 = vunpack.c.l.s4 1983009808
  %v4680 = vunpack.c.0.s8 %v4679
  %v4681 = vperm.slane %v4673, %v4680
  %v4682 = vrot.slane %v4653, 4
  %v4683 = vsel %vm206, %v4682, %v4641
  %v4684 = vrot.slane %v4641, 4
  %v4685 = vsel %vm206, %v4653, %v4684
  %v4687 = vunpack.c.l.s4 1934713408
  %v4688 = vunpack.c.0.s8 %v4687
  %v4689 = vperm.slane %v4683, %v4688
  %v4691 = vunpack.c.l.s4 1934713408
  %v4692 = vunpack.c.0.s8 %v4691
  %v4693 = vperm.slane %v4685, %v4692
  %v4694 = vrot.slane %v4657, 4
  %v4695 = vsel %vm206, %v4694, %v4645
  %v4696 = vrot.slane %v4645, 4
  %v4697 = vsel %vm206, %v4657, %v4696
  %v4699 = vunpack.c.l.s4 1934713408
  %v4700 = vunpack.c.0.s8 %v4699
  %v4701 = vperm.slane %v4695, %v4700
  %v4703 = vunpack.c.l.s4 1934713408
  %v4704 = vunpack.c.0.s8 %v4703
  %v4705 = vperm.slane %v4697, %v4704
  %v4706 = vrot.slane %v4677, 4
  %v4707 = vsel %vm206, %v4706, %v4665
  %v4708 = vrot.slane %v4665, 4
  %v4709 = vsel %vm206, %v4677, %v4708
  %v4711 = vunpack.c.l.s4 1934713408
  %v4712 = vunpack.c.0.s8 %v4711
  %v4713 = vperm.slane %v4707, %v4712
  %v4715 = vunpack.c.l.s4 1934713408
  %v4716 = vunpack.c.0.s8 %v4715
  %v4717 = vperm.slane %v4709, %v4716
  %v4718 = vrot.slane %v4681, 4
  %v4719 = vsel %vm206, %v4718, %v4669
  %v4720 = vrot.slane %v4669, 4
  %v4721 = vsel %vm206, %v4681, %v4720
  %v4723 = vunpack.c.l.s4 1934713408
  %v4724 = vunpack.c.0.s8 %v4723
  %v4725 = vperm.slane %v4719, %v4724
  %v4727 = vunpack.c.l.s4 1934713408
  %v4728 = vunpack.c.0.s8 %v4727
  %v4729 = vperm.slane %v4721, %v4728
  %v4730 = vrot.slane %v4713, 4
  %v4731 = vsel %vm206, %v4730, %v4689
  %v4732 = vrot.slane %v4689, 4
  %v4733 = vsel %vm206, %v4713, %v4732
  %v4734 = vrot.slane %v4717, 4
  %v4735 = vsel %vm206, %v4734, %v4693
  %v4736 = vrot.slane %v4693, 4
  %v4737 = vsel %vm206, %v4717, %v4736
  %v4738 = vrot.slane %v4725, 4
  %v4739 = vsel %vm206, %v4738, %v4701
  %v4740 = vrot.slane %v4701, 4
  %v4741 = vsel %vm206, %v4725, %v4740
  %v4742 = vrot.slane %v4729, 4
  %v4743 = vsel %vm206, %v4742, %v4705
  %v4744 = vrot.slane %v4705, 4
  %v4745 = vsel %vm206, %v4729, %v4744
  %v4746 = vrot.slane %v3888, 4
  %v4747 = vsel %vm206, %v4746, %v3860
  %v4748 = vrot.slane %v3860, 4
  %v4749 = vsel %vm206, %v3888, %v4748
  %v4751 = vunpack.c.l.s4 1983009808
  %v4752 = vunpack.c.0.s8 %v4751
  %v4753 = vperm.slane %v4747, %v4752
  %v4755 = vunpack.c.l.s4 1983009808
  %v4756 = vunpack.c.0.s8 %v4755
  %v4757 = vperm.slane %v4749, %v4756
  %v4758 = vrot.slane %v3902, 4
  %v4759 = vsel %vm206, %v4758, %v3874
  %v4760 = vrot.slane %v3874, 4
  %v4761 = vsel %vm206, %v3902, %v4760
  %v4763 = vunpack.c.l.s4 1983009808
  %v4764 = vunpack.c.0.s8 %v4763
  %v4765 = vperm.slane %v4759, %v4764
  %v4767 = vunpack.c.l.s4 1983009808
  %v4768 = vunpack.c.0.s8 %v4767
  %v4769 = vperm.slane %v4761, %v4768
  %v4770 = vrot.slane %v3944, 4
  %v4771 = vsel %vm206, %v4770, %v3916
  %v4772 = vrot.slane %v3916, 4
  %v4773 = vsel %vm206, %v3944, %v4772
  %v4775 = vunpack.c.l.s4 1983009808
  %v4776 = vunpack.c.0.s8 %v4775
  %v4777 = vperm.slane %v4771, %v4776
  %v4779 = vunpack.c.l.s4 1983009808
  %v4780 = vunpack.c.0.s8 %v4779
  %v4781 = vperm.slane %v4773, %v4780
  %v4782 = vrot.slane %v3958, 4
  %v4783 = vsel %vm206, %v4782, %v3930
  %v4784 = vrot.slane %v3930, 4
  %v4785 = vsel %vm206, %v3958, %v4784
  %v4787 = vunpack.c.l.s4 1983009808
  %v4788 = vunpack.c.0.s8 %v4787
  %v4789 = vperm.slane %v4783, %v4788
  %v4791 = vunpack.c.l.s4 1983009808
  %v4792 = vunpack.c.0.s8 %v4791
  %v4793 = vperm.slane %v4785, %v4792
  %v4794 = vrot.slane %v4765, 4
  %v4795 = vsel %vm206, %v4794, %v4753
  %v4796 = vrot.slane %v4753, 4
  %v4797 = vsel %vm206, %v4765, %v4796
  %v4799 = vunpack.c.l.s4 1934713408
  %v4800 = vunpack.c.0.s8 %v4799
  %v4801 = vperm.slane %v4795, %v4800
  %v4803 = vunpack.c.l.s4 1934713408
  %v4804 = vunpack.c.0.s8 %v4803
  %v4805 = vperm.slane %v4797, %v4804
  %v4806 = vrot.slane %v4769, 4
  %v4807 = vsel %vm206, %v4806, %v4757
  %v4808 = vrot.slane %v4757, 4
  %v4809 = vsel %vm206, %v4769, %v4808
  %v4811 = vunpack.c.l.s4 1934713408
  %v4812 = vunpack.c.0.s8 %v4811
  %v4813 = vperm.slane %v4807, %v4812
  %v4815 = vunpack.c.l.s4 1934713408
  %v4816 = vunpack.c.0.s8 %v4815
  %v4817 = vperm.slane %v4809, %v4816
  %v4818 = vrot.slane %v4789, 4
  %v4819 = vsel %vm206, %v4818, %v4777
  %v4820 = vrot.slane %v4777, 4
  %v4821 = vsel %vm206, %v4789, %v4820
  %v4823 = vunpack.c.l.s4 1934713408
  %v4824 = vunpack.c.0.s8 %v4823
  %v4825 = vperm.slane %v4819, %v4824
  %v4827 = vunpack.c.l.s4 1934713408
  %v4828 = vunpack.c.0.s8 %v4827
  %v4829 = vperm.slane %v4821, %v4828
  %v4830 = vrot.slane %v4793, 4
  %v4831 = vsel %vm206, %v4830, %v4781
  %v4832 = vrot.slane %v4781, 4
  %v4833 = vsel %vm206, %v4793, %v4832
  %v4835 = vunpack.c.l.s4 1934713408
  %v4836 = vunpack.c.0.s8 %v4835
  %v4837 = vperm.slane %v4831, %v4836
  %v4839 = vunpack.c.l.s4 1934713408
  %v4840 = vunpack.c.0.s8 %v4839
  %v4841 = vperm.slane %v4833, %v4840
  %v4842 = vrot.slane %v4825, 4
  %v4843 = vsel %vm206, %v4842, %v4801
  %v4844 = vrot.slane %v4801, 4
  %v4845 = vsel %vm206, %v4825, %v4844
  %v4846 = vrot.slane %v4829, 4
  %v4847 = vsel %vm206, %v4846, %v4805
  %v4848 = vrot.slane %v4805, 4
  %v4849 = vsel %vm206, %v4829, %v4848
  %v4850 = vrot.slane %v4837, 4
  %v4851 = vsel %vm206, %v4850, %v4813
  %v4852 = vrot.slane %v4813, 4
  %v4853 = vsel %vm206, %v4837, %v4852
  %v4854 = vrot.slane %v4841, 4
  %v4855 = vsel %vm206, %v4854, %v4817
  %v4856 = vrot.slane %v4817, 4
  %v4857 = vsel %vm206, %v4841, %v4856
  %v4858 = vrot.slane %v4000, 4
  %v4859 = vsel %vm206, %v4858, %v3972
  %v4860 = vrot.slane %v3972, 4
  %v4861 = vsel %vm206, %v4000, %v4860
  %v4863 = vunpack.c.l.s4 1983009808
  %v4864 = vunpack.c.0.s8 %v4863
  %v4865 = vperm.slane %v4859, %v4864
  %v4867 = vunpack.c.l.s4 1983009808
  %v4868 = vunpack.c.0.s8 %v4867
  %v4869 = vperm.slane %v4861, %v4868
  %v4870 = vrot.slane %v4014, 4
  %v4871 = vsel %vm206, %v4870, %v3986
  %v4872 = vrot.slane %v3986, 4
  %v4873 = vsel %vm206, %v4014, %v4872
  %v4875 = vunpack.c.l.s4 1983009808
  %v4876 = vunpack.c.0.s8 %v4875
  %v4877 = vperm.slane %v4871, %v4876
  %v4879 = vunpack.c.l.s4 1983009808
  %v4880 = vunpack.c.0.s8 %v4879
  %v4881 = vperm.slane %v4873, %v4880
  %v4882 = vrot.slane %v4056, 4
  %v4883 = vsel %vm206, %v4882, %v4028
  %v4884 = vrot.slane %v4028, 4
  %v4885 = vsel %vm206, %v4056, %v4884
  %v4887 = vunpack.c.l.s4 1983009808
  %v4888 = vunpack.c.0.s8 %v4887
  %v4889 = vperm.slane %v4883, %v4888
  %v4891 = vunpack.c.l.s4 1983009808
  %v4892 = vunpack.c.0.s8 %v4891
  %v4893 = vperm.slane %v4885, %v4892
  %v4894 = vrot.slane %v4070, 4
  %v4895 = vsel %vm206, %v4894, %v4042
  %v4896 = vrot.slane %v4042, 4
  %v4897 = vsel %vm206, %v4070, %v4896
  %v4899 = vunpack.c.l.s4 1983009808
  %v4900 = vunpack.c.0.s8 %v4899
  %v4901 = vperm.slane %v4895, %v4900
  %v4903 = vunpack.c.l.s4 1983009808
  %v4904 = vunpack.c.0.s8 %v4903
  %v4905 = vperm.slane %v4897, %v4904
  %v4906 = vrot.slane %v4877, 4
  %v4907 = vsel %vm206, %v4906, %v4865
  %v4908 = vrot.slane %v4865, 4
  %v4909 = vsel %vm206, %v4877, %v4908
  %v4911 = vunpack.c.l.s4 1934713408
  %v4912 = vunpack.c.0.s8 %v4911
  %v4913 = vperm.slane %v4907, %v4912
  %v4915 = vunpack.c.l.s4 1934713408
  %v4916 = vunpack.c.0.s8 %v4915
  %v4917 = vperm.slane %v4909, %v4916
  %v4918 = vrot.slane %v4881, 4
  %v4919 = vsel %vm206, %v4918, %v4869
  %v4920 = vrot.slane %v4869, 4
  %v4921 = vsel %vm206, %v4881, %v4920
  %v4923 = vunpack.c.l.s4 1934713408
  %v4924 = vunpack.c.0.s8 %v4923
  %v4925 = vperm.slane %v4919, %v4924
  %v4927 = vunpack.c.l.s4 1934713408
  %v4928 = vunpack.c.0.s8 %v4927
  %v4929 = vperm.slane %v4921, %v4928
  %v4930 = vrot.slane %v4901, 4
  %v4931 = vsel %vm206, %v4930, %v4889
  %v4932 = vrot.slane %v4889, 4
  %v4933 = vsel %vm206, %v4901, %v4932
  %v4935 = vunpack.c.l.s4 1934713408
  %v4936 = vunpack.c.0.s8 %v4935
  %v4937 = vperm.slane %v4931, %v4936
  %v4939 = vunpack.c.l.s4 1934713408
  %v4940 = vunpack.c.0.s8 %v4939
  %v4941 = vperm.slane %v4933, %v4940
  %v4942 = vrot.slane %v4905, 4
  %v4943 = vsel %vm206, %v4942, %v4893
  %v4944 = vrot.slane %v4893, 4
  %v4945 = vsel %vm206, %v4905, %v4944
  %v4947 = vunpack.c.l.s4 1934713408
  %v4948 = vunpack.c.0.s8 %v4947
  %v4949 = vperm.slane %v4943, %v4948
  %v4951 = vunpack.c.l.s4 1934713408
  %v4952 = vunpack.c.0.s8 %v4951
  %v4953 = vperm.slane %v4945, %v4952
  %v4954 = vrot.slane %v4937, 4
  %v4955 = vsel %vm206, %v4954, %v4913
  %v4956 = vrot.slane %v4913, 4
  %v4957 = vsel %vm206, %v4937, %v4956
  %v4958 = vrot.slane %v4941, 4
  %v4959 = vsel %vm206, %v4958, %v4917
  %v4960 = vrot.slane %v4917, 4
  %v4961 = vsel %vm206, %v4941, %v4960
  %v4962 = vrot.slane %v4949, 4
  %v4963 = vsel %vm206, %v4962, %v4925
  %v4964 = vrot.slane %v4925, 4
  %v4965 = vsel %vm206, %v4949, %v4964
  %v4966 = vrot.slane %v4953, 4
  %v4967 = vsel %vm206, %v4966, %v4929
  %v4968 = vrot.slane %v4929, 4
  %v4969 = vsel %vm206, %v4953, %v4968
  %v4970 = vrot.slane %v3218, 4
  %v4971 = vsel %vm206, %v4970, %v3190
  %v4973 = vunpack.c.l.s4 1983009808
  %v4974 = vunpack.c.0.s8 %v4973
  %v4975 = vperm.slane %v4971, %v4974
  %v4976 = vrot.slane %v3232, 4
  %v4977 = vsel %vm206, %v4976, %v3204
  %v4979 = vunpack.c.l.s4 1983009808
  %v4980 = vunpack.c.0.s8 %v4979
  %v4981 = vperm.slane %v4977, %v4980
  %v4982 = vrot.slane %v3274, 4
  %v4983 = vsel %vm206, %v4982, %v3246
  %v4985 = vunpack.c.l.s4 1983009808
  %v4986 = vunpack.c.0.s8 %v4985
  %v4987 = vperm.slane %v4983, %v4986
  %v4988 = vrot.slane %v3288, 4
  %v4989 = vsel %vm206, %v4988, %v3260
  %v4991 = vunpack.c.l.s4 1983009808
  %v4992 = vunpack.c.0.s8 %v4991
  %v4993 = vperm.slane %v4989, %v4992
  %v4994 = vrot.slane %v4981, 4
  %v4995 = vsel %vm206, %v4994, %v4975
  %v4997 = vunpack.c.l.s4 1934713408
  %v4998 = vunpack.c.0.s8 %v4997
  %v4999 = vperm.slane %v4995, %v4998
  %v5000 = vrot.slane %v4993, 4
  %v5001 = vsel %vm206, %v5000, %v4987
  %v5003 = vunpack.c.l.s4 1934713408
  %v5004 = vunpack.c.0.s8 %v5003
  %v5005 = vperm.slane %v5001, %v5004
  %v5006 = vrot.slane %v5005, 4
  %v5007 = vsel %vm206, %v5006, %v4999
  %v5008 = vrot.slane %v4999, 4
  %v5009 = vsel %vm206, %v5005, %v5008
  %v5010 = vrot.slane %v3330, 4
  %v5011 = vsel %vm206, %v5010, %v3302
  %v5013 = vunpack.c.l.s4 1983009808
  %v5014 = vunpack.c.0.s8 %v5013
  %v5015 = vperm.slane %v5011, %v5014
  %v5016 = vrot.slane %v3344, 4
  %v5017 = vsel %vm206, %v5016, %v3316
  %v5019 = vunpack.c.l.s4 1983009808
  %v5020 = vunpack.c.0.s8 %v5019
  %v5021 = vperm.slane %v5017, %v5020
  %v5022 = vrot.slane %v3386, 4
  %v5023 = vsel %vm206, %v5022, %v3358
  %v5025 = vunpack.c.l.s4 1983009808
  %v5026 = vunpack.c.0.s8 %v5025
  %v5027 = vperm.slane %v5023, %v5026
  %v5028 = vrot.slane %v3400, 4
  %v5029 = vsel %vm206, %v5028, %v3372
  %v5031 = vunpack.c.l.s4 1983009808
  %v5032 = vunpack.c.0.s8 %v5031
  %v5033 = vperm.slane %v5029, %v5032
  %v5034 = vrot.slane %v5021, 4
  %v5035 = vsel %vm206, %v5034, %v5015
  %v5037 = vunpack.c.l.s4 1934713408
  %v5038 = vunpack.c.0.s8 %v5037
  %v5039 = vperm.slane %v5035, %v5038
  %v5040 = vrot.slane %v5033, 4
  %v5041 = vsel %vm206, %v5040, %v5027
  %v5043 = vunpack.c.l.s4 1934713408
  %v5044 = vunpack.c.0.s8 %v5043
  %v5045 = vperm.slane %v5041, %v5044
  %v5046 = vrot.slane %v5045, 4
  %v5047 = vsel %vm206, %v5046, %v5039
  %v5048 = vrot.slane %v5039, 4
  %v5049 = vsel %vm206, %v5045, %v5048
  %v5050 = vrot.slane %v3442, 4
  %v5051 = vsel %vm206, %v5050, %v3414
  %v5053 = vunpack.c.l.s4 1983009808
  %v5054 = vunpack.c.0.s8 %v5053
  %v5055 = vperm.slane %v5051, %v5054
  %v5056 = vrot.slane %v3456, 4
  %v5057 = vsel %vm206, %v5056, %v3428
  %v5059 = vunpack.c.l.s4 1983009808
  %v5060 = vunpack.c.0.s8 %v5059
  %v5061 = vperm.slane %v5057, %v5060
  %v5062 = vrot.slane %v3498, 4
  %v5063 = vsel %vm206, %v5062, %v3470
  %v5065 = vunpack.c.l.s4 1983009808
  %v5066 = vunpack.c.0.s8 %v5065
  %v5067 = vperm.slane %v5063, %v5066
  %v5068 = vrot.slane %v3512, 4
  %v5069 = vsel %vm206, %v5068, %v3484
  %v5071 = vunpack.c.l.s4 1983009808
  %v5072 = vunpack.c.0.s8 %v5071
  %v5073 = vperm.slane %v5069, %v5072
  %v5074 = vrot.slane %v5061, 4
  %v5075 = vsel %vm206, %v5074, %v5055
  %v5077 = vunpack.c.l.s4 1934713408
  %v5078 = vunpack.c.0.s8 %v5077
  %v5079 = vperm.slane %v5075, %v5078
  %v5080 = vrot.slane %v5073, 4
  %v5081 = vsel %vm206, %v5080, %v5067
  %v5083 = vunpack.c.l.s4 1934713408
  %v5084 = vunpack.c.0.s8 %v5083
  %v5085 = vperm.slane %v5081, %v5084
  %v5086 = vrot.slane %v5085, 4
  %v5087 = vsel %vm206, %v5086, %v5079
  %v5088 = vrot.slane %v5079, 4
  %v5089 = vsel %vm206, %v5085, %v5088
  %v5090 = vrot.slane %v3554, 4
  %v5091 = vsel %vm206, %v5090, %v3526
  %v5093 = vunpack.c.l.s4 1983009808
  %v5094 = vunpack.c.0.s8 %v5093
  %v5095 = vperm.slane %v5091, %v5094
  %v5096 = vrot.slane %v3568, 4
  %v5097 = vsel %vm206, %v5096, %v3540
  %v5099 = vunpack.c.l.s4 1983009808
  %v5100 = vunpack.c.0.s8 %v5099
  %v5101 = vperm.slane %v5097, %v5100
  %v5102 = vrot.slane %v3610, 4
  %v5103 = vsel %vm206, %v5102, %v3582
  %v5105 = vunpack.c.l.s4 1983009808
  %v5106 = vunpack.c.0.s8 %v5105
  %v5107 = vperm.slane %v5103, %v5106
  %v5108 = vrot.slane %v3624, 4
  %v5109 = vsel %vm206, %v5108, %v3596
  %v5111 = vunpack.c.l.s4 1983009808
  %v5112 = vunpack.c.0.s8 %v5111
  %v5113 = vperm.slane %v5109, %v5112
  %v5114 = vrot.slane %v5101, 4
  %v5115 = vsel %vm206, %v5114, %v5095
  %v5117 = vunpack.c.l.s4 1934713408
  %v5118 = vunpack.c.0.s8 %v5117
  %v5119 = vperm.slane %v5115, %v5118
  %v5120 = vrot.slane %v5113, 4
  %v5121 = vsel %vm206, %v5120, %v5107
  %v5123 = vunpack.c.l.s4 1934713408
  %v5124 = vunpack.c.0.s8 %v5123
  %v5125 = vperm.slane %v5121, %v5124
  %v5126 = vrot.slane %v5125, 4
  %v5127 = vsel %vm206, %v5126, %v5119
  %v5128 = vrot.slane %v5119, 4
  %v5129 = vsel %vm206, %v5125, %v5128
  %v5130 = vrot.slane %v3666, 4
  %v5131 = vsel %vm206, %v5130, %v3638
  %v5133 = vunpack.c.l.s4 1983009808
  %v5134 = vunpack.c.0.s8 %v5133
  %v5135 = vperm.slane %v5131, %v5134
  %v5136 = vrot.slane %v3680, 4
  %v5137 = vsel %vm206, %v5136, %v3652
  %v5139 = vunpack.c.l.s4 1983009808
  %v5140 = vunpack.c.0.s8 %v5139
  %v5141 = vperm.slane %v5137, %v5140
  %v5142 = vrot.slane %v3722, 4
  %v5143 = vsel %vm206, %v5142, %v3694
  %v5145 = vunpack.c.l.s4 1983009808
  %v5146 = vunpack.c.0.s8 %v5145
  %v5147 = vperm.slane %v5143, %v5146
  %v5148 = vrot.slane %v3736, 4
  %v5149 = vsel %vm206, %v5148, %v3708
  %v5151 = vunpack.c.l.s4 1983009808
  %v5152 = vunpack.c.0.s8 %v5151
  %v5153 = vperm.slane %v5149, %v5152
  %v5154 = vrot.slane %v5141, 4
  %v5155 = vsel %vm206, %v5154, %v5135
  %v5157 = vunpack.c.l.s4 1934713408
  %v5158 = vunpack.c.0.s8 %v5157
  %v5159 = vperm.slane %v5155, %v5158
  %v5160 = vrot.slane %v5153, 4
  %v5161 = vsel %vm206, %v5160, %v5147
  %v5163 = vunpack.c.l.s4 1934713408
  %v5164 = vunpack.c.0.s8 %v5163
  %v5165 = vperm.slane %v5161, %v5164
  %v5166 = vrot.slane %v5165, 4
  %v5167 = vsel %vm206, %v5166, %v5159
  %v5168 = vrot.slane %v5159, 4
  %v5169 = vsel %vm206, %v5165, %v5168
  %v5170 = vrot.slane %v3778, 4
  %v5171 = vsel %vm206, %v5170, %v3750
  %v5173 = vunpack.c.l.s4 1983009808
  %v5174 = vunpack.c.0.s8 %v5173
  %v5175 = vperm.slane %v5171, %v5174
  %v5176 = vrot.slane %v3792, 4
  %v5177 = vsel %vm206, %v5176, %v3764
  %v5179 = vunpack.c.l.s4 1983009808
  %v5180 = vunpack.c.0.s8 %v5179
  %v5181 = vperm.slane %v5177, %v5180
  %v5182 = vrot.slane %v3834, 4
  %v5183 = vsel %vm206, %v5182, %v3806
  %v5185 = vunpack.c.l.s4 1983009808
  %v5186 = vunpack.c.0.s8 %v5185
  %v5187 = vperm.slane %v5183, %v5186
  %v5188 = vrot.slane %v3848, 4
  %v5189 = vsel %vm206, %v5188, %v3820
  %v5191 = vunpack.c.l.s4 1983009808
  %v5192 = vunpack.c.0.s8 %v5191
  %v5193 = vperm.slane %v5189, %v5192
  %v5194 = vrot.slane %v5181, 4
  %v5195 = vsel %vm206, %v5194, %v5175
  %v5197 = vunpack.c.l.s4 1934713408
  %v5198 = vunpack.c.0.s8 %v5197
  %v5199 = vperm.slane %v5195, %v5198
  %v5200 = vrot.slane %v5193, 4
  %v5201 = vsel %vm206, %v5200, %v5187
  %v5203 = vunpack.c.l.s4 1934713408
  %v5204 = vunpack.c.0.s8 %v5203
  %v5205 = vperm.slane %v5201, %v5204
  %v5206 = vrot.slane %v5205, 4
  %v5207 = vsel %vm206, %v5206, %v5199
  %v5208 = vrot.slane %v5199, 4
  %v5209 = vsel %vm206, %v5205, %v5208
  %v5210 = vrot.slane %v3890, 4
  %v5211 = vsel %vm206, %v5210, %v3862
  %v5213 = vunpack.c.l.s4 1983009808
  %v5214 = vunpack.c.0.s8 %v5213
  %v5215 = vperm.slane %v5211, %v5214
  %v5216 = vrot.slane %v3904, 4
  %v5217 = vsel %vm206, %v5216, %v3876
  %v5219 = vunpack.c.l.s4 1983009808
  %v5220 = vunpack.c.0.s8 %v5219
  %v5221 = vperm.slane %v5217, %v5220
  %v5222 = vrot.slane %v3946, 4
  %v5223 = vsel %vm206, %v5222, %v3918
  %v5225 = vunpack.c.l.s4 1983009808
  %v5226 = vunpack.c.0.s8 %v5225
  %v5227 = vperm.slane %v5223, %v5226
  %v5228 = vrot.slane %v3960, 4
  %v5229 = vsel %vm206, %v5228, %v3932
  %v5231 = vunpack.c.l.s4 1983009808
  %v5232 = vunpack.c.0.s8 %v5231
  %v5233 = vperm.slane %v5229, %v5232
  %v5234 = vrot.slane %v5221, 4
  %v5235 = vsel %vm206, %v5234, %v5215
  %v5237 = vunpack.c.l.s4 1934713408
  %v5238 = vunpack.c.0.s8 %v5237
  %v5239 = vperm.slane %v5235, %v5238
  %v5240 = vrot.slane %v5233, 4
  %v5241 = vsel %vm206, %v5240, %v5227
  %v5243 = vunpack.c.l.s4 1934713408
  %v5244 = vunpack.c.0.s8 %v5243
  %v5245 = vperm.slane %v5241, %v5244
  %v5246 = vrot.slane %v5245, 4
  %v5247 = vsel %vm206, %v5246, %v5239
  %v5248 = vrot.slane %v5239, 4
  %v5249 = vsel %vm206, %v5245, %v5248
  %v5250 = vrot.slane %v4002, 4
  %v5251 = vsel %vm206, %v5250, %v3974
  %v5253 = vunpack.c.l.s4 1983009808
  %v5254 = vunpack.c.0.s8 %v5253
  %v5255 = vperm.slane %v5251, %v5254
  %v5256 = vrot.slane %v4016, 4
  %v5257 = vsel %vm206, %v5256, %v3988
  %v5259 = vunpack.c.l.s4 1983009808
  %v5260 = vunpack.c.0.s8 %v5259
  %v5261 = vperm.slane %v5257, %v5260
  %v5262 = vrot.slane %v4058, 4
  %v5263 = vsel %vm206, %v5262, %v4030
  %v5265 = vunpack.c.l.s4 1983009808
  %v5266 = vunpack.c.0.s8 %v5265
  %v5267 = vperm.slane %v5263, %v5266
  %v5268 = vrot.slane %v4072, 4
  %v5269 = vsel %vm206, %v5268, %v4044
  %v5271 = vunpack.c.l.s4 1983009808
  %v5272 = vunpack.c.0.s8 %v5271
  %v5273 = vperm.slane %v5269, %v5272
  %v5274 = vrot.slane %v5261, 4
  %v5275 = vsel %vm206, %v5274, %v5255
  %v5277 = vunpack.c.l.s4 1934713408
  %v5278 = vunpack.c.0.s8 %v5277
  %v5279 = vperm.slane %v5275, %v5278
  %v5280 = vrot.slane %v5273, 4
  %v5281 = vsel %vm206, %v5280, %v5267
  %v5283 = vunpack.c.l.s4 1934713408
  %v5284 = vunpack.c.0.s8 %v5283
  %v5285 = vperm.slane %v5281, %v5284
  %v5286 = vrot.slane %v5285, 4
  %v5287 = vsel %vm206, %v5286, %v5279
  %v5288 = vrot.slane %v5279, 4
  %v5289 = vsel %vm206, %v5285, %v5288
  %v5290 = vmax.f32 %v4171, 0.0
  %v5291 = vmax.f32 %v4283, 0.0
  %v5292 = vmax.f32 %v4395, 0.0
  %v5293 = vmax.f32 %v4507, 0.0
  %v5294 = vmax.f32 %v4619, 0.0
  %v5295 = vmax.f32 %v4731, 0.0
  %v5296 = vmax.f32 %v4843, 0.0
  %v5297 = vmax.f32 %v4955, 0.0
  %vm5298 = vcmp.ne.f32.partialorder %v4171, %v4171
  %vm5299 = vcmp.ne.f32.partialorder %v4283, %v4283
  %vm5300 = vcmp.ne.f32.partialorder %v4395, %v4395
  %vm5301 = vcmp.ne.f32.partialorder %v4507, %v4507
  %vm5302 = vcmp.ne.f32.partialorder %v4619, %v4619
  %vm5303 = vcmp.ne.f32.partialorder %v4731, %v4731
  %vm5304 = vcmp.ne.f32.partialorder %v4843, %v4843
  %vm5305 = vcmp.ne.f32.partialorder %v4955, %v4955
  %v5306 = vadd.f32 %v4171, 0.0
  %v5307 = vadd.f32 %v4283, 0.0
  %v5308 = vadd.f32 %v4395, 0.0
  %v5309 = vadd.f32 %v4507, 0.0
  %v5310 = vadd.f32 %v4619, 0.0
  %v5311 = vadd.f32 %v4731, 0.0
  %v5312 = vadd.f32 %v4843, 0.0
  %v5313 = vadd.f32 %v4955, 0.0
  %v5314 = vand.u32 2147483647, %v4171
  %v5315 = vand.u32 2147483647, %v4283
  %v5316 = vand.u32 2147483647, %v4395
  %v5317 = vand.u32 2147483647, %v4507
  %v5318 = vand.u32 2147483647, %v4619
  %v5319 = vand.u32 2147483647, %v4731
  %v5320 = vand.u32 2147483647, %v4843
  %v5321 = vand.u32 2147483647, %v4955
  %v5322 = vsub.f32 0.0, %v5314
  %v5323 = vsub.f32 0.0, %v5315
  %v5324 = vsub.f32 0.0, %v5316
  %v5325 = vsub.f32 0.0, %v5317
  %v5326 = vsub.f32 0.0, %v5318
  %v5327 = vsub.f32 0.0, %v5319
  %v5328 = vsub.f32 0.0, %v5320
  %v5329 = vsub.f32 0.0, %v5321
  %v5330 = vmul.f32 %v5322, 1.442695
  %v5331 = vpow.pop %v5330
  %v5332 = vmul.f32 %v5323, 1.442695
  %v5333 = vpow.pop %v5332
  %v5334 = vmul.f32 %v5324, 1.442695
  %v5335 = vpow.pop %v5334
  %v5336 = vmul.f32 %v5325, 1.442695
  %v5337 = vpow.pop %v5336
  %v5338 = vmul.f32 %v5326, 1.442695
  %v5339 = vpow.pop %v5338
  %v5340 = vmul.f32 %v5327, 1.442695
  %v5341 = vpow.pop %v5340
  %v5342 = vmul.f32 %v5328, 1.442695
  %v5343 = vpow.pop %v5342
  %v5344 = vmul.f32 %v5329, 1.442695
  %v5345 = vpow.pop %v5344
  %v5346 = vadd.f32 %v5331, 1.0
  %v5347 = vlog2.pop %v5346
  %v5348 = vmul.f32 %v5347, 0.6931472
  %v5349 = vmul.f32 -0.5, %v5331
  %v5350 = vadd.f32 %v5349, 1.0
  %v5351 = vmul.f32 %v5350, %v5331
  %v5352 = vand.u32 2147483647, %v5331
  %vm5353 = vcmp.lt.f32.partialorder %v5352, 0.0004427343
  %v5354 = vsel %vm5353, %v5351, %v5348
  %v5355 = vadd.f32 %v5333, 1.0
  %v5356 = vlog2.pop %v5355
  %v5357 = vmul.f32 %v5356, 0.6931472
  %v5358 = vmul.f32 -0.5, %v5333
  %v5359 = vadd.f32 %v5358, 1.0
  %v5360 = vmul.f32 %v5359, %v5333
  %v5361 = vand.u32 2147483647, %v5333
  %vm5362 = vcmp.lt.f32.partialorder %v5361, 0.0004427343
  %v5363 = vsel %vm5362, %v5360, %v5357
  %v5364 = vadd.f32 %v5335, 1.0
  %v5365 = vlog2.pop %v5364
  %v5366 = vmul.f32 %v5365, 0.6931472
  %v5367 = vmul.f32 -0.5, %v5335
  %v5368 = vadd.f32 %v5367, 1.0
  %v5369 = vmul.f32 %v5368, %v5335
  %v5370 = vand.u32 2147483647, %v5335
  %vm5371 = vcmp.lt.f32.partialorder %v5370, 0.0004427343
  %v5372 = vsel %vm5371, %v5369, %v5366
  %v5373 = vadd.f32 %v5337, 1.0
  %v5374 = vlog2.pop %v5373
  %v5375 = vmul.f32 %v5374, 0.6931472
  %v5376 = vmul.f32 -0.5, %v5337
  %v5377 = vadd.f32 %v5376, 1.0
  %v5378 = vmul.f32 %v5377, %v5337
  %v5379 = vand.u32 2147483647, %v5337
  %vm5380 = vcmp.lt.f32.partialorder %v5379, 0.0004427343
  %v5381 = vsel %vm5380, %v5378, %v5375
  %v5382 = vadd.f32 %v5339, 1.0
  %v5383 = vlog2.pop %v5382
  %v5384 = vmul.f32 %v5383, 0.6931472
  %v5385 = vmul.f32 -0.5, %v5339
  %v5386 = vadd.f32 %v5385, 1.0
  %v5387 = vmul.f32 %v5386, %v5339
  %v5388 = vand.u32 2147483647, %v5339
  %vm5389 = vcmp.lt.f32.partialorder %v5388, 0.0004427343
  %v5390 = vsel %vm5389, %v5387, %v5384
  %v5391 = vadd.f32 %v5341, 1.0
  %v5392 = vlog2.pop %v5391
  %v5393 = vmul.f32 %v5392, 0.6931472
  %v5394 = vmul.f32 -0.5, %v5341
  %v5395 = vadd.f32 %v5394, 1.0
  %v5396 = vmul.f32 %v5395, %v5341
  %v5397 = vand.u32 2147483647, %v5341
  %vm5398 = vcmp.lt.f32.partialorder %v5397, 0.0004427343
  %v5399 = vsel %vm5398, %v5396, %v5393
  %v5400 = vadd.f32 %v5343, 1.0
  %v5401 = vlog2.pop %v5400
  %v5402 = vmul.f32 %v5401, 0.6931472
  %v5403 = vmul.f32 -0.5, %v5343
  %v5404 = vadd.f32 %v5403, 1.0
  %v5405 = vmul.f32 %v5404, %v5343
  %v5406 = vand.u32 2147483647, %v5343
  %vm5407 = vcmp.lt.f32.partialorder %v5406, 0.0004427343
  %v5408 = vsel %vm5407, %v5405, %v5402
  %v5409 = vadd.f32 %v5345, 1.0
  %v5410 = vlog2.pop %v5409
  %v5411 = vmul.f32 %v5410, 0.6931472
  %v5412 = vmul.f32 -0.5, %v5345
  %v5413 = vadd.f32 %v5412, 1.0
  %v5414 = vmul.f32 %v5413, %v5345
  %v5415 = vand.u32 2147483647, %v5345
  %vm5416 = vcmp.lt.f32.partialorder %v5415, 0.0004427343
  %v5417 = vsel %vm5416, %v5414, %v5411
  %v5418 = vadd.f32 %v5290, %v5354
  %v5419 = vadd.f32 %v5291, %v5363
  %v5420 = vadd.f32 %v5292, %v5372
  %v5421 = vadd.f32 %v5293, %v5381
  %v5422 = vadd.f32 %v5294, %v5390
  %v5423 = vadd.f32 %v5295, %v5399
  %v5424 = vadd.f32 %v5296, %v5408
  %v5425 = vadd.f32 %v5297, %v5417
  %v5426 = vsel %vm5298, %v5306, %v5418
  %v5427 = vsel %vm5299, %v5307, %v5419
  %v5428 = vsel %vm5300, %v5308, %v5420
  %v5429 = vsel %vm5301, %v5309, %v5421
  %v5430 = vsel %vm5302, %v5310, %v5422
  %v5431 = vsel %vm5303, %v5311, %v5423
  %v5432 = vsel %vm5304, %v5312, %v5424
  %v5433 = vsel %vm5305, %v5313, %v5425
  %v5434 = vxor.u32 %v4173, 2147483648
  %v5435 = vxor.u32 %v4285, 2147483648
  %v5436 = vxor.u32 %v4397, 2147483648
  %v5437 = vxor.u32 %v4509, 2147483648
  %v5438 = vxor.u32 %v4621, 2147483648
  %v5439 = vxor.u32 %v4733, 2147483648
  %v5440 = vxor.u32 %v4845, 2147483648
  %v5441 = vxor.u32 %v4957, 2147483648
  %v5442 = vxor.u32 %v4175, 2147483648
  %v5443 = vxor.u32 %v4287, 2147483648
  %v5444 = vxor.u32 %v4399, 2147483648
  %v5445 = vxor.u32 %v4511, 2147483648
  %v5446 = vxor.u32 %v4623, 2147483648
  %v5447 = vxor.u32 %v4735, 2147483648
  %v5448 = vxor.u32 %v4847, 2147483648
  %v5449 = vxor.u32 %v4959, 2147483648
  %v5450 = vxor.u32 %v4177, 2147483648
  %v5451 = vxor.u32 %v4289, 2147483648
  %v5452 = vxor.u32 %v4401, 2147483648
  %v5453 = vxor.u32 %v4513, 2147483648
  %v5454 = vxor.u32 %v4625, 2147483648
  %v5455 = vxor.u32 %v4737, 2147483648
  %v5456 = vxor.u32 %v4849, 2147483648
  %v5457 = vxor.u32 %v4961, 2147483648
  %v5458 = vxor.u32 %v4179, 2147483648
  %v5459 = vxor.u32 %v4291, 2147483648
  %v5460 = vxor.u32 %v4403, 2147483648
  %v5461 = vxor.u32 %v4515, 2147483648
  %v5462 = vxor.u32 %v4627, 2147483648
  %v5463 = vxor.u32 %v4739, 2147483648
  %v5464 = vxor.u32 %v4851, 2147483648
  %v5465 = vxor.u32 %v4963, 2147483648
  %v5466 = vxor.u32 %v4181, 2147483648
  %v5467 = vxor.u32 %v4293, 2147483648
  %v5468 = vxor.u32 %v4405, 2147483648
  %v5469 = vxor.u32 %v4517, 2147483648
  %v5470 = vxor.u32 %v4629, 2147483648
  %v5471 = vxor.u32 %v4741, 2147483648
  %v5472 = vxor.u32 %v4853, 2147483648
  %v5473 = vxor.u32 %v4965, 2147483648
  %v5474 = vxor.u32 %v4183, 2147483648
  %v5475 = vxor.u32 %v4295, 2147483648
  %v5476 = vxor.u32 %v4407, 2147483648
  %v5477 = vxor.u32 %v4519, 2147483648
  %v5478 = vxor.u32 %v4631, 2147483648
  %v5479 = vxor.u32 %v4743, 2147483648
  %v5480 = vxor.u32 %v4855, 2147483648
  %v5481 = vxor.u32 %v4967, 2147483648
  %v5482 = vxor.u32 %v4185, 2147483648
  %v5483 = vxor.u32 %v4297, 2147483648
  %v5484 = vxor.u32 %v4409, 2147483648
  %v5485 = vxor.u32 %v4521, 2147483648
  %v5486 = vxor.u32 %v4633, 2147483648
  %v5487 = vxor.u32 %v4745, 2147483648
  %v5488 = vxor.u32 %v4857, 2147483648
  %v5489 = vxor.u32 %v4969, 2147483648
  %v5490 = vxor.u32 %v5007, 2147483648
  %v5491 = vxor.u32 %v5047, 2147483648
  %v5492 = vxor.u32 %v5087, 2147483648
  %v5493 = vxor.u32 %v5127, 2147483648
  %v5494 = vxor.u32 %v5167, 2147483648
  %v5495 = vxor.u32 %v5207, 2147483648
  %v5496 = vxor.u32 %v5247, 2147483648
  %v5497 = vxor.u32 %v5287, 2147483648
  %v5498 = vxor.u32 %v5009, 2147483648
  %v5499 = vxor.u32 %v5049, 2147483648
  %v5500 = vxor.u32 %v5089, 2147483648
  %v5501 = vxor.u32 %v5129, 2147483648
  %v5502 = vxor.u32 %v5169, 2147483648
  %v5503 = vxor.u32 %v5209, 2147483648
  %v5504 = vxor.u32 %v5249, 2147483648
  %v5505 = vxor.u32 %v5289, 2147483648
  %v5506 = vmul.f32 %v5434, 1.442695
  %v5507 = vpow.pop %v5506
  %v5508 = vmul.f32 %v5435, 1.442695
  %v5509 = vpow.pop %v5508
  %v5510 = vmul.f32 %v5436, 1.442695
  %v5511 = vpow.pop %v5510
  %v5512 = vmul.f32 %v5437, 1.442695
  %v5513 = vpow.pop %v5512
  %v5514 = vmul.f32 %v5438, 1.442695
  %v5515 = vpow.pop %v5514
  %v5516 = vmul.f32 %v5439, 1.442695
  %v5517 = vpow.pop %v5516
  %v5518 = vmul.f32 %v5440, 1.442695
  %v5519 = vpow.pop %v5518
  %v5520 = vmul.f32 %v5441, 1.442695
  %v5521 = vpow.pop %v5520
  %v5522 = vmul.f32 %v5442, 1.442695
  %v5523 = vpow.pop %v5522
  %v5524 = vmul.f32 %v5443, 1.442695
  %v5525 = vpow.pop %v5524
  %v5526 = vmul.f32 %v5444, 1.442695
  %v5527 = vpow.pop %v5526
  %v5528 = vmul.f32 %v5445, 1.442695
  %v5529 = vpow.pop %v5528
  %v5530 = vmul.f32 %v5446, 1.442695
  %v5531 = vpow.pop %v5530
  %v5532 = vmul.f32 %v5447, 1.442695
  %v5533 = vpow.pop %v5532
  %v5534 = vmul.f32 %v5448, 1.442695
  %v5535 = vpow.pop %v5534
  %v5536 = vmul.f32 %v5449, 1.442695
  %v5537 = vpow.pop %v5536
  %v5538 = vmul.f32 %v5450, 1.442695
  %v5539 = vpow.pop %v5538
  %v5540 = vmul.f32 %v5451, 1.442695
  %v5541 = vpow.pop %v5540
  %v5542 = vmul.f32 %v5452, 1.442695
  %v5543 = vpow.pop %v5542
  %v5544 = vmul.f32 %v5453, 1.442695
  %v5545 = vpow.pop %v5544
  %v5546 = vmul.f32 %v5454, 1.442695
  %v5547 = vpow.pop %v5546
  %v5548 = vmul.f32 %v5455, 1.442695
  %v5549 = vpow.pop %v5548
  %v5550 = vmul.f32 %v5456, 1.442695
  %v5551 = vpow.pop %v5550
  %v5552 = vmul.f32 %v5457, 1.442695
  %v5553 = vpow.pop %v5552
  %v5554 = vmul.f32 %v5458, 1.442695
  %v5555 = vpow.pop %v5554
  %v5556 = vmul.f32 %v5459, 1.442695
  %v5557 = vpow.pop %v5556
  %v5558 = vmul.f32 %v5460, 1.442695
  %v5559 = vpow.pop %v5558
  %v5560 = vmul.f32 %v5461, 1.442695
  %v5561 = vpow.pop %v5560
  %v5562 = vmul.f32 %v5462, 1.442695
  %v5563 = vpow.pop %v5562
  %v5564 = vmul.f32 %v5463, 1.442695
  %v5565 = vpow.pop %v5564
  %v5566 = vmul.f32 %v5464, 1.442695
  %v5567 = vpow.pop %v5566
  %v5568 = vmul.f32 %v5465, 1.442695
  %v5569 = vpow.pop %v5568
  %v5570 = vmul.f32 %v5466, 1.442695
  %v5571 = vpow.pop %v5570
  %v5572 = vmul.f32 %v5467, 1.442695
  %v5573 = vpow.pop %v5572
  %v5574 = vmul.f32 %v5468, 1.442695
  %v5575 = vpow.pop %v5574
  %v5576 = vmul.f32 %v5469, 1.442695
  %v5577 = vpow.pop %v5576
  %v5578 = vmul.f32 %v5470, 1.442695
  %v5579 = vpow.pop %v5578
  %v5580 = vmul.f32 %v5471, 1.442695
  %v5581 = vpow.pop %v5580
  %v5582 = vmul.f32 %v5472, 1.442695
  %v5583 = vpow.pop %v5582
  %v5584 = vmul.f32 %v5473, 1.442695
  %v5585 = vpow.pop %v5584
  %v5586 = vmul.f32 %v5474, 1.442695
  %v5587 = vpow.pop %v5586
  %v5588 = vmul.f32 %v5475, 1.442695
  %v5589 = vpow.pop %v5588
  %v5590 = vmul.f32 %v5476, 1.442695
  %v5591 = vpow.pop %v5590
  %v5592 = vmul.f32 %v5477, 1.442695
  %v5593 = vpow.pop %v5592
  %v5594 = vmul.f32 %v5478, 1.442695
  %v5595 = vpow.pop %v5594
  %v5596 = vmul.f32 %v5479, 1.442695
  %v5597 = vpow.pop %v5596
  %v5598 = vmul.f32 %v5480, 1.442695
  %v5599 = vpow.pop %v5598
  %v5600 = vmul.f32 %v5481, 1.442695
  %v5601 = vpow.pop %v5600
  %v5602 = vmul.f32 %v5482, 1.442695
  %v5603 = vpow.pop %v5602
  %v5604 = vmul.f32 %v5483, 1.442695
  %v5605 = vpow.pop %v5604
  %v5606 = vmul.f32 %v5484, 1.442695
  %v5607 = vpow.pop %v5606
  %v5608 = vmul.f32 %v5485, 1.442695
  %v5609 = vpow.pop %v5608
  %v5610 = vmul.f32 %v5486, 1.442695
  %v5611 = vpow.pop %v5610
  %v5612 = vmul.f32 %v5487, 1.442695
  %v5613 = vpow.pop %v5612
  %v5614 = vmul.f32 %v5488, 1.442695
  %v5615 = vpow.pop %v5614
  %v5616 = vmul.f32 %v5489, 1.442695
  %v5617 = vpow.pop %v5616
  %v5618 = vmul.f32 %v5490, 1.442695
  %v5619 = vpow.pop %v5618
  %v5620 = vmul.f32 %v5491, 1.442695
  %v5621 = vpow.pop %v5620
  %v5622 = vmul.f32 %v5492, 1.442695
  %v5623 = vpow.pop %v5622
  %v5624 = vmul.f32 %v5493, 1.442695
  %v5625 = vpow.pop %v5624
  %v5626 = vmul.f32 %v5494, 1.442695
  %v5627 = vpow.pop %v5626
  %v5628 = vmul.f32 %v5495, 1.442695
  %v5629 = vpow.pop %v5628
  %v5630 = vmul.f32 %v5496, 1.442695
  %v5631 = vpow.pop %v5630
  %v5632 = vmul.f32 %v5497, 1.442695
  %v5633 = vpow.pop %v5632
  %v5634 = vmul.f32 %v5498, 1.442695
  %v5635 = vpow.pop %v5634
  %v5636 = vmul.f32 %v5499, 1.442695
  %v5637 = vpow.pop %v5636
  %v5638 = vmul.f32 %v5500, 1.442695
  %v5639 = vpow.pop %v5638
  %v5640 = vmul.f32 %v5501, 1.442695
  %v5641 = vpow.pop %v5640
  %v5642 = vmul.f32 %v5502, 1.442695
  %v5643 = vpow.pop %v5642
  %v5644 = vmul.f32 %v5503, 1.442695
  %v5645 = vpow.pop %v5644
  %v5646 = vmul.f32 %v5504, 1.442695
  %v5647 = vpow.pop %v5646
  %v5648 = vmul.f32 %v5505, 1.442695
  %v5649 = vpow.pop %v5648
  %v5650 = vadd.f32 %v5507, 1.0
  %v5651 = vadd.f32 %v5509, 1.0
  %v5652 = vadd.f32 %v5511, 1.0
  %v5653 = vadd.f32 %v5513, 1.0
  %v5654 = vadd.f32 %v5515, 1.0
  %v5655 = vadd.f32 %v5517, 1.0
  %v5656 = vadd.f32 %v5519, 1.0
  %v5657 = vadd.f32 %v5521, 1.0
  %v5658 = vadd.f32 %v5523, 1.0
  %v5659 = vadd.f32 %v5525, 1.0
  %v5660 = vadd.f32 %v5527, 1.0
  %v5661 = vadd.f32 %v5529, 1.0
  %v5662 = vadd.f32 %v5531, 1.0
  %v5663 = vadd.f32 %v5533, 1.0
  %v5664 = vadd.f32 %v5535, 1.0
  %v5665 = vadd.f32 %v5537, 1.0
  %v5666 = vadd.f32 %v5539, 1.0
  %v5667 = vadd.f32 %v5541, 1.0
  %v5668 = vadd.f32 %v5543, 1.0
  %v5669 = vadd.f32 %v5545, 1.0
  %v5670 = vadd.f32 %v5547, 1.0
  %v5671 = vadd.f32 %v5549, 1.0
  %v5672 = vadd.f32 %v5551, 1.0
  %v5673 = vadd.f32 %v5553, 1.0
  %v5674 = vadd.f32 %v5555, 1.0
  %v5675 = vadd.f32 %v5557, 1.0
  %v5676 = vadd.f32 %v5559, 1.0
  %v5677 = vadd.f32 %v5561, 1.0
  %v5678 = vadd.f32 %v5563, 1.0
  %v5679 = vadd.f32 %v5565, 1.0
  %v5680 = vadd.f32 %v5567, 1.0
  %v5681 = vadd.f32 %v5569, 1.0
  %v5682 = vadd.f32 %v5571, 1.0
  %v5683 = vadd.f32 %v5573, 1.0
  %v5684 = vadd.f32 %v5575, 1.0
  %v5685 = vadd.f32 %v5577, 1.0
  %v5686 = vadd.f32 %v5579, 1.0
  %v5687 = vadd.f32 %v5581, 1.0
  %v5688 = vadd.f32 %v5583, 1.0
  %v5689 = vadd.f32 %v5585, 1.0
  %v5690 = vadd.f32 %v5587, 1.0
  %v5691 = vadd.f32 %v5589, 1.0
  %v5692 = vadd.f32 %v5591, 1.0
  %v5693 = vadd.f32 %v5593, 1.0
  %v5694 = vadd.f32 %v5595, 1.0
  %v5695 = vadd.f32 %v5597, 1.0
  %v5696 = vadd.f32 %v5599, 1.0
  %v5697 = vadd.f32 %v5601, 1.0
  %v5698 = vadd.f32 %v5603, 1.0
  %v5699 = vadd.f32 %v5605, 1.0
  %v5700 = vadd.f32 %v5607, 1.0
  %v5701 = vadd.f32 %v5609, 1.0
  %v5702 = vadd.f32 %v5611, 1.0
  %v5703 = vadd.f32 %v5613, 1.0
  %v5704 = vadd.f32 %v5615, 1.0
  %v5705 = vadd.f32 %v5617, 1.0
  %v5706 = vadd.f32 %v5619, 1.0
  %v5707 = vadd.f32 %v5621, 1.0
  %v5708 = vadd.f32 %v5623, 1.0
  %v5709 = vadd.f32 %v5625, 1.0
  %v5710 = vadd.f32 %v5627, 1.0
  %v5711 = vadd.f32 %v5629, 1.0
  %v5712 = vadd.f32 %v5631, 1.0
  %v5713 = vadd.f32 %v5633, 1.0
  %v5714 = vadd.f32 %v5635, 1.0
  %v5715 = vadd.f32 %v5637, 1.0
  %v5716 = vadd.f32 %v5639, 1.0
  %v5717 = vadd.f32 %v5641, 1.0
  %v5718 = vadd.f32 %v5643, 1.0
  %v5719 = vadd.f32 %v5645, 1.0
  %v5720 = vadd.f32 %v5647, 1.0
  %v5721 = vadd.f32 %v5649, 1.0
  %v5722 = vrcp.pop %v5650
  %v5723 = vmul.f32 %v5650, %v5722
  %v5724 = vsub.f32 1.0, %v5723
  %v5725 = vmul.f32 %v5722, %v5724
  %v5726 = vadd.f32 %v5722, %v5725
  %vm5727 = vweird.f32 %v5650
  %vm5728 = vweird.f32 %v5722
  %vm5729 = vmor %vm5727, %vm5728
  %v5730 = vsel %vm5729, %v5722, %v5726
  %v5731 = vand.u32 2147483647, %v5650
  %vm5732 = vcmp.eq.f32.partialorder %v5731, 8.507059e+37
  %v5733 = vand.u32 %v5650, 2147483648
  %v5734 = vor.u32 1.1754944e-38, %v5733
  %v5735 = vsel %vm5732, %v5734, %v5730
  %v5736 = vmul.f32 1.0, %v5735
  %v5737 = vrcp.pop %v5651
  %v5738 = vmul.f32 %v5651, %v5737
  %v5739 = vsub.f32 1.0, %v5738
  %v5740 = vmul.f32 %v5737, %v5739
  %v5741 = vadd.f32 %v5737, %v5740
  %vm5742 = vweird.f32 %v5651
  %vm5743 = vweird.f32 %v5737
  %vm5744 = vmor %vm5742, %vm5743
  %v5745 = vsel %vm5744, %v5737, %v5741
  %v5746 = vand.u32 2147483647, %v5651
  %vm5747 = vcmp.eq.f32.partialorder %v5746, 8.507059e+37
  %v5748 = vand.u32 %v5651, 2147483648
  %v5749 = vor.u32 1.1754944e-38, %v5748
  %v5750 = vsel %vm5747, %v5749, %v5745
  %v5751 = vmul.f32 1.0, %v5750
  %v5752 = vrcp.pop %v5652
  %v5753 = vmul.f32 %v5652, %v5752
  %v5754 = vsub.f32 1.0, %v5753
  %v5755 = vmul.f32 %v5752, %v5754
  %v5756 = vadd.f32 %v5752, %v5755
  %vm5757 = vweird.f32 %v5652
  %vm5758 = vweird.f32 %v5752
  %vm5759 = vmor %vm5757, %vm5758
  %v5760 = vsel %vm5759, %v5752, %v5756
  %v5761 = vand.u32 2147483647, %v5652
  %vm5762 = vcmp.eq.f32.partialorder %v5761, 8.507059e+37
  %v5763 = vand.u32 %v5652, 2147483648
  %v5764 = vor.u32 1.1754944e-38, %v5763
  %v5765 = vsel %vm5762, %v5764, %v5760
  %v5766 = vmul.f32 1.0, %v5765
  %v5767 = vrcp.pop %v5653
  %v5768 = vmul.f32 %v5653, %v5767
  %v5769 = vsub.f32 1.0, %v5768
  %v5770 = vmul.f32 %v5767, %v5769
  %v5771 = vadd.f32 %v5767, %v5770
  %vm5772 = vweird.f32 %v5653
  %vm5773 = vweird.f32 %v5767
  %vm5774 = vmor %vm5772, %vm5773
  %v5775 = vsel %vm5774, %v5767, %v5771
  %v5776 = vand.u32 2147483647, %v5653
  %vm5777 = vcmp.eq.f32.partialorder %v5776, 8.507059e+37
  %v5778 = vand.u32 %v5653, 2147483648
  %v5779 = vor.u32 1.1754944e-38, %v5778
  %v5780 = vsel %vm5777, %v5779, %v5775
  %v5781 = vmul.f32 1.0, %v5780
  %v5782 = vrcp.pop %v5654
  %v5783 = vmul.f32 %v5654, %v5782
  %v5784 = vsub.f32 1.0, %v5783
  %v5785 = vmul.f32 %v5782, %v5784
  %v5786 = vadd.f32 %v5782, %v5785
  %vm5787 = vweird.f32 %v5654
  %vm5788 = vweird.f32 %v5782
  %vm5789 = vmor %vm5787, %vm5788
  %v5790 = vsel %vm5789, %v5782, %v5786
  %v5791 = vand.u32 2147483647, %v5654
  %vm5792 = vcmp.eq.f32.partialorder %v5791, 8.507059e+37
  %v5793 = vand.u32 %v5654, 2147483648
  %v5794 = vor.u32 1.1754944e-38, %v5793
  %v5795 = vsel %vm5792, %v5794, %v5790
  %v5796 = vmul.f32 1.0, %v5795
  %v5797 = vrcp.pop %v5655
  %v5798 = vmul.f32 %v5655, %v5797
  %v5799 = vsub.f32 1.0, %v5798
  %v5800 = vmul.f32 %v5797, %v5799
  %v5801 = vadd.f32 %v5797, %v5800
  %vm5802 = vweird.f32 %v5655
  %vm5803 = vweird.f32 %v5797
  %vm5804 = vmor %vm5802, %vm5803
  %v5805 = vsel %vm5804, %v5797, %v5801
  %v5806 = vand.u32 2147483647, %v5655
  %vm5807 = vcmp.eq.f32.partialorder %v5806, 8.507059e+37
  %v5808 = vand.u32 %v5655, 2147483648
  %v5809 = vor.u32 1.1754944e-38, %v5808
  %v5810 = vsel %vm5807, %v5809, %v5805
  %v5811 = vmul.f32 1.0, %v5810
  %v5812 = vrcp.pop %v5656
  %v5813 = vmul.f32 %v5656, %v5812
  %v5814 = vsub.f32 1.0, %v5813
  %v5815 = vmul.f32 %v5812, %v5814
  %v5816 = vadd.f32 %v5812, %v5815
  %vm5817 = vweird.f32 %v5656
  %vm5818 = vweird.f32 %v5812
  %vm5819 = vmor %vm5817, %vm5818
  %v5820 = vsel %vm5819, %v5812, %v5816
  %v5821 = vand.u32 2147483647, %v5656
  %vm5822 = vcmp.eq.f32.partialorder %v5821, 8.507059e+37
  %v5823 = vand.u32 %v5656, 2147483648
  %v5824 = vor.u32 1.1754944e-38, %v5823
  %v5825 = vsel %vm5822, %v5824, %v5820
  %v5826 = vmul.f32 1.0, %v5825
  %v5827 = vrcp.pop %v5657
  %v5828 = vmul.f32 %v5657, %v5827
  %v5829 = vsub.f32 1.0, %v5828
  %v5830 = vmul.f32 %v5827, %v5829
  %v5831 = vadd.f32 %v5827, %v5830
  %vm5832 = vweird.f32 %v5657
  %vm5833 = vweird.f32 %v5827
  %vm5834 = vmor %vm5832, %vm5833
  %v5835 = vsel %vm5834, %v5827, %v5831
  %v5836 = vand.u32 2147483647, %v5657
  %vm5837 = vcmp.eq.f32.partialorder %v5836, 8.507059e+37
  %v5838 = vand.u32 %v5657, 2147483648
  %v5839 = vor.u32 1.1754944e-38, %v5838
  %v5840 = vsel %vm5837, %v5839, %v5835
  %v5841 = vmul.f32 1.0, %v5840
  %v5842 = vrcp.pop %v5658
  %v5843 = vmul.f32 %v5658, %v5842
  %v5844 = vsub.f32 1.0, %v5843
  %v5845 = vmul.f32 %v5842, %v5844
  %v5846 = vadd.f32 %v5842, %v5845
  %vm5847 = vweird.f32 %v5658
  %vm5848 = vweird.f32 %v5842
  %vm5849 = vmor %vm5847, %vm5848
  %v5850 = vsel %vm5849, %v5842, %v5846
  %v5851 = vand.u32 2147483647, %v5658
  %vm5852 = vcmp.eq.f32.partialorder %v5851, 8.507059e+37
  %v5853 = vand.u32 %v5658, 2147483648
  %v5854 = vor.u32 1.1754944e-38, %v5853
  %v5855 = vsel %vm5852, %v5854, %v5850
  %v5856 = vmul.f32 1.0, %v5855
  %v5857 = vrcp.pop %v5659
  %v5858 = vmul.f32 %v5659, %v5857
  %v5859 = vsub.f32 1.0, %v5858
  %v5860 = vmul.f32 %v5857, %v5859
  %v5861 = vadd.f32 %v5857, %v5860
  %vm5862 = vweird.f32 %v5659
  %vm5863 = vweird.f32 %v5857
  %vm5864 = vmor %vm5862, %vm5863
  %v5865 = vsel %vm5864, %v5857, %v5861
  %v5866 = vand.u32 2147483647, %v5659
  %vm5867 = vcmp.eq.f32.partialorder %v5866, 8.507059e+37
  %v5868 = vand.u32 %v5659, 2147483648
  %v5869 = vor.u32 1.1754944e-38, %v5868
  %v5870 = vsel %vm5867, %v5869, %v5865
  %v5871 = vmul.f32 1.0, %v5870
  %v5872 = vrcp.pop %v5660
  %v5873 = vmul.f32 %v5660, %v5872
  %v5874 = vsub.f32 1.0, %v5873
  %v5875 = vmul.f32 %v5872, %v5874
  %v5876 = vadd.f32 %v5872, %v5875
  %vm5877 = vweird.f32 %v5660
  %vm5878 = vweird.f32 %v5872
  %vm5879 = vmor %vm5877, %vm5878
  %v5880 = vsel %vm5879, %v5872, %v5876
  %v5881 = vand.u32 2147483647, %v5660
  %vm5882 = vcmp.eq.f32.partialorder %v5881, 8.507059e+37
  %v5883 = vand.u32 %v5660, 2147483648
  %v5884 = vor.u32 1.1754944e-38, %v5883
  %v5885 = vsel %vm5882, %v5884, %v5880
  %v5886 = vmul.f32 1.0, %v5885
  %v5887 = vrcp.pop %v5661
  %v5888 = vmul.f32 %v5661, %v5887
  %v5889 = vsub.f32 1.0, %v5888
  %v5890 = vmul.f32 %v5887, %v5889
  %v5891 = vadd.f32 %v5887, %v5890
  %vm5892 = vweird.f32 %v5661
  %vm5893 = vweird.f32 %v5887
  %vm5894 = vmor %vm5892, %vm5893
  %v5895 = vsel %vm5894, %v5887, %v5891
  %v5896 = vand.u32 2147483647, %v5661
  %vm5897 = vcmp.eq.f32.partialorder %v5896, 8.507059e+37
  %v5898 = vand.u32 %v5661, 2147483648
  %v5899 = vor.u32 1.1754944e-38, %v5898
  %v5900 = vsel %vm5897, %v5899, %v5895
  %v5901 = vmul.f32 1.0, %v5900
  %v5902 = vrcp.pop %v5662
  %v5903 = vmul.f32 %v5662, %v5902
  %v5904 = vsub.f32 1.0, %v5903
  %v5905 = vmul.f32 %v5902, %v5904
  %v5906 = vadd.f32 %v5902, %v5905
  %vm5907 = vweird.f32 %v5662
  %vm5908 = vweird.f32 %v5902
  %vm5909 = vmor %vm5907, %vm5908
  %v5910 = vsel %vm5909, %v5902, %v5906
  %v5911 = vand.u32 2147483647, %v5662
  %vm5912 = vcmp.eq.f32.partialorder %v5911, 8.507059e+37
  %v5913 = vand.u32 %v5662, 2147483648
  %v5914 = vor.u32 1.1754944e-38, %v5913
  %v5915 = vsel %vm5912, %v5914, %v5910
  %v5916 = vmul.f32 1.0, %v5915
  %v5917 = vrcp.pop %v5663
  %v5918 = vmul.f32 %v5663, %v5917
  %v5919 = vsub.f32 1.0, %v5918
  %v5920 = vmul.f32 %v5917, %v5919
  %v5921 = vadd.f32 %v5917, %v5920
  %vm5922 = vweird.f32 %v5663
  %vm5923 = vweird.f32 %v5917
  %vm5924 = vmor %vm5922, %vm5923
  %v5925 = vsel %vm5924, %v5917, %v5921
  %v5926 = vand.u32 2147483647, %v5663
  %vm5927 = vcmp.eq.f32.partialorder %v5926, 8.507059e+37
  %v5928 = vand.u32 %v5663, 2147483648
  %v5929 = vor.u32 1.1754944e-38, %v5928
  %v5930 = vsel %vm5927, %v5929, %v5925
  %v5931 = vmul.f32 1.0, %v5930
  %v5932 = vrcp.pop %v5664
  %v5933 = vmul.f32 %v5664, %v5932
  %v5934 = vsub.f32 1.0, %v5933
  %v5935 = vmul.f32 %v5932, %v5934
  %v5936 = vadd.f32 %v5932, %v5935
  %vm5937 = vweird.f32 %v5664
  %vm5938 = vweird.f32 %v5932
  %vm5939 = vmor %vm5937, %vm5938
  %v5940 = vsel %vm5939, %v5932, %v5936
  %v5941 = vand.u32 2147483647, %v5664
  %vm5942 = vcmp.eq.f32.partialorder %v5941, 8.507059e+37
  %v5943 = vand.u32 %v5664, 2147483648
  %v5944 = vor.u32 1.1754944e-38, %v5943
  %v5945 = vsel %vm5942, %v5944, %v5940
  %v5946 = vmul.f32 1.0, %v5945
  %v5947 = vrcp.pop %v5665
  %v5948 = vmul.f32 %v5665, %v5947
  %v5949 = vsub.f32 1.0, %v5948
  %v5950 = vmul.f32 %v5947, %v5949
  %v5951 = vadd.f32 %v5947, %v5950
  %vm5952 = vweird.f32 %v5665
  %vm5953 = vweird.f32 %v5947
  %vm5954 = vmor %vm5952, %vm5953
  %v5955 = vsel %vm5954, %v5947, %v5951
  %v5956 = vand.u32 2147483647, %v5665
  %vm5957 = vcmp.eq.f32.partialorder %v5956, 8.507059e+37
  %v5958 = vand.u32 %v5665, 2147483648
  %v5959 = vor.u32 1.1754944e-38, %v5958
  %v5960 = vsel %vm5957, %v5959, %v5955
  %v5961 = vmul.f32 1.0, %v5960
  %v5962 = vrcp.pop %v5666
  %v5963 = vmul.f32 %v5666, %v5962
  %v5964 = vsub.f32 1.0, %v5963
  %v5965 = vmul.f32 %v5962, %v5964
  %v5966 = vadd.f32 %v5962, %v5965
  %vm5967 = vweird.f32 %v5666
  %vm5968 = vweird.f32 %v5962
  %vm5969 = vmor %vm5967, %vm5968
  %v5970 = vsel %vm5969, %v5962, %v5966
  %v5971 = vand.u32 2147483647, %v5666
  %vm5972 = vcmp.eq.f32.partialorder %v5971, 8.507059e+37
  %v5973 = vand.u32 %v5666, 2147483648
  %v5974 = vor.u32 1.1754944e-38, %v5973
  %v5975 = vsel %vm5972, %v5974, %v5970
  %v5976 = vmul.f32 1.0, %v5975
  %v5977 = vrcp.pop %v5667
  %v5978 = vmul.f32 %v5667, %v5977
  %v5979 = vsub.f32 1.0, %v5978
  %v5980 = vmul.f32 %v5977, %v5979
  %v5981 = vadd.f32 %v5977, %v5980
  %vm5982 = vweird.f32 %v5667
  %vm5983 = vweird.f32 %v5977
  %vm5984 = vmor %vm5982, %vm5983
  %v5985 = vsel %vm5984, %v5977, %v5981
  %v5986 = vand.u32 2147483647, %v5667
  %vm5987 = vcmp.eq.f32.partialorder %v5986, 8.507059e+37
  %v5988 = vand.u32 %v5667, 2147483648
  %v5989 = vor.u32 1.1754944e-38, %v5988
  %v5990 = vsel %vm5987, %v5989, %v5985
  %v5991 = vmul.f32 1.0, %v5990
  %v5992 = vrcp.pop %v5668
  %v5993 = vmul.f32 %v5668, %v5992
  %v5994 = vsub.f32 1.0, %v5993
  %v5995 = vmul.f32 %v5992, %v5994
  %v5996 = vadd.f32 %v5992, %v5995
  %vm5997 = vweird.f32 %v5668
  %vm5998 = vweird.f32 %v5992
  %vm5999 = vmor %vm5997, %vm5998
  %v6000 = vsel %vm5999, %v5992, %v5996
  %v6001 = vand.u32 2147483647, %v5668
  %vm6002 = vcmp.eq.f32.partialorder %v6001, 8.507059e+37
  %v6003 = vand.u32 %v5668, 2147483648
  %v6004 = vor.u32 1.1754944e-38, %v6003
  %v6005 = vsel %vm6002, %v6004, %v6000
  %v6006 = vmul.f32 1.0, %v6005
  %v6007 = vrcp.pop %v5669
  %v6008 = vmul.f32 %v5669, %v6007
  %v6009 = vsub.f32 1.0, %v6008
  %v6010 = vmul.f32 %v6007, %v6009
  %v6011 = vadd.f32 %v6007, %v6010
  %vm6012 = vweird.f32 %v5669
  %vm6013 = vweird.f32 %v6007
  %vm6014 = vmor %vm6012, %vm6013
  %v6015 = vsel %vm6014, %v6007, %v6011
  %v6016 = vand.u32 2147483647, %v5669
  %vm6017 = vcmp.eq.f32.partialorder %v6016, 8.507059e+37
  %v6018 = vand.u32 %v5669, 2147483648
  %v6019 = vor.u32 1.1754944e-38, %v6018
  %v6020 = vsel %vm6017, %v6019, %v6015
  %v6021 = vmul.f32 1.0, %v6020
  %v6022 = vrcp.pop %v5670
  %v6023 = vmul.f32 %v5670, %v6022
  %v6024 = vsub.f32 1.0, %v6023
  %v6025 = vmul.f32 %v6022, %v6024
  %v6026 = vadd.f32 %v6022, %v6025
  %vm6027 = vweird.f32 %v5670
  %vm6028 = vweird.f32 %v6022
  %vm6029 = vmor %vm6027, %vm6028
  %v6030 = vsel %vm6029, %v6022, %v6026
  %v6031 = vand.u32 2147483647, %v5670
  %vm6032 = vcmp.eq.f32.partialorder %v6031, 8.507059e+37
  %v6033 = vand.u32 %v5670, 2147483648
  %v6034 = vor.u32 1.1754944e-38, %v6033
  %v6035 = vsel %vm6032, %v6034, %v6030
  %v6036 = vmul.f32 1.0, %v6035
  %v6037 = vrcp.pop %v5671
  %v6038 = vmul.f32 %v5671, %v6037
  %v6039 = vsub.f32 1.0, %v6038
  %v6040 = vmul.f32 %v6037, %v6039
  %v6041 = vadd.f32 %v6037, %v6040
  %vm6042 = vweird.f32 %v5671
  %vm6043 = vweird.f32 %v6037
  %vm6044 = vmor %vm6042, %vm6043
  %v6045 = vsel %vm6044, %v6037, %v6041
  %v6046 = vand.u32 2147483647, %v5671
  %vm6047 = vcmp.eq.f32.partialorder %v6046, 8.507059e+37
  %v6048 = vand.u32 %v5671, 2147483648
  %v6049 = vor.u32 1.1754944e-38, %v6048
  %v6050 = vsel %vm6047, %v6049, %v6045
  %v6051 = vmul.f32 1.0, %v6050
  %v6052 = vrcp.pop %v5672
  %v6053 = vmul.f32 %v5672, %v6052
  %v6054 = vsub.f32 1.0, %v6053
  %v6055 = vmul.f32 %v6052, %v6054
  %v6056 = vadd.f32 %v6052, %v6055
  %vm6057 = vweird.f32 %v5672
  %vm6058 = vweird.f32 %v6052
  %vm6059 = vmor %vm6057, %vm6058
  %v6060 = vsel %vm6059, %v6052, %v6056
  %v6061 = vand.u32 2147483647, %v5672
  %vm6062 = vcmp.eq.f32.partialorder %v6061, 8.507059e+37
  %v6063 = vand.u32 %v5672, 2147483648
  %v6064 = vor.u32 1.1754944e-38, %v6063
  %v6065 = vsel %vm6062, %v6064, %v6060
  %v6066 = vmul.f32 1.0, %v6065
  %v6067 = vrcp.pop %v5673
  %v6068 = vmul.f32 %v5673, %v6067
  %v6069 = vsub.f32 1.0, %v6068
  %v6070 = vmul.f32 %v6067, %v6069
  %v6071 = vadd.f32 %v6067, %v6070
  %vm6072 = vweird.f32 %v5673
  %vm6073 = vweird.f32 %v6067
  %vm6074 = vmor %vm6072, %vm6073
  %v6075 = vsel %vm6074, %v6067, %v6071
  %v6076 = vand.u32 2147483647, %v5673
  %vm6077 = vcmp.eq.f32.partialorder %v6076, 8.507059e+37
  %v6078 = vand.u32 %v5673, 2147483648
  %v6079 = vor.u32 1.1754944e-38, %v6078
  %v6080 = vsel %vm6077, %v6079, %v6075
  %v6081 = vmul.f32 1.0, %v6080
  %v6082 = vrcp.pop %v5674
  %v6083 = vmul.f32 %v5674, %v6082
  %v6084 = vsub.f32 1.0, %v6083
  %v6085 = vmul.f32 %v6082, %v6084
  %v6086 = vadd.f32 %v6082, %v6085
  %vm6087 = vweird.f32 %v5674
  %vm6088 = vweird.f32 %v6082
  %vm6089 = vmor %vm6087, %vm6088
  %v6090 = vsel %vm6089, %v6082, %v6086
  %v6091 = vand.u32 2147483647, %v5674
  %vm6092 = vcmp.eq.f32.partialorder %v6091, 8.507059e+37
  %v6093 = vand.u32 %v5674, 2147483648
  %v6094 = vor.u32 1.1754944e-38, %v6093
  %v6095 = vsel %vm6092, %v6094, %v6090
  %v6096 = vmul.f32 1.0, %v6095
  %v6097 = vrcp.pop %v5675
  %v6098 = vmul.f32 %v5675, %v6097
  %v6099 = vsub.f32 1.0, %v6098
  %v6100 = vmul.f32 %v6097, %v6099
  %v6101 = vadd.f32 %v6097, %v6100
  %vm6102 = vweird.f32 %v5675
  %vm6103 = vweird.f32 %v6097
  %vm6104 = vmor %vm6102, %vm6103
  %v6105 = vsel %vm6104, %v6097, %v6101
  %v6106 = vand.u32 2147483647, %v5675
  %vm6107 = vcmp.eq.f32.partialorder %v6106, 8.507059e+37
  %v6108 = vand.u32 %v5675, 2147483648
  %v6109 = vor.u32 1.1754944e-38, %v6108
  %v6110 = vsel %vm6107, %v6109, %v6105
  %v6111 = vmul.f32 1.0, %v6110
  %v6112 = vrcp.pop %v5676
  %v6113 = vmul.f32 %v5676, %v6112
  %v6114 = vsub.f32 1.0, %v6113
  %v6115 = vmul.f32 %v6112, %v6114
  %v6116 = vadd.f32 %v6112, %v6115
  %vm6117 = vweird.f32 %v5676
  %vm6118 = vweird.f32 %v6112
  %vm6119 = vmor %vm6117, %vm6118
  %v6120 = vsel %vm6119, %v6112, %v6116
  %v6121 = vand.u32 2147483647, %v5676
  %vm6122 = vcmp.eq.f32.partialorder %v6121, 8.507059e+37
  %v6123 = vand.u32 %v5676, 2147483648
  %v6124 = vor.u32 1.1754944e-38, %v6123
  %v6125 = vsel %vm6122, %v6124, %v6120
  %v6126 = vmul.f32 1.0, %v6125
  %v6127 = vrcp.pop %v5677
  %v6128 = vmul.f32 %v5677, %v6127
  %v6129 = vsub.f32 1.0, %v6128
  %v6130 = vmul.f32 %v6127, %v6129
  %v6131 = vadd.f32 %v6127, %v6130
  %vm6132 = vweird.f32 %v5677
  %vm6133 = vweird.f32 %v6127
  %vm6134 = vmor %vm6132, %vm6133
  %v6135 = vsel %vm6134, %v6127, %v6131
  %v6136 = vand.u32 2147483647, %v5677
  %vm6137 = vcmp.eq.f32.partialorder %v6136, 8.507059e+37
  %v6138 = vand.u32 %v5677, 2147483648
  %v6139 = vor.u32 1.1754944e-38, %v6138
  %v6140 = vsel %vm6137, %v6139, %v6135
  %v6141 = vmul.f32 1.0, %v6140
  %v6142 = vrcp.pop %v5678
  %v6143 = vmul.f32 %v5678, %v6142
  %v6144 = vsub.f32 1.0, %v6143
  %v6145 = vmul.f32 %v6142, %v6144
  %v6146 = vadd.f32 %v6142, %v6145
  %vm6147 = vweird.f32 %v5678
  %vm6148 = vweird.f32 %v6142
  %vm6149 = vmor %vm6147, %vm6148
  %v6150 = vsel %vm6149, %v6142, %v6146
  %v6151 = vand.u32 2147483647, %v5678
  %vm6152 = vcmp.eq.f32.partialorder %v6151, 8.507059e+37
  %v6153 = vand.u32 %v5678, 2147483648
  %v6154 = vor.u32 1.1754944e-38, %v6153
  %v6155 = vsel %vm6152, %v6154, %v6150
  %v6156 = vmul.f32 1.0, %v6155
  %v6157 = vrcp.pop %v5679
  %v6158 = vmul.f32 %v5679, %v6157
  %v6159 = vsub.f32 1.0, %v6158
  %v6160 = vmul.f32 %v6157, %v6159
  %v6161 = vadd.f32 %v6157, %v6160
  %vm6162 = vweird.f32 %v5679
  %vm6163 = vweird.f32 %v6157
  %vm6164 = vmor %vm6162, %vm6163
  %v6165 = vsel %vm6164, %v6157, %v6161
  %v6166 = vand.u32 2147483647, %v5679
  %vm6167 = vcmp.eq.f32.partialorder %v6166, 8.507059e+37
  %v6168 = vand.u32 %v5679, 2147483648
  %v6169 = vor.u32 1.1754944e-38, %v6168
  %v6170 = vsel %vm6167, %v6169, %v6165
  %v6171 = vmul.f32 1.0, %v6170
  %v6172 = vrcp.pop %v5680
  %v6173 = vmul.f32 %v5680, %v6172
  %v6174 = vsub.f32 1.0, %v6173
  %v6175 = vmul.f32 %v6172, %v6174
  %v6176 = vadd.f32 %v6172, %v6175
  %vm6177 = vweird.f32 %v5680
  %vm6178 = vweird.f32 %v6172
  %vm6179 = vmor %vm6177, %vm6178
  %v6180 = vsel %vm6179, %v6172, %v6176
  %v6181 = vand.u32 2147483647, %v5680
  %vm6182 = vcmp.eq.f32.partialorder %v6181, 8.507059e+37
  %v6183 = vand.u32 %v5680, 2147483648
  %v6184 = vor.u32 1.1754944e-38, %v6183
  %v6185 = vsel %vm6182, %v6184, %v6180
  %v6186 = vmul.f32 1.0, %v6185
  %v6187 = vrcp.pop %v5681
  %v6188 = vmul.f32 %v5681, %v6187
  %v6189 = vsub.f32 1.0, %v6188
  %v6190 = vmul.f32 %v6187, %v6189
  %v6191 = vadd.f32 %v6187, %v6190
  %vm6192 = vweird.f32 %v5681
  %vm6193 = vweird.f32 %v6187
  %vm6194 = vmor %vm6192, %vm6193
  %v6195 = vsel %vm6194, %v6187, %v6191
  %v6196 = vand.u32 2147483647, %v5681
  %vm6197 = vcmp.eq.f32.partialorder %v6196, 8.507059e+37
  %v6198 = vand.u32 %v5681, 2147483648
  %v6199 = vor.u32 1.1754944e-38, %v6198
  %v6200 = vsel %vm6197, %v6199, %v6195
  %v6201 = vmul.f32 1.0, %v6200
  %v6202 = vrcp.pop %v5682
  %v6203 = vmul.f32 %v5682, %v6202
  %v6204 = vsub.f32 1.0, %v6203
  %v6205 = vmul.f32 %v6202, %v6204
  %v6206 = vadd.f32 %v6202, %v6205
  %vm6207 = vweird.f32 %v5682
  %vm6208 = vweird.f32 %v6202
  %vm6209 = vmor %vm6207, %vm6208
  %v6210 = vsel %vm6209, %v6202, %v6206
  %v6211 = vand.u32 2147483647, %v5682
  %vm6212 = vcmp.eq.f32.partialorder %v6211, 8.507059e+37
  %v6213 = vand.u32 %v5682, 2147483648
  %v6214 = vor.u32 1.1754944e-38, %v6213
  %v6215 = vsel %vm6212, %v6214, %v6210
  %v6216 = vmul.f32 1.0, %v6215
  %v6217 = vrcp.pop %v5683
  %v6218 = vmul.f32 %v5683, %v6217
  %v6219 = vsub.f32 1.0, %v6218
  %v6220 = vmul.f32 %v6217, %v6219
  %v6221 = vadd.f32 %v6217, %v6220
  %vm6222 = vweird.f32 %v5683
  %vm6223 = vweird.f32 %v6217
  %vm6224 = vmor %vm6222, %vm6223
  %v6225 = vsel %vm6224, %v6217, %v6221
  %v6226 = vand.u32 2147483647, %v5683
  %vm6227 = vcmp.eq.f32.partialorder %v6226, 8.507059e+37
  %v6228 = vand.u32 %v5683, 2147483648
  %v6229 = vor.u32 1.1754944e-38, %v6228
  %v6230 = vsel %vm6227, %v6229, %v6225
  %v6231 = vmul.f32 1.0, %v6230
  %v6232 = vrcp.pop %v5684
  %v6233 = vmul.f32 %v5684, %v6232
  %v6234 = vsub.f32 1.0, %v6233
  %v6235 = vmul.f32 %v6232, %v6234
  %v6236 = vadd.f32 %v6232, %v6235
  %vm6237 = vweird.f32 %v5684
  %vm6238 = vweird.f32 %v6232
  %vm6239 = vmor %vm6237, %vm6238
  %v6240 = vsel %vm6239, %v6232, %v6236
  %v6241 = vand.u32 2147483647, %v5684
  %vm6242 = vcmp.eq.f32.partialorder %v6241, 8.507059e+37
  %v6243 = vand.u32 %v5684, 2147483648
  %v6244 = vor.u32 1.1754944e-38, %v6243
  %v6245 = vsel %vm6242, %v6244, %v6240
  %v6246 = vmul.f32 1.0, %v6245
  %v6247 = vrcp.pop %v5685
  %v6248 = vmul.f32 %v5685, %v6247
  %v6249 = vsub.f32 1.0, %v6248
  %v6250 = vmul.f32 %v6247, %v6249
  %v6251 = vadd.f32 %v6247, %v6250
  %vm6252 = vweird.f32 %v5685
  %vm6253 = vweird.f32 %v6247
  %vm6254 = vmor %vm6252, %vm6253
  %v6255 = vsel %vm6254, %v6247, %v6251
  %v6256 = vand.u32 2147483647, %v5685
  %vm6257 = vcmp.eq.f32.partialorder %v6256, 8.507059e+37
  %v6258 = vand.u32 %v5685, 2147483648
  %v6259 = vor.u32 1.1754944e-38, %v6258
  %v6260 = vsel %vm6257, %v6259, %v6255
  %v6261 = vmul.f32 1.0, %v6260
  %v6262 = vrcp.pop %v5686
  %v6263 = vmul.f32 %v5686, %v6262
  %v6264 = vsub.f32 1.0, %v6263
  %v6265 = vmul.f32 %v6262, %v6264
  %v6266 = vadd.f32 %v6262, %v6265
  %vm6267 = vweird.f32 %v5686
  %vm6268 = vweird.f32 %v6262
  %vm6269 = vmor %vm6267, %vm6268
  %v6270 = vsel %vm6269, %v6262, %v6266
  %v6271 = vand.u32 2147483647, %v5686
  %vm6272 = vcmp.eq.f32.partialorder %v6271, 8.507059e+37
  %v6273 = vand.u32 %v5686, 2147483648
  %v6274 = vor.u32 1.1754944e-38, %v6273
  %v6275 = vsel %vm6272, %v6274, %v6270
  %v6276 = vmul.f32 1.0, %v6275
  %v6277 = vrcp.pop %v5687
  %v6278 = vmul.f32 %v5687, %v6277
  %v6279 = vsub.f32 1.0, %v6278
  %v6280 = vmul.f32 %v6277, %v6279
  %v6281 = vadd.f32 %v6277, %v6280
  %vm6282 = vweird.f32 %v5687
  %vm6283 = vweird.f32 %v6277
  %vm6284 = vmor %vm6282, %vm6283
  %v6285 = vsel %vm6284, %v6277, %v6281
  %v6286 = vand.u32 2147483647, %v5687
  %vm6287 = vcmp.eq.f32.partialorder %v6286, 8.507059e+37
  %v6288 = vand.u32 %v5687, 2147483648
  %v6289 = vor.u32 1.1754944e-38, %v6288
  %v6290 = vsel %vm6287, %v6289, %v6285
  %v6291 = vmul.f32 1.0, %v6290
  %v6292 = vrcp.pop %v5688
  %v6293 = vmul.f32 %v5688, %v6292
  %v6294 = vsub.f32 1.0, %v6293
  %v6295 = vmul.f32 %v6292, %v6294
  %v6296 = vadd.f32 %v6292, %v6295
  %vm6297 = vweird.f32 %v5688
  %vm6298 = vweird.f32 %v6292
  %vm6299 = vmor %vm6297, %vm6298
  %v6300 = vsel %vm6299, %v6292, %v6296
  %v6301 = vand.u32 2147483647, %v5688
  %vm6302 = vcmp.eq.f32.partialorder %v6301, 8.507059e+37
  %v6303 = vand.u32 %v5688, 2147483648
  %v6304 = vor.u32 1.1754944e-38, %v6303
  %v6305 = vsel %vm6302, %v6304, %v6300
  %v6306 = vmul.f32 1.0, %v6305
  %v6307 = vrcp.pop %v5689
  %v6308 = vmul.f32 %v5689, %v6307
  %v6309 = vsub.f32 1.0, %v6308
  %v6310 = vmul.f32 %v6307, %v6309
  %v6311 = vadd.f32 %v6307, %v6310
  %vm6312 = vweird.f32 %v5689
  %vm6313 = vweird.f32 %v6307
  %vm6314 = vmor %vm6312, %vm6313
  %v6315 = vsel %vm6314, %v6307, %v6311
  %v6316 = vand.u32 2147483647, %v5689
  %vm6317 = vcmp.eq.f32.partialorder %v6316, 8.507059e+37
  %v6318 = vand.u32 %v5689, 2147483648
  %v6319 = vor.u32 1.1754944e-38, %v6318
  %v6320 = vsel %vm6317, %v6319, %v6315
  %v6321 = vmul.f32 1.0, %v6320
  %v6322 = vrcp.pop %v5690
  %v6323 = vmul.f32 %v5690, %v6322
  %v6324 = vsub.f32 1.0, %v6323
  %v6325 = vmul.f32 %v6322, %v6324
  %v6326 = vadd.f32 %v6322, %v6325
  %vm6327 = vweird.f32 %v5690
  %vm6328 = vweird.f32 %v6322
  %vm6329 = vmor %vm6327, %vm6328
  %v6330 = vsel %vm6329, %v6322, %v6326
  %v6331 = vand.u32 2147483647, %v5690
  %vm6332 = vcmp.eq.f32.partialorder %v6331, 8.507059e+37
  %v6333 = vand.u32 %v5690, 2147483648
  %v6334 = vor.u32 1.1754944e-38, %v6333
  %v6335 = vsel %vm6332, %v6334, %v6330
  %v6336 = vmul.f32 1.0, %v6335
  %v6337 = vrcp.pop %v5691
  %v6338 = vmul.f32 %v5691, %v6337
  %v6339 = vsub.f32 1.0, %v6338
  %v6340 = vmul.f32 %v6337, %v6339
  %v6341 = vadd.f32 %v6337, %v6340
  %vm6342 = vweird.f32 %v5691
  %vm6343 = vweird.f32 %v6337
  %vm6344 = vmor %vm6342, %vm6343
  %v6345 = vsel %vm6344, %v6337, %v6341
  %v6346 = vand.u32 2147483647, %v5691
  %vm6347 = vcmp.eq.f32.partialorder %v6346, 8.507059e+37
  %v6348 = vand.u32 %v5691, 2147483648
  %v6349 = vor.u32 1.1754944e-38, %v6348
  %v6350 = vsel %vm6347, %v6349, %v6345
  %v6351 = vmul.f32 1.0, %v6350
  %v6352 = vrcp.pop %v5692
  %v6353 = vmul.f32 %v5692, %v6352
  %v6354 = vsub.f32 1.0, %v6353
  %v6355 = vmul.f32 %v6352, %v6354
  %v6356 = vadd.f32 %v6352, %v6355
  %vm6357 = vweird.f32 %v5692
  %vm6358 = vweird.f32 %v6352
  %vm6359 = vmor %vm6357, %vm6358
  %v6360 = vsel %vm6359, %v6352, %v6356
  %v6361 = vand.u32 2147483647, %v5692
  %vm6362 = vcmp.eq.f32.partialorder %v6361, 8.507059e+37
  %v6363 = vand.u32 %v5692, 2147483648
  %v6364 = vor.u32 1.1754944e-38, %v6363
  %v6365 = vsel %vm6362, %v6364, %v6360
  %v6366 = vmul.f32 1.0, %v6365
  %v6367 = vrcp.pop %v5693
  %v6368 = vmul.f32 %v5693, %v6367
  %v6369 = vsub.f32 1.0, %v6368
  %v6370 = vmul.f32 %v6367, %v6369
  %v6371 = vadd.f32 %v6367, %v6370
  %vm6372 = vweird.f32 %v5693
  %vm6373 = vweird.f32 %v6367
  %vm6374 = vmor %vm6372, %vm6373
  %v6375 = vsel %vm6374, %v6367, %v6371
  %v6376 = vand.u32 2147483647, %v5693
  %vm6377 = vcmp.eq.f32.partialorder %v6376, 8.507059e+37
  %v6378 = vand.u32 %v5693, 2147483648
  %v6379 = vor.u32 1.1754944e-38, %v6378
  %v6380 = vsel %vm6377, %v6379, %v6375
  %v6381 = vmul.f32 1.0, %v6380
  %v6382 = vrcp.pop %v5694
  %v6383 = vmul.f32 %v5694, %v6382
  %v6384 = vsub.f32 1.0, %v6383
  %v6385 = vmul.f32 %v6382, %v6384
  %v6386 = vadd.f32 %v6382, %v6385
  %vm6387 = vweird.f32 %v5694
  %vm6388 = vweird.f32 %v6382
  %vm6389 = vmor %vm6387, %vm6388
  %v6390 = vsel %vm6389, %v6382, %v6386
  %v6391 = vand.u32 2147483647, %v5694
  %vm6392 = vcmp.eq.f32.partialorder %v6391, 8.507059e+37
  %v6393 = vand.u32 %v5694, 2147483648
  %v6394 = vor.u32 1.1754944e-38, %v6393
  %v6395 = vsel %vm6392, %v6394, %v6390
  %v6396 = vmul.f32 1.0, %v6395
  %v6397 = vrcp.pop %v5695
  %v6398 = vmul.f32 %v5695, %v6397
  %v6399 = vsub.f32 1.0, %v6398
  %v6400 = vmul.f32 %v6397, %v6399
  %v6401 = vadd.f32 %v6397, %v6400
  %vm6402 = vweird.f32 %v5695
  %vm6403 = vweird.f32 %v6397
  %vm6404 = vmor %vm6402, %vm6403
  %v6405 = vsel %vm6404, %v6397, %v6401
  %v6406 = vand.u32 2147483647, %v5695
  %vm6407 = vcmp.eq.f32.partialorder %v6406, 8.507059e+37
  %v6408 = vand.u32 %v5695, 2147483648
  %v6409 = vor.u32 1.1754944e-38, %v6408
  %v6410 = vsel %vm6407, %v6409, %v6405
  %v6411 = vmul.f32 1.0, %v6410
  %v6412 = vrcp.pop %v5696
  %v6413 = vmul.f32 %v5696, %v6412
  %v6414 = vsub.f32 1.0, %v6413
  %v6415 = vmul.f32 %v6412, %v6414
  %v6416 = vadd.f32 %v6412, %v6415
  %vm6417 = vweird.f32 %v5696
  %vm6418 = vweird.f32 %v6412
  %vm6419 = vmor %vm6417, %vm6418
  %v6420 = vsel %vm6419, %v6412, %v6416
  %v6421 = vand.u32 2147483647, %v5696
  %vm6422 = vcmp.eq.f32.partialorder %v6421, 8.507059e+37
  %v6423 = vand.u32 %v5696, 2147483648
  %v6424 = vor.u32 1.1754944e-38, %v6423
  %v6425 = vsel %vm6422, %v6424, %v6420
  %v6426 = vmul.f32 1.0, %v6425
  %v6427 = vrcp.pop %v5697
  %v6428 = vmul.f32 %v5697, %v6427
  %v6429 = vsub.f32 1.0, %v6428
  %v6430 = vmul.f32 %v6427, %v6429
  %v6431 = vadd.f32 %v6427, %v6430
  %vm6432 = vweird.f32 %v5697
  %vm6433 = vweird.f32 %v6427
  %vm6434 = vmor %vm6432, %vm6433
  %v6435 = vsel %vm6434, %v6427, %v6431
  %v6436 = vand.u32 2147483647, %v5697
  %vm6437 = vcmp.eq.f32.partialorder %v6436, 8.507059e+37
  %v6438 = vand.u32 %v5697, 2147483648
  %v6439 = vor.u32 1.1754944e-38, %v6438
  %v6440 = vsel %vm6437, %v6439, %v6435
  %v6441 = vmul.f32 1.0, %v6440
  %v6442 = vrcp.pop %v5698
  %v6443 = vmul.f32 %v5698, %v6442
  %v6444 = vsub.f32 1.0, %v6443
  %v6445 = vmul.f32 %v6442, %v6444
  %v6446 = vadd.f32 %v6442, %v6445
  %vm6447 = vweird.f32 %v5698
  %vm6448 = vweird.f32 %v6442
  %vm6449 = vmor %vm6447, %vm6448
  %v6450 = vsel %vm6449, %v6442, %v6446
  %v6451 = vand.u32 2147483647, %v5698
  %vm6452 = vcmp.eq.f32.partialorder %v6451, 8.507059e+37
  %v6453 = vand.u32 %v5698, 2147483648
  %v6454 = vor.u32 1.1754944e-38, %v6453
  %v6455 = vsel %vm6452, %v6454, %v6450
  %v6456 = vmul.f32 1.0, %v6455
  %v6457 = vrcp.pop %v5699
  %v6458 = vmul.f32 %v5699, %v6457
  %v6459 = vsub.f32 1.0, %v6458
  %v6460 = vmul.f32 %v6457, %v6459
  %v6461 = vadd.f32 %v6457, %v6460
  %vm6462 = vweird.f32 %v5699
  %vm6463 = vweird.f32 %v6457
  %vm6464 = vmor %vm6462, %vm6463
  %v6465 = vsel %vm6464, %v6457, %v6461
  %v6466 = vand.u32 2147483647, %v5699
  %vm6467 = vcmp.eq.f32.partialorder %v6466, 8.507059e+37
  %v6468 = vand.u32 %v5699, 2147483648
  %v6469 = vor.u32 1.1754944e-38, %v6468
  %v6470 = vsel %vm6467, %v6469, %v6465
  %v6471 = vmul.f32 1.0, %v6470
  %v6472 = vrcp.pop %v5700
  %v6473 = vmul.f32 %v5700, %v6472
  %v6474 = vsub.f32 1.0, %v6473
  %v6475 = vmul.f32 %v6472, %v6474
  %v6476 = vadd.f32 %v6472, %v6475
  %vm6477 = vweird.f32 %v5700
  %vm6478 = vweird.f32 %v6472
  %vm6479 = vmor %vm6477, %vm6478
  %v6480 = vsel %vm6479, %v6472, %v6476
  %v6481 = vand.u32 2147483647, %v5700
  %vm6482 = vcmp.eq.f32.partialorder %v6481, 8.507059e+37
  %v6483 = vand.u32 %v5700, 2147483648
  %v6484 = vor.u32 1.1754944e-38, %v6483
  %v6485 = vsel %vm6482, %v6484, %v6480
  %v6486 = vmul.f32 1.0, %v6485
  %v6487 = vrcp.pop %v5701
  %v6488 = vmul.f32 %v5701, %v6487
  %v6489 = vsub.f32 1.0, %v6488
  %v6490 = vmul.f32 %v6487, %v6489
  %v6491 = vadd.f32 %v6487, %v6490
  %vm6492 = vweird.f32 %v5701
  %vm6493 = vweird.f32 %v6487
  %vm6494 = vmor %vm6492, %vm6493
  %v6495 = vsel %vm6494, %v6487, %v6491
  %v6496 = vand.u32 2147483647, %v5701
  %vm6497 = vcmp.eq.f32.partialorder %v6496, 8.507059e+37
  %v6498 = vand.u32 %v5701, 2147483648
  %v6499 = vor.u32 1.1754944e-38, %v6498
  %v6500 = vsel %vm6497, %v6499, %v6495
  %v6501 = vmul.f32 1.0, %v6500
  %v6502 = vrcp.pop %v5702
  %v6503 = vmul.f32 %v5702, %v6502
  %v6504 = vsub.f32 1.0, %v6503
  %v6505 = vmul.f32 %v6502, %v6504
  %v6506 = vadd.f32 %v6502, %v6505
  %vm6507 = vweird.f32 %v5702
  %vm6508 = vweird.f32 %v6502
  %vm6509 = vmor %vm6507, %vm6508
  %v6510 = vsel %vm6509, %v6502, %v6506
  %v6511 = vand.u32 2147483647, %v5702
  %vm6512 = vcmp.eq.f32.partialorder %v6511, 8.507059e+37
  %v6513 = vand.u32 %v5702, 2147483648
  %v6514 = vor.u32 1.1754944e-38, %v6513
  %v6515 = vsel %vm6512, %v6514, %v6510
  %v6516 = vmul.f32 1.0, %v6515
  %v6517 = vrcp.pop %v5703
  %v6518 = vmul.f32 %v5703, %v6517
  %v6519 = vsub.f32 1.0, %v6518
  %v6520 = vmul.f32 %v6517, %v6519
  %v6521 = vadd.f32 %v6517, %v6520
  %vm6522 = vweird.f32 %v5703
  %vm6523 = vweird.f32 %v6517
  %vm6524 = vmor %vm6522, %vm6523
  %v6525 = vsel %vm6524, %v6517, %v6521
  %v6526 = vand.u32 2147483647, %v5703
  %vm6527 = vcmp.eq.f32.partialorder %v6526, 8.507059e+37
  %v6528 = vand.u32 %v5703, 2147483648
  %v6529 = vor.u32 1.1754944e-38, %v6528
  %v6530 = vsel %vm6527, %v6529, %v6525
  %v6531 = vmul.f32 1.0, %v6530
  %v6532 = vrcp.pop %v5704
  %v6533 = vmul.f32 %v5704, %v6532
  %v6534 = vsub.f32 1.0, %v6533
  %v6535 = vmul.f32 %v6532, %v6534
  %v6536 = vadd.f32 %v6532, %v6535
  %vm6537 = vweird.f32 %v5704
  %vm6538 = vweird.f32 %v6532
  %vm6539 = vmor %vm6537, %vm6538
  %v6540 = vsel %vm6539, %v6532, %v6536
  %v6541 = vand.u32 2147483647, %v5704
  %vm6542 = vcmp.eq.f32.partialorder %v6541, 8.507059e+37
  %v6543 = vand.u32 %v5704, 2147483648
  %v6544 = vor.u32 1.1754944e-38, %v6543
  %v6545 = vsel %vm6542, %v6544, %v6540
  %v6546 = vmul.f32 1.0, %v6545
  %v6547 = vrcp.pop %v5705
  %v6548 = vmul.f32 %v5705, %v6547
  %v6549 = vsub.f32 1.0, %v6548
  %v6550 = vmul.f32 %v6547, %v6549
  %v6551 = vadd.f32 %v6547, %v6550
  %vm6552 = vweird.f32 %v5705
  %vm6553 = vweird.f32 %v6547
  %vm6554 = vmor %vm6552, %vm6553
  %v6555 = vsel %vm6554, %v6547, %v6551
  %v6556 = vand.u32 2147483647, %v5705
  %vm6557 = vcmp.eq.f32.partialorder %v6556, 8.507059e+37
  %v6558 = vand.u32 %v5705, 2147483648
  %v6559 = vor.u32 1.1754944e-38, %v6558
  %v6560 = vsel %vm6557, %v6559, %v6555
  %v6561 = vmul.f32 1.0, %v6560
  %v6562 = vrcp.pop %v5706
  %v6563 = vmul.f32 %v5706, %v6562
  %v6564 = vsub.f32 1.0, %v6563
  %v6565 = vmul.f32 %v6562, %v6564
  %v6566 = vadd.f32 %v6562, %v6565
  %vm6567 = vweird.f32 %v5706
  %vm6568 = vweird.f32 %v6562
  %vm6569 = vmor %vm6567, %vm6568
  %v6570 = vsel %vm6569, %v6562, %v6566
  %v6571 = vand.u32 2147483647, %v5706
  %vm6572 = vcmp.eq.f32.partialorder %v6571, 8.507059e+37
  %v6573 = vand.u32 %v5706, 2147483648
  %v6574 = vor.u32 1.1754944e-38, %v6573
  %v6575 = vsel %vm6572, %v6574, %v6570
  %v6576 = vmul.f32 1.0, %v6575
  %v6577 = vrcp.pop %v5707
  %v6578 = vmul.f32 %v5707, %v6577
  %v6579 = vsub.f32 1.0, %v6578
  %v6580 = vmul.f32 %v6577, %v6579
  %v6581 = vadd.f32 %v6577, %v6580
  %vm6582 = vweird.f32 %v5707
  %vm6583 = vweird.f32 %v6577
  %vm6584 = vmor %vm6582, %vm6583
  %v6585 = vsel %vm6584, %v6577, %v6581
  %v6586 = vand.u32 2147483647, %v5707
  %vm6587 = vcmp.eq.f32.partialorder %v6586, 8.507059e+37
  %v6588 = vand.u32 %v5707, 2147483648
  %v6589 = vor.u32 1.1754944e-38, %v6588
  %v6590 = vsel %vm6587, %v6589, %v6585
  %v6591 = vmul.f32 1.0, %v6590
  %v6592 = vrcp.pop %v5708
  %v6593 = vmul.f32 %v5708, %v6592
  %v6594 = vsub.f32 1.0, %v6593
  %v6595 = vmul.f32 %v6592, %v6594
  %v6596 = vadd.f32 %v6592, %v6595
  %vm6597 = vweird.f32 %v5708
  %vm6598 = vweird.f32 %v6592
  %vm6599 = vmor %vm6597, %vm6598
  %v6600 = vsel %vm6599, %v6592, %v6596
  %v6601 = vand.u32 2147483647, %v5708
  %vm6602 = vcmp.eq.f32.partialorder %v6601, 8.507059e+37
  %v6603 = vand.u32 %v5708, 2147483648
  %v6604 = vor.u32 1.1754944e-38, %v6603
  %v6605 = vsel %vm6602, %v6604, %v6600
  %v6606 = vmul.f32 1.0, %v6605
  %v6607 = vrcp.pop %v5709
  %v6608 = vmul.f32 %v5709, %v6607
  %v6609 = vsub.f32 1.0, %v6608
  %v6610 = vmul.f32 %v6607, %v6609
  %v6611 = vadd.f32 %v6607, %v6610
  %vm6612 = vweird.f32 %v5709
  %vm6613 = vweird.f32 %v6607
  %vm6614 = vmor %vm6612, %vm6613
  %v6615 = vsel %vm6614, %v6607, %v6611
  %v6616 = vand.u32 2147483647, %v5709
  %vm6617 = vcmp.eq.f32.partialorder %v6616, 8.507059e+37
  %v6618 = vand.u32 %v5709, 2147483648
  %v6619 = vor.u32 1.1754944e-38, %v6618
  %v6620 = vsel %vm6617, %v6619, %v6615
  %v6621 = vmul.f32 1.0, %v6620
  %v6622 = vrcp.pop %v5710
  %v6623 = vmul.f32 %v5710, %v6622
  %v6624 = vsub.f32 1.0, %v6623
  %v6625 = vmul.f32 %v6622, %v6624
  %v6626 = vadd.f32 %v6622, %v6625
  %vm6627 = vweird.f32 %v5710
  %vm6628 = vweird.f32 %v6622
  %vm6629 = vmor %vm6627, %vm6628
  %v6630 = vsel %vm6629, %v6622, %v6626
  %v6631 = vand.u32 2147483647, %v5710
  %vm6632 = vcmp.eq.f32.partialorder %v6631, 8.507059e+37
  %v6633 = vand.u32 %v5710, 2147483648
  %v6634 = vor.u32 1.1754944e-38, %v6633
  %v6635 = vsel %vm6632, %v6634, %v6630
  %v6636 = vmul.f32 1.0, %v6635
  %v6637 = vrcp.pop %v5711
  %v6638 = vmul.f32 %v5711, %v6637
  %v6639 = vsub.f32 1.0, %v6638
  %v6640 = vmul.f32 %v6637, %v6639
  %v6641 = vadd.f32 %v6637, %v6640
  %vm6642 = vweird.f32 %v5711
  %vm6643 = vweird.f32 %v6637
  %vm6644 = vmor %vm6642, %vm6643
  %v6645 = vsel %vm6644, %v6637, %v6641
  %v6646 = vand.u32 2147483647, %v5711
  %vm6647 = vcmp.eq.f32.partialorder %v6646, 8.507059e+37
  %v6648 = vand.u32 %v5711, 2147483648
  %v6649 = vor.u32 1.1754944e-38, %v6648
  %v6650 = vsel %vm6647, %v6649, %v6645
  %v6651 = vmul.f32 1.0, %v6650
  %v6652 = vrcp.pop %v5712
  %v6653 = vmul.f32 %v5712, %v6652
  %v6654 = vsub.f32 1.0, %v6653
  %v6655 = vmul.f32 %v6652, %v6654
  %v6656 = vadd.f32 %v6652, %v6655
  %vm6657 = vweird.f32 %v5712
  %vm6658 = vweird.f32 %v6652
  %vm6659 = vmor %vm6657, %vm6658
  %v6660 = vsel %vm6659, %v6652, %v6656
  %v6661 = vand.u32 2147483647, %v5712
  %vm6662 = vcmp.eq.f32.partialorder %v6661, 8.507059e+37
  %v6663 = vand.u32 %v5712, 2147483648
  %v6664 = vor.u32 1.1754944e-38, %v6663
  %v6665 = vsel %vm6662, %v6664, %v6660
  %v6666 = vmul.f32 1.0, %v6665
  %v6667 = vrcp.pop %v5713
  %v6668 = vmul.f32 %v5713, %v6667
  %v6669 = vsub.f32 1.0, %v6668
  %v6670 = vmul.f32 %v6667, %v6669
  %v6671 = vadd.f32 %v6667, %v6670
  %vm6672 = vweird.f32 %v5713
  %vm6673 = vweird.f32 %v6667
  %vm6674 = vmor %vm6672, %vm6673
  %v6675 = vsel %vm6674, %v6667, %v6671
  %v6676 = vand.u32 2147483647, %v5713
  %vm6677 = vcmp.eq.f32.partialorder %v6676, 8.507059e+37
  %v6678 = vand.u32 %v5713, 2147483648
  %v6679 = vor.u32 1.1754944e-38, %v6678
  %v6680 = vsel %vm6677, %v6679, %v6675
  %v6681 = vmul.f32 1.0, %v6680
  %v6682 = vrcp.pop %v5714
  %v6683 = vmul.f32 %v5714, %v6682
  %v6684 = vsub.f32 1.0, %v6683
  %v6685 = vmul.f32 %v6682, %v6684
  %v6686 = vadd.f32 %v6682, %v6685
  %vm6687 = vweird.f32 %v5714
  %vm6688 = vweird.f32 %v6682
  %vm6689 = vmor %vm6687, %vm6688
  %v6690 = vsel %vm6689, %v6682, %v6686
  %v6691 = vand.u32 2147483647, %v5714
  %vm6692 = vcmp.eq.f32.partialorder %v6691, 8.507059e+37
  %v6693 = vand.u32 %v5714, 2147483648
  %v6694 = vor.u32 1.1754944e-38, %v6693
  %v6695 = vsel %vm6692, %v6694, %v6690
  %v6696 = vmul.f32 1.0, %v6695
  %v6697 = vrcp.pop %v5715
  %v6698 = vmul.f32 %v5715, %v6697
  %v6699 = vsub.f32 1.0, %v6698
  %v6700 = vmul.f32 %v6697, %v6699
  %v6701 = vadd.f32 %v6697, %v6700
  %vm6702 = vweird.f32 %v5715
  %vm6703 = vweird.f32 %v6697
  %vm6704 = vmor %vm6702, %vm6703
  %v6705 = vsel %vm6704, %v6697, %v6701
  %v6706 = vand.u32 2147483647, %v5715
  %vm6707 = vcmp.eq.f32.partialorder %v6706, 8.507059e+37
  %v6708 = vand.u32 %v5715, 2147483648
  %v6709 = vor.u32 1.1754944e-38, %v6708
  %v6710 = vsel %vm6707, %v6709, %v6705
  %v6711 = vmul.f32 1.0, %v6710
  %v6712 = vrcp.pop %v5716
  %v6713 = vmul.f32 %v5716, %v6712
  %v6714 = vsub.f32 1.0, %v6713
  %v6715 = vmul.f32 %v6712, %v6714
  %v6716 = vadd.f32 %v6712, %v6715
  %vm6717 = vweird.f32 %v5716
  %vm6718 = vweird.f32 %v6712
  %vm6719 = vmor %vm6717, %vm6718
  %v6720 = vsel %vm6719, %v6712, %v6716
  %v6721 = vand.u32 2147483647, %v5716
  %vm6722 = vcmp.eq.f32.partialorder %v6721, 8.507059e+37
  %v6723 = vand.u32 %v5716, 2147483648
  %v6724 = vor.u32 1.1754944e-38, %v6723
  %v6725 = vsel %vm6722, %v6724, %v6720
  %v6726 = vmul.f32 1.0, %v6725
  %v6727 = vrcp.pop %v5717
  %v6728 = vmul.f32 %v5717, %v6727
  %v6729 = vsub.f32 1.0, %v6728
  %v6730 = vmul.f32 %v6727, %v6729
  %v6731 = vadd.f32 %v6727, %v6730
  %vm6732 = vweird.f32 %v5717
  %vm6733 = vweird.f32 %v6727
  %vm6734 = vmor %vm6732, %vm6733
  %v6735 = vsel %vm6734, %v6727, %v6731
  %v6736 = vand.u32 2147483647, %v5717
  %vm6737 = vcmp.eq.f32.partialorder %v6736, 8.507059e+37
  %v6738 = vand.u32 %v5717, 2147483648
  %v6739 = vor.u32 1.1754944e-38, %v6738
  %v6740 = vsel %vm6737, %v6739, %v6735
  %v6741 = vmul.f32 1.0, %v6740
  %v6742 = vrcp.pop %v5718
  %v6743 = vmul.f32 %v5718, %v6742
  %v6744 = vsub.f32 1.0, %v6743
  %v6745 = vmul.f32 %v6742, %v6744
  %v6746 = vadd.f32 %v6742, %v6745
  %vm6747 = vweird.f32 %v5718
  %vm6748 = vweird.f32 %v6742
  %vm6749 = vmor %vm6747, %vm6748
  %v6750 = vsel %vm6749, %v6742, %v6746
  %v6751 = vand.u32 2147483647, %v5718
  %vm6752 = vcmp.eq.f32.partialorder %v6751, 8.507059e+37
  %v6753 = vand.u32 %v5718, 2147483648
  %v6754 = vor.u32 1.1754944e-38, %v6753
  %v6755 = vsel %vm6752, %v6754, %v6750
  %v6756 = vmul.f32 1.0, %v6755
  %v6757 = vrcp.pop %v5719
  %v6758 = vmul.f32 %v5719, %v6757
  %v6759 = vsub.f32 1.0, %v6758
  %v6760 = vmul.f32 %v6757, %v6759
  %v6761 = vadd.f32 %v6757, %v6760
  %vm6762 = vweird.f32 %v5719
  %vm6763 = vweird.f32 %v6757
  %vm6764 = vmor %vm6762, %vm6763
  %v6765 = vsel %vm6764, %v6757, %v6761
  %v6766 = vand.u32 2147483647, %v5719
  %vm6767 = vcmp.eq.f32.partialorder %v6766, 8.507059e+37
  %v6768 = vand.u32 %v5719, 2147483648
  %v6769 = vor.u32 1.1754944e-38, %v6768
  %v6770 = vsel %vm6767, %v6769, %v6765
  %v6771 = vmul.f32 1.0, %v6770
  %v6772 = vrcp.pop %v5720
  %v6773 = vmul.f32 %v5720, %v6772
  %v6774 = vsub.f32 1.0, %v6773
  %v6775 = vmul.f32 %v6772, %v6774
  %v6776 = vadd.f32 %v6772, %v6775
  %vm6777 = vweird.f32 %v5720
  %vm6778 = vweird.f32 %v6772
  %vm6779 = vmor %vm6777, %vm6778
  %v6780 = vsel %vm6779, %v6772, %v6776
  %v6781 = vand.u32 2147483647, %v5720
  %vm6782 = vcmp.eq.f32.partialorder %v6781, 8.507059e+37
  %v6783 = vand.u32 %v5720, 2147483648
  %v6784 = vor.u32 1.1754944e-38, %v6783
  %v6785 = vsel %vm6782, %v6784, %v6780
  %v6786 = vmul.f32 1.0, %v6785
  %v6787 = vrcp.pop %v5721
  %v6788 = vmul.f32 %v5721, %v6787
  %v6789 = vsub.f32 1.0, %v6788
  %v6790 = vmul.f32 %v6787, %v6789
  %v6791 = vadd.f32 %v6787, %v6790
  %vm6792 = vweird.f32 %v5721
  %vm6793 = vweird.f32 %v6787
  %vm6794 = vmor %vm6792, %vm6793
  %v6795 = vsel %vm6794, %v6787, %v6791
  %v6796 = vand.u32 2147483647, %v5721
  %vm6797 = vcmp.eq.f32.partialorder %v6796, 8.507059e+37
  %v6798 = vand.u32 %v5721, 2147483648
  %v6799 = vor.u32 1.1754944e-38, %v6798
  %v6800 = vsel %vm6797, %v6799, %v6795
  %v6801 = vmul.f32 1.0, %v6800
  %v6802 = vmul.f32 %v80, %v5426
  %v6803 = vmul.f32 %v81, %v5427
  %v6804 = vmul.f32 %v82, %v5428
  %v6805 = vmul.f32 %v83, %v5429
  %v6806 = vmul.f32 %v84, %v5430
  %v6807 = vmul.f32 %v85, %v5431
  %v6808 = vmul.f32 %v86, %v5432
  %v6809 = vmul.f32 %v87, %v5433
  %v6810 = vsub.f32 0.0, %v6802
  %v6811 = vsub.f32 0.0, %v6803
  %v6812 = vsub.f32 0.0, %v6804
  %v6813 = vsub.f32 0.0, %v6805
  %v6814 = vsub.f32 0.0, %v6806
  %v6815 = vsub.f32 0.0, %v6807
  %v6816 = vsub.f32 0.0, %v6808
  %v6817 = vsub.f32 0.0, %v6809
  %v6818 = vmul.f32 %v6810, 1.442695
  %v6819 = vpow.pop %v6818
  %v6820 = vmul.f32 %v6811, 1.442695
  %v6821 = vpow.pop %v6820
  %v6822 = vmul.f32 %v6812, 1.442695
  %v6823 = vpow.pop %v6822
  %v6824 = vmul.f32 %v6813, 1.442695
  %v6825 = vpow.pop %v6824
  %v6826 = vmul.f32 %v6814, 1.442695
  %v6827 = vpow.pop %v6826
  %v6828 = vmul.f32 %v6815, 1.442695
  %v6829 = vpow.pop %v6828
  %v6830 = vmul.f32 %v6816, 1.442695
  %v6831 = vpow.pop %v6830
  %v6832 = vmul.f32 %v6817, 1.442695
  %v6833 = vpow.pop %v6832
  %v6834 = vsub.f32 1.0, %v6819
  %v6835 = vsub.f32 1.0, %v6821
  %v6836 = vsub.f32 1.0, %v6823
  %v6837 = vsub.f32 1.0, %v6825
  %v6838 = vsub.f32 1.0, %v6827
  %v6839 = vsub.f32 1.0, %v6829
  %v6840 = vsub.f32 1.0, %v6831
  %v6841 = vsub.f32 1.0, %v6833
  %v6842 = vld [vmem:[%s3] sm:$0xff]
  %v6843 = vld [vmem:[%s3 + $0x8] sm:$0xff]
  %v6844 = vld [vmem:[%s3 + $0x10] sm:$0xff]
  %v6845 = vld [vmem:[%s3 + $0x18] sm:$0xff]
  %v6846 = vld [vmem:[%s3 + $0x20] sm:$0xff]
  %v6847 = vld [vmem:[%s3 + $0x28] sm:$0xff]
  %v6848 = vld [vmem:[%s3 + $0x30] sm:$0xff]
  %v6849 = vld [vmem:[%s3 + $0x38] sm:$0xff]
  %vm6850 = vcmask 523264
  %v6852 = vsel %vm6850, %v6842, 0
  %v6855 = vsel %vm6850, %v6843, 0
  %v6858 = vsel %vm6850, %v6844, 0
  %v6861 = vsel %vm6850, %v6845, 0
  %v6864 = vsel %vm6850, %v6846, 0
  %v6867 = vsel %vm6850, %v6847, 0
  %v6870 = vsel %vm6850, %v6848, 0
  %v6873 = vsel %vm6850, %v6849, 0
  %6875 = vmatpush.msra.mxu0 0.0
  %6876 = vmatpush.msra.mxu0 0.0
  %6877 = vmatpush.msra.mxu0 0.0
  %6878 = vmatpush.msra.mxu0 0.0
  %6879 = vmatpush.msra.mxu0 0.0
  %6880 = vmatpush.msra.mxu0 0.0
  %6881 = vmatpush.msra.mxu0 0.0
  %6882 = vmatpush.msra.mxu0 0.0
  %6883 = vmatpush.msra.mxu0 %v6809
  %6884 = vmatpush.msra.mxu0 %v6808
  %6885 = vmatpush.msra.mxu0 %v6807
  %6886 = vmatpush.msra.mxu0 %v6806
  %6887 = vmatpush.msra.mxu0 %v6805
  %6888 = vmatpush.msra.mxu0 %v6804
  %6889 = vmatpush.msra.mxu0 %v6803
  %6890 = vmatpush.msra.mxu0 %v6802
  %6891 = vmatmul.f32.gmra.mxu0 %v6852
  %v6892 = vpop.f32.mrf.mxu0
  %v6893 = vadd.f32 0.0, %v6892
  %6894 = vmatmul.f32.gmra.mxu0 %v6855
  %v6895 = vpop.f32.mrf.mxu0
  %v6896 = vadd.f32 0.0, %v6895
  %6897 = vmatmul.f32.gmra.mxu0 %v6858
  %v6898 = vpop.f32.mrf.mxu0
  %v6899 = vadd.f32 0.0, %v6898
  %6900 = vmatmul.f32.gmra.mxu0 %v6861
  %v6901 = vpop.f32.mrf.mxu0
  %v6902 = vadd.f32 0.0, %v6901
  %6903 = vmatmul.f32.gmra.mxu0 %v6864
  %v6904 = vpop.f32.mrf.mxu0
  %v6905 = vadd.f32 0.0, %v6904
  %6906 = vmatmul.f32.gmra.mxu0 %v6867
  %v6907 = vpop.f32.mrf.mxu0
  %v6908 = vadd.f32 0.0, %v6907
  %6909 = vmatmul.f32.gmra.mxu0 %v6870
  %v6910 = vpop.f32.mrf.mxu0
  %v6911 = vadd.f32 0.0, %v6910
  %6912 = vmatmul.f32.gmra.mxu0 %v6873
  %v6913 = vpop.f32.mrf.mxu0
  %v6914 = vadd.f32 0.0, %v6913
  %6915 = vdwg.mxu0
  %v6916 = vsub.f32 0.0, %v6893
  %v6917 = vsub.f32 0.0, %v6896
  %v6918 = vsub.f32 0.0, %v6899
  %v6919 = vsub.f32 0.0, %v6902
  %v6920 = vsub.f32 0.0, %v6905
  %v6921 = vsub.f32 0.0, %v6908
  %v6922 = vsub.f32 0.0, %v6911
  %v6923 = vsub.f32 0.0, %v6914
  %v6924 = vmul.f32 %v6916, 1.442695
  %v6925 = vpow.pop %v6924
  %v6926 = vmul.f32 %v6917, 1.442695
  %v6927 = vpow.pop %v6926
  %v6928 = vmul.f32 %v6918, 1.442695
  %v6929 = vpow.pop %v6928
  %v6930 = vmul.f32 %v6919, 1.442695
  %v6931 = vpow.pop %v6930
  %v6932 = vmul.f32 %v6920, 1.442695
  %v6933 = vpow.pop %v6932
  %v6934 = vmul.f32 %v6921, 1.442695
  %v6935 = vpow.pop %v6934
  %v6936 = vmul.f32 %v6922, 1.442695
  %v6937 = vpow.pop %v6936
  %v6938 = vmul.f32 %v6923, 1.442695
  %v6939 = vpow.pop %v6938
  %v6940 = vmul.f32 %v6834, %v6925
  %v6941 = vmul.f32 %v6835, %v6927
  %v6942 = vmul.f32 %v6836, %v6929
  %v6943 = vmul.f32 %v6837, %v6931
  %v6944 = vmul.f32 %v6838, %v6933
  %v6945 = vmul.f32 %v6839, %v6935
  %v6946 = vmul.f32 %v6840, %v6937
  %v6947 = vmul.f32 %v6841, %v6939
  %6948 = vst [vmem:[%s4] sm:$0xff] %v6940
  %6949 = vst [vmem:[%s4 + $0x8] sm:$0xff] %v6941
  %6950 = vst [vmem:[%s4 + $0x10] sm:$0xff] %v6942
  %6951 = vst [vmem:[%s4 + $0x18] sm:$0xff] %v6943
  %6952 = vst [vmem:[%s4 + $0x20] sm:$0xff] %v6944
  %6953 = vst [vmem:[%s4 + $0x28] sm:$0xff] %v6945
  %6954 = vst [vmem:[%s4 + $0x30] sm:$0xff] %v6946
  %6955 = vst [vmem:[%s4 + $0x38] sm:$0xff] %v6947
  %v6956 = vadd.f32 %v6940, %v6941
  %v6957 = vadd.f32 %v6956, %v6942
  %v6958 = vadd.f32 %v6957, %v6943
  %v6959 = vadd.f32 %v6958, %v6944
  %v6960 = vadd.f32 %v6959, %v6945
  %v6961 = vadd.f32 %v6960, %v6946
  %v6962 = vadd.f32 %v6961, %v6947
  %v6963 = vrot.slane %v6962, 4
  %v6964 = vadd.f32 %v6962, %v6963
  %v6965 = vrot.slane %v6964, 2
  %v6966 = vadd.f32 %v6964, %v6965
  %v6967 = vrot.slane %v6966, 1
  %v6968 = vadd.f32 %v6966, %v6967
  %v6969 = vmul.f32 %v6940, %v60
  %v6970 = vmul.f32 %v6941, %v61
  %v6971 = vmul.f32 %v6942, %v62
  %v6972 = vmul.f32 %v6943, %v63
  %v6973 = vmul.f32 %v6944, %v64
  %v6974 = vmul.f32 %v6945, %v65
  %v6975 = vmul.f32 %v6946, %v66
  %v6976 = vmul.f32 %v6947, %v67
  %v6977 = vadd.f32 %v6969, %v6970
  %v6978 = vadd.f32 %v6977, %v6971
  %v6979 = vadd.f32 %v6978, %v6972
  %v6980 = vadd.f32 %v6979, %v6973
  %v6981 = vadd.f32 %v6980, %v6974
  %v6982 = vadd.f32 %v6981, %v6975
  %v6983 = vadd.f32 %v6982, %v6976
  %v6984 = vrot.slane %v6983, 4
  %v6985 = vadd.f32 %v6983, %v6984
  %v6986 = vrot.slane %v6985, 2
  %v6987 = vadd.f32 %v6985, %v6986
  %v6988 = vrot.slane %v6987, 1
  %v6989 = vadd.f32 %v6987, %v6988
  %v6990 = vmul.f32 %v6940, %v5736
  %v6991 = vmul.f32 %v6941, %v5751
  %v6992 = vmul.f32 %v6942, %v5766
  %v6993 = vmul.f32 %v6943, %v5781
  %v6994 = vmul.f32 %v6944, %v5796
  %v6995 = vmul.f32 %v6945, %v5811
  %v6996 = vmul.f32 %v6946, %v5826
  %v6997 = vmul.f32 %v6947, %v5841
  %v6998 = vmul.f32 %v6940, %v5856
  %v6999 = vmul.f32 %v6941, %v5871
  %v7000 = vmul.f32 %v6942, %v5886
  %v7001 = vmul.f32 %v6943, %v5901
  %v7002 = vmul.f32 %v6944, %v5916
  %v7003 = vmul.f32 %v6945, %v5931
  %v7004 = vmul.f32 %v6946, %v5946
  %v7005 = vmul.f32 %v6947, %v5961
  %v7006 = vmul.f32 %v6940, %v5976
  %v7007 = vmul.f32 %v6941, %v5991
  %v7008 = vmul.f32 %v6942, %v6006
  %v7009 = vmul.f32 %v6943, %v6021
  %v7010 = vmul.f32 %v6944, %v6036
  %v7011 = vmul.f32 %v6945, %v6051
  %v7012 = vmul.f32 %v6946, %v6066
  %v7013 = vmul.f32 %v6947, %v6081
  %v7014 = vmul.f32 %v6940, %v6096
  %v7015 = vmul.f32 %v6941, %v6111
  %v7016 = vmul.f32 %v6942, %v6126
  %v7017 = vmul.f32 %v6943, %v6141
  %v7018 = vmul.f32 %v6944, %v6156
  %v7019 = vmul.f32 %v6945, %v6171
  %v7020 = vmul.f32 %v6946, %v6186
  %v7021 = vmul.f32 %v6947, %v6201
  %v7022 = vmul.f32 %v6940, %v6216
  %v7023 = vmul.f32 %v6941, %v6231
  %v7024 = vmul.f32 %v6942, %v6246
  %v7025 = vmul.f32 %v6943, %v6261
  %v7026 = vmul.f32 %v6944, %v6276
  %v7027 = vmul.f32 %v6945, %v6291
  %v7028 = vmul.f32 %v6946, %v6306
  %v7029 = vmul.f32 %v6947, %v6321
  %v7030 = vmul.f32 %v6940, %v6336
  %v7031 = vmul.f32 %v6941, %v6351
  %v7032 = vmul.f32 %v6942, %v6366
  %v7033 = vmul.f32 %v6943, %v6381
  %v7034 = vmul.f32 %v6944, %v6396
  %v7035 = vmul.f32 %v6945, %v6411
  %v7036 = vmul.f32 %v6946, %v6426
  %v7037 = vmul.f32 %v6947, %v6441
  %v7038 = vmul.f32 %v6940, %v6456
  %v7039 = vmul.f32 %v6941, %v6471
  %v7040 = vmul.f32 %v6942, %v6486
  %v7041 = vmul.f32 %v6943, %v6501
  %v7042 = vmul.f32 %v6944, %v6516
  %v7043 = vmul.f32 %v6945, %v6531
  %v7044 = vmul.f32 %v6946, %v6546
  %v7045 = vmul.f32 %v6947, %v6561
  %v7046 = vmul.f32 %v6940, %v6576
  %v7047 = vmul.f32 %v6941, %v6591
  %v7048 = vmul.f32 %v6942, %v6606
  %v7049 = vmul.f32 %v6943, %v6621
  %v7050 = vmul.f32 %v6944, %v6636
  %v7051 = vmul.f32 %v6945, %v6651
  %v7052 = vmul.f32 %v6946, %v6666
  %v7053 = vmul.f32 %v6947, %v6681
  %v7054 = vmul.f32 %v6940, %v6696
  %v7055 = vmul.f32 %v6941, %v6711
  %v7056 = vmul.f32 %v6942, %v6726
  %v7057 = vmul.f32 %v6943, %v6741
  %v7058 = vmul.f32 %v6944, %v6756
  %v7059 = vmul.f32 %v6945, %v6771
  %v7060 = vmul.f32 %v6946, %v6786
  %v7061 = vmul.f32 %v6947, %v6801
  %v7062 = vadd.f32 %v6990, %v6991
  %v7063 = vadd.f32 %v7062, %v6992
  %v7064 = vadd.f32 %v7063, %v6993
  %v7065 = vadd.f32 %v7064, %v6994
  %v7066 = vadd.f32 %v7065, %v6995
  %v7067 = vadd.f32 %v7066, %v6996
  %v7068 = vadd.f32 %v7067, %v6997
  %v7069 = vrot.slane %v7068, 4
  %v7070 = vadd.f32 %v7068, %v7069
  %v7071 = vrot.slane %v7070, 2
  %v7072 = vadd.f32 %v7070, %v7071
  %v7073 = vrot.slane %v7072, 1
  %v7074 = vadd.f32 %v7072, %v7073
  %v7075 = vadd.f32 %v6998, %v6999
  %v7076 = vadd.f32 %v7075, %v7000
  %v7077 = vadd.f32 %v7076, %v7001
  %v7078 = vadd.f32 %v7077, %v7002
  %v7079 = vadd.f32 %v7078, %v7003
  %v7080 = vadd.f32 %v7079, %v7004
  %v7081 = vadd.f32 %v7080, %v7005
  %v7082 = vrot.slane %v7081, 4
  %v7083 = vadd.f32 %v7081, %v7082
  %v7084 = vrot.slane %v7083, 2
  %v7085 = vadd.f32 %v7083, %v7084
  %v7086 = vrot.slane %v7085, 1
  %v7087 = vadd.f32 %v7085, %v7086
  %v7088 = vadd.f32 %v7006, %v7007
  %v7089 = vadd.f32 %v7088, %v7008
  %v7090 = vadd.f32 %v7089, %v7009
  %v7091 = vadd.f32 %v7090, %v7010
  %v7092 = vadd.f32 %v7091, %v7011
  %v7093 = vadd.f32 %v7092, %v7012
  %v7094 = vadd.f32 %v7093, %v7013
  %v7095 = vrot.slane %v7094, 4
  %v7096 = vadd.f32 %v7094, %v7095
  %v7097 = vrot.slane %v7096, 2
  %v7098 = vadd.f32 %v7096, %v7097
  %v7099 = vrot.slane %v7098, 1
  %v7100 = vadd.f32 %v7098, %v7099
  %v7101 = vadd.f32 %v7014, %v7015
  %v7102 = vadd.f32 %v7101, %v7016
  %v7103 = vadd.f32 %v7102, %v7017
  %v7104 = vadd.f32 %v7103, %v7018
  %v7105 = vadd.f32 %v7104, %v7019
  %v7106 = vadd.f32 %v7105, %v7020
  %v7107 = vadd.f32 %v7106, %v7021
  %v7108 = vrot.slane %v7107, 4
  %v7109 = vadd.f32 %v7107, %v7108
  %v7110 = vrot.slane %v7109, 2
  %v7111 = vadd.f32 %v7109, %v7110
  %v7112 = vrot.slane %v7111, 1
  %v7113 = vadd.f32 %v7111, %v7112
  %v7114 = vadd.f32 %v7022, %v7023
  %v7115 = vadd.f32 %v7114, %v7024
  %v7116 = vadd.f32 %v7115, %v7025
  %v7117 = vadd.f32 %v7116, %v7026
  %v7118 = vadd.f32 %v7117, %v7027
  %v7119 = vadd.f32 %v7118, %v7028
  %v7120 = vadd.f32 %v7119, %v7029
  %v7121 = vrot.slane %v7120, 4
  %v7122 = vadd.f32 %v7120, %v7121
  %v7123 = vrot.slane %v7122, 2
  %v7124 = vadd.f32 %v7122, %v7123
  %v7125 = vrot.slane %v7124, 1
  %v7126 = vadd.f32 %v7124, %v7125
  %v7127 = vadd.f32 %v7030, %v7031
  %v7128 = vadd.f32 %v7127, %v7032
  %v7129 = vadd.f32 %v7128, %v7033
  %v7130 = vadd.f32 %v7129, %v7034
  %v7131 = vadd.f32 %v7130, %v7035
  %v7132 = vadd.f32 %v7131, %v7036
  %v7133 = vadd.f32 %v7132, %v7037
  %v7134 = vrot.slane %v7133, 4
  %v7135 = vadd.f32 %v7133, %v7134
  %v7136 = vrot.slane %v7135, 2
  %v7137 = vadd.f32 %v7135, %v7136
  %v7138 = vrot.slane %v7137, 1
  %v7139 = vadd.f32 %v7137, %v7138
  %v7140 = vadd.f32 %v7038, %v7039
  %v7141 = vadd.f32 %v7140, %v7040
  %v7142 = vadd.f32 %v7141, %v7041
  %v7143 = vadd.f32 %v7142, %v7042
  %v7144 = vadd.f32 %v7143, %v7043
  %v7145 = vadd.f32 %v7144, %v7044
  %v7146 = vadd.f32 %v7145, %v7045
  %v7147 = vrot.slane %v7146, 4
  %v7148 = vadd.f32 %v7146, %v7147
  %v7149 = vrot.slane %v7148, 2
  %v7150 = vadd.f32 %v7148, %v7149
  %v7151 = vrot.slane %v7150, 1
  %v7152 = vadd.f32 %v7150, %v7151
  %v7153 = vadd.f32 %v7046, %v7047
  %v7154 = vadd.f32 %v7153, %v7048
  %v7155 = vadd.f32 %v7154, %v7049
  %v7156 = vadd.f32 %v7155, %v7050
  %v7157 = vadd.f32 %v7156, %v7051
  %v7158 = vadd.f32 %v7157, %v7052
  %v7159 = vadd.f32 %v7158, %v7053
  %v7160 = vrot.slane %v7159, 4
  %v7161 = vadd.f32 %v7159, %v7160
  %v7162 = vrot.slane %v7161, 2
  %v7163 = vadd.f32 %v7161, %v7162
  %v7164 = vrot.slane %v7163, 1
  %v7165 = vadd.f32 %v7163, %v7164
  %v7166 = vadd.f32 %v7054, %v7055
  %v7167 = vadd.f32 %v7166, %v7056
  %v7168 = vadd.f32 %v7167, %v7057
  %v7169 = vadd.f32 %v7168, %v7058
  %v7170 = vadd.f32 %v7169, %v7059
  %v7171 = vadd.f32 %v7170, %v7060
  %v7172 = vadd.f32 %v7171, %v7061
  %v7173 = vrot.slane %v7172, 4
  %v7174 = vadd.f32 %v7172, %v7173
  %v7175 = vrot.slane %v7174, 2
  %v7176 = vadd.f32 %v7174, %v7175
  %v7177 = vrot.slane %v7176, 1
  %v7178 = vadd.f32 %v7176, %v7177
  %vm7188 = vcmask 1043459
  %v7189 = vsel %vm7188, %v7087, %v7074
  %vm7190 = vcmask 1044484
  %v7191 = vsel %vm7190, %v7100, %v7189
  %vm7192 = vcmask 1045509
  %v7193 = vsel %vm7192, %v7113, %v7191
  %vm7194 = vcmask 1046534
  %v7195 = vsel %vm7194, %v7126, %v7193
  %vm7196 = vcmask 1047559
  %v7197 = vsel %vm7196, %v7139, %v7195
  %vm7198 = vcmask 1041409
  %v7199 = vsel %vm7198, %v7165, %v7152
  %vm7200 = vcmask 1042434
  %v7201 = vsel %vm7200, %v7178, %v7199
  %v7204 = vsel %vm2983, %v6968, %v6989
  %v7205 = vsel %vm795, %v7204, %v7197
  %v7206 = vsel %vm638, %v7201, 0.0
  %7207 = vst [vmem:[%s5] sm:$0xff] %v7205
  %7208 = vst [vmem:[%s5 + $0x8] sm:$0xff] %v7206
  // Predicated region
  $region18: #{_lambda_.1} parent=0 // pred_check
    _
  $region19: #{_lambda_.1} parent=0 // pred_check_branch
    %7210 = sbr.rel (0) target = $region21
  $region20: #{_lambda_.1} parent=0 // pred_region
    _
  $region21: #{_lambda_.1} parent=0 // pred_fallthru
    _
  // Predicated region
  $region22: #{_lambda_.1} parent=0 // pred_check
    _
  $region23: #{_lambda_.1} parent=0 // pred_check_branch
    %7212 = sbr.rel (0) target = $region25
  $region24: #{_lambda_.1} parent=0 // pred_region
    _
  $region25: #{_lambda_.1} parent=0 // pred_fallthru
    _
  // Predicated region
  $region26: #{_lambda_.1} parent=0 // pred_check
    _
  $region27: #{_lambda_.1} parent=0 // pred_check_branch
    %7214 = sbr.rel (0) target = $region29
  $region28: #{_lambda_.1} parent=0 // pred_region
    _
  $region29: #{_lambda_.1} parent=0 // pred_fallthru
    _
  // Predicated region
  $region30: #{_lambda_.1} parent=0 // pred_check
    _
  $region31: #{_lambda_.1} parent=0 // pred_check_branch
    %7216 = sbr.rel (0) target = $region33
  $region32: #{_lambda_.1} parent=0 // pred_region
    _
  $region33: #{_lambda_.1} parent=0 // pred_fallthru
    _

</llo_original>
